<compile_context>
chip_gen: v7x
topology: tpu7x:2x2x1
jax: 0.10.0
libtpu: 0.0.40
codegen_flags: <defaults>
</compile_context>

<pallas_src>
import jax
import jax.numpy as jnp
from jax import lax
from jax.experimental import pallas as pl
from jax.experimental.pallas import tpu as pltpu


def _lateral_block_kernel(a1_ref, w1_ref, b1_ref, a2_ref, w2_ref, b2_ref,
                          x_ref, o_ref):
    # x_ref block: (1, C, H+4, W+4) f32 (zero ring of width 2, padded in XLA once)
    # o_ref block: (1, C, H, W) f32
    _, C, H, W = o_ref.shape
    Hp, Wp = H + 2, W + 2            # stage-1 extended domain == stage-2 padded input

    xq = x_ref[0]                                    # (C, H+4, W+4), resident in VMEM
    a1 = a1_ref[0]
    p1 = jnp.where(xq > 0, xq, a1 * xq)              # PReLU1 once; PReLU(0)=0 keeps pad

    # Zero-ring mask for the extended stage-1 output (acts as the conv padding
    # of stage 2 without any in-kernel pad / offset store).
    row = lax.broadcasted_iota(jnp.int32, (Hp, Wp), 0)
    col = lax.broadcasted_iota(jnp.int32, (Hp, Wp), 1)
    interior = (row >= 1) & (row <= H) & (col >= 1) & (col <= W)

    a2 = a2_ref[0]

    def widx(co, ci, kh, kw):                        # (Cout, Cin, 3, 3) row-major flat
        return ((co * C + ci) * 3 + kh) * 3 + kw

    # ---- stage 1: y1 = Conv1(PReLU1(x)) on the (Hp, Wp) extended domain --------
    # Tap slices are built once and reused for every output channel.
    taps1 = [[[p1[ci, kh:kh + Hp, kw:kw + Wp] for kw in range(3)]
              for kh in range(3)] for ci in range(C)]
    p2 = []                                          # stage-2 input, per channel (Hp, Wp)
    for co in range(C):
        acc = jnp.full((Hp, Wp), b1_ref[co], jnp.float32)
        for ci in range(C):
            for kh in range(3):
                for kw in range(3):
                    acc = acc + w1_ref[widx(co, ci, kh, kw)] * taps1[ci][kh][kw]
        acc = jnp.where(interior, acc, 0.0)          # zero ring == stage-2 conv padding
        p2.append(jnp.where(acc > 0, acc, a2 * acc)) # PReLU2 (ring stays 0)

    # ---- stage 2: out = Conv2(PReLU2(y1)) + x -----------------------------------
    taps2 = [[[p2[ci][kh:kh + H, kw:kw + W] for kw in range(3)]
              for kh in range(3)] for ci in range(C)]
    for co in range(C):
        acc = jnp.full((H, W), b2_ref[co], jnp.float32)
        for ci in range(C):
            for kh in range(3):
                for kw in range(3):
                    acc = acc + w2_ref[widx(co, ci, kh, kw)] * taps2[ci][kh][kw]
        acc = acc + xq[co, 2:2 + H, 2:2 + W]         # residual from the resident block
        o_ref[0, co] = acc.astype(o_ref.dtype)


def lateral_block(x_nchw, params):
    """PyTorch LateralBlock forward: x + Conv(PReLU(Conv(PReLU(x))))."""
    a1, w1, b1, a2, w2, b2 = params
    n, c, h, w = x_nchw.shape

    # Single tiny spatial pad (2 each side); channels are NOT padded, layout stays NCHW.
    xp = jnp.pad(x_nchw.astype(jnp.float32), ((0, 0), (0, 0), (2, 2), (2, 2)))

    smem = lambda: pl.BlockSpec(memory_space=pltpu.MemorySpace.SMEM)
    scalar = lambda a: jnp.reshape(a, (1,)).astype(jnp.float32)
    flat = lambda arr: arr.astype(jnp.float32).reshape(-1)

    flops = 2 * (2 * n * h * w * 9 * c * c)          # two 3x3 convs, TRUE channel count
    bytes_accessed = (xp.size + n * c * h * w
                      + w1.size + w2.size + b1.size + b2.size + 2) * 4

    return pl.pallas_call(
        _lateral_block_kernel,
        out_shape=jax.ShapeDtypeStruct((n, c, h, w), jnp.float32),
        grid=(n,),
        in_specs=[smem(), smem(), smem(), smem(), smem(), smem(),
                  pl.BlockSpec((1, c, h + 4, w + 4), lambda i: (i, 0, 0, 0))],
        out_specs=pl.BlockSpec((1, c, h, w), lambda i: (i, 0, 0, 0)),
        compiler_params=pltpu.CompilerParams(
            dimension_semantics=("parallel",),        # N=2 images -> both v7x TCs busy
            vmem_limit_bytes=32 * 1024 * 1024),
        cost_estimate=pl.CostEstimate(flops=int(flops), transcendentals=0,
                                      bytes_accessed=int(bytes_accessed)),
    )(scalar(a1), flat(w1), b1.astype(jnp.float32),
      scalar(a2), flat(w2), b2.astype(jnp.float32), xp)


def ref_lateral_block(x, params):
    """Plain-JAX reference mirroring the PyTorch module."""
    a1, w1, b1, a2, w2, b2 = params

    def prelu(v, a):
        return jnp.where(v > 0, v, a * v)

    dn = ('NCHW', 'OIHW', 'NCHW')
    y = prelu(x, a1)
    y = lax.conv_general_dilated(y, w1, (1, 1), ((1, 1), (1, 1)),
                                 dimension_numbers=dn) + b1[None, :, None, None]
    y = prelu(y, a2)
    y = lax.conv_general_dilated(y, w2, (1, 1), ((1, 1), (1, 1)),
                                 dimension_numbers=dn) + b2[None, :, None, None]
    return y + x


def init_params(key, dim):
    k1, k2, k3, k4 = jax.random.split(key, 4)
    bound = 1.0 / (dim * 9.0) ** 0.5
    w1 = jax.random.uniform(k1, (dim, dim, 3, 3), jnp.float32, -bound, bound)
    b1 = jax.random.uniform(k2, (dim,), jnp.float32, -bound, bound)
    w2 = jax.random.uniform(k3, (dim, dim, 3, 3), jnp.float32, -bound, bound)
    b2 = jax.random.uniform(k4, (dim,), jnp.float32, -bound, bound)
    a1 = jnp.float32(0.25)   # PReLU default init (single shared slope)
    a2 = jnp.float32(0.25)
    return (a1, w1, b1, a2, w2, b2)


if __name__ == "__main__":
    key = jax.random.PRNGKey(0)
    kx, kp = jax.random.split(key)

    N, dim, H, W = 2, 4, 16, 16
    x = jax.random.normal(kx, (N, dim, H, W), jnp.float32)
    params = init_params(kp, dim)

    fwd = jax.jit(lateral_block)
    out = jax.block_until_ready(fwd(x, params))
    ref = jax.block_until_ready(ref_lateral_block(x, params))

    assert out.shape == (N, dim, H, W), out.shape
    err = float(jnp.max(jnp.abs(out - ref)))
    assert err < 1e-3, err        # f32 end-to-end now (was 2e-2 with bf16 path)
    print("KERNEL_OK")
</pallas_src>

<mosaic_0001>
module attributes {stable_mosaic.version = 11 : i64} {
  func.func @_lateral_block_kernel(%arg0: i32, %arg1: memref<1xf32, #tpu.memory_space<smem>>, %arg2: memref<144xf32, #tpu.memory_space<smem>>, %arg3: memref<4xf32, #tpu.memory_space<smem>>, %arg4: memref<1xf32, #tpu.memory_space<smem>>, %arg5: memref<144xf32, #tpu.memory_space<smem>>, %arg6: memref<4xf32, #tpu.memory_space<smem>>, %arg7: memref<1x4x20x20xf32, #tpu.memory_space<vmem>>, %arg8: memref<1x4x16x16xf32, #tpu.memory_space<vmem>>) attributes {dimension_semantics = [#tpu.dimension_semantics<parallel>], iteration_bounds = array<i64: 2>, scalar_prefetch = 0 : i64, scratch_operands = 0 : i64, tpu.core_type = #tpu.core_type<tc>, window_params = [{transform_indices = @transform_0, window_bounds = array<i64: 1>}, {transform_indices = @transform_1, window_bounds = array<i64: 144>}, {transform_indices = @transform_2, window_bounds = array<i64: 4>}, {transform_indices = @transform_3, window_bounds = array<i64: 1>}, {transform_indices = @transform_4, window_bounds = array<i64: 144>}, {transform_indices = @transform_5, window_bounds = array<i64: 4>}, {transform_indices = @transform_6, window_bounds = array<i64: 1, 4, 20, 20>}, {transform_indices = @transform_7, window_bounds = array<i64: 1, 4, 16, 16>}]} {
    %c0 = arith.constant 0 : index
    %c0_0 = arith.constant 0 : index
    %c0_1 = arith.constant 0 : index
    %c0_2 = arith.constant 0 : index
    %0 = vector.load %arg7[%c0, %c0_0, %c0_1, %c0_2] : memref<1x4x20x20xf32, #tpu.memory_space<vmem>>, vector<1x4x20x20xf32>
    %1 = vector.shape_cast %0 : vector<1x4x20x20xf32> to vector<4x20x20xf32>
    %c0_3 = arith.constant 0 : index
    %2 = memref.load %arg1[%c0_3] : memref<1xf32, #tpu.memory_space<smem>>
    %cst = arith.constant 0.000000e+00 : f32
    %3 = vector.broadcast %cst : f32 to vector<4x20x20xf32>
    %4 = arith.cmpf ogt, %1, %3 : vector<4x20x20xf32>
    %5 = vector.broadcast %2 : f32 to vector<4x20x20xf32>
    %6 = arith.mulf %5, %1 : vector<4x20x20xf32>
    %7 = arith.select %4, %1, %6 : vector<4x20x20xi1>, vector<4x20x20xf32>
    %8 = tpu.iota {dimensions = array<i32: 0>} : vector<18x18xi32>
    %9 = tpu.iota {dimensions = array<i32: 1>} : vector<18x18xi32>
    %c1_i32 = arith.constant 1 : i32
    %10 = vector.broadcast %c1_i32 : i32 to vector<18x18xi32>
    %11 = arith.cmpi sge, %8, %10 : vector<18x18xi32>
    %c16_i32 = arith.constant 16 : i32
    %12 = vector.broadcast %c16_i32 : i32 to vector<18x18xi32>
    %13 = arith.cmpi sle, %8, %12 : vector<18x18xi32>
    %14 = arith.andi %11, %13 : vector<18x18xi1>
    %c1_i32_4 = arith.constant 1 : i32
    %15 = vector.broadcast %c1_i32_4 : i32 to vector<18x18xi32>
    %16 = arith.cmpi sge, %9, %15 : vector<18x18xi32>
    %17 = arith.andi %14, %16 : vector<18x18xi1>
    %c16_i32_5 = arith.constant 16 : i32
    %18 = vector.broadcast %c16_i32_5 : i32 to vector<18x18xi32>
    %19 = arith.cmpi sle, %9, %18 : vector<18x18xi32>
    %20 = arith.andi %17, %19 : vector<18x18xi1>
    %c0_6 = arith.constant 0 : index
    %21 = memref.load %arg4[%c0_6] : memref<1xf32, #tpu.memory_space<smem>>
    %22 = vector.extract_strided_slice %7 {offsets = [0, 0, 0], sizes = [1, 18, 18], strides = [1, 1, 1]} : vector<4x20x20xf32> to vector<1x18x18xf32>
    %23 = vector.shape_cast %22 : vector<1x18x18xf32> to vector<18x18xf32>
    %24 = vector.extract_strided_slice %7 {offsets = [0, 0, 1], sizes = [1, 18, 18], strides = [1, 1, 1]} : vector<4x20x20xf32> to vector<1x18x18xf32>
    %25 = vector.shape_cast %24 : vector<1x18x18xf32> to vector<18x18xf32>
    %26 = vector.extract_strided_slice %7 {offsets = [0, 0, 2], sizes = [1, 18, 18], strides = [1, 1, 1]} : vector<4x20x20xf32> to vector<1x18x18xf32>
    %27 = vector.shape_cast %26 : vector<1x18x18xf32> to vector<18x18xf32>
    %28 = vector.extract_strided_slice %7 {offsets = [0, 1, 0], sizes = [1, 18, 18], strides = [1, 1, 1]} : vector<4x20x20xf32> to vector<1x18x18xf32>
    %29 = vector.shape_cast %28 : vector<1x18x18xf32> to vector<18x18xf32>
    %30 = vector.extract_strided_slice %7 {offsets = [0, 1, 1], sizes = [1, 18, 18], strides = [1, 1, 1]} : vector<4x20x20xf32> to vector<1x18x18xf32>
    %31 = vector.shape_cast %30 : vector<1x18x18xf32> to vector<18x18xf32>
    %32 = vector.extract_strided_slice %7 {offsets = [0, 1, 2], sizes = [1, 18, 18], strides = [1, 1, 1]} : vector<4x20x20xf32> to vector<1x18x18xf32>
    %33 = vector.shape_cast %32 : vector<1x18x18xf32> to vector<18x18xf32>
    %34 = vector.extract_strided_slice %7 {offsets = [0, 2, 0], sizes = [1, 18, 18], strides = [1, 1, 1]} : vector<4x20x20xf32> to vector<1x18x18xf32>
    %35 = vector.shape_cast %34 : vector<1x18x18xf32> to vector<18x18xf32>
    %36 = vector.extract_strided_slice %7 {offsets = [0, 2, 1], sizes = [1, 18, 18], strides = [1, 1, 1]} : vector<4x20x20xf32> to vector<1x18x18xf32>
    %37 = vector.shape_cast %36 : vector<1x18x18xf32> to vector<18x18xf32>
    %38 = vector.extract_strided_slice %7 {offsets = [0, 2, 2], sizes = [1, 18, 18], strides = [1, 1, 1]} : vector<4x20x20xf32> to vector<1x18x18xf32>
    %39 = vector.shape_cast %38 : vector<1x18x18xf32> to vector<18x18xf32>
    %40 = vector.extract_strided_slice %7 {offsets = [1, 0, 0], sizes = [1, 18, 18], strides = [1, 1, 1]} : vector<4x20x20xf32> to vector<1x18x18xf32>
    %41 = vector.shape_cast %40 : vector<1x18x18xf32> to vector<18x18xf32>
    %42 = vector.extract_strided_slice %7 {offsets = [1, 0, 1], sizes = [1, 18, 18], strides = [1, 1, 1]} : vector<4x20x20xf32> to vector<1x18x18xf32>
    %43 = vector.shape_cast %42 : vector<1x18x18xf32> to vector<18x18xf32>
    %44 = vector.extract_strided_slice %7 {offsets = [1, 0, 2], sizes = [1, 18, 18], strides = [1, 1, 1]} : vector<4x20x20xf32> to vector<1x18x18xf32>
    %45 = vector.shape_cast %44 : vector<1x18x18xf32> to vector<18x18xf32>
    %46 = vector.extract_strided_slice %7 {offsets = [1, 1, 0], sizes = [1, 18, 18], strides = [1, 1, 1]} : vector<4x20x20xf32> to vector<1x18x18xf32>
    %47 = vector.shape_cast %46 : vector<1x18x18xf32> to vector<18x18xf32>
    %48 = vector.extract_strided_slice %7 {offsets = [1, 1, 1], sizes = [1, 18, 18], strides = [1, 1, 1]} : vector<4x20x20xf32> to vector<1x18x18xf32>
    %49 = vector.shape_cast %48 : vector<1x18x18xf32> to vector<18x18xf32>
    %50 = vector.extract_strided_slice %7 {offsets = [1, 1, 2], sizes = [1, 18, 18], strides = [1, 1, 1]} : vector<4x20x20xf32> to vector<1x18x18xf32>
    %51 = vector.shape_cast %50 : vector<1x18x18xf32> to vector<18x18xf32>
    %52 = vector.extract_strided_slice %7 {offsets = [1, 2, 0], sizes = [1, 18, 18], strides = [1, 1, 1]} : vector<4x20x20xf32> to vector<1x18x18xf32>
    %53 = vector.shape_cast %52 : vector<1x18x18xf32> to vector<18x18xf32>
    %54 = vector.extract_strided_slice %7 {offsets = [1, 2, 1], sizes = [1, 18, 18], strides = [1, 1, 1]} : vector<4x20x20xf32> to vector<1x18x18xf32>
    %55 = vector.shape_cast %54 : vector<1x18x18xf32> to vector<18x18xf32>
    %56 = vector.extract_strided_slice %7 {offsets = [1, 2, 2], sizes = [1, 18, 18], strides = [1, 1, 1]} : vector<4x20x20xf32> to vector<1x18x18xf32>
    %57 = vector.shape_cast %56 : vector<1x18x18xf32> to vector<18x18xf32>
    %58 = vector.extract_strided_slice %7 {offsets = [2, 0, 0], sizes = [1, 18, 18], strides = [1, 1, 1]} : vector<4x20x20xf32> to vector<1x18x18xf32>
    %59 = vector.shape_cast %58 : vector<1x18x18xf32> to vector<18x18xf32>
    %60 = vector.extract_strided_slice %7 {offsets = [2, 0, 1], sizes = [1, 18, 18], strides = [1, 1, 1]} : vector<4x20x20xf32> to vector<1x18x18xf32>
    %61 = vector.shape_cast %60 : vector<1x18x18xf32> to vector<18x18xf32>
    %62 = vector.extract_strided_slice %7 {offsets = [2, 0, 2], sizes = [1, 18, 18], strides = [1, 1, 1]} : vector<4x20x20xf32> to vector<1x18x18xf32>
    %63 = vector.shape_cast %62 : vector<1x18x18xf32> to vector<18x18xf32>
    %64 = vector.extract_strided_slice %7 {offsets = [2, 1, 0], sizes = [1, 18, 18], strides = [1, 1, 1]} : vector<4x20x20xf32> to vector<1x18x18xf32>
    %65 = vector.shape_cast %64 : vector<1x18x18xf32> to vector<18x18xf32>
    %66 = vector.extract_strided_slice %7 {offsets = [2, 1, 1], sizes = [1, 18, 18], strides = [1, 1, 1]} : vector<4x20x20xf32> to vector<1x18x18xf32>
    %67 = vector.shape_cast %66 : vector<1x18x18xf32> to vector<18x18xf32>
    %68 = vector.extract_strided_slice %7 {offsets = [2, 1, 2], sizes = [1, 18, 18], strides = [1, 1, 1]} : vector<4x20x20xf32> to vector<1x18x18xf32>
    %69 = vector.shape_cast %68 : vector<1x18x18xf32> to vector<18x18xf32>
    %70 = vector.extract_strided_slice %7 {offsets = [2, 2, 0], sizes = [1, 18, 18], strides = [1, 1, 1]} : vector<4x20x20xf32> to vector<1x18x18xf32>
    %71 = vector.shape_cast %70 : vector<1x18x18xf32> to vector<18x18xf32>
    %72 = vector.extract_strided_slice %7 {offsets = [2, 2, 1], sizes = [1, 18, 18], strides = [1, 1, 1]} : vector<4x20x20xf32> to vector<1x18x18xf32>
    %73 = vector.shape_cast %72 : vector<1x18x18xf32> to vector<18x18xf32>
    %74 = vector.extract_strided_slice %7 {offsets = [2, 2, 2], sizes = [1, 18, 18], strides = [1, 1, 1]} : vector<4x20x20xf32> to vector<1x18x18xf32>
    %75 = vector.shape_cast %74 : vector<1x18x18xf32> to vector<18x18xf32>
    %76 = vector.extract_strided_slice %7 {offsets = [3, 0, 0], sizes = [1, 18, 18], strides = [1, 1, 1]} : vector<4x20x20xf32> to vector<1x18x18xf32>
    %77 = vector.shape_cast %76 : vector<1x18x18xf32> to vector<18x18xf32>
    %78 = vector.extract_strided_slice %7 {offsets = [3, 0, 1], sizes = [1, 18, 18], strides = [1, 1, 1]} : vector<4x20x20xf32> to vector<1x18x18xf32>
    %79 = vector.shape_cast %78 : vector<1x18x18xf32> to vector<18x18xf32>
    %80 = vector.extract_strided_slice %7 {offsets = [3, 0, 2], sizes = [1, 18, 18], strides = [1, 1, 1]} : vector<4x20x20xf32> to vector<1x18x18xf32>
    %81 = vector.shape_cast %80 : vector<1x18x18xf32> to vector<18x18xf32>
    %82 = vector.extract_strided_slice %7 {offsets = [3, 1, 0], sizes = [1, 18, 18], strides = [1, 1, 1]} : vector<4x20x20xf32> to vector<1x18x18xf32>
    %83 = vector.shape_cast %82 : vector<1x18x18xf32> to vector<18x18xf32>
    %84 = vector.extract_strided_slice %7 {offsets = [3, 1, 1], sizes = [1, 18, 18], strides = [1, 1, 1]} : vector<4x20x20xf32> to vector<1x18x18xf32>
    %85 = vector.shape_cast %84 : vector<1x18x18xf32> to vector<18x18xf32>
    %86 = vector.extract_strided_slice %7 {offsets = [3, 1, 2], sizes = [1, 18, 18], strides = [1, 1, 1]} : vector<4x20x20xf32> to vector<1x18x18xf32>
    %87 = vector.shape_cast %86 : vector<1x18x18xf32> to vector<18x18xf32>
    %88 = vector.extract_strided_slice %7 {offsets = [3, 2, 0], sizes = [1, 18, 18], strides = [1, 1, 1]} : vector<4x20x20xf32> to vector<1x18x18xf32>
    %89 = vector.shape_cast %88 : vector<1x18x18xf32> to vector<18x18xf32>
    %90 = vector.extract_strided_slice %7 {offsets = [3, 2, 1], sizes = [1, 18, 18], strides = [1, 1, 1]} : vector<4x20x20xf32> to vector<1x18x18xf32>
    %91 = vector.shape_cast %90 : vector<1x18x18xf32> to vector<18x18xf32>
    %92 = vector.extract_strided_slice %7 {offsets = [3, 2, 2], sizes = [1, 18, 18], strides = [1, 1, 1]} : vector<4x20x20xf32> to vector<1x18x18xf32>
    %93 = vector.shape_cast %92 : vector<1x18x18xf32> to vector<18x18xf32>
    %c0_7 = arith.constant 0 : index
    %94 = memref.load %arg3[%c0_7] : memref<4xf32, #tpu.memory_space<smem>>
    %95 = vector.broadcast %94 : f32 to vector<18x18xf32>
    %c0_8 = arith.constant 0 : index
    %96 = memref.load %arg2[%c0_8] : memref<144xf32, #tpu.memory_space<smem>>
    %97 = vector.broadcast %96 : f32 to vector<18x18xf32>
    %98 = arith.mulf %97, %23 : vector<18x18xf32>
    %99 = arith.addf %95, %98 : vector<18x18xf32>
    %c1 = arith.constant 1 : index
    %100 = memref.load %arg2[%c1] : memref<144xf32, #tpu.memory_space<smem>>
    %101 = vector.broadcast %100 : f32 to vector<18x18xf32>
    %102 = arith.mulf %101, %25 : vector<18x18xf32>
    %103 = arith.addf %99, %102 : vector<18x18xf32>
    %c2 = arith.constant 2 : index
    %104 = memref.load %arg2[%c2] : memref<144xf32, #tpu.memory_space<smem>>
    %105 = vector.broadcast %104 : f32 to vector<18x18xf32>
    %106 = arith.mulf %105, %27 : vector<18x18xf32>
    %107 = arith.addf %103, %106 : vector<18x18xf32>
    %c3 = arith.constant 3 : index
    %108 = memref.load %arg2[%c3] : memref<144xf32, #tpu.memory_space<smem>>
    %109 = vector.broadcast %108 : f32 to vector<18x18xf32>
    %110 = arith.mulf %109, %29 : vector<18x18xf32>
    %111 = arith.addf %107, %110 : vector<18x18xf32>
    %c4 = arith.constant 4 : index
    %112 = memref.load %arg2[%c4] : memref<144xf32, #tpu.memory_space<smem>>
    %113 = vector.broadcast %112 : f32 to vector<18x18xf32>
    %114 = arith.mulf %113, %31 : vector<18x18xf32>
    %115 = arith.addf %111, %114 : vector<18x18xf32>
    %c5 = arith.constant 5 : index
    %116 = memref.load %arg2[%c5] : memref<144xf32, #tpu.memory_space<smem>>
    %117 = vector.broadcast %116 : f32 to vector<18x18xf32>
    %118 = arith.mulf %117, %33 : vector<18x18xf32>
    %119 = arith.addf %115, %118 : vector<18x18xf32>
    %c6 = arith.constant 6 : index
    %120 = memref.load %arg2[%c6] : memref<144xf32, #tpu.memory_space<smem>>
    %121 = vector.broadcast %120 : f32 to vector<18x18xf32>
    %122 = arith.mulf %121, %35 : vector<18x18xf32>
    %123 = arith.addf %119, %122 : vector<18x18xf32>
    %c7 = arith.constant 7 : index
    %124 = memref.load %arg2[%c7] : memref<144xf32, #tpu.memory_space<smem>>
    %125 = vector.broadcast %124 : f32 to vector<18x18xf32>
    %126 = arith.mulf %125, %37 : vector<18x18xf32>
    %127 = arith.addf %123, %126 : vector<18x18xf32>
    %c8 = arith.constant 8 : index
    %128 = memref.load %arg2[%c8] : memref<144xf32, #tpu.memory_space<smem>>
    %129 = vector.broadcast %128 : f32 to vector<18x18xf32>
    %130 = arith.mulf %129, %39 : vector<18x18xf32>
    %131 = arith.addf %127, %130 : vector<18x18xf32>
    %c9 = arith.constant 9 : index
    %132 = memref.load %arg2[%c9] : memref<144xf32, #tpu.memory_space<smem>>
    %133 = vector.broadcast %132 : f32 to vector<18x18xf32>
    %134 = arith.mulf %133, %41 : vector<18x18xf32>
    %135 = arith.addf %131, %134 : vector<18x18xf32>
    %c10 = arith.constant 10 : index
    %136 = memref.load %arg2[%c10] : memref<144xf32, #tpu.memory_space<smem>>
    %137 = vector.broadcast %136 : f32 to vector<18x18xf32>
    %138 = arith.mulf %137, %43 : vector<18x18xf32>
    %139 = arith.addf %135, %138 : vector<18x18xf32>
    %c11 = arith.constant 11 : index
    %140 = memref.load %arg2[%c11] : memref<144xf32, #tpu.memory_space<smem>>
    %141 = vector.broadcast %140 : f32 to vector<18x18xf32>
    %142 = arith.mulf %141, %45 : vector<18x18xf32>
    %143 = arith.addf %139, %142 : vector<18x18xf32>
    %c12 = arith.constant 12 : index
    %144 = memref.load %arg2[%c12] : memref<144xf32, #tpu.memory_space<smem>>
    %145 = vector.broadcast %144 : f32 to vector<18x18xf32>
    %146 = arith.mulf %145, %47 : vector<18x18xf32>
    %147 = arith.addf %143, %146 : vector<18x18xf32>
    %c13 = arith.constant 13 : index
    %148 = memref.load %arg2[%c13] : memref<144xf32, #tpu.memory_space<smem>>
    %149 = vector.broadcast %148 : f32 to vector<18x18xf32>
    %150 = arith.mulf %149, %49 : vector<18x18xf32>
    %151 = arith.addf %147, %150 : vector<18x18xf32>
    %c14 = arith.constant 14 : index
    %152 = memref.load %arg2[%c14] : memref<144xf32, #tpu.memory_space<smem>>
    %153 = vector.broadcast %152 : f32 to vector<18x18xf32>
    %154 = arith.mulf %153, %51 : vector<18x18xf32>
    %155 = arith.addf %151, %154 : vector<18x18xf32>
    %c15 = arith.constant 15 : index
    %156 = memref.load %arg2[%c15] : memref<144xf32, #tpu.memory_space<smem>>
    %157 = vector.broadcast %156 : f32 to vector<18x18xf32>
    %158 = arith.mulf %157, %53 : vector<18x18xf32>
    %159 = arith.addf %155, %158 : vector<18x18xf32>
    %c16 = arith.constant 16 : index
    %160 = memref.load %arg2[%c16] : memref<144xf32, #tpu.memory_space<smem>>
    %161 = vector.broadcast %160 : f32 to vector<18x18xf32>
    %162 = arith.mulf %161, %55 : vector<18x18xf32>
    %163 = arith.addf %159, %162 : vector<18x18xf32>
    %c17 = arith.constant 17 : index
    %164 = memref.load %arg2[%c17] : memref<144xf32, #tpu.memory_space<smem>>
    %165 = vector.broadcast %164 : f32 to vector<18x18xf32>
    %166 = arith.mulf %165, %57 : vector<18x18xf32>
    %167 = arith.addf %163, %166 : vector<18x18xf32>
    %c18 = arith.constant 18 : index
    %168 = memref.load %arg2[%c18] : memref<144xf32, #tpu.memory_space<smem>>
    %169 = vector.broadcast %168 : f32 to vector<18x18xf32>
    %170 = arith.mulf %169, %59 : vector<18x18xf32>
    %171 = arith.addf %167, %170 : vector<18x18xf32>
    %c19 = arith.constant 19 : index
    %172 = memref.load %arg2[%c19] : memref<144xf32, #tpu.memory_space<smem>>
    %173 = vector.broadcast %172 : f32 to vector<18x18xf32>
    %174 = arith.mulf %173, %61 : vector<18x18xf32>
    %175 = arith.addf %171, %174 : vector<18x18xf32>
    %c20 = arith.constant 20 : index
    %176 = memref.load %arg2[%c20] : memref<144xf32, #tpu.memory_space<smem>>
    %177 = vector.broadcast %176 : f32 to vector<18x18xf32>
    %178 = arith.mulf %177, %63 : vector<18x18xf32>
    %179 = arith.addf %175, %178 : vector<18x18xf32>
    %c21 = arith.constant 21 : index
    %180 = memref.load %arg2[%c21] : memref<144xf32, #tpu.memory_space<smem>>
    %181 = vector.broadcast %180 : f32 to vector<18x18xf32>
    %182 = arith.mulf %181, %65 : vector<18x18xf32>
    %183 = arith.addf %179, %182 : vector<18x18xf32>
    %c22 = arith.constant 22 : index
    %184 = memref.load %arg2[%c22] : memref<144xf32, #tpu.memory_space<smem>>
    %185 = vector.broadcast %184 : f32 to vector<18x18xf32>
    %186 = arith.mulf %185, %67 : vector<18x18xf32>
    %187 = arith.addf %183, %186 : vector<18x18xf32>
    %c23 = arith.constant 23 : index
    %188 = memref.load %arg2[%c23] : memref<144xf32, #tpu.memory_space<smem>>
    %189 = vector.broadcast %188 : f32 to vector<18x18xf32>
    %190 = arith.mulf %189, %69 : vector<18x18xf32>
    %191 = arith.addf %187, %190 : vector<18x18xf32>
    %c24 = arith.constant 24 : index
    %192 = memref.load %arg2[%c24] : memref<144xf32, #tpu.memory_space<smem>>
    %193 = vector.broadcast %192 : f32 to vector<18x18xf32>
    %194 = arith.mulf %193, %71 : vector<18x18xf32>
    %195 = arith.addf %191, %194 : vector<18x18xf32>
    %c25 = arith.constant 25 : index
    %196 = memref.load %arg2[%c25] : memref<144xf32, #tpu.memory_space<smem>>
    %197 = vector.broadcast %196 : f32 to vector<18x18xf32>
    %198 = arith.mulf %197, %73 : vector<18x18xf32>
    %199 = arith.addf %195, %198 : vector<18x18xf32>
    %c26 = arith.constant 26 : index
    %200 = memref.load %arg2[%c26] : memref<144xf32, #tpu.memory_space<smem>>
    %201 = vector.broadcast %200 : f32 to vector<18x18xf32>
    %202 = arith.mulf %201, %75 : vector<18x18xf32>
    %203 = arith.addf %199, %202 : vector<18x18xf32>
    %c27 = arith.constant 27 : index
    %204 = memref.load %arg2[%c27] : memref<144xf32, #tpu.memory_space<smem>>
    %205 = vector.broadcast %204 : f32 to vector<18x18xf32>
    %206 = arith.mulf %205, %77 : vector<18x18xf32>
    %207 = arith.addf %203, %206 : vector<18x18xf32>
    %c28 = arith.constant 28 : index
    %208 = memref.load %arg2[%c28] : memref<144xf32, #tpu.memory_space<smem>>
    %209 = vector.broadcast %208 : f32 to vector<18x18xf32>
    %210 = arith.mulf %209, %79 : vector<18x18xf32>
    %211 = arith.addf %207, %210 : vector<18x18xf32>
    %c29 = arith.constant 29 : index
    %212 = memref.load %arg2[%c29] : memref<144xf32, #tpu.memory_space<smem>>
    %213 = vector.broadcast %212 : f32 to vector<18x18xf32>
    %214 = arith.mulf %213, %81 : vector<18x18xf32>
    %215 = arith.addf %211, %214 : vector<18x18xf32>
    %c30 = arith.constant 30 : index
    %216 = memref.load %arg2[%c30] : memref<144xf32, #tpu.memory_space<smem>>
    %217 = vector.broadcast %216 : f32 to vector<18x18xf32>
    %218 = arith.mulf %217, %83 : vector<18x18xf32>
    %219 = arith.addf %215, %218 : vector<18x18xf32>
    %c31 = arith.constant 31 : index
    %220 = memref.load %arg2[%c31] : memref<144xf32, #tpu.memory_space<smem>>
    %221 = vector.broadcast %220 : f32 to vector<18x18xf32>
    %222 = arith.mulf %221, %85 : vector<18x18xf32>
    %223 = arith.addf %219, %222 : vector<18x18xf32>
    %c32 = arith.constant 32 : index
    %224 = memref.load %arg2[%c32] : memref<144xf32, #tpu.memory_space<smem>>
    %225 = vector.broadcast %224 : f32 to vector<18x18xf32>
    %226 = arith.mulf %225, %87 : vector<18x18xf32>
    %227 = arith.addf %223, %226 : vector<18x18xf32>
    %c33 = arith.constant 33 : index
    %228 = memref.load %arg2[%c33] : memref<144xf32, #tpu.memory_space<smem>>
    %229 = vector.broadcast %228 : f32 to vector<18x18xf32>
    %230 = arith.mulf %229, %89 : vector<18x18xf32>
    %231 = arith.addf %227, %230 : vector<18x18xf32>
    %c34 = arith.constant 34 : index
    %232 = memref.load %arg2[%c34] : memref<144xf32, #tpu.memory_space<smem>>
    %233 = vector.broadcast %232 : f32 to vector<18x18xf32>
    %234 = arith.mulf %233, %91 : vector<18x18xf32>
    %235 = arith.addf %231, %234 : vector<18x18xf32>
    %c35 = arith.constant 35 : index
    %236 = memref.load %arg2[%c35] : memref<144xf32, #tpu.memory_space<smem>>
    %237 = vector.broadcast %236 : f32 to vector<18x18xf32>
    %238 = arith.mulf %237, %93 : vector<18x18xf32>
    %239 = arith.addf %235, %238 : vector<18x18xf32>
    %cst_9 = arith.constant 0.000000e+00 : f32
    %240 = vector.broadcast %cst_9 : f32 to vector<18x18xf32>
    %241 = arith.select %20, %239, %240 : vector<18x18xi1>, vector<18x18xf32>
    %cst_10 = arith.constant 0.000000e+00 : f32
    %242 = vector.broadcast %cst_10 : f32 to vector<18x18xf32>
    %243 = arith.cmpf ogt, %241, %242 : vector<18x18xf32>
    %244 = vector.broadcast %21 : f32 to vector<18x18xf32>
    %245 = arith.mulf %244, %241 : vector<18x18xf32>
    %246 = arith.select %243, %241, %245 : vector<18x18xi1>, vector<18x18xf32>
    %c1_11 = arith.constant 1 : index
    %247 = memref.load %arg3[%c1_11] : memref<4xf32, #tpu.memory_space<smem>>
    %248 = vector.broadcast %247 : f32 to vector<18x18xf32>
    %c36 = arith.constant 36 : index
    %249 = memref.load %arg2[%c36] : memref<144xf32, #tpu.memory_space<smem>>
    %250 = vector.broadcast %249 : f32 to vector<18x18xf32>
    %251 = arith.mulf %250, %23 : vector<18x18xf32>
    %252 = arith.addf %248, %251 : vector<18x18xf32>
    %c37 = arith.constant 37 : index
    %253 = memref.load %arg2[%c37] : memref<144xf32, #tpu.memory_space<smem>>
    %254 = vector.broadcast %253 : f32 to vector<18x18xf32>
    %255 = arith.mulf %254, %25 : vector<18x18xf32>
    %256 = arith.addf %252, %255 : vector<18x18xf32>
    %c38 = arith.constant 38 : index
    %257 = memref.load %arg2[%c38] : memref<144xf32, #tpu.memory_space<smem>>
    %258 = vector.broadcast %257 : f32 to vector<18x18xf32>
    %259 = arith.mulf %258, %27 : vector<18x18xf32>
    %260 = arith.addf %256, %259 : vector<18x18xf32>
    %c39 = arith.constant 39 : index
    %261 = memref.load %arg2[%c39] : memref<144xf32, #tpu.memory_space<smem>>
    %262 = vector.broadcast %261 : f32 to vector<18x18xf32>
    %263 = arith.mulf %262, %29 : vector<18x18xf32>
    %264 = arith.addf %260, %263 : vector<18x18xf32>
    %c40 = arith.constant 40 : index
    %265 = memref.load %arg2[%c40] : memref<144xf32, #tpu.memory_space<smem>>
    %266 = vector.broadcast %265 : f32 to vector<18x18xf32>
    %267 = arith.mulf %266, %31 : vector<18x18xf32>
    %268 = arith.addf %264, %267 : vector<18x18xf32>
    %c41 = arith.constant 41 : index
    %269 = memref.load %arg2[%c41] : memref<144xf32, #tpu.memory_space<smem>>
    %270 = vector.broadcast %269 : f32 to vector<18x18xf32>
    %271 = arith.mulf %270, %33 : vector<18x18xf32>
    %272 = arith.addf %268, %271 : vector<18x18xf32>
    %c42 = arith.constant 42 : index
    %273 = memref.load %arg2[%c42] : memref<144xf32, #tpu.memory_space<smem>>
    %274 = vector.broadcast %273 : f32 to vector<18x18xf32>
    %275 = arith.mulf %274, %35 : vector<18x18xf32>
    %276 = arith.addf %272, %275 : vector<18x18xf32>
    %c43 = arith.constant 43 : index
    %277 = memref.load %arg2[%c43] : memref<144xf32, #tpu.memory_space<smem>>
    %278 = vector.broadcast %277 : f32 to vector<18x18xf32>
    %279 = arith.mulf %278, %37 : vector<18x18xf32>
    %280 = arith.addf %276, %279 : vector<18x18xf32>
    %c44 = arith.constant 44 : index
    %281 = memref.load %arg2[%c44] : memref<144xf32, #tpu.memory_space<smem>>
    %282 = vector.broadcast %281 : f32 to vector<18x18xf32>
    %283 = arith.mulf %282, %39 : vector<18x18xf32>
    %284 = arith.addf %280, %283 : vector<18x18xf32>
    %c45 = arith.constant 45 : index
    %285 = memref.load %arg2[%c45] : memref<144xf32, #tpu.memory_space<smem>>
    %286 = vector.broadcast %285 : f32 to vector<18x18xf32>
    %287 = arith.mulf %286, %41 : vector<18x18xf32>
    %288 = arith.addf %284, %287 : vector<18x18xf32>
    %c46 = arith.constant 46 : index
    %289 = memref.load %arg2[%c46] : memref<144xf32, #tpu.memory_space<smem>>
    %290 = vector.broadcast %289 : f32 to vector<18x18xf32>
    %291 = arith.mulf %290, %43 : vector<18x18xf32>
    %292 = arith.addf %288, %291 : vector<18x18xf32>
    %c47 = arith.constant 47 : index
    %293 = memref.load %arg2[%c47] : memref<144xf32, #tpu.memory_space<smem>>
    %294 = vector.broadcast %293 : f32 to vector<18x18xf32>
    %295 = arith.mulf %294, %45 : vector<18x18xf32>
    %296 = arith.addf %292, %295 : vector<18x18xf32>
    %c48 = arith.constant 48 : index
    %297 = memref.load %arg2[%c48] : memref<144xf32, #tpu.memory_space<smem>>
    %298 = vector.broadcast %297 : f32 to vector<18x18xf32>
    %299 = arith.mulf %298, %47 : vector<18x18xf32>
    %300 = arith.addf %296, %299 : vector<18x18xf32>
    %c49 = arith.constant 49 : index
    %301 = memref.load %arg2[%c49] : memref<144xf32, #tpu.memory_space<smem>>
    %302 = vector.broadcast %301 : f32 to vector<18x18xf32>
    %303 = arith.mulf %302, %49 : vector<18x18xf32>
    %304 = arith.addf %300, %303 : vector<18x18xf32>
    %c50 = arith.constant 50 : index
    %305 = memref.load %arg2[%c50] : memref<144xf32, #tpu.memory_space<smem>>
    %306 = vector.broadcast %305 : f32 to vector<18x18xf32>
    %307 = arith.mulf %306, %51 : vector<18x18xf32>
    %308 = arith.addf %304, %307 : vector<18x18xf32>
    %c51 = arith.constant 51 : index
    %309 = memref.load %arg2[%c51] : memref<144xf32, #tpu.memory_space<smem>>
    %310 = vector.broadcast %309 : f32 to vector<18x18xf32>
    %311 = arith.mulf %310, %53 : vector<18x18xf32>
    %312 = arith.addf %308, %311 : vector<18x18xf32>
    %c52 = arith.constant 52 : index
    %313 = memref.load %arg2[%c52] : memref<144xf32, #tpu.memory_space<smem>>
    %314 = vector.broadcast %313 : f32 to vector<18x18xf32>
    %315 = arith.mulf %314, %55 : vector<18x18xf32>
    %316 = arith.addf %312, %315 : vector<18x18xf32>
    %c53 = arith.constant 53 : index
    %317 = memref.load %arg2[%c53] : memref<144xf32, #tpu.memory_space<smem>>
    %318 = vector.broadcast %317 : f32 to vector<18x18xf32>
    %319 = arith.mulf %318, %57 : vector<18x18xf32>
    %320 = arith.addf %316, %319 : vector<18x18xf32>
    %c54 = arith.constant 54 : index
    %321 = memref.load %arg2[%c54] : memref<144xf32, #tpu.memory_space<smem>>
    %322 = vector.broadcast %321 : f32 to vector<18x18xf32>
    %323 = arith.mulf %322, %59 : vector<18x18xf32>
    %324 = arith.addf %320, %323 : vector<18x18xf32>
    %c55 = arith.constant 55 : index
    %325 = memref.load %arg2[%c55] : memref<144xf32, #tpu.memory_space<smem>>
    %326 = vector.broadcast %325 : f32 to vector<18x18xf32>
    %327 = arith.mulf %326, %61 : vector<18x18xf32>
    %328 = arith.addf %324, %327 : vector<18x18xf32>
    %c56 = arith.constant 56 : index
    %329 = memref.load %arg2[%c56] : memref<144xf32, #tpu.memory_space<smem>>
    %330 = vector.broadcast %329 : f32 to vector<18x18xf32>
    %331 = arith.mulf %330, %63 : vector<18x18xf32>
    %332 = arith.addf %328, %331 : vector<18x18xf32>
    %c57 = arith.constant 57 : index
    %333 = memref.load %arg2[%c57] : memref<144xf32, #tpu.memory_space<smem>>
    %334 = vector.broadcast %333 : f32 to vector<18x18xf32>
    %335 = arith.mulf %334, %65 : vector<18x18xf32>
    %336 = arith.addf %332, %335 : vector<18x18xf32>
    %c58 = arith.constant 58 : index
    %337 = memref.load %arg2[%c58] : memref<144xf32, #tpu.memory_space<smem>>
    %338 = vector.broadcast %337 : f32 to vector<18x18xf32>
    %339 = arith.mulf %338, %67 : vector<18x18xf32>
    %340 = arith.addf %336, %339 : vector<18x18xf32>
    %c59 = arith.constant 59 : index
    %341 = memref.load %arg2[%c59] : memref<144xf32, #tpu.memory_space<smem>>
    %342 = vector.broadcast %341 : f32 to vector<18x18xf32>
    %343 = arith.mulf %342, %69 : vector<18x18xf32>
    %344 = arith.addf %340, %343 : vector<18x18xf32>
    %c60 = arith.constant 60 : index
    %345 = memref.load %arg2[%c60] : memref<144xf32, #tpu.memory_space<smem>>
    %346 = vector.broadcast %345 : f32 to vector<18x18xf32>
    %347 = arith.mulf %346, %71 : vector<18x18xf32>
    %348 = arith.addf %344, %347 : vector<18x18xf32>
    %c61 = arith.constant 61 : index
    %349 = memref.load %arg2[%c61] : memref<144xf32, #tpu.memory_space<smem>>
    %350 = vector.broadcast %349 : f32 to vector<18x18xf32>
    %351 = arith.mulf %350, %73 : vector<18x18xf32>
    %352 = arith.addf %348, %351 : vector<18x18xf32>
    %c62 = arith.constant 62 : index
    %353 = memref.load %arg2[%c62] : memref<144xf32, #tpu.memory_space<smem>>
    %354 = vector.broadcast %353 : f32 to vector<18x18xf32>
    %355 = arith.mulf %354, %75 : vector<18x18xf32>
    %356 = arith.addf %352, %355 : vector<18x18xf32>
    %c63 = arith.constant 63 : index
    %357 = memref.load %arg2[%c63] : memref<144xf32, #tpu.memory_space<smem>>
    %358 = vector.broadcast %357 : f32 to vector<18x18xf32>
    %359 = arith.mulf %358, %77 : vector<18x18xf32>
    %360 = arith.addf %356, %359 : vector<18x18xf32>
    %c64 = arith.constant 64 : index
    %361 = memref.load %arg2[%c64] : memref<144xf32, #tpu.memory_space<smem>>
    %362 = vector.broadcast %361 : f32 to vector<18x18xf32>
    %363 = arith.mulf %362, %79 : vector<18x18xf32>
    %364 = arith.addf %360, %363 : vector<18x18xf32>
    %c65 = arith.constant 65 : index
    %365 = memref.load %arg2[%c65] : memref<144xf32, #tpu.memory_space<smem>>
    %366 = vector.broadcast %365 : f32 to vector<18x18xf32>
    %367 = arith.mulf %366, %81 : vector<18x18xf32>
    %368 = arith.addf %364, %367 : vector<18x18xf32>
    %c66 = arith.constant 66 : index
    %369 = memref.load %arg2[%c66] : memref<144xf32, #tpu.memory_space<smem>>
    %370 = vector.broadcast %369 : f32 to vector<18x18xf32>
    %371 = arith.mulf %370, %83 : vector<18x18xf32>
    %372 = arith.addf %368, %371 : vector<18x18xf32>
    %c67 = arith.constant 67 : index
    %373 = memref.load %arg2[%c67] : memref<144xf32, #tpu.memory_space<smem>>
    %374 = vector.broadcast %373 : f32 to vector<18x18xf32>
    %375 = arith.mulf %374, %85 : vector<18x18xf32>
    %376 = arith.addf %372, %375 : vector<18x18xf32>
    %c68 = arith.constant 68 : index
    %377 = memref.load %arg2[%c68] : memref<144xf32, #tpu.memory_space<smem>>
    %378 = vector.broadcast %377 : f32 to vector<18x18xf32>
    %379 = arith.mulf %378, %87 : vector<18x18xf32>
    %380 = arith.addf %376, %379 : vector<18x18xf32>
    %c69 = arith.constant 69 : index
    %381 = memref.load %arg2[%c69] : memref<144xf32, #tpu.memory_space<smem>>
    %382 = vector.broadcast %381 : f32 to vector<18x18xf32>
    %383 = arith.mulf %382, %89 : vector<18x18xf32>
    %384 = arith.addf %380, %383 : vector<18x18xf32>
    %c70 = arith.constant 70 : index
    %385 = memref.load %arg2[%c70] : memref<144xf32, #tpu.memory_space<smem>>
    %386 = vector.broadcast %385 : f32 to vector<18x18xf32>
    %387 = arith.mulf %386, %91 : vector<18x18xf32>
    %388 = arith.addf %384, %387 : vector<18x18xf32>
    %c71 = arith.constant 71 : index
    %389 = memref.load %arg2[%c71] : memref<144xf32, #tpu.memory_space<smem>>
    %390 = vector.broadcast %389 : f32 to vector<18x18xf32>
    %391 = arith.mulf %390, %93 : vector<18x18xf32>
    %392 = arith.addf %388, %391 : vector<18x18xf32>
    %cst_12 = arith.constant 0.000000e+00 : f32
    %393 = vector.broadcast %cst_12 : f32 to vector<18x18xf32>
    %394 = arith.select %20, %392, %393 : vector<18x18xi1>, vector<18x18xf32>
    %cst_13 = arith.constant 0.000000e+00 : f32
    %395 = vector.broadcast %cst_13 : f32 to vector<18x18xf32>
    %396 = arith.cmpf ogt, %394, %395 : vector<18x18xf32>
    %397 = vector.broadcast %21 : f32 to vector<18x18xf32>
    %398 = arith.mulf %397, %394 : vector<18x18xf32>
    %399 = arith.select %396, %394, %398 : vector<18x18xi1>, vector<18x18xf32>
    %c2_14 = arith.constant 2 : index
    %400 = memref.load %arg3[%c2_14] : memref<4xf32, #tpu.memory_space<smem>>
    %401 = vector.broadcast %400 : f32 to vector<18x18xf32>
    %c72 = arith.constant 72 : index
    %402 = memref.load %arg2[%c72] : memref<144xf32, #tpu.memory_space<smem>>
    %403 = vector.broadcast %402 : f32 to vector<18x18xf32>
    %404 = arith.mulf %403, %23 : vector<18x18xf32>
    %405 = arith.addf %401, %404 : vector<18x18xf32>
    %c73 = arith.constant 73 : index
    %406 = memref.load %arg2[%c73] : memref<144xf32, #tpu.memory_space<smem>>
    %407 = vector.broadcast %406 : f32 to vector<18x18xf32>
    %408 = arith.mulf %407, %25 : vector<18x18xf32>
    %409 = arith.addf %405, %408 : vector<18x18xf32>
    %c74 = arith.constant 74 : index
    %410 = memref.load %arg2[%c74] : memref<144xf32, #tpu.memory_space<smem>>
    %411 = vector.broadcast %410 : f32 to vector<18x18xf32>
    %412 = arith.mulf %411, %27 : vector<18x18xf32>
    %413 = arith.addf %409, %412 : vector<18x18xf32>
    %c75 = arith.constant 75 : index
    %414 = memref.load %arg2[%c75] : memref<144xf32, #tpu.memory_space<smem>>
    %415 = vector.broadcast %414 : f32 to vector<18x18xf32>
    %416 = arith.mulf %415, %29 : vector<18x18xf32>
    %417 = arith.addf %413, %416 : vector<18x18xf32>
    %c76 = arith.constant 76 : index
    %418 = memref.load %arg2[%c76] : memref<144xf32, #tpu.memory_space<smem>>
    %419 = vector.broadcast %418 : f32 to vector<18x18xf32>
    %420 = arith.mulf %419, %31 : vector<18x18xf32>
    %421 = arith.addf %417, %420 : vector<18x18xf32>
    %c77 = arith.constant 77 : index
    %422 = memref.load %arg2[%c77] : memref<144xf32, #tpu.memory_space<smem>>
    %423 = vector.broadcast %422 : f32 to vector<18x18xf32>
    %424 = arith.mulf %423, %33 : vector<18x18xf32>
    %425 = arith.addf %421, %424 : vector<18x18xf32>
    %c78 = arith.constant 78 : index
    %426 = memref.load %arg2[%c78] : memref<144xf32, #tpu.memory_space<smem>>
    %427 = vector.broadcast %426 : f32 to vector<18x18xf32>
    %428 = arith.mulf %427, %35 : vector<18x18xf32>
    %429 = arith.addf %425, %428 : vector<18x18xf32>
    %c79 = arith.constant 79 : index
    %430 = memref.load %arg2[%c79] : memref<144xf32, #tpu.memory_space<smem>>
    %431 = vector.broadcast %430 : f32 to vector<18x18xf32>
    %432 = arith.mulf %431, %37 : vector<18x18xf32>
    %433 = arith.addf %429, %432 : vector<18x18xf32>
    %c80 = arith.constant 80 : index
    %434 = memref.load %arg2[%c80] : memref<144xf32, #tpu.memory_space<smem>>
    %435 = vector.broadcast %434 : f32 to vector<18x18xf32>
    %436 = arith.mulf %435, %39 : vector<18x18xf32>
    %437 = arith.addf %433, %436 : vector<18x18xf32>
    %c81 = arith.constant 81 : index
    %438 = memref.load %arg2[%c81] : memref<144xf32, #tpu.memory_space<smem>>
    %439 = vector.broadcast %438 : f32 to vector<18x18xf32>
    %440 = arith.mulf %439, %41 : vector<18x18xf32>
    %441 = arith.addf %437, %440 : vector<18x18xf32>
    %c82 = arith.constant 82 : index
    %442 = memref.load %arg2[%c82] : memref<144xf32, #tpu.memory_space<smem>>
    %443 = vector.broadcast %442 : f32 to vector<18x18xf32>
    %444 = arith.mulf %443, %43 : vector<18x18xf32>
    %445 = arith.addf %441, %444 : vector<18x18xf32>
    %c83 = arith.constant 83 : index
    %446 = memref.load %arg2[%c83] : memref<144xf32, #tpu.memory_space<smem>>
    %447 = vector.broadcast %446 : f32 to vector<18x18xf32>
    %448 = arith.mulf %447, %45 : vector<18x18xf32>
    %449 = arith.addf %445, %448 : vector<18x18xf32>
    %c84 = arith.constant 84 : index
    %450 = memref.load %arg2[%c84] : memref<144xf32, #tpu.memory_space<smem>>
    %451 = vector.broadcast %450 : f32 to vector<18x18xf32>
    %452 = arith.mulf %451, %47 : vector<18x18xf32>
    %453 = arith.addf %449, %452 : vector<18x18xf32>
    %c85 = arith.constant 85 : index
    %454 = memref.load %arg2[%c85] : memref<144xf32, #tpu.memory_space<smem>>
    %455 = vector.broadcast %454 : f32 to vector<18x18xf32>
    %456 = arith.mulf %455, %49 : vector<18x18xf32>
    %457 = arith.addf %453, %456 : vector<18x18xf32>
    %c86 = arith.constant 86 : index
    %458 = memref.load %arg2[%c86] : memref<144xf32, #tpu.memory_space<smem>>
    %459 = vector.broadcast %458 : f32 to vector<18x18xf32>
    %460 = arith.mulf %459, %51 : vector<18x18xf32>
    %461 = arith.addf %457, %460 : vector<18x18xf32>
    %c87 = arith.constant 87 : index
    %462 = memref.load %arg2[%c87] : memref<144xf32, #tpu.memory_space<smem>>
    %463 = vector.broadcast %462 : f32 to vector<18x18xf32>
    %464 = arith.mulf %463, %53 : vector<18x18xf32>
    %465 = arith.addf %461, %464 : vector<18x18xf32>
    %c88 = arith.constant 88 : index
    %466 = memref.load %arg2[%c88] : memref<144xf32, #tpu.memory_space<smem>>
    %467 = vector.broadcast %466 : f32 to vector<18x18xf32>
    %468 = arith.mulf %467, %55 : vector<18x18xf32>
    %469 = arith.addf %465, %468 : vector<18x18xf32>
    %c89 = arith.constant 89 : index
    %470 = memref.load %arg2[%c89] : memref<144xf32, #tpu.memory_space<smem>>
    %471 = vector.broadcast %470 : f32 to vector<18x18xf32>
    %472 = arith.mulf %471, %57 : vector<18x18xf32>
    %473 = arith.addf %469, %472 : vector<18x18xf32>
    %c90 = arith.constant 90 : index
    %474 = memref.load %arg2[%c90] : memref<144xf32, #tpu.memory_space<smem>>
    %475 = vector.broadcast %474 : f32 to vector<18x18xf32>
    %476 = arith.mulf %475, %59 : vector<18x18xf32>
    %477 = arith.addf %473, %476 : vector<18x18xf32>
    %c91 = arith.constant 91 : index
    %478 = memref.load %arg2[%c91] : memref<144xf32, #tpu.memory_space<smem>>
    %479 = vector.broadcast %478 : f32 to vector<18x18xf32>
    %480 = arith.mulf %479, %61 : vector<18x18xf32>
    %481 = arith.addf %477, %480 : vector<18x18xf32>
    %c92 = arith.constant 92 : index
    %482 = memref.load %arg2[%c92] : memref<144xf32, #tpu.memory_space<smem>>
    %483 = vector.broadcast %482 : f32 to vector<18x18xf32>
    %484 = arith.mulf %483, %63 : vector<18x18xf32>
    %485 = arith.addf %481, %484 : vector<18x18xf32>
    %c93 = arith.constant 93 : index
    %486 = memref.load %arg2[%c93] : memref<144xf32, #tpu.memory_space<smem>>
    %487 = vector.broadcast %486 : f32 to vector<18x18xf32>
    %488 = arith.mulf %487, %65 : vector<18x18xf32>
    %489 = arith.addf %485, %488 : vector<18x18xf32>
    %c94 = arith.constant 94 : index
    %490 = memref.load %arg2[%c94] : memref<144xf32, #tpu.memory_space<smem>>
    %491 = vector.broadcast %490 : f32 to vector<18x18xf32>
    %492 = arith.mulf %491, %67 : vector<18x18xf32>
    %493 = arith.addf %489, %492 : vector<18x18xf32>
    %c95 = arith.constant 95 : index
    %494 = memref.load %arg2[%c95] : memref<144xf32, #tpu.memory_space<smem>>
    %495 = vector.broadcast %494 : f32 to vector<18x18xf32>
    %496 = arith.mulf %495, %69 : vector<18x18xf32>
    %497 = arith.addf %493, %496 : vector<18x18xf32>
    %c96 = arith.constant 96 : index
    %498 = memref.load %arg2[%c96] : memref<144xf32, #tpu.memory_space<smem>>
    %499 = vector.broadcast %498 : f32 to vector<18x18xf32>
    %500 = arith.mulf %499, %71 : vector<18x18xf32>
    %501 = arith.addf %497, %500 : vector<18x18xf32>
    %c97 = arith.constant 97 : index
    %502 = memref.load %arg2[%c97] : memref<144xf32, #tpu.memory_space<smem>>
    %503 = vector.broadcast %502 : f32 to vector<18x18xf32>
    %504 = arith.mulf %503, %73 : vector<18x18xf32>
    %505 = arith.addf %501, %504 : vector<18x18xf32>
    %c98 = arith.constant 98 : index
    %506 = memref.load %arg2[%c98] : memref<144xf32, #tpu.memory_space<smem>>
    %507 = vector.broadcast %506 : f32 to vector<18x18xf32>
    %508 = arith.mulf %507, %75 : vector<18x18xf32>
    %509 = arith.addf %505, %508 : vector<18x18xf32>
    %c99 = arith.constant 99 : index
    %510 = memref.load %arg2[%c99] : memref<144xf32, #tpu.memory_space<smem>>
    %511 = vector.broadcast %510 : f32 to vector<18x18xf32>
    %512 = arith.mulf %511, %77 : vector<18x18xf32>
    %513 = arith.addf %509, %512 : vector<18x18xf32>
    %c100 = arith.constant 100 : index
    %514 = memref.load %arg2[%c100] : memref<144xf32, #tpu.memory_space<smem>>
    %515 = vector.broadcast %514 : f32 to vector<18x18xf32>
    %516 = arith.mulf %515, %79 : vector<18x18xf32>
    %517 = arith.addf %513, %516 : vector<18x18xf32>
    %c101 = arith.constant 101 : index
    %518 = memref.load %arg2[%c101] : memref<144xf32, #tpu.memory_space<smem>>
    %519 = vector.broadcast %518 : f32 to vector<18x18xf32>
    %520 = arith.mulf %519, %81 : vector<18x18xf32>
    %521 = arith.addf %517, %520 : vector<18x18xf32>
    %c102 = arith.constant 102 : index
    %522 = memref.load %arg2[%c102] : memref<144xf32, #tpu.memory_space<smem>>
    %523 = vector.broadcast %522 : f32 to vector<18x18xf32>
    %524 = arith.mulf %523, %83 : vector<18x18xf32>
    %525 = arith.addf %521, %524 : vector<18x18xf32>
    %c103 = arith.constant 103 : index
    %526 = memref.load %arg2[%c103] : memref<144xf32, #tpu.memory_space<smem>>
    %527 = vector.broadcast %526 : f32 to vector<18x18xf32>
    %528 = arith.mulf %527, %85 : vector<18x18xf32>
    %529 = arith.addf %525, %528 : vector<18x18xf32>
    %c104 = arith.constant 104 : index
    %530 = memref.load %arg2[%c104] : memref<144xf32, #tpu.memory_space<smem>>
    %531 = vector.broadcast %530 : f32 to vector<18x18xf32>
    %532 = arith.mulf %531, %87 : vector<18x18xf32>
    %533 = arith.addf %529, %532 : vector<18x18xf32>
    %c105 = arith.constant 105 : index
    %534 = memref.load %arg2[%c105] : memref<144xf32, #tpu.memory_space<smem>>
    %535 = vector.broadcast %534 : f32 to vector<18x18xf32>
    %536 = arith.mulf %535, %89 : vector<18x18xf32>
    %537 = arith.addf %533, %536 : vector<18x18xf32>
    %c106 = arith.constant 106 : index
    %538 = memref.load %arg2[%c106] : memref<144xf32, #tpu.memory_space<smem>>
    %539 = vector.broadcast %538 : f32 to vector<18x18xf32>
    %540 = arith.mulf %539, %91 : vector<18x18xf32>
    %541 = arith.addf %537, %540 : vector<18x18xf32>
    %c107 = arith.constant 107 : index
    %542 = memref.load %arg2[%c107] : memref<144xf32, #tpu.memory_space<smem>>
    %543 = vector.broadcast %542 : f32 to vector<18x18xf32>
    %544 = arith.mulf %543, %93 : vector<18x18xf32>
    %545 = arith.addf %541, %544 : vector<18x18xf32>
    %cst_15 = arith.constant 0.000000e+00 : f32
    %546 = vector.broadcast %cst_15 : f32 to vector<18x18xf32>
    %547 = arith.select %20, %545, %546 : vector<18x18xi1>, vector<18x18xf32>
    %cst_16 = arith.constant 0.000000e+00 : f32
    %548 = vector.broadcast %cst_16 : f32 to vector<18x18xf32>
    %549 = arith.cmpf ogt, %547, %548 : vector<18x18xf32>
    %550 = vector.broadcast %21 : f32 to vector<18x18xf32>
    %551 = arith.mulf %550, %547 : vector<18x18xf32>
    %552 = arith.select %549, %547, %551 : vector<18x18xi1>, vector<18x18xf32>
    %c3_17 = arith.constant 3 : index
    %553 = memref.load %arg3[%c3_17] : memref<4xf32, #tpu.memory_space<smem>>
    %554 = vector.broadcast %553 : f32 to vector<18x18xf32>
    %c108 = arith.constant 108 : index
    %555 = memref.load %arg2[%c108] : memref<144xf32, #tpu.memory_space<smem>>
    %556 = vector.broadcast %555 : f32 to vector<18x18xf32>
    %557 = arith.mulf %556, %23 : vector<18x18xf32>
    %558 = arith.addf %554, %557 : vector<18x18xf32>
    %c109 = arith.constant 109 : index
    %559 = memref.load %arg2[%c109] : memref<144xf32, #tpu.memory_space<smem>>
    %560 = vector.broadcast %559 : f32 to vector<18x18xf32>
    %561 = arith.mulf %560, %25 : vector<18x18xf32>
    %562 = arith.addf %558, %561 : vector<18x18xf32>
    %c110 = arith.constant 110 : index
    %563 = memref.load %arg2[%c110] : memref<144xf32, #tpu.memory_space<smem>>
    %564 = vector.broadcast %563 : f32 to vector<18x18xf32>
    %565 = arith.mulf %564, %27 : vector<18x18xf32>
    %566 = arith.addf %562, %565 : vector<18x18xf32>
    %c111 = arith.constant 111 : index
    %567 = memref.load %arg2[%c111] : memref<144xf32, #tpu.memory_space<smem>>
    %568 = vector.broadcast %567 : f32 to vector<18x18xf32>
    %569 = arith.mulf %568, %29 : vector<18x18xf32>
    %570 = arith.addf %566, %569 : vector<18x18xf32>
    %c112 = arith.constant 112 : index
    %571 = memref.load %arg2[%c112] : memref<144xf32, #tpu.memory_space<smem>>
    %572 = vector.broadcast %571 : f32 to vector<18x18xf32>
    %573 = arith.mulf %572, %31 : vector<18x18xf32>
    %574 = arith.addf %570, %573 : vector<18x18xf32>
    %c113 = arith.constant 113 : index
    %575 = memref.load %arg2[%c113] : memref<144xf32, #tpu.memory_space<smem>>
    %576 = vector.broadcast %575 : f32 to vector<18x18xf32>
    %577 = arith.mulf %576, %33 : vector<18x18xf32>
    %578 = arith.addf %574, %577 : vector<18x18xf32>
    %c114 = arith.constant 114 : index
    %579 = memref.load %arg2[%c114] : memref<144xf32, #tpu.memory_space<smem>>
    %580 = vector.broadcast %579 : f32 to vector<18x18xf32>
    %581 = arith.mulf %580, %35 : vector<18x18xf32>
    %582 = arith.addf %578, %581 : vector<18x18xf32>
    %c115 = arith.constant 115 : index
    %583 = memref.load %arg2[%c115] : memref<144xf32, #tpu.memory_space<smem>>
    %584 = vector.broadcast %583 : f32 to vector<18x18xf32>
    %585 = arith.mulf %584, %37 : vector<18x18xf32>
    %586 = arith.addf %582, %585 : vector<18x18xf32>
    %c116 = arith.constant 116 : index
    %587 = memref.load %arg2[%c116] : memref<144xf32, #tpu.memory_space<smem>>
    %588 = vector.broadcast %587 : f32 to vector<18x18xf32>
    %589 = arith.mulf %588, %39 : vector<18x18xf32>
    %590 = arith.addf %586, %589 : vector<18x18xf32>
    %c117 = arith.constant 117 : index
    %591 = memref.load %arg2[%c117] : memref<144xf32, #tpu.memory_space<smem>>
    %592 = vector.broadcast %591 : f32 to vector<18x18xf32>
    %593 = arith.mulf %592, %41 : vector<18x18xf32>
    %594 = arith.addf %590, %593 : vector<18x18xf32>
    %c118 = arith.constant 118 : index
    %595 = memref.load %arg2[%c118] : memref<144xf32, #tpu.memory_space<smem>>
    %596 = vector.broadcast %595 : f32 to vector<18x18xf32>
    %597 = arith.mulf %596, %43 : vector<18x18xf32>
    %598 = arith.addf %594, %597 : vector<18x18xf32>
    %c119 = arith.constant 119 : index
    %599 = memref.load %arg2[%c119] : memref<144xf32, #tpu.memory_space<smem>>
    %600 = vector.broadcast %599 : f32 to vector<18x18xf32>
    %601 = arith.mulf %600, %45 : vector<18x18xf32>
    %602 = arith.addf %598, %601 : vector<18x18xf32>
    %c120 = arith.constant 120 : index
    %603 = memref.load %arg2[%c120] : memref<144xf32, #tpu.memory_space<smem>>
    %604 = vector.broadcast %603 : f32 to vector<18x18xf32>
    %605 = arith.mulf %604, %47 : vector<18x18xf32>
    %606 = arith.addf %602, %605 : vector<18x18xf32>
    %c121 = arith.constant 121 : index
    %607 = memref.load %arg2[%c121] : memref<144xf32, #tpu.memory_space<smem>>
    %608 = vector.broadcast %607 : f32 to vector<18x18xf32>
    %609 = arith.mulf %608, %49 : vector<18x18xf32>
    %610 = arith.addf %606, %609 : vector<18x18xf32>
    %c122 = arith.constant 122 : index
    %611 = memref.load %arg2[%c122] : memref<144xf32, #tpu.memory_space<smem>>
    %612 = vector.broadcast %611 : f32 to vector<18x18xf32>
    %613 = arith.mulf %612, %51 : vector<18x18xf32>
    %614 = arith.addf %610, %613 : vector<18x18xf32>
    %c123 = arith.constant 123 : index
    %615 = memref.load %arg2[%c123] : memref<144xf32, #tpu.memory_space<smem>>
    %616 = vector.broadcast %615 : f32 to vector<18x18xf32>
    %617 = arith.mulf %616, %53 : vector<18x18xf32>
    %618 = arith.addf %614, %617 : vector<18x18xf32>
    %c124 = arith.constant 124 : index
    %619 = memref.load %arg2[%c124] : memref<144xf32, #tpu.memory_space<smem>>
    %620 = vector.broadcast %619 : f32 to vector<18x18xf32>
    %621 = arith.mulf %620, %55 : vector<18x18xf32>
    %622 = arith.addf %618, %621 : vector<18x18xf32>
    %c125 = arith.constant 125 : index
    %623 = memref.load %arg2[%c125] : memref<144xf32, #tpu.memory_space<smem>>
    %624 = vector.broadcast %623 : f32 to vector<18x18xf32>
    %625 = arith.mulf %624, %57 : vector<18x18xf32>
    %626 = arith.addf %622, %625 : vector<18x18xf32>
    %c126 = arith.constant 126 : index
    %627 = memref.load %arg2[%c126] : memref<144xf32, #tpu.memory_space<smem>>
    %628 = vector.broadcast %627 : f32 to vector<18x18xf32>
    %629 = arith.mulf %628, %59 : vector<18x18xf32>
    %630 = arith.addf %626, %629 : vector<18x18xf32>
    %c127 = arith.constant 127 : index
    %631 = memref.load %arg2[%c127] : memref<144xf32, #tpu.memory_space<smem>>
    %632 = vector.broadcast %631 : f32 to vector<18x18xf32>
    %633 = arith.mulf %632, %61 : vector<18x18xf32>
    %634 = arith.addf %630, %633 : vector<18x18xf32>
    %c128 = arith.constant 128 : index
    %635 = memref.load %arg2[%c128] : memref<144xf32, #tpu.memory_space<smem>>
    %636 = vector.broadcast %635 : f32 to vector<18x18xf32>
    %637 = arith.mulf %636, %63 : vector<18x18xf32>
    %638 = arith.addf %634, %637 : vector<18x18xf32>
    %c129 = arith.constant 129 : index
    %639 = memref.load %arg2[%c129] : memref<144xf32, #tpu.memory_space<smem>>
    %640 = vector.broadcast %639 : f32 to vector<18x18xf32>
    %641 = arith.mulf %640, %65 : vector<18x18xf32>
    %642 = arith.addf %638, %641 : vector<18x18xf32>
    %c130 = arith.constant 130 : index
    %643 = memref.load %arg2[%c130] : memref<144xf32, #tpu.memory_space<smem>>
    %644 = vector.broadcast %643 : f32 to vector<18x18xf32>
    %645 = arith.mulf %644, %67 : vector<18x18xf32>
    %646 = arith.addf %642, %645 : vector<18x18xf32>
    %c131 = arith.constant 131 : index
    %647 = memref.load %arg2[%c131] : memref<144xf32, #tpu.memory_space<smem>>
    %648 = vector.broadcast %647 : f32 to vector<18x18xf32>
    %649 = arith.mulf %648, %69 : vector<18x18xf32>
    %650 = arith.addf %646, %649 : vector<18x18xf32>
    %c132 = arith.constant 132 : index
    %651 = memref.load %arg2[%c132] : memref<144xf32, #tpu.memory_space<smem>>
    %652 = vector.broadcast %651 : f32 to vector<18x18xf32>
    %653 = arith.mulf %652, %71 : vector<18x18xf32>
    %654 = arith.addf %650, %653 : vector<18x18xf32>
    %c133 = arith.constant 133 : index
    %655 = memref.load %arg2[%c133] : memref<144xf32, #tpu.memory_space<smem>>
    %656 = vector.broadcast %655 : f32 to vector<18x18xf32>
    %657 = arith.mulf %656, %73 : vector<18x18xf32>
    %658 = arith.addf %654, %657 : vector<18x18xf32>
    %c134 = arith.constant 134 : index
    %659 = memref.load %arg2[%c134] : memref<144xf32, #tpu.memory_space<smem>>
    %660 = vector.broadcast %659 : f32 to vector<18x18xf32>
    %661 = arith.mulf %660, %75 : vector<18x18xf32>
    %662 = arith.addf %658, %661 : vector<18x18xf32>
    %c135 = arith.constant 135 : index
    %663 = memref.load %arg2[%c135] : memref<144xf32, #tpu.memory_space<smem>>
    %664 = vector.broadcast %663 : f32 to vector<18x18xf32>
    %665 = arith.mulf %664, %77 : vector<18x18xf32>
    %666 = arith.addf %662, %665 : vector<18x18xf32>
    %c136 = arith.constant 136 : index
    %667 = memref.load %arg2[%c136] : memref<144xf32, #tpu.memory_space<smem>>
    %668 = vector.broadcast %667 : f32 to vector<18x18xf32>
    %669 = arith.mulf %668, %79 : vector<18x18xf32>
    %670 = arith.addf %666, %669 : vector<18x18xf32>
    %c137 = arith.constant 137 : index
    %671 = memref.load %arg2[%c137] : memref<144xf32, #tpu.memory_space<smem>>
    %672 = vector.broadcast %671 : f32 to vector<18x18xf32>
    %673 = arith.mulf %672, %81 : vector<18x18xf32>
    %674 = arith.addf %670, %673 : vector<18x18xf32>
    %c138 = arith.constant 138 : index
    %675 = memref.load %arg2[%c138] : memref<144xf32, #tpu.memory_space<smem>>
    %676 = vector.broadcast %675 : f32 to vector<18x18xf32>
    %677 = arith.mulf %676, %83 : vector<18x18xf32>
    %678 = arith.addf %674, %677 : vector<18x18xf32>
    %c139 = arith.constant 139 : index
    %679 = memref.load %arg2[%c139] : memref<144xf32, #tpu.memory_space<smem>>
    %680 = vector.broadcast %679 : f32 to vector<18x18xf32>
    %681 = arith.mulf %680, %85 : vector<18x18xf32>
    %682 = arith.addf %678, %681 : vector<18x18xf32>
    %c140 = arith.constant 140 : index
    %683 = memref.load %arg2[%c140] : memref<144xf32, #tpu.memory_space<smem>>
    %684 = vector.broadcast %683 : f32 to vector<18x18xf32>
    %685 = arith.mulf %684, %87 : vector<18x18xf32>
    %686 = arith.addf %682, %685 : vector<18x18xf32>
    %c141 = arith.constant 141 : index
    %687 = memref.load %arg2[%c141] : memref<144xf32, #tpu.memory_space<smem>>
    %688 = vector.broadcast %687 : f32 to vector<18x18xf32>
    %689 = arith.mulf %688, %89 : vector<18x18xf32>
    %690 = arith.addf %686, %689 : vector<18x18xf32>
    %c142 = arith.constant 142 : index
    %691 = memref.load %arg2[%c142] : memref<144xf32, #tpu.memory_space<smem>>
    %692 = vector.broadcast %691 : f32 to vector<18x18xf32>
    %693 = arith.mulf %692, %91 : vector<18x18xf32>
    %694 = arith.addf %690, %693 : vector<18x18xf32>
    %c143 = arith.constant 143 : index
    %695 = memref.load %arg2[%c143] : memref<144xf32, #tpu.memory_space<smem>>
    %696 = vector.broadcast %695 : f32 to vector<18x18xf32>
    %697 = arith.mulf %696, %93 : vector<18x18xf32>
    %698 = arith.addf %694, %697 : vector<18x18xf32>
    %cst_18 = arith.constant 0.000000e+00 : f32
    %699 = vector.broadcast %cst_18 : f32 to vector<18x18xf32>
    %700 = arith.select %20, %698, %699 : vector<18x18xi1>, vector<18x18xf32>
    %cst_19 = arith.constant 0.000000e+00 : f32
    %701 = vector.broadcast %cst_19 : f32 to vector<18x18xf32>
    %702 = arith.cmpf ogt, %700, %701 : vector<18x18xf32>
    %703 = vector.broadcast %21 : f32 to vector<18x18xf32>
    %704 = arith.mulf %703, %700 : vector<18x18xf32>
    %705 = arith.select %702, %700, %704 : vector<18x18xi1>, vector<18x18xf32>
    %706 = vector.extract_strided_slice %246 {offsets = [0, 0], sizes = [16, 16], strides = [1, 1]} : vector<18x18xf32> to vector<16x16xf32>
    %707 = vector.extract_strided_slice %246 {offsets = [0, 1], sizes = [16, 16], strides = [1, 1]} : vector<18x18xf32> to vector<16x16xf32>
    %708 = vector.extract_strided_slice %246 {offsets = [0, 2], sizes = [16, 16], strides = [1, 1]} : vector<18x18xf32> to vector<16x16xf32>
    %709 = vector.extract_strided_slice %246 {offsets = [1, 0], sizes = [16, 16], strides = [1, 1]} : vector<18x18xf32> to vector<16x16xf32>
    %710 = vector.extract_strided_slice %246 {offsets = [1, 1], sizes = [16, 16], strides = [1, 1]} : vector<18x18xf32> to vector<16x16xf32>
    %711 = vector.extract_strided_slice %246 {offsets = [1, 2], sizes = [16, 16], strides = [1, 1]} : vector<18x18xf32> to vector<16x16xf32>
    %712 = vector.extract_strided_slice %246 {offsets = [2, 0], sizes = [16, 16], strides = [1, 1]} : vector<18x18xf32> to vector<16x16xf32>
    %713 = vector.extract_strided_slice %246 {offsets = [2, 1], sizes = [16, 16], strides = [1, 1]} : vector<18x18xf32> to vector<16x16xf32>
    %714 = vector.extract_strided_slice %246 {offsets = [2, 2], sizes = [16, 16], strides = [1, 1]} : vector<18x18xf32> to vector<16x16xf32>
    %715 = vector.extract_strided_slice %399 {offsets = [0, 0], sizes = [16, 16], strides = [1, 1]} : vector<18x18xf32> to vector<16x16xf32>
    %716 = vector.extract_strided_slice %399 {offsets = [0, 1], sizes = [16, 16], strides = [1, 1]} : vector<18x18xf32> to vector<16x16xf32>
    %717 = vector.extract_strided_slice %399 {offsets = [0, 2], sizes = [16, 16], strides = [1, 1]} : vector<18x18xf32> to vector<16x16xf32>
    %718 = vector.extract_strided_slice %399 {offsets = [1, 0], sizes = [16, 16], strides = [1, 1]} : vector<18x18xf32> to vector<16x16xf32>
    %719 = vector.extract_strided_slice %399 {offsets = [1, 1], sizes = [16, 16], strides = [1, 1]} : vector<18x18xf32> to vector<16x16xf32>
    %720 = vector.extract_strided_slice %399 {offsets = [1, 2], sizes = [16, 16], strides = [1, 1]} : vector<18x18xf32> to vector<16x16xf32>
    %721 = vector.extract_strided_slice %399 {offsets = [2, 0], sizes = [16, 16], strides = [1, 1]} : vector<18x18xf32> to vector<16x16xf32>
    %722 = vector.extract_strided_slice %399 {offsets = [2, 1], sizes = [16, 16], strides = [1, 1]} : vector<18x18xf32> to vector<16x16xf32>
    %723 = vector.extract_strided_slice %399 {offsets = [2, 2], sizes = [16, 16], strides = [1, 1]} : vector<18x18xf32> to vector<16x16xf32>
    %724 = vector.extract_strided_slice %552 {offsets = [0, 0], sizes = [16, 16], strides = [1, 1]} : vector<18x18xf32> to vector<16x16xf32>
    %725 = vector.extract_strided_slice %552 {offsets = [0, 1], sizes = [16, 16], strides = [1, 1]} : vector<18x18xf32> to vector<16x16xf32>
    %726 = vector.extract_strided_slice %552 {offsets = [0, 2], sizes = [16, 16], strides = [1, 1]} : vector<18x18xf32> to vector<16x16xf32>
    %727 = vector.extract_strided_slice %552 {offsets = [1, 0], sizes = [16, 16], strides = [1, 1]} : vector<18x18xf32> to vector<16x16xf32>
    %728 = vector.extract_strided_slice %552 {offsets = [1, 1], sizes = [16, 16], strides = [1, 1]} : vector<18x18xf32> to vector<16x16xf32>
    %729 = vector.extract_strided_slice %552 {offsets = [1, 2], sizes = [16, 16], strides = [1, 1]} : vector<18x18xf32> to vector<16x16xf32>
    %730 = vector.extract_strided_slice %552 {offsets = [2, 0], sizes = [16, 16], strides = [1, 1]} : vector<18x18xf32> to vector<16x16xf32>
    %731 = vector.extract_strided_slice %552 {offsets = [2, 1], sizes = [16, 16], strides = [1, 1]} : vector<18x18xf32> to vector<16x16xf32>
    %732 = vector.extract_strided_slice %552 {offsets = [2, 2], sizes = [16, 16], strides = [1, 1]} : vector<18x18xf32> to vector<16x16xf32>
    %733 = vector.extract_strided_slice %705 {offsets = [0, 0], sizes = [16, 16], strides = [1, 1]} : vector<18x18xf32> to vector<16x16xf32>
    %734 = vector.extract_strided_slice %705 {offsets = [0, 1], sizes = [16, 16], strides = [1, 1]} : vector<18x18xf32> to vector<16x16xf32>
    %735 = vector.extract_strided_slice %705 {offsets = [0, 2], sizes = [16, 16], strides = [1, 1]} : vector<18x18xf32> to vector<16x16xf32>
    %736 = vector.extract_strided_slice %705 {offsets = [1, 0], sizes = [16, 16], strides = [1, 1]} : vector<18x18xf32> to vector<16x16xf32>
    %737 = vector.extract_strided_slice %705 {offsets = [1, 1], sizes = [16, 16], strides = [1, 1]} : vector<18x18xf32> to vector<16x16xf32>
    %738 = vector.extract_strided_slice %705 {offsets = [1, 2], sizes = [16, 16], strides = [1, 1]} : vector<18x18xf32> to vector<16x16xf32>
    %739 = vector.extract_strided_slice %705 {offsets = [2, 0], sizes = [16, 16], strides = [1, 1]} : vector<18x18xf32> to vector<16x16xf32>
    %740 = vector.extract_strided_slice %705 {offsets = [2, 1], sizes = [16, 16], strides = [1, 1]} : vector<18x18xf32> to vector<16x16xf32>
    %741 = vector.extract_strided_slice %705 {offsets = [2, 2], sizes = [16, 16], strides = [1, 1]} : vector<18x18xf32> to vector<16x16xf32>
    %c0_20 = arith.constant 0 : index
    %742 = memref.load %arg6[%c0_20] : memref<4xf32, #tpu.memory_space<smem>>
    %743 = vector.broadcast %742 : f32 to vector<16x16xf32>
    %c0_21 = arith.constant 0 : index
    %744 = memref.load %arg5[%c0_21] : memref<144xf32, #tpu.memory_space<smem>>
    %745 = vector.broadcast %744 : f32 to vector<16x16xf32>
    %746 = arith.mulf %745, %706 : vector<16x16xf32>
    %747 = arith.addf %743, %746 : vector<16x16xf32>
    %c1_22 = arith.constant 1 : index
    %748 = memref.load %arg5[%c1_22] : memref<144xf32, #tpu.memory_space<smem>>
    %749 = vector.broadcast %748 : f32 to vector<16x16xf32>
    %750 = arith.mulf %749, %707 : vector<16x16xf32>
    %751 = arith.addf %747, %750 : vector<16x16xf32>
    %c2_23 = arith.constant 2 : index
    %752 = memref.load %arg5[%c2_23] : memref<144xf32, #tpu.memory_space<smem>>
    %753 = vector.broadcast %752 : f32 to vector<16x16xf32>
    %754 = arith.mulf %753, %708 : vector<16x16xf32>
    %755 = arith.addf %751, %754 : vector<16x16xf32>
    %c3_24 = arith.constant 3 : index
    %756 = memref.load %arg5[%c3_24] : memref<144xf32, #tpu.memory_space<smem>>
    %757 = vector.broadcast %756 : f32 to vector<16x16xf32>
    %758 = arith.mulf %757, %709 : vector<16x16xf32>
    %759 = arith.addf %755, %758 : vector<16x16xf32>
    %c4_25 = arith.constant 4 : index
    %760 = memref.load %arg5[%c4_25] : memref<144xf32, #tpu.memory_space<smem>>
    %761 = vector.broadcast %760 : f32 to vector<16x16xf32>
    %762 = arith.mulf %761, %710 : vector<16x16xf32>
    %763 = arith.addf %759, %762 : vector<16x16xf32>
    %c5_26 = arith.constant 5 : index
    %764 = memref.load %arg5[%c5_26] : memref<144xf32, #tpu.memory_space<smem>>
    %765 = vector.broadcast %764 : f32 to vector<16x16xf32>
    %766 = arith.mulf %765, %711 : vector<16x16xf32>
    %767 = arith.addf %763, %766 : vector<16x16xf32>
    %c6_27 = arith.constant 6 : index
    %768 = memref.load %arg5[%c6_27] : memref<144xf32, #tpu.memory_space<smem>>
    %769 = vector.broadcast %768 : f32 to vector<16x16xf32>
    %770 = arith.mulf %769, %712 : vector<16x16xf32>
    %771 = arith.addf %767, %770 : vector<16x16xf32>
    %c7_28 = arith.constant 7 : index
    %772 = memref.load %arg5[%c7_28] : memref<144xf32, #tpu.memory_space<smem>>
    %773 = vector.broadcast %772 : f32 to vector<16x16xf32>
    %774 = arith.mulf %773, %713 : vector<16x16xf32>
    %775 = arith.addf %771, %774 : vector<16x16xf32>
    %c8_29 = arith.constant 8 : index
    %776 = memref.load %arg5[%c8_29] : memref<144xf32, #tpu.memory_space<smem>>
    %777 = vector.broadcast %776 : f32 to vector<16x16xf32>
    %778 = arith.mulf %777, %714 : vector<16x16xf32>
    %779 = arith.addf %775, %778 : vector<16x16xf32>
    %c9_30 = arith.constant 9 : index
    %780 = memref.load %arg5[%c9_30] : memref<144xf32, #tpu.memory_space<smem>>
    %781 = vector.broadcast %780 : f32 to vector<16x16xf32>
    %782 = arith.mulf %781, %715 : vector<16x16xf32>
    %783 = arith.addf %779, %782 : vector<16x16xf32>
    %c10_31 = arith.constant 10 : index
    %784 = memref.load %arg5[%c10_31] : memref<144xf32, #tpu.memory_space<smem>>
    %785 = vector.broadcast %784 : f32 to vector<16x16xf32>
    %786 = arith.mulf %785, %716 : vector<16x16xf32>
    %787 = arith.addf %783, %786 : vector<16x16xf32>
    %c11_32 = arith.constant 11 : index
    %788 = memref.load %arg5[%c11_32] : memref<144xf32, #tpu.memory_space<smem>>
    %789 = vector.broadcast %788 : f32 to vector<16x16xf32>
    %790 = arith.mulf %789, %717 : vector<16x16xf32>
    %791 = arith.addf %787, %790 : vector<16x16xf32>
    %c12_33 = arith.constant 12 : index
    %792 = memref.load %arg5[%c12_33] : memref<144xf32, #tpu.memory_space<smem>>
    %793 = vector.broadcast %792 : f32 to vector<16x16xf32>
    %794 = arith.mulf %793, %718 : vector<16x16xf32>
    %795 = arith.addf %791, %794 : vector<16x16xf32>
    %c13_34 = arith.constant 13 : index
    %796 = memref.load %arg5[%c13_34] : memref<144xf32, #tpu.memory_space<smem>>
    %797 = vector.broadcast %796 : f32 to vector<16x16xf32>
    %798 = arith.mulf %797, %719 : vector<16x16xf32>
    %799 = arith.addf %795, %798 : vector<16x16xf32>
    %c14_35 = arith.constant 14 : index
    %800 = memref.load %arg5[%c14_35] : memref<144xf32, #tpu.memory_space<smem>>
    %801 = vector.broadcast %800 : f32 to vector<16x16xf32>
    %802 = arith.mulf %801, %720 : vector<16x16xf32>
    %803 = arith.addf %799, %802 : vector<16x16xf32>
    %c15_36 = arith.constant 15 : index
    %804 = memref.load %arg5[%c15_36] : memref<144xf32, #tpu.memory_space<smem>>
    %805 = vector.broadcast %804 : f32 to vector<16x16xf32>
    %806 = arith.mulf %805, %721 : vector<16x16xf32>
    %807 = arith.addf %803, %806 : vector<16x16xf32>
    %c16_37 = arith.constant 16 : index
    %808 = memref.load %arg5[%c16_37] : memref<144xf32, #tpu.memory_space<smem>>
    %809 = vector.broadcast %808 : f32 to vector<16x16xf32>
    %810 = arith.mulf %809, %722 : vector<16x16xf32>
    %811 = arith.addf %807, %810 : vector<16x16xf32>
    %c17_38 = arith.constant 17 : index
    %812 = memref.load %arg5[%c17_38] : memref<144xf32, #tpu.memory_space<smem>>
    %813 = vector.broadcast %812 : f32 to vector<16x16xf32>
    %814 = arith.mulf %813, %723 : vector<16x16xf32>
    %815 = arith.addf %811, %814 : vector<16x16xf32>
    %c18_39 = arith.constant 18 : index
    %816 = memref.load %arg5[%c18_39] : memref<144xf32, #tpu.memory_space<smem>>
    %817 = vector.broadcast %816 : f32 to vector<16x16xf32>
    %818 = arith.mulf %817, %724 : vector<16x16xf32>
    %819 = arith.addf %815, %818 : vector<16x16xf32>
    %c19_40 = arith.constant 19 : index
    %820 = memref.load %arg5[%c19_40] : memref<144xf32, #tpu.memory_space<smem>>
    %821 = vector.broadcast %820 : f32 to vector<16x16xf32>
    %822 = arith.mulf %821, %725 : vector<16x16xf32>
    %823 = arith.addf %819, %822 : vector<16x16xf32>
    %c20_41 = arith.constant 20 : index
    %824 = memref.load %arg5[%c20_41] : memref<144xf32, #tpu.memory_space<smem>>
    %825 = vector.broadcast %824 : f32 to vector<16x16xf32>
    %826 = arith.mulf %825, %726 : vector<16x16xf32>
    %827 = arith.addf %823, %826 : vector<16x16xf32>
    %c21_42 = arith.constant 21 : index
    %828 = memref.load %arg5[%c21_42] : memref<144xf32, #tpu.memory_space<smem>>
    %829 = vector.broadcast %828 : f32 to vector<16x16xf32>
    %830 = arith.mulf %829, %727 : vector<16x16xf32>
    %831 = arith.addf %827, %830 : vector<16x16xf32>
    %c22_43 = arith.constant 22 : index
    %832 = memref.load %arg5[%c22_43] : memref<144xf32, #tpu.memory_space<smem>>
    %833 = vector.broadcast %832 : f32 to vector<16x16xf32>
    %834 = arith.mulf %833, %728 : vector<16x16xf32>
    %835 = arith.addf %831, %834 : vector<16x16xf32>
    %c23_44 = arith.constant 23 : index
    %836 = memref.load %arg5[%c23_44] : memref<144xf32, #tpu.memory_space<smem>>
    %837 = vector.broadcast %836 : f32 to vector<16x16xf32>
    %838 = arith.mulf %837, %729 : vector<16x16xf32>
    %839 = arith.addf %835, %838 : vector<16x16xf32>
    %c24_45 = arith.constant 24 : index
    %840 = memref.load %arg5[%c24_45] : memref<144xf32, #tpu.memory_space<smem>>
    %841 = vector.broadcast %840 : f32 to vector<16x16xf32>
    %842 = arith.mulf %841, %730 : vector<16x16xf32>
    %843 = arith.addf %839, %842 : vector<16x16xf32>
    %c25_46 = arith.constant 25 : index
    %844 = memref.load %arg5[%c25_46] : memref<144xf32, #tpu.memory_space<smem>>
    %845 = vector.broadcast %844 : f32 to vector<16x16xf32>
    %846 = arith.mulf %845, %731 : vector<16x16xf32>
    %847 = arith.addf %843, %846 : vector<16x16xf32>
    %c26_47 = arith.constant 26 : index
    %848 = memref.load %arg5[%c26_47] : memref<144xf32, #tpu.memory_space<smem>>
    %849 = vector.broadcast %848 : f32 to vector<16x16xf32>
    %850 = arith.mulf %849, %732 : vector<16x16xf32>
    %851 = arith.addf %847, %850 : vector<16x16xf32>
    %c27_48 = arith.constant 27 : index
    %852 = memref.load %arg5[%c27_48] : memref<144xf32, #tpu.memory_space<smem>>
    %853 = vector.broadcast %852 : f32 to vector<16x16xf32>
    %854 = arith.mulf %853, %733 : vector<16x16xf32>
    %855 = arith.addf %851, %854 : vector<16x16xf32>
    %c28_49 = arith.constant 28 : index
    %856 = memref.load %arg5[%c28_49] : memref<144xf32, #tpu.memory_space<smem>>
    %857 = vector.broadcast %856 : f32 to vector<16x16xf32>
    %858 = arith.mulf %857, %734 : vector<16x16xf32>
    %859 = arith.addf %855, %858 : vector<16x16xf32>
    %c29_50 = arith.constant 29 : index
    %860 = memref.load %arg5[%c29_50] : memref<144xf32, #tpu.memory_space<smem>>
    %861 = vector.broadcast %860 : f32 to vector<16x16xf32>
    %862 = arith.mulf %861, %735 : vector<16x16xf32>
    %863 = arith.addf %859, %862 : vector<16x16xf32>
    %c30_51 = arith.constant 30 : index
    %864 = memref.load %arg5[%c30_51] : memref<144xf32, #tpu.memory_space<smem>>
    %865 = vector.broadcast %864 : f32 to vector<16x16xf32>
    %866 = arith.mulf %865, %736 : vector<16x16xf32>
    %867 = arith.addf %863, %866 : vector<16x16xf32>
    %c31_52 = arith.constant 31 : index
    %868 = memref.load %arg5[%c31_52] : memref<144xf32, #tpu.memory_space<smem>>
    %869 = vector.broadcast %868 : f32 to vector<16x16xf32>
    %870 = arith.mulf %869, %737 : vector<16x16xf32>
    %871 = arith.addf %867, %870 : vector<16x16xf32>
    %c32_53 = arith.constant 32 : index
    %872 = memref.load %arg5[%c32_53] : memref<144xf32, #tpu.memory_space<smem>>
    %873 = vector.broadcast %872 : f32 to vector<16x16xf32>
    %874 = arith.mulf %873, %738 : vector<16x16xf32>
    %875 = arith.addf %871, %874 : vector<16x16xf32>
    %c33_54 = arith.constant 33 : index
    %876 = memref.load %arg5[%c33_54] : memref<144xf32, #tpu.memory_space<smem>>
    %877 = vector.broadcast %876 : f32 to vector<16x16xf32>
    %878 = arith.mulf %877, %739 : vector<16x16xf32>
    %879 = arith.addf %875, %878 : vector<16x16xf32>
    %c34_55 = arith.constant 34 : index
    %880 = memref.load %arg5[%c34_55] : memref<144xf32, #tpu.memory_space<smem>>
    %881 = vector.broadcast %880 : f32 to vector<16x16xf32>
    %882 = arith.mulf %881, %740 : vector<16x16xf32>
    %883 = arith.addf %879, %882 : vector<16x16xf32>
    %c35_56 = arith.constant 35 : index
    %884 = memref.load %arg5[%c35_56] : memref<144xf32, #tpu.memory_space<smem>>
    %885 = vector.broadcast %884 : f32 to vector<16x16xf32>
    %886 = arith.mulf %885, %741 : vector<16x16xf32>
    %887 = arith.addf %883, %886 : vector<16x16xf32>
    %888 = vector.extract_strided_slice %1 {offsets = [0, 2, 2], sizes = [1, 16, 16], strides = [1, 1, 1]} : vector<4x20x20xf32> to vector<1x16x16xf32>
    %889 = vector.shape_cast %888 : vector<1x16x16xf32> to vector<16x16xf32>
    %890 = arith.addf %887, %889 : vector<16x16xf32>
    %c0_57 = arith.constant 0 : index
    %c0_58 = arith.constant 0 : index
    %c0_59 = arith.constant 0 : index
    %c0_60 = arith.constant 0 : index
    %891 = vector.load %arg8[%c0_57, %c0_58, %c0_59, %c0_60] : memref<1x4x16x16xf32, #tpu.memory_space<vmem>>, vector<1x1x16x16xf32>
    %892 = vector.shape_cast %891 : vector<1x1x16x16xf32> to vector<16x16xf32>
    %893 = vector.shape_cast %890 : vector<16x16xf32> to vector<1x1x16x16xf32>
    tpu.vector_store %arg8[%c0_57, %c0_58, %c0_59, %c0_60], %893 {strides = array<i32>} : memref<1x4x16x16xf32, #tpu.memory_space<vmem>>, vector<1x1x16x16xf32>,
    %c1_61 = arith.constant 1 : index
    %894 = memref.load %arg6[%c1_61] : memref<4xf32, #tpu.memory_space<smem>>
    %895 = vector.broadcast %894 : f32 to vector<16x16xf32>
    %c36_62 = arith.constant 36 : index
    %896 = memref.load %arg5[%c36_62] : memref<144xf32, #tpu.memory_space<smem>>
    %897 = vector.broadcast %896 : f32 to vector<16x16xf32>
    %898 = arith.mulf %897, %706 : vector<16x16xf32>
    %899 = arith.addf %895, %898 : vector<16x16xf32>
    %c37_63 = arith.constant 37 : index
    %900 = memref.load %arg5[%c37_63] : memref<144xf32, #tpu.memory_space<smem>>
    %901 = vector.broadcast %900 : f32 to vector<16x16xf32>
    %902 = arith.mulf %901, %707 : vector<16x16xf32>
    %903 = arith.addf %899, %902 : vector<16x16xf32>
    %c38_64 = arith.constant 38 : index
    %904 = memref.load %arg5[%c38_64] : memref<144xf32, #tpu.memory_space<smem>>
    %905 = vector.broadcast %904 : f32 to vector<16x16xf32>
    %906 = arith.mulf %905, %708 : vector<16x16xf32>
    %907 = arith.addf %903, %906 : vector<16x16xf32>
    %c39_65 = arith.constant 39 : index
    %908 = memref.load %arg5[%c39_65] : memref<144xf32, #tpu.memory_space<smem>>
    %909 = vector.broadcast %908 : f32 to vector<16x16xf32>
    %910 = arith.mulf %909, %709 : vector<16x16xf32>
    %911 = arith.addf %907, %910 : vector<16x16xf32>
    %c40_66 = arith.constant 40 : index
    %912 = memref.load %arg5[%c40_66] : memref<144xf32, #tpu.memory_space<smem>>
    %913 = vector.broadcast %912 : f32 to vector<16x16xf32>
    %914 = arith.mulf %913, %710 : vector<16x16xf32>
    %915 = arith.addf %911, %914 : vector<16x16xf32>
    %c41_67 = arith.constant 41 : index
    %916 = memref.load %arg5[%c41_67] : memref<144xf32, #tpu.memory_space<smem>>
    %917 = vector.broadcast %916 : f32 to vector<16x16xf32>
    %918 = arith.mulf %917, %711 : vector<16x16xf32>
    %919 = arith.addf %915, %918 : vector<16x16xf32>
    %c42_68 = arith.constant 42 : index
    %920 = memref.load %arg5[%c42_68] : memref<144xf32, #tpu.memory_space<smem>>
    %921 = vector.broadcast %920 : f32 to vector<16x16xf32>
    %922 = arith.mulf %921, %712 : vector<16x16xf32>
    %923 = arith.addf %919, %922 : vector<16x16xf32>
    %c43_69 = arith.constant 43 : index
    %924 = memref.load %arg5[%c43_69] : memref<144xf32, #tpu.memory_space<smem>>
    %925 = vector.broadcast %924 : f32 to vector<16x16xf32>
    %926 = arith.mulf %925, %713 : vector<16x16xf32>
    %927 = arith.addf %923, %926 : vector<16x16xf32>
    %c44_70 = arith.constant 44 : index
    %928 = memref.load %arg5[%c44_70] : memref<144xf32, #tpu.memory_space<smem>>
    %929 = vector.broadcast %928 : f32 to vector<16x16xf32>
    %930 = arith.mulf %929, %714 : vector<16x16xf32>
    %931 = arith.addf %927, %930 : vector<16x16xf32>
    %c45_71 = arith.constant 45 : index
    %932 = memref.load %arg5[%c45_71] : memref<144xf32, #tpu.memory_space<smem>>
    %933 = vector.broadcast %932 : f32 to vector<16x16xf32>
    %934 = arith.mulf %933, %715 : vector<16x16xf32>
    %935 = arith.addf %931, %934 : vector<16x16xf32>
    %c46_72 = arith.constant 46 : index
    %936 = memref.load %arg5[%c46_72] : memref<144xf32, #tpu.memory_space<smem>>
    %937 = vector.broadcast %936 : f32 to vector<16x16xf32>
    %938 = arith.mulf %937, %716 : vector<16x16xf32>
    %939 = arith.addf %935, %938 : vector<16x16xf32>
    %c47_73 = arith.constant 47 : index
    %940 = memref.load %arg5[%c47_73] : memref<144xf32, #tpu.memory_space<smem>>
    %941 = vector.broadcast %940 : f32 to vector<16x16xf32>
    %942 = arith.mulf %941, %717 : vector<16x16xf32>
    %943 = arith.addf %939, %942 : vector<16x16xf32>
    %c48_74 = arith.constant 48 : index
    %944 = memref.load %arg5[%c48_74] : memref<144xf32, #tpu.memory_space<smem>>
    %945 = vector.broadcast %944 : f32 to vector<16x16xf32>
    %946 = arith.mulf %945, %718 : vector<16x16xf32>
    %947 = arith.addf %943, %946 : vector<16x16xf32>
    %c49_75 = arith.constant 49 : index
    %948 = memref.load %arg5[%c49_75] : memref<144xf32, #tpu.memory_space<smem>>
    %949 = vector.broadcast %948 : f32 to vector<16x16xf32>
    %950 = arith.mulf %949, %719 : vector<16x16xf32>
    %951 = arith.addf %947, %950 : vector<16x16xf32>
    %c50_76 = arith.constant 50 : index
    %952 = memref.load %arg5[%c50_76] : memref<144xf32, #tpu.memory_space<smem>>
    %953 = vector.broadcast %952 : f32 to vector<16x16xf32>
    %954 = arith.mulf %953, %720 : vector<16x16xf32>
    %955 = arith.addf %951, %954 : vector<16x16xf32>
    %c51_77 = arith.constant 51 : index
    %956 = memref.load %arg5[%c51_77] : memref<144xf32, #tpu.memory_space<smem>>
    %957 = vector.broadcast %956 : f32 to vector<16x16xf32>
    %958 = arith.mulf %957, %721 : vector<16x16xf32>
    %959 = arith.addf %955, %958 : vector<16x16xf32>
    %c52_78 = arith.constant 52 : index
    %960 = memref.load %arg5[%c52_78] : memref<144xf32, #tpu.memory_space<smem>>
    %961 = vector.broadcast %960 : f32 to vector<16x16xf32>
    %962 = arith.mulf %961, %722 : vector<16x16xf32>
    %963 = arith.addf %959, %962 : vector<16x16xf32>
    %c53_79 = arith.constant 53 : index
    %964 = memref.load %arg5[%c53_79] : memref<144xf32, #tpu.memory_space<smem>>
    %965 = vector.broadcast %964 : f32 to vector<16x16xf32>
    %966 = arith.mulf %965, %723 : vector<16x16xf32>
    %967 = arith.addf %963, %966 : vector<16x16xf32>
    %c54_80 = arith.constant 54 : index
    %968 = memref.load %arg5[%c54_80] : memref<144xf32, #tpu.memory_space<smem>>
    %969 = vector.broadcast %968 : f32 to vector<16x16xf32>
    %970 = arith.mulf %969, %724 : vector<16x16xf32>
    %971 = arith.addf %967, %970 : vector<16x16xf32>
    %c55_81 = arith.constant 55 : index
    %972 = memref.load %arg5[%c55_81] : memref<144xf32, #tpu.memory_space<smem>>
    %973 = vector.broadcast %972 : f32 to vector<16x16xf32>
    %974 = arith.mulf %973, %725 : vector<16x16xf32>
    %975 = arith.addf %971, %974 : vector<16x16xf32>
    %c56_82 = arith.constant 56 : index
    %976 = memref.load %arg5[%c56_82] : memref<144xf32, #tpu.memory_space<smem>>
    %977 = vector.broadcast %976 : f32 to vector<16x16xf32>
    %978 = arith.mulf %977, %726 : vector<16x16xf32>
    %979 = arith.addf %975, %978 : vector<16x16xf32>
    %c57_83 = arith.constant 57 : index
    %980 = memref.load %arg5[%c57_83] : memref<144xf32, #tpu.memory_space<smem>>
    %981 = vector.broadcast %980 : f32 to vector<16x16xf32>
    %982 = arith.mulf %981, %727 : vector<16x16xf32>
    %983 = arith.addf %979, %982 : vector<16x16xf32>
    %c58_84 = arith.constant 58 : index
    %984 = memref.load %arg5[%c58_84] : memref<144xf32, #tpu.memory_space<smem>>
    %985 = vector.broadcast %984 : f32 to vector<16x16xf32>
    %986 = arith.mulf %985, %728 : vector<16x16xf32>
    %987 = arith.addf %983, %986 : vector<16x16xf32>
    %c59_85 = arith.constant 59 : index
    %988 = memref.load %arg5[%c59_85] : memref<144xf32, #tpu.memory_space<smem>>
    %989 = vector.broadcast %988 : f32 to vector<16x16xf32>
    %990 = arith.mulf %989, %729 : vector<16x16xf32>
    %991 = arith.addf %987, %990 : vector<16x16xf32>
    %c60_86 = arith.constant 60 : index
    %992 = memref.load %arg5[%c60_86] : memref<144xf32, #tpu.memory_space<smem>>
    %993 = vector.broadcast %992 : f32 to vector<16x16xf32>
    %994 = arith.mulf %993, %730 : vector<16x16xf32>
    %995 = arith.addf %991, %994 : vector<16x16xf32>
    %c61_87 = arith.constant 61 : index
    %996 = memref.load %arg5[%c61_87] : memref<144xf32, #tpu.memory_space<smem>>
    %997 = vector.broadcast %996 : f32 to vector<16x16xf32>
    %998 = arith.mulf %997, %731 : vector<16x16xf32>
    %999 = arith.addf %995, %998 : vector<16x16xf32>
    %c62_88 = arith.constant 62 : index
    %1000 = memref.load %arg5[%c62_88] : memref<144xf32, #tpu.memory_space<smem>>
    %1001 = vector.broadcast %1000 : f32 to vector<16x16xf32>
    %1002 = arith.mulf %1001, %732 : vector<16x16xf32>
    %1003 = arith.addf %999, %1002 : vector<16x16xf32>
    %c63_89 = arith.constant 63 : index
    %1004 = memref.load %arg5[%c63_89] : memref<144xf32, #tpu.memory_space<smem>>
    %1005 = vector.broadcast %1004 : f32 to vector<16x16xf32>
    %1006 = arith.mulf %1005, %733 : vector<16x16xf32>
    %1007 = arith.addf %1003, %1006 : vector<16x16xf32>
    %c64_90 = arith.constant 64 : index
    %1008 = memref.load %arg5[%c64_90] : memref<144xf32, #tpu.memory_space<smem>>
    %1009 = vector.broadcast %1008 : f32 to vector<16x16xf32>
    %1010 = arith.mulf %1009, %734 : vector<16x16xf32>
    %1011 = arith.addf %1007, %1010 : vector<16x16xf32>
    %c65_91 = arith.constant 65 : index
    %1012 = memref.load %arg5[%c65_91] : memref<144xf32, #tpu.memory_space<smem>>
    %1013 = vector.broadcast %1012 : f32 to vector<16x16xf32>
    %1014 = arith.mulf %1013, %735 : vector<16x16xf32>
    %1015 = arith.addf %1011, %1014 : vector<16x16xf32>
    %c66_92 = arith.constant 66 : index
    %1016 = memref.load %arg5[%c66_92] : memref<144xf32, #tpu.memory_space<smem>>
    %1017 = vector.broadcast %1016 : f32 to vector<16x16xf32>
    %1018 = arith.mulf %1017, %736 : vector<16x16xf32>
    %1019 = arith.addf %1015, %1018 : vector<16x16xf32>
    %c67_93 = arith.constant 67 : index
    %1020 = memref.load %arg5[%c67_93] : memref<144xf32, #tpu.memory_space<smem>>
    %1021 = vector.broadcast %1020 : f32 to vector<16x16xf32>
    %1022 = arith.mulf %1021, %737 : vector<16x16xf32>
    %1023 = arith.addf %1019, %1022 : vector<16x16xf32>
    %c68_94 = arith.constant 68 : index
    %1024 = memref.load %arg5[%c68_94] : memref<144xf32, #tpu.memory_space<smem>>
    %1025 = vector.broadcast %1024 : f32 to vector<16x16xf32>
    %1026 = arith.mulf %1025, %738 : vector<16x16xf32>
    %1027 = arith.addf %1023, %1026 : vector<16x16xf32>
    %c69_95 = arith.constant 69 : index
    %1028 = memref.load %arg5[%c69_95] : memref<144xf32, #tpu.memory_space<smem>>
    %1029 = vector.broadcast %1028 : f32 to vector<16x16xf32>
    %1030 = arith.mulf %1029, %739 : vector<16x16xf32>
    %1031 = arith.addf %1027, %1030 : vector<16x16xf32>
    %c70_96 = arith.constant 70 : index
    %1032 = memref.load %arg5[%c70_96] : memref<144xf32, #tpu.memory_space<smem>>
    %1033 = vector.broadcast %1032 : f32 to vector<16x16xf32>
    %1034 = arith.mulf %1033, %740 : vector<16x16xf32>
    %1035 = arith.addf %1031, %1034 : vector<16x16xf32>
    %c71_97 = arith.constant 71 : index
    %1036 = memref.load %arg5[%c71_97] : memref<144xf32, #tpu.memory_space<smem>>
    %1037 = vector.broadcast %1036 : f32 to vector<16x16xf32>
    %1038 = arith.mulf %1037, %741 : vector<16x16xf32>
    %1039 = arith.addf %1035, %1038 : vector<16x16xf32>
    %1040 = vector.extract_strided_slice %1 {offsets = [1, 2, 2], sizes = [1, 16, 16], strides = [1, 1, 1]} : vector<4x20x20xf32> to vector<1x16x16xf32>
    %1041 = vector.shape_cast %1040 : vector<1x16x16xf32> to vector<16x16xf32>
    %1042 = arith.addf %1039, %1041 : vector<16x16xf32>
    %c0_98 = arith.constant 0 : index
    %c1_99 = arith.constant 1 : index
    %c0_100 = arith.constant 0 : index
    %c0_101 = arith.constant 0 : index
    %1043 = vector.load %arg8[%c0_98, %c1_99, %c0_100, %c0_101] : memref<1x4x16x16xf32, #tpu.memory_space<vmem>>, vector<1x1x16x16xf32>
    %1044 = vector.shape_cast %1043 : vector<1x1x16x16xf32> to vector<16x16xf32>
    %1045 = vector.shape_cast %1042 : vector<16x16xf32> to vector<1x1x16x16xf32>
    tpu.vector_store %arg8[%c0_98, %c1_99, %c0_100, %c0_101], %1045 {strides = array<i32>} : memref<1x4x16x16xf32, #tpu.memory_space<vmem>>, vector<1x1x16x16xf32>,
    %c2_102 = arith.constant 2 : index
    %1046 = memref.load %arg6[%c2_102] : memref<4xf32, #tpu.memory_space<smem>>
    %1047 = vector.broadcast %1046 : f32 to vector<16x16xf32>
    %c72_103 = arith.constant 72 : index
    %1048 = memref.load %arg5[%c72_103] : memref<144xf32, #tpu.memory_space<smem>>
    %1049 = vector.broadcast %1048 : f32 to vector<16x16xf32>
    %1050 = arith.mulf %1049, %706 : vector<16x16xf32>
    %1051 = arith.addf %1047, %1050 : vector<16x16xf32>
    %c73_104 = arith.constant 73 : index
    %1052 = memref.load %arg5[%c73_104] : memref<144xf32, #tpu.memory_space<smem>>
    %1053 = vector.broadcast %1052 : f32 to vector<16x16xf32>
    %1054 = arith.mulf %1053, %707 : vector<16x16xf32>
    %1055 = arith.addf %1051, %1054 : vector<16x16xf32>
    %c74_105 = arith.constant 74 : index
    %1056 = memref.load %arg5[%c74_105] : memref<144xf32, #tpu.memory_space<smem>>
    %1057 = vector.broadcast %1056 : f32 to vector<16x16xf32>
    %1058 = arith.mulf %1057, %708 : vector<16x16xf32>
    %1059 = arith.addf %1055, %1058 : vector<16x16xf32>
    %c75_106 = arith.constant 75 : index
    %1060 = memref.load %arg5[%c75_106] : memref<144xf32, #tpu.memory_space<smem>>
    %1061 = vector.broadcast %1060 : f32 to vector<16x16xf32>
    %1062 = arith.mulf %1061, %709 : vector<16x16xf32>
    %1063 = arith.addf %1059, %1062 : vector<16x16xf32>
    %c76_107 = arith.constant 76 : index
    %1064 = memref.load %arg5[%c76_107] : memref<144xf32, #tpu.memory_space<smem>>
    %1065 = vector.broadcast %1064 : f32 to vector<16x16xf32>
    %1066 = arith.mulf %1065, %710 : vector<16x16xf32>
    %1067 = arith.addf %1063, %1066 : vector<16x16xf32>
    %c77_108 = arith.constant 77 : index
    %1068 = memref.load %arg5[%c77_108] : memref<144xf32, #tpu.memory_space<smem>>
    %1069 = vector.broadcast %1068 : f32 to vector<16x16xf32>
    %1070 = arith.mulf %1069, %711 : vector<16x16xf32>
    %1071 = arith.addf %1067, %1070 : vector<16x16xf32>
    %c78_109 = arith.constant 78 : index
    %1072 = memref.load %arg5[%c78_109] : memref<144xf32, #tpu.memory_space<smem>>
    %1073 = vector.broadcast %1072 : f32 to vector<16x16xf32>
    %1074 = arith.mulf %1073, %712 : vector<16x16xf32>
    %1075 = arith.addf %1071, %1074 : vector<16x16xf32>
    %c79_110 = arith.constant 79 : index
    %1076 = memref.load %arg5[%c79_110] : memref<144xf32, #tpu.memory_space<smem>>
    %1077 = vector.broadcast %1076 : f32 to vector<16x16xf32>
    %1078 = arith.mulf %1077, %713 : vector<16x16xf32>
    %1079 = arith.addf %1075, %1078 : vector<16x16xf32>
    %c80_111 = arith.constant 80 : index
    %1080 = memref.load %arg5[%c80_111] : memref<144xf32, #tpu.memory_space<smem>>
    %1081 = vector.broadcast %1080 : f32 to vector<16x16xf32>
    %1082 = arith.mulf %1081, %714 : vector<16x16xf32>
    %1083 = arith.addf %1079, %1082 : vector<16x16xf32>
    %c81_112 = arith.constant 81 : index
    %1084 = memref.load %arg5[%c81_112] : memref<144xf32, #tpu.memory_space<smem>>
    %1085 = vector.broadcast %1084 : f32 to vector<16x16xf32>
    %1086 = arith.mulf %1085, %715 : vector<16x16xf32>
    %1087 = arith.addf %1083, %1086 : vector<16x16xf32>
    %c82_113 = arith.constant 82 : index
    %1088 = memref.load %arg5[%c82_113] : memref<144xf32, #tpu.memory_space<smem>>
    %1089 = vector.broadcast %1088 : f32 to vector<16x16xf32>
    %1090 = arith.mulf %1089, %716 : vector<16x16xf32>
    %1091 = arith.addf %1087, %1090 : vector<16x16xf32>
    %c83_114 = arith.constant 83 : index
    %1092 = memref.load %arg5[%c83_114] : memref<144xf32, #tpu.memory_space<smem>>
    %1093 = vector.broadcast %1092 : f32 to vector<16x16xf32>
    %1094 = arith.mulf %1093, %717 : vector<16x16xf32>
    %1095 = arith.addf %1091, %1094 : vector<16x16xf32>
    %c84_115 = arith.constant 84 : index
    %1096 = memref.load %arg5[%c84_115] : memref<144xf32, #tpu.memory_space<smem>>
    %1097 = vector.broadcast %1096 : f32 to vector<16x16xf32>
    %1098 = arith.mulf %1097, %718 : vector<16x16xf32>
    %1099 = arith.addf %1095, %1098 : vector<16x16xf32>
    %c85_116 = arith.constant 85 : index
    %1100 = memref.load %arg5[%c85_116] : memref<144xf32, #tpu.memory_space<smem>>
    %1101 = vector.broadcast %1100 : f32 to vector<16x16xf32>
    %1102 = arith.mulf %1101, %719 : vector<16x16xf32>
    %1103 = arith.addf %1099, %1102 : vector<16x16xf32>
    %c86_117 = arith.constant 86 : index
    %1104 = memref.load %arg5[%c86_117] : memref<144xf32, #tpu.memory_space<smem>>
    %1105 = vector.broadcast %1104 : f32 to vector<16x16xf32>
    %1106 = arith.mulf %1105, %720 : vector<16x16xf32>
    %1107 = arith.addf %1103, %1106 : vector<16x16xf32>
    %c87_118 = arith.constant 87 : index
    %1108 = memref.load %arg5[%c87_118] : memref<144xf32, #tpu.memory_space<smem>>
    %1109 = vector.broadcast %1108 : f32 to vector<16x16xf32>
    %1110 = arith.mulf %1109, %721 : vector<16x16xf32>
    %1111 = arith.addf %1107, %1110 : vector<16x16xf32>
    %c88_119 = arith.constant 88 : index
    %1112 = memref.load %arg5[%c88_119] : memref<144xf32, #tpu.memory_space<smem>>
    %1113 = vector.broadcast %1112 : f32 to vector<16x16xf32>
    %1114 = arith.mulf %1113, %722 : vector<16x16xf32>
    %1115 = arith.addf %1111, %1114 : vector<16x16xf32>
    %c89_120 = arith.constant 89 : index
    %1116 = memref.load %arg5[%c89_120] : memref<144xf32, #tpu.memory_space<smem>>
    %1117 = vector.broadcast %1116 : f32 to vector<16x16xf32>
    %1118 = arith.mulf %1117, %723 : vector<16x16xf32>
    %1119 = arith.addf %1115, %1118 : vector<16x16xf32>
    %c90_121 = arith.constant 90 : index
    %1120 = memref.load %arg5[%c90_121] : memref<144xf32, #tpu.memory_space<smem>>
    %1121 = vector.broadcast %1120 : f32 to vector<16x16xf32>
    %1122 = arith.mulf %1121, %724 : vector<16x16xf32>
    %1123 = arith.addf %1119, %1122 : vector<16x16xf32>
    %c91_122 = arith.constant 91 : index
    %1124 = memref.load %arg5[%c91_122] : memref<144xf32, #tpu.memory_space<smem>>
    %1125 = vector.broadcast %1124 : f32 to vector<16x16xf32>
    %1126 = arith.mulf %1125, %725 : vector<16x16xf32>
    %1127 = arith.addf %1123, %1126 : vector<16x16xf32>
    %c92_123 = arith.constant 92 : index
    %1128 = memref.load %arg5[%c92_123] : memref<144xf32, #tpu.memory_space<smem>>
    %1129 = vector.broadcast %1128 : f32 to vector<16x16xf32>
    %1130 = arith.mulf %1129, %726 : vector<16x16xf32>
    %1131 = arith.addf %1127, %1130 : vector<16x16xf32>
    %c93_124 = arith.constant 93 : index
    %1132 = memref.load %arg5[%c93_124] : memref<144xf32, #tpu.memory_space<smem>>
    %1133 = vector.broadcast %1132 : f32 to vector<16x16xf32>
    %1134 = arith.mulf %1133, %727 : vector<16x16xf32>
    %1135 = arith.addf %1131, %1134 : vector<16x16xf32>
    %c94_125 = arith.constant 94 : index
    %1136 = memref.load %arg5[%c94_125] : memref<144xf32, #tpu.memory_space<smem>>
    %1137 = vector.broadcast %1136 : f32 to vector<16x16xf32>
    %1138 = arith.mulf %1137, %728 : vector<16x16xf32>
    %1139 = arith.addf %1135, %1138 : vector<16x16xf32>
    %c95_126 = arith.constant 95 : index
    %1140 = memref.load %arg5[%c95_126] : memref<144xf32, #tpu.memory_space<smem>>
    %1141 = vector.broadcast %1140 : f32 to vector<16x16xf32>
    %1142 = arith.mulf %1141, %729 : vector<16x16xf32>
    %1143 = arith.addf %1139, %1142 : vector<16x16xf32>
    %c96_127 = arith.constant 96 : index
    %1144 = memref.load %arg5[%c96_127] : memref<144xf32, #tpu.memory_space<smem>>
    %1145 = vector.broadcast %1144 : f32 to vector<16x16xf32>
    %1146 = arith.mulf %1145, %730 : vector<16x16xf32>
    %1147 = arith.addf %1143, %1146 : vector<16x16xf32>
    %c97_128 = arith.constant 97 : index
    %1148 = memref.load %arg5[%c97_128] : memref<144xf32, #tpu.memory_space<smem>>
    %1149 = vector.broadcast %1148 : f32 to vector<16x16xf32>
    %1150 = arith.mulf %1149, %731 : vector<16x16xf32>
    %1151 = arith.addf %1147, %1150 : vector<16x16xf32>
    %c98_129 = arith.constant 98 : index
    %1152 = memref.load %arg5[%c98_129] : memref<144xf32, #tpu.memory_space<smem>>
    %1153 = vector.broadcast %1152 : f32 to vector<16x16xf32>
    %1154 = arith.mulf %1153, %732 : vector<16x16xf32>
    %1155 = arith.addf %1151, %1154 : vector<16x16xf32>
    %c99_130 = arith.constant 99 : index
    %1156 = memref.load %arg5[%c99_130] : memref<144xf32, #tpu.memory_space<smem>>
    %1157 = vector.broadcast %1156 : f32 to vector<16x16xf32>
    %1158 = arith.mulf %1157, %733 : vector<16x16xf32>
    %1159 = arith.addf %1155, %1158 : vector<16x16xf32>
    %c100_131 = arith.constant 100 : index
    %1160 = memref.load %arg5[%c100_131] : memref<144xf32, #tpu.memory_space<smem>>
    %1161 = vector.broadcast %1160 : f32 to vector<16x16xf32>
    %1162 = arith.mulf %1161, %734 : vector<16x16xf32>
    %1163 = arith.addf %1159, %1162 : vector<16x16xf32>
    %c101_132 = arith.constant 101 : index
    %1164 = memref.load %arg5[%c101_132] : memref<144xf32, #tpu.memory_space<smem>>
    %1165 = vector.broadcast %1164 : f32 to vector<16x16xf32>
    %1166 = arith.mulf %1165, %735 : vector<16x16xf32>
    %1167 = arith.addf %1163, %1166 : vector<16x16xf32>
    %c102_133 = arith.constant 102 : index
    %1168 = memref.load %arg5[%c102_133] : memref<144xf32, #tpu.memory_space<smem>>
    %1169 = vector.broadcast %1168 : f32 to vector<16x16xf32>
    %1170 = arith.mulf %1169, %736 : vector<16x16xf32>
    %1171 = arith.addf %1167, %1170 : vector<16x16xf32>
    %c103_134 = arith.constant 103 : index
    %1172 = memref.load %arg5[%c103_134] : memref<144xf32, #tpu.memory_space<smem>>
    %1173 = vector.broadcast %1172 : f32 to vector<16x16xf32>
    %1174 = arith.mulf %1173, %737 : vector<16x16xf32>
    %1175 = arith.addf %1171, %1174 : vector<16x16xf32>
    %c104_135 = arith.constant 104 : index
    %1176 = memref.load %arg5[%c104_135] : memref<144xf32, #tpu.memory_space<smem>>
    %1177 = vector.broadcast %1176 : f32 to vector<16x16xf32>
    %1178 = arith.mulf %1177, %738 : vector<16x16xf32>
    %1179 = arith.addf %1175, %1178 : vector<16x16xf32>
    %c105_136 = arith.constant 105 : index
    %1180 = memref.load %arg5[%c105_136] : memref<144xf32, #tpu.memory_space<smem>>
    %1181 = vector.broadcast %1180 : f32 to vector<16x16xf32>
    %1182 = arith.mulf %1181, %739 : vector<16x16xf32>
    %1183 = arith.addf %1179, %1182 : vector<16x16xf32>
    %c106_137 = arith.constant 106 : index
    %1184 = memref.load %arg5[%c106_137] : memref<144xf32, #tpu.memory_space<smem>>
    %1185 = vector.broadcast %1184 : f32 to vector<16x16xf32>
    %1186 = arith.mulf %1185, %740 : vector<16x16xf32>
    %1187 = arith.addf %1183, %1186 : vector<16x16xf32>
    %c107_138 = arith.constant 107 : index
    %1188 = memref.load %arg5[%c107_138] : memref<144xf32, #tpu.memory_space<smem>>
    %1189 = vector.broadcast %1188 : f32 to vector<16x16xf32>
    %1190 = arith.mulf %1189, %741 : vector<16x16xf32>
    %1191 = arith.addf %1187, %1190 : vector<16x16xf32>
    %1192 = vector.extract_strided_slice %1 {offsets = [2, 2, 2], sizes = [1, 16, 16], strides = [1, 1, 1]} : vector<4x20x20xf32> to vector<1x16x16xf32>
    %1193 = vector.shape_cast %1192 : vector<1x16x16xf32> to vector<16x16xf32>
    %1194 = arith.addf %1191, %1193 : vector<16x16xf32>
    %c0_139 = arith.constant 0 : index
    %c2_140 = arith.constant 2 : index
    %c0_141 = arith.constant 0 : index
    %c0_142 = arith.constant 0 : index
    %1195 = vector.load %arg8[%c0_139, %c2_140, %c0_141, %c0_142] : memref<1x4x16x16xf32, #tpu.memory_space<vmem>>, vector<1x1x16x16xf32>
    %1196 = vector.shape_cast %1195 : vector<1x1x16x16xf32> to vector<16x16xf32>
    %1197 = vector.shape_cast %1194 : vector<16x16xf32> to vector<1x1x16x16xf32>
    tpu.vector_store %arg8[%c0_139, %c2_140, %c0_141, %c0_142], %1197 {strides = array<i32>} : memref<1x4x16x16xf32, #tpu.memory_space<vmem>>, vector<1x1x16x16xf32>,
    %c3_143 = arith.constant 3 : index
    %1198 = memref.load %arg6[%c3_143] : memref<4xf32, #tpu.memory_space<smem>>
    %1199 = vector.broadcast %1198 : f32 to vector<16x16xf32>
    %c108_144 = arith.constant 108 : index
    %1200 = memref.load %arg5[%c108_144] : memref<144xf32, #tpu.memory_space<smem>>
    %1201 = vector.broadcast %1200 : f32 to vector<16x16xf32>
    %1202 = arith.mulf %1201, %706 : vector<16x16xf32>
    %1203 = arith.addf %1199, %1202 : vector<16x16xf32>
    %c109_145 = arith.constant 109 : index
    %1204 = memref.load %arg5[%c109_145] : memref<144xf32, #tpu.memory_space<smem>>
    %1205 = vector.broadcast %1204 : f32 to vector<16x16xf32>
    %1206 = arith.mulf %1205, %707 : vector<16x16xf32>
    %1207 = arith.addf %1203, %1206 : vector<16x16xf32>
    %c110_146 = arith.constant 110 : index
    %1208 = memref.load %arg5[%c110_146] : memref<144xf32, #tpu.memory_space<smem>>
    %1209 = vector.broadcast %1208 : f32 to vector<16x16xf32>
    %1210 = arith.mulf %1209, %708 : vector<16x16xf32>
    %1211 = arith.addf %1207, %1210 : vector<16x16xf32>
    %c111_147 = arith.constant 111 : index
    %1212 = memref.load %arg5[%c111_147] : memref<144xf32, #tpu.memory_space<smem>>
    %1213 = vector.broadcast %1212 : f32 to vector<16x16xf32>
    %1214 = arith.mulf %1213, %709 : vector<16x16xf32>
    %1215 = arith.addf %1211, %1214 : vector<16x16xf32>
    %c112_148 = arith.constant 112 : index
    %1216 = memref.load %arg5[%c112_148] : memref<144xf32, #tpu.memory_space<smem>>
    %1217 = vector.broadcast %1216 : f32 to vector<16x16xf32>
    %1218 = arith.mulf %1217, %710 : vector<16x16xf32>
    %1219 = arith.addf %1215, %1218 : vector<16x16xf32>
    %c113_149 = arith.constant 113 : index
    %1220 = memref.load %arg5[%c113_149] : memref<144xf32, #tpu.memory_space<smem>>
    %1221 = vector.broadcast %1220 : f32 to vector<16x16xf32>
    %1222 = arith.mulf %1221, %711 : vector<16x16xf32>
    %1223 = arith.addf %1219, %1222 : vector<16x16xf32>
    %c114_150 = arith.constant 114 : index
    %1224 = memref.load %arg5[%c114_150] : memref<144xf32, #tpu.memory_space<smem>>
    %1225 = vector.broadcast %1224 : f32 to vector<16x16xf32>
    %1226 = arith.mulf %1225, %712 : vector<16x16xf32>
    %1227 = arith.addf %1223, %1226 : vector<16x16xf32>
    %c115_151 = arith.constant 115 : index
    %1228 = memref.load %arg5[%c115_151] : memref<144xf32, #tpu.memory_space<smem>>
    %1229 = vector.broadcast %1228 : f32 to vector<16x16xf32>
    %1230 = arith.mulf %1229, %713 : vector<16x16xf32>
    %1231 = arith.addf %1227, %1230 : vector<16x16xf32>
    %c116_152 = arith.constant 116 : index
    %1232 = memref.load %arg5[%c116_152] : memref<144xf32, #tpu.memory_space<smem>>
    %1233 = vector.broadcast %1232 : f32 to vector<16x16xf32>
    %1234 = arith.mulf %1233, %714 : vector<16x16xf32>
    %1235 = arith.addf %1231, %1234 : vector<16x16xf32>
    %c117_153 = arith.constant 117 : index
    %1236 = memref.load %arg5[%c117_153] : memref<144xf32, #tpu.memory_space<smem>>
    %1237 = vector.broadcast %1236 : f32 to vector<16x16xf32>
    %1238 = arith.mulf %1237, %715 : vector<16x16xf32>
    %1239 = arith.addf %1235, %1238 : vector<16x16xf32>
    %c118_154 = arith.constant 118 : index
    %1240 = memref.load %arg5[%c118_154] : memref<144xf32, #tpu.memory_space<smem>>
    %1241 = vector.broadcast %1240 : f32 to vector<16x16xf32>
    %1242 = arith.mulf %1241, %716 : vector<16x16xf32>
    %1243 = arith.addf %1239, %1242 : vector<16x16xf32>
    %c119_155 = arith.constant 119 : index
    %1244 = memref.load %arg5[%c119_155] : memref<144xf32, #tpu.memory_space<smem>>
    %1245 = vector.broadcast %1244 : f32 to vector<16x16xf32>
    %1246 = arith.mulf %1245, %717 : vector<16x16xf32>
    %1247 = arith.addf %1243, %1246 : vector<16x16xf32>
    %c120_156 = arith.constant 120 : index
    %1248 = memref.load %arg5[%c120_156] : memref<144xf32, #tpu.memory_space<smem>>
    %1249 = vector.broadcast %1248 : f32 to vector<16x16xf32>
    %1250 = arith.mulf %1249, %718 : vector<16x16xf32>
    %1251 = arith.addf %1247, %1250 : vector<16x16xf32>
    %c121_157 = arith.constant 121 : index
    %1252 = memref.load %arg5[%c121_157] : memref<144xf32, #tpu.memory_space<smem>>
    %1253 = vector.broadcast %1252 : f32 to vector<16x16xf32>
    %1254 = arith.mulf %1253, %719 : vector<16x16xf32>
    %1255 = arith.addf %1251, %1254 : vector<16x16xf32>
    %c122_158 = arith.constant 122 : index
    %1256 = memref.load %arg5[%c122_158] : memref<144xf32, #tpu.memory_space<smem>>
    %1257 = vector.broadcast %1256 : f32 to vector<16x16xf32>
    %1258 = arith.mulf %1257, %720 : vector<16x16xf32>
    %1259 = arith.addf %1255, %1258 : vector<16x16xf32>
    %c123_159 = arith.constant 123 : index
    %1260 = memref.load %arg5[%c123_159] : memref<144xf32, #tpu.memory_space<smem>>
    %1261 = vector.broadcast %1260 : f32 to vector<16x16xf32>
    %1262 = arith.mulf %1261, %721 : vector<16x16xf32>
    %1263 = arith.addf %1259, %1262 : vector<16x16xf32>
    %c124_160 = arith.constant 124 : index
    %1264 = memref.load %arg5[%c124_160] : memref<144xf32, #tpu.memory_space<smem>>
    %1265 = vector.broadcast %1264 : f32 to vector<16x16xf32>
    %1266 = arith.mulf %1265, %722 : vector<16x16xf32>
    %1267 = arith.addf %1263, %1266 : vector<16x16xf32>
    %c125_161 = arith.constant 125 : index
    %1268 = memref.load %arg5[%c125_161] : memref<144xf32, #tpu.memory_space<smem>>
    %1269 = vector.broadcast %1268 : f32 to vector<16x16xf32>
    %1270 = arith.mulf %1269, %723 : vector<16x16xf32>
    %1271 = arith.addf %1267, %1270 : vector<16x16xf32>
    %c126_162 = arith.constant 126 : index
    %1272 = memref.load %arg5[%c126_162] : memref<144xf32, #tpu.memory_space<smem>>
    %1273 = vector.broadcast %1272 : f32 to vector<16x16xf32>
    %1274 = arith.mulf %1273, %724 : vector<16x16xf32>
    %1275 = arith.addf %1271, %1274 : vector<16x16xf32>
    %c127_163 = arith.constant 127 : index
    %1276 = memref.load %arg5[%c127_163] : memref<144xf32, #tpu.memory_space<smem>>
    %1277 = vector.broadcast %1276 : f32 to vector<16x16xf32>
    %1278 = arith.mulf %1277, %725 : vector<16x16xf32>
    %1279 = arith.addf %1275, %1278 : vector<16x16xf32>
    %c128_164 = arith.constant 128 : index
    %1280 = memref.load %arg5[%c128_164] : memref<144xf32, #tpu.memory_space<smem>>
    %1281 = vector.broadcast %1280 : f32 to vector<16x16xf32>
    %1282 = arith.mulf %1281, %726 : vector<16x16xf32>
    %1283 = arith.addf %1279, %1282 : vector<16x16xf32>
    %c129_165 = arith.constant 129 : index
    %1284 = memref.load %arg5[%c129_165] : memref<144xf32, #tpu.memory_space<smem>>
    %1285 = vector.broadcast %1284 : f32 to vector<16x16xf32>
    %1286 = arith.mulf %1285, %727 : vector<16x16xf32>
    %1287 = arith.addf %1283, %1286 : vector<16x16xf32>
    %c130_166 = arith.constant 130 : index
    %1288 = memref.load %arg5[%c130_166] : memref<144xf32, #tpu.memory_space<smem>>
    %1289 = vector.broadcast %1288 : f32 to vector<16x16xf32>
    %1290 = arith.mulf %1289, %728 : vector<16x16xf32>
    %1291 = arith.addf %1287, %1290 : vector<16x16xf32>
    %c131_167 = arith.constant 131 : index
    %1292 = memref.load %arg5[%c131_167] : memref<144xf32, #tpu.memory_space<smem>>
    %1293 = vector.broadcast %1292 : f32 to vector<16x16xf32>
    %1294 = arith.mulf %1293, %729 : vector<16x16xf32>
    %1295 = arith.addf %1291, %1294 : vector<16x16xf32>
    %c132_168 = arith.constant 132 : index
    %1296 = memref.load %arg5[%c132_168] : memref<144xf32, #tpu.memory_space<smem>>
    %1297 = vector.broadcast %1296 : f32 to vector<16x16xf32>
    %1298 = arith.mulf %1297, %730 : vector<16x16xf32>
    %1299 = arith.addf %1295, %1298 : vector<16x16xf32>
    %c133_169 = arith.constant 133 : index
    %1300 = memref.load %arg5[%c133_169] : memref<144xf32, #tpu.memory_space<smem>>
    %1301 = vector.broadcast %1300 : f32 to vector<16x16xf32>
    %1302 = arith.mulf %1301, %731 : vector<16x16xf32>
    %1303 = arith.addf %1299, %1302 : vector<16x16xf32>
    %c134_170 = arith.constant 134 : index
    %1304 = memref.load %arg5[%c134_170] : memref<144xf32, #tpu.memory_space<smem>>
    %1305 = vector.broadcast %1304 : f32 to vector<16x16xf32>
    %1306 = arith.mulf %1305, %732 : vector<16x16xf32>
    %1307 = arith.addf %1303, %1306 : vector<16x16xf32>
    %c135_171 = arith.constant 135 : index
    %1308 = memref.load %arg5[%c135_171] : memref<144xf32, #tpu.memory_space<smem>>
    %1309 = vector.broadcast %1308 : f32 to vector<16x16xf32>
    %1310 = arith.mulf %1309, %733 : vector<16x16xf32>
    %1311 = arith.addf %1307, %1310 : vector<16x16xf32>
    %c136_172 = arith.constant 136 : index
    %1312 = memref.load %arg5[%c136_172] : memref<144xf32, #tpu.memory_space<smem>>
    %1313 = vector.broadcast %1312 : f32 to vector<16x16xf32>
    %1314 = arith.mulf %1313, %734 : vector<16x16xf32>
    %1315 = arith.addf %1311, %1314 : vector<16x16xf32>
    %c137_173 = arith.constant 137 : index
    %1316 = memref.load %arg5[%c137_173] : memref<144xf32, #tpu.memory_space<smem>>
    %1317 = vector.broadcast %1316 : f32 to vector<16x16xf32>
    %1318 = arith.mulf %1317, %735 : vector<16x16xf32>
    %1319 = arith.addf %1315, %1318 : vector<16x16xf32>
    %c138_174 = arith.constant 138 : index
    %1320 = memref.load %arg5[%c138_174] : memref<144xf32, #tpu.memory_space<smem>>
    %1321 = vector.broadcast %1320 : f32 to vector<16x16xf32>
    %1322 = arith.mulf %1321, %736 : vector<16x16xf32>
    %1323 = arith.addf %1319, %1322 : vector<16x16xf32>
    %c139_175 = arith.constant 139 : index
    %1324 = memref.load %arg5[%c139_175] : memref<144xf32, #tpu.memory_space<smem>>
    %1325 = vector.broadcast %1324 : f32 to vector<16x16xf32>
    %1326 = arith.mulf %1325, %737 : vector<16x16xf32>
    %1327 = arith.addf %1323, %1326 : vector<16x16xf32>
    %c140_176 = arith.constant 140 : index
    %1328 = memref.load %arg5[%c140_176] : memref<144xf32, #tpu.memory_space<smem>>
    %1329 = vector.broadcast %1328 : f32 to vector<16x16xf32>
    %1330 = arith.mulf %1329, %738 : vector<16x16xf32>
    %1331 = arith.addf %1327, %1330 : vector<16x16xf32>
    %c141_177 = arith.constant 141 : index
    %1332 = memref.load %arg5[%c141_177] : memref<144xf32, #tpu.memory_space<smem>>
    %1333 = vector.broadcast %1332 : f32 to vector<16x16xf32>
    %1334 = arith.mulf %1333, %739 : vector<16x16xf32>
    %1335 = arith.addf %1331, %1334 : vector<16x16xf32>
    %c142_178 = arith.constant 142 : index
    %1336 = memref.load %arg5[%c142_178] : memref<144xf32, #tpu.memory_space<smem>>
    %1337 = vector.broadcast %1336 : f32 to vector<16x16xf32>
    %1338 = arith.mulf %1337, %740 : vector<16x16xf32>
    %1339 = arith.addf %1335, %1338 : vector<16x16xf32>
    %c143_179 = arith.constant 143 : index
    %1340 = memref.load %arg5[%c143_179] : memref<144xf32, #tpu.memory_space<smem>>
    %1341 = vector.broadcast %1340 : f32 to vector<16x16xf32>
    %1342 = arith.mulf %1341, %741 : vector<16x16xf32>
    %1343 = arith.addf %1339, %1342 : vector<16x16xf32>
    %1344 = vector.extract_strided_slice %1 {offsets = [3, 2, 2], sizes = [1, 16, 16], strides = [1, 1, 1]} : vector<4x20x20xf32> to vector<1x16x16xf32>
    %1345 = vector.shape_cast %1344 : vector<1x16x16xf32> to vector<16x16xf32>
    %1346 = arith.addf %1343, %1345 : vector<16x16xf32>
    %c0_180 = arith.constant 0 : index
    %c3_181 = arith.constant 3 : index
    %c0_182 = arith.constant 0 : index
    %c0_183 = arith.constant 0 : index
    %1347 = vector.load %arg8[%c0_180, %c3_181, %c0_182, %c0_183] : memref<1x4x16x16xf32, #tpu.memory_space<vmem>>, vector<1x1x16x16xf32>
    %1348 = vector.shape_cast %1347 : vector<1x1x16x16xf32> to vector<16x16xf32>
    %1349 = vector.shape_cast %1346 : vector<16x16xf32> to vector<1x1x16x16xf32>
    tpu.vector_store %arg8[%c0_180, %c3_181, %c0_182, %c0_183], %1349 {strides = array<i32>} : memref<1x4x16x16xf32, #tpu.memory_space<vmem>>, vector<1x1x16x16xf32>,
    return
  }
  func.func @transform_0(%arg0: i32) -> i32 {
    %c0_i32 = arith.constant 0 : i32
    %c0_i32_0 = arith.constant 0 : i32
    return %c0_i32 : i32
  }
  func.func @transform_1(%arg0: i32) -> i32 {
    %c0_i32 = arith.constant 0 : i32
    %c0_i32_0 = arith.constant 0 : i32
    return %c0_i32 : i32
  }
  func.func @transform_2(%arg0: i32) -> i32 {
    %c0_i32 = arith.constant 0 : i32
    %c0_i32_0 = arith.constant 0 : i32
    return %c0_i32 : i32
  }
  func.func @transform_3(%arg0: i32) -> i32 {
    %c0_i32 = arith.constant 0 : i32
    %c0_i32_0 = arith.constant 0 : i32
    return %c0_i32 : i32
  }
  func.func @transform_4(%arg0: i32) -> i32 {
    %c0_i32 = arith.constant 0 : i32
    %c0_i32_0 = arith.constant 0 : i32
    return %c0_i32 : i32
  }
  func.func @transform_5(%arg0: i32) -> i32 {
    %c0_i32 = arith.constant 0 : i32
    %c0_i32_0 = arith.constant 0 : i32
    return %c0_i32 : i32
  }
  func.func @transform_6(%arg0: i32) -> (i32, i32, i32, i32) {
    %c0_i32 = arith.constant 0 : i32
    %c0_i32_0 = arith.constant 0 : i32
    %c0_i32_1 = arith.constant 0 : i32
    %c0_i32_2 = arith.constant 0 : i32
    return %arg0, %c0_i32, %c0_i32_0, %c0_i32_1 : i32, i32, i32, i32
  }
  func.func @transform_7(%arg0: i32) -> (i32, i32, i32, i32) {
    %c0_i32 = arith.constant 0 : i32
    %c0_i32_0 = arith.constant 0 : i32
    %c0_i32_1 = arith.constant 0 : i32
    %c0_i32_2 = arith.constant 0 : i32
    return %arg0, %c0_i32, %c0_i32_0, %c0_i32_1 : i32, i32, i32, i32
  }
}

</mosaic_0001>

<llo_original>
// kernel: lateral_block.1
$region0: #{lateral_block.1}
  #allocation0 [shape = 'u32[]', space=smem, size = 0x4, offset = 0x4, fixed_abs, tag = 'smem constant byte address 0x4 - core index']
  #allocation1 [shape = 'u32[144,128]{1,0:T(1,128)}', space=vmem, size = 0x12000, scoped, tag = 'internal scratch']
  #allocation2 [shape = 'f32[1]{0:T(128)S(6)}', space=smem, size = 0x200, scoped, tag = 'scoped memory for lateral_block.1']
  #allocation3 [shape = 'f32[1]{0:T(128)S(6)}', space=smem, size = 0x200, scoped, tag = 'scoped memory for lateral_block.1']
  %s0 = inlined_call_operand.<no memory space> [shape: f32[1], index: 0, kind: input, shape index: {}]
  %s1 = inlined_call_operand.vmem [shape: f32[144], index: 1, kind: input, shape index: {}]
  %s2 = inlined_call_operand.vmem [shape: f32[4], index: 2, kind: input, shape index: {}]
  %s3 = inlined_call_operand.<no memory space> [shape: f32[1], index: 3, kind: input, shape index: {}]
  %s4 = inlined_call_operand.vmem [shape: f32[144], index: 4, kind: input, shape index: {}]
  %s5 = inlined_call_operand.vmem [shape: f32[4], index: 5, kind: input, shape index: {}]
  %s6 = inlined_call_operand.vmem [shape: f32[2,4,20,20], index: 6, kind: input, shape index: {}]
  %s7 = inlined_call_operand.hbm [shape: f32[2,4,16,16], index: 7, kind: output, shape index: {}]
  %s8 = sld [smem:[#allocation0]]
  $region77: #{lateral_block.1} parent=0
    _
  %s10 = ssub.s32 1, %s8
  %s11 = scalar_select 0, %s10, %s8
  %12 = sst [smem:[#allocation2]] %s0
  %13 = sst [smem:[#allocation3]] %s3
  $region1: #{lateral_block.1} parent=0
    #allocation4 [shape = 'u8[1024]{0}', space=smem, size = 0x400, scoped, tag = 'input window, operand 1, single buffered']
    #allocation5 [shape = 's32[2]{0}', space=sflag, size = 0x8, scoped, tag = 'scoped memory for lateral_block.1']
    #allocation6 [shape = 's32[2]{0}', space=sflag, size = 0x8, scoped, tag = 'scoped memory for lateral_block.1']
    #allocation7 [shape = 'u8[512]{0}', space=smem, size = 0x200, scoped, tag = 'input window, operand 2, single buffered']
    #allocation8 [shape = 's32[1]{0}', space=sflag, size = 0x4, scoped, tag = 'scoped memory for lateral_block.1']
    #allocation9 [shape = 'u8[1024]{0}', space=smem, size = 0x400, scoped, tag = 'input window, operand 4, single buffered']
    #allocation10 [shape = 'u8[512]{0}', space=smem, size = 0x200, scoped, tag = 'input window, operand 5, single buffered']
    #allocation11 [shape = 's32[1]{0}', space=sflag, size = 0x4, scoped, tag = 'scoped memory for lateral_block.1']
    #allocation12 [shape = 'u8[65536]{0}', space=vmem, size = 0x10000, scoped, tag = 'output window, operand 0']
    %14 = vsyncpa [#allocation6], 0
    %15 = vsyncpa [#allocation8], 0
    %16 = vsyncpa [#allocation11], 0
    %17 = vsyncpa [#allocation5], 0
    %s18 = scalar_lea.sflag [#allocation5], 1
    %19 = vsyncpa %s18, 0
    loop: start=0, step=1, limit=4
    $region2: #{lateral_block.1} parent=1 // loop_pre_header
      _
    $region3: #{lateral_block.1} parent=1 // loop_header
      %s21 = sphi 0, %s25
      %p22 = scmp.ge.s32.totalorder %s21, 4
      %s29 = sphi 0, %s29
      %s31 = sphi 0, %s29
      %s32 = sphi 0, %s31
      %s46 = sphi 0, %s32
      %s50 = sphi 0, %s50
      %s52 = sphi 0, %s50
      %s53 = sphi 0, %s52
      %s67 = sphi 0, %s53
      %s71 = sphi 0, %s71
      %s73 = sphi 0, %s71
      %s74 = sphi 0, %s73
      %s88 = sphi 0, %s74
      %s92 = sphi 0, %s92
      %s94 = sphi 0, %s92
      %s95 = sphi 0, %s94
      %s109 = sphi 0, %s95
      %s113 = sphi 0, %s113
      %s115 = sphi 0, %s113
      %s116 = sphi 0, %s115
      %s130 = sphi 0, %s116
      %s134 = sphi 0, %s134
      %s136 = sphi 0, %s134
      %s137 = sphi 0, %s136
      %s151 = sphi 0, %s137
      %s157 = sphi 0, %s159
      %s160 = sphi 0, %s157
      %s161 = sphi 0, %s160
      %s177 = sphi 0, %s161
      %s183 = sphi 0, %s185
      %s186 = sphi 0, %s183
      %s187 = sphi 0, %s186
      %s203 = sphi 0, %s187
    $region4: #{lateral_block.1} parent=1 // loop_header_branch
      %24 = sbr.rel (%p22) target = $region8
    $region5: #{lateral_block.1} parent=1 // loop_body
      %s26 = ssub.s32 %s21, 1
      %s27 = ssub.s32 %s21, 2
      %s28 = sadd.s32 %s21, 1
      %s30 = sadd.s32 %s29, 1
      %p33 = scmp.eq.s32.totalorder %s21, 1
      %p34 = scmp.ne.s32.totalorder %s29, %s31
      %p35 = scmp.eq.s32.totalorder %s21, 0
      %p36 = por %p34, %p35
      %p37 = scmp.ne.s32.totalorder %s29, %s31
      %p38 = scmp.eq.s32.totalorder %s26, 1
      %p39 = por %p37, %p38
      %p40 = scmp.ne.s32.totalorder %s31, %s32
      %p41 = scmp.eq.s32.totalorder %s26, 0
      %p42 = por %p40, %p41
      %p43 = scmp.ne.s32.totalorder %s31, %s32
      %p44 = scmp.eq.s32.totalorder %s27, 1
      %p45 = por %p43, %p44
      %p47 = scmp.ne.s32.totalorder %s32, %s46
      %p48 = scmp.eq.s32.totalorder %s27, 0
      %p49 = por %p47, %p48
      %s51 = sadd.s32 %s50, 1
      %p54 = scmp.eq.s32.totalorder %s21, 1
      %p55 = scmp.ne.s32.totalorder %s50, %s52
      %p56 = scmp.eq.s32.totalorder %s21, 0
      %p57 = por %p55, %p56
      %p58 = scmp.ne.s32.totalorder %s50, %s52
      %p59 = scmp.eq.s32.totalorder %s26, 1
      %p60 = por %p58, %p59
      %p61 = scmp.ne.s32.totalorder %s52, %s53
      %p62 = scmp.eq.s32.totalorder %s26, 0
      %p63 = por %p61, %p62
      %p64 = scmp.ne.s32.totalorder %s52, %s53
      %p65 = scmp.eq.s32.totalorder %s27, 1
      %p66 = por %p64, %p65
      %p68 = scmp.ne.s32.totalorder %s53, %s67
      %p69 = scmp.eq.s32.totalorder %s27, 0
      %p70 = por %p68, %p69
      %s72 = sadd.s32 %s71, 1
      %p75 = scmp.eq.s32.totalorder %s21, 1
      %p76 = scmp.ne.s32.totalorder %s71, %s73
      %p77 = scmp.eq.s32.totalorder %s21, 0
      %p78 = por %p76, %p77
      %p79 = scmp.ne.s32.totalorder %s71, %s73
      %p80 = scmp.eq.s32.totalorder %s26, 1
      %p81 = por %p79, %p80
      %p82 = scmp.ne.s32.totalorder %s73, %s74
      %p83 = scmp.eq.s32.totalorder %s26, 0
      %p84 = por %p82, %p83
      %p85 = scmp.ne.s32.totalorder %s73, %s74
      %p86 = scmp.eq.s32.totalorder %s27, 1
      %p87 = por %p85, %p86
      %p89 = scmp.ne.s32.totalorder %s74, %s88
      %p90 = scmp.eq.s32.totalorder %s27, 0
      %p91 = por %p89, %p90
      %s93 = sadd.s32 %s92, 1
      %p96 = scmp.eq.s32.totalorder %s21, 1
      %p97 = scmp.ne.s32.totalorder %s92, %s94
      %p98 = scmp.eq.s32.totalorder %s21, 0
      %p99 = por %p97, %p98
      %p100 = scmp.ne.s32.totalorder %s92, %s94
      %p101 = scmp.eq.s32.totalorder %s26, 1
      %p102 = por %p100, %p101
      %p103 = scmp.ne.s32.totalorder %s94, %s95
      %p104 = scmp.eq.s32.totalorder %s26, 0
      %p105 = por %p103, %p104
      %p106 = scmp.ne.s32.totalorder %s94, %s95
      %p107 = scmp.eq.s32.totalorder %s27, 1
      %p108 = por %p106, %p107
      %p110 = scmp.ne.s32.totalorder %s95, %s109
      %p111 = scmp.eq.s32.totalorder %s27, 0
      %p112 = por %p110, %p111
      %s114 = sadd.s32 %s113, 1
      %p117 = scmp.eq.s32.totalorder %s21, 1
      %p118 = scmp.ne.s32.totalorder %s113, %s115
      %p119 = scmp.eq.s32.totalorder %s21, 0
      %p120 = por %p118, %p119
      %p121 = scmp.ne.s32.totalorder %s113, %s115
      %p122 = scmp.eq.s32.totalorder %s26, 1
      %p123 = por %p121, %p122
      %p124 = scmp.ne.s32.totalorder %s115, %s116
      %p125 = scmp.eq.s32.totalorder %s26, 0
      %p126 = por %p124, %p125
      %p127 = scmp.ne.s32.totalorder %s115, %s116
      %p128 = scmp.eq.s32.totalorder %s27, 1
      %p129 = por %p127, %p128
      %p131 = scmp.ne.s32.totalorder %s116, %s130
      %p132 = scmp.eq.s32.totalorder %s27, 0
      %p133 = por %p131, %p132
      %s135 = sadd.s32 %s134, 1
      %p138 = scmp.eq.s32.totalorder %s21, 1
      %p139 = scmp.ne.s32.totalorder %s134, %s136
      %p140 = scmp.eq.s32.totalorder %s21, 0
      %p141 = por %p139, %p140
      %p142 = scmp.ne.s32.totalorder %s134, %s136
      %p143 = scmp.eq.s32.totalorder %s26, 1
      %p144 = por %p142, %p143
      %p145 = scmp.ne.s32.totalorder %s136, %s137
      %p146 = scmp.eq.s32.totalorder %s26, 0
      %p147 = por %p145, %p146
      %p148 = scmp.ne.s32.totalorder %s136, %s137
      %p149 = scmp.eq.s32.totalorder %s27, 1
      %p150 = por %p148, %p149
      %p152 = scmp.ne.s32.totalorder %s137, %s151
      %p153 = scmp.eq.s32.totalorder %s27, 0
      %p154 = por %p152, %p153
      %s155 = ssub.s32 %s21, %s28
      %p156 = scmp.eq.s32.totalorder %s155, 0
      %s158 = sadd.s32 %s157, 1
      %s159 = scalar_select %p156, %s157, %s158
      %p162 = pneg %p156
      %p163 = scmp.eq.s32.totalorder %s21, 1
      %p164 = por %p162, %p163
      %p165 = scmp.ne.s32.totalorder %s157, %s160
      %p166 = scmp.eq.s32.totalorder %s21, 0
      %p167 = por %p165, %p166
      %p168 = scmp.ne.s32.totalorder %s157, %s160
      %p169 = scmp.eq.s32.totalorder %s26, 1
      %p170 = por %p168, %p169
      %p171 = scmp.ne.s32.totalorder %s160, %s161
      %p172 = scmp.eq.s32.totalorder %s26, 0
      %p173 = por %p171, %p172
      %p174 = scmp.ne.s32.totalorder %s160, %s161
      %p175 = scmp.eq.s32.totalorder %s27, 1
      %p176 = por %p174, %p175
      %p178 = scmp.ne.s32.totalorder %s161, %s177
      %p179 = scmp.eq.s32.totalorder %s27, 0
      %p180 = por %p178, %p179
      %s181 = ssub.s32 %s21, %s28
      %p182 = scmp.eq.s32.totalorder %s181, 0
      %s184 = sadd.s32 %s183, 1
      %s185 = scalar_select %p182, %s183, %s184
      %p188 = pneg %p182
      %p189 = scmp.eq.s32.totalorder %s21, 1
      %p190 = por %p188, %p189
      %p191 = scmp.ne.s32.totalorder %s183, %s186
      %p192 = scmp.eq.s32.totalorder %s21, 0
      %p193 = por %p191, %p192
      %p194 = scmp.ne.s32.totalorder %s183, %s186
      %p195 = scmp.eq.s32.totalorder %s26, 1
      %p196 = por %p194, %p195
      %p197 = scmp.ne.s32.totalorder %s186, %s187
      %p198 = scmp.eq.s32.totalorder %s26, 0
      %p199 = por %p197, %p198
      %p200 = scmp.ne.s32.totalorder %s186, %s187
      %p201 = scmp.eq.s32.totalorder %s27, 1
      %p202 = por %p200, %p201
      %p204 = scmp.ne.s32.totalorder %s187, %s203
      %p205 = scmp.eq.s32.totalorder %s27, 0
      %p206 = por %p204, %p205
      %p207 = scmp.le.s32.totalorder 1, %s21
      %p208 = scmp.lt.s32.totalorder %s21, 3
      %p209 = pnand %p207, %p208
      %p210 = pneg %p209
      // Predicated region
      $region9: #{lateral_block.1} parent=5 // pred_check
        _
      $region10: #{lateral_block.1} parent=5 // pred_check_branch
        %212 = sbr.rel (%p209) target = $region12
      $region11: #{lateral_block.1} parent=5 // pred_region
        %s213 = ssub.s32 %s21, 1
        // Predicated region
        $region13: #{lateral_block.1} parent=11 // pred_check
          %p214 = pneg %p42
        $region14: #{lateral_block.1} parent=11 // pred_check_branch
          %216 = sbr.rel (%p214) target = $region16
        $region15: #{lateral_block.1} parent=11 // pred_region
          _
        $region16: #{lateral_block.1} parent=11 // pred_fallthru
          _
        // Predicated region
        $region17: #{lateral_block.1} parent=11 // pred_check
          %p217 = pneg %p63
        $region18: #{lateral_block.1} parent=11 // pred_check_branch
          %219 = sbr.rel (%p217) target = $region20
        $region19: #{lateral_block.1} parent=11 // pred_region
          %s221 = ssub.s32 32, 32
          %222 = vsyncadd [#allocation6], %s221
          %s224 = sshll.u32 %s1, 4
          %s225 = int_to_ptr.vmem [resolvable:$true] %s224
          %227 = dma.vmem_to_smem %s225, 32, [#allocation4], [#allocation6]
        $region20: #{lateral_block.1} parent=11 // pred_fallthru
          _
        // Predicated region
        $region21: #{lateral_block.1} parent=11 // pred_check
          %p228 = pneg %p84
        $region22: #{lateral_block.1} parent=11 // pred_check_branch
          %230 = sbr.rel (%p228) target = $region24
        $region23: #{lateral_block.1} parent=11 // pred_region
          %s232 = ssub.s32 16, 16
          %233 = vsyncadd [#allocation8], %s232
          %s235 = sshll.u32 %s2, 4
          %s236 = int_to_ptr.vmem [resolvable:$true] %s235
          %238 = dma.vmem_to_smem %s236, 16, [#allocation7], [#allocation8]
        $region24: #{lateral_block.1} parent=11 // pred_fallthru
          _
        // Predicated region
        $region25: #{lateral_block.1} parent=11 // pred_check
          %p239 = pneg %p105
        $region26: #{lateral_block.1} parent=11 // pred_check_branch
          %241 = sbr.rel (%p239) target = $region28
        $region27: #{lateral_block.1} parent=11 // pred_region
          _
        $region28: #{lateral_block.1} parent=11 // pred_fallthru
          _
        // Predicated region
        $region29: #{lateral_block.1} parent=11 // pred_check
          %p242 = pneg %p126
        $region30: #{lateral_block.1} parent=11 // pred_check_branch
          %244 = sbr.rel (%p242) target = $region32
        $region31: #{lateral_block.1} parent=11 // pred_region
          %s246 = ssub.s32 32, 32
          %247 = vsyncadd [#allocation8], %s246
          %s249 = sshll.u32 %s4, 4
          %s250 = int_to_ptr.vmem [resolvable:$true] %s249
          %252 = dma.vmem_to_smem %s250, 32, [#allocation9], [#allocation8]
        $region32: #{lateral_block.1} parent=11 // pred_fallthru
          _
        // Predicated region
        $region33: #{lateral_block.1} parent=11 // pred_check
          %p253 = pneg %p147
        $region34: #{lateral_block.1} parent=11 // pred_check_branch
          %255 = sbr.rel (%p253) target = $region36
        $region35: #{lateral_block.1} parent=11 // pred_region
          %s257 = ssub.s32 16, 16
          %258 = vsyncadd [#allocation11], %s257
          %s260 = sshll.u32 %s5, 4
          %s261 = int_to_ptr.vmem [resolvable:$true] %s260
          %263 = dma.vmem_to_smem %s261, 16, [#allocation10], [#allocation11]
        $region36: #{lateral_block.1} parent=11 // pred_fallthru
          _
      $region12: #{lateral_block.1} parent=5 // pred_fallthru
        _
      %p264 = scmp.lt.s32.totalorder %s21, 2
      // Predicated region
      $region37: #{lateral_block.1} parent=5 // pred_check
        %p265 = pneg %p264
      $region38: #{lateral_block.1} parent=5 // pred_check_branch
        %267 = sbr.rel (%p265) target = $region40
      $region39: #{lateral_block.1} parent=5 // pred_region
        // Predicated region
        $region41: #{lateral_block.1} parent=39 // pred_check
          %p268 = pneg %p167
        $region42: #{lateral_block.1} parent=39 // pred_check_branch
          %270 = sbr.rel (%p268) target = $region44
        $region43: #{lateral_block.1} parent=39 // pred_region
          %p271 = scmp.lt.s32.totalorder %s21, 1
          %s272 = scalar_select %p271, %s21, 1
          %s273 = smul.addr %s272, 12
          %s274 = smul.addr %s273, 8
          %s275 = scalar_lea.vmem %s6, %s274
        $region44: #{lateral_block.1} parent=39 // pred_fallthru
          _
      $region40: #{lateral_block.1} parent=5 // pred_fallthru
        _
      %p276 = scmp.le.s32.totalorder 1, %s21
      %p277 = scmp.lt.s32.totalorder %s21, 3
      %p278 = pnand %p276, %p277
      %p279 = pneg %p278
      // Predicated region
      $region45: #{lateral_block.1} parent=5 // pred_check
        _
      $region46: #{lateral_block.1} parent=5 // pred_check_branch
        %281 = sbr.rel (%p278) target = $region48
      $region47: #{lateral_block.1} parent=5 // pred_region
        %s282 = ssub.s32 %s21, 1
        // Predicated region
        $region49: #{lateral_block.1} parent=47 // pred_check
          %p283 = pneg %p63
        $region50: #{lateral_block.1} parent=47 // pred_check_branch
          %285 = sbr.rel (%p283) target = $region52
        $region51: #{lateral_block.1} parent=47 // pred_region
          %286 = dma.done [#allocation6], 32
        $region52: #{lateral_block.1} parent=47 // pred_fallthru
          _
        // Predicated region
        $region53: #{lateral_block.1} parent=47 // pred_check
          %p287 = pneg %p84
        $region54: #{lateral_block.1} parent=47 // pred_check_branch
          %289 = sbr.rel (%p287) target = $region56
        $region55: #{lateral_block.1} parent=47 // pred_region
          %290 = dma.done [#allocation8], 16
        $region56: #{lateral_block.1} parent=47 // pred_fallthru
          _
        // Predicated region
        $region57: #{lateral_block.1} parent=47 // pred_check
          %p291 = pneg %p126
        $region58: #{lateral_block.1} parent=47 // pred_check_branch
          %293 = sbr.rel (%p291) target = $region60
        $region59: #{lateral_block.1} parent=47 // pred_region
          %294 = dma.done [#allocation8], 32
        $region60: #{lateral_block.1} parent=47 // pred_fallthru
          _
        // Predicated region
        $region61: #{lateral_block.1} parent=47 // pred_check
          %p295 = pneg %p147
        $region62: #{lateral_block.1} parent=47 // pred_check_branch
          %297 = sbr.rel (%p295) target = $region64
        $region63: #{lateral_block.1} parent=47 // pred_region
          %298 = dma.done [#allocation11], 16
        $region64: #{lateral_block.1} parent=47 // pred_fallthru
          _
        %299 = sfence
        %p300 = pneg %p42
        %p301 = pneg %p39
        %p302 = pneg %p63
        %p303 = pneg %p60
        %p304 = pneg %p84
        %p305 = pneg %p81
        %p306 = pneg %p105
        %p307 = pneg %p102
        %p308 = pneg %p126
        %p309 = pneg %p123
        %p310 = pneg %p147
        %p311 = pneg %p144
        %p312 = scmp.lt.s32.totalorder %s26, 1
        %s313 = scalar_select %p312, %s26, 1
        %s314 = smul.addr %s313, 12
        %s315 = smul.addr %s314, 8
        %s316 = scalar_lea.vmem %s6, %s315
        %p317 = pneg %p173
        %p318 = pneg %p170
        %p319 = pneg %p199
        %p320 = pneg %p196
        %s321 = sand.u32 %s186, 1
        %s322 = scalar_lea.sflag [#allocation5], %s321
        %s323 = sand.u32 %s186, 1
        %s324 = smul.addr %s323, 64
        %s325 = scalar_lea.vmem [#allocation12], %s324
        %p326 = scmp.lt.s32.totalorder %s26, 1
        %s327 = scalar_select %p326, %s26, 1
        %s328 = smul.addr %s327, 12
        %s329 = smul.addr %s328, 8
        %s330 = scalar_lea.vmem %s6, %s329
        %v331 = vld [vmem:[%s330] sm:$0xff]
        %v332 = vld [vmem:[%s330 + $0x8] sm:$0xff]
        %v333 = vld [vmem:[%s330 + $0x10] sm:$0xf]
        %v334 = vld [vmem:[%s330 + $0x18] sm:$0xff]
        %v335 = vld [vmem:[%s330 + $0x20] sm:$0xff]
        %v336 = vld [vmem:[%s330 + $0x28] sm:$0xf]
        %v337 = vld [vmem:[%s330 + $0x30] sm:$0xff]
        %v338 = vld [vmem:[%s330 + $0x38] sm:$0xff]
        %v339 = vld [vmem:[%s330 + $0x40] sm:$0xf]
        %v340 = vld [vmem:[%s330 + $0x48] sm:$0xff]
        %v341 = vld [vmem:[%s330 + $0x50] sm:$0xff]
        %v342 = vld [vmem:[%s330 + $0x58] sm:$0xf]
        %s343 = sld [smem:[#allocation2]]
        %vm344 = vcmp.gt.f32.partialorder %v331, 0.0
        %vm345 = vcmp.gt.f32.partialorder %v332, 0.0
        %vm346 = vcmp.gt.f32.partialorder %v333, 0.0
        %vm347 = vcmp.gt.f32.partialorder %v334, 0.0
        %vm348 = vcmp.gt.f32.partialorder %v335, 0.0
        %vm349 = vcmp.gt.f32.partialorder %v336, 0.0
        %vm350 = vcmp.gt.f32.partialorder %v337, 0.0
        %vm351 = vcmp.gt.f32.partialorder %v338, 0.0
        %vm352 = vcmp.gt.f32.partialorder %v339, 0.0
        %vm353 = vcmp.gt.f32.partialorder %v340, 0.0
        %vm354 = vcmp.gt.f32.partialorder %v341, 0.0
        %vm355 = vcmp.gt.f32.partialorder %v342, 0.0
        %v356 = vstv %s343
        %v357 = vmul.f32 %v356, %v331
        %v358 = vmul.f32 %v356, %v332
        %v359 = vmul.f32 %v356, %v333
        %v360 = vmul.f32 %v356, %v334
        %v361 = vmul.f32 %v356, %v335
        %v362 = vmul.f32 %v356, %v336
        %v363 = vmul.f32 %v356, %v337
        %v364 = vmul.f32 %v356, %v338
        %v365 = vmul.f32 %v356, %v339
        %v366 = vmul.f32 %v356, %v340
        %v367 = vmul.f32 %v356, %v341
        %v368 = vmul.f32 %v356, %v342
        %v369 = vsel %vm344, %v331, %v357
        %v370 = vsel %vm345, %v332, %v358
        %v371 = vsel %vm346, %v333, %v359
        %v372 = vsel %vm347, %v334, %v360
        %v373 = vsel %vm348, %v335, %v361
        %v374 = vsel %vm349, %v336, %v362
        %v375 = vsel %vm350, %v337, %v363
        %v376 = vsel %vm351, %v338, %v364
        %v377 = vsel %vm352, %v339, %v365
        %v378 = vsel %vm353, %v340, %v366
        %v379 = vsel %vm354, %v341, %v367
        %v380 = vsel %vm355, %v342, %v368
        %v381 = vlaneseq
        %v382 = vshrl.u32 %v381, 7
        %v383 = vadd.s32 %v382, 8
        %v384 = vadd.s32 %v382, 16
        %v385 = vlaneseq
        %v386 = vand.u32 %v385, 127
        %vm387 = vcmp.ge.s32.totalorder %v382, 1
        %vm388 = vcmp.ge.s32.totalorder %v383, 1
        %vm389 = vcmp.ge.s32.totalorder %v384, 1
        %vm390 = vcmp.le.s32.totalorder %v382, 16
        %vm391 = vcmp.le.s32.totalorder %v383, 16
        %vm392 = vcmp.le.s32.totalorder %v384, 16
        %vm393 = vmand %vm387, %vm390
        %vm394 = vmand %vm388, %vm391
        %vm395 = vmand %vm389, %vm392
        %vm396 = vcmp.ge.s32.totalorder %v386, 1
        %vm397 = vmand %vm393, %vm396
        %vm398 = vmand %vm394, %vm396
        %vm399 = vmand %vm395, %vm396
        %vm400 = vcmp.le.s32.totalorder %v386, 16
        %vm401 = vmand %vm397, %vm400
        %vm402 = vmand %vm398, %vm400
        %vm403 = vmand %vm399, %vm400
        %s404 = sld [smem:[#allocation3]]
        %s405 = sld [smem:[#allocation7]]
        %v406 = vstv %s405
        %s407 = sld [smem:[#allocation4]]
        %v408 = vstv %s407
        %v409 = vmul.f32 %v408, %v369
        %v410 = vmul.f32 %v408, %v370
        %v411 = vmul.f32 %v408, %v371
        %v412 = vadd.f32 %v406, %v409
        %v413 = vadd.f32 %v406, %v410
        %v414 = vadd.f32 %v406, %v411
        %s415 = sld [smem:[#allocation4 + $0x1]]
        %v416 = vstv %s415
        %v417 = vmul.f32 %v416, %v369
        %v418 = vmul.f32 %v416, %v370
        %v419 = vmul.f32 %v416, %v371
        %423 = vrot.lane.b32.xlu0 %v417, 127
        %v424 = vpop.permute.xlu0 %423
        %425 = vrot.lane.b32.xlu0 %v418, 127
        %v426 = vpop.permute.xlu0 %425
        %427 = vrot.lane.b32.xlu0 %v419, 127
        %v428 = vpop.permute.xlu0 %427
        %v432 = vadd.f32 %v412, %v424
        %v433 = vadd.f32 %v413, %v426
        %v434 = vadd.f32 %v414, %v428
        %s435 = sld [smem:[#allocation4 + $0x2]]
        %v436 = vstv %s435
        %v437 = vmul.f32 %v436, %v369
        %v438 = vmul.f32 %v436, %v370
        %v439 = vmul.f32 %v436, %v371
        %443 = vrot.lane.b32.xlu0 %v437, 126
        %v444 = vpop.permute.xlu0 %443
        %445 = vrot.lane.b32.xlu0 %v438, 126
        %v446 = vpop.permute.xlu0 %445
        %447 = vrot.lane.b32.xlu0 %v439, 126
        %v448 = vpop.permute.xlu0 %447
        %v452 = vadd.f32 %v432, %v444
        %v453 = vadd.f32 %v433, %v446
        %v454 = vadd.f32 %v434, %v448
        %s455 = sld [smem:[#allocation4 + $0x3]]
        %v456 = vstv %s455
        %v457 = vmul.f32 %v456, %v369
        %v458 = vmul.f32 %v456, %v370
        %v459 = vmul.f32 %v456, %v371
        %vm463 = vcmask 1046528
        %v464 = vrot.slane %v457, 1
        %v465 = vrot.slane %v458, 1
        %v466 = vsel %vm463, %v464, %v465
        %v467 = vrot.slane %v459, 1
        %v468 = vsel %vm463, %v465, %v467
        %v472 = vadd.f32 %v452, %v466
        %v473 = vadd.f32 %v453, %v468
        %v474 = vadd.f32 %v454, %v467
        %s475 = sld [smem:[#allocation4 + $0x4]]
        %v476 = vstv %s475
        %v477 = vmul.f32 %v476, %v369
        %v478 = vmul.f32 %v476, %v370
        %v479 = vmul.f32 %v476, %v371
        %v483 = vrot.slane %v477, 1
        %v484 = vrot.slane %v478, 1
        %v485 = vsel %vm463, %v483, %v484
        %v486 = vrot.slane %v479, 1
        %v487 = vsel %vm463, %v484, %v486
        %488 = vrot.lane.b32.xlu0 %v485, 127
        %v489 = vpop.permute.xlu0 %488
        %490 = vrot.lane.b32.xlu0 %v487, 127
        %v491 = vpop.permute.xlu0 %490
        %492 = vrot.lane.b32.xlu0 %v486, 127
        %v493 = vpop.permute.xlu0 %492
        %v497 = vadd.f32 %v472, %v489
        %v498 = vadd.f32 %v473, %v491
        %v499 = vadd.f32 %v474, %v493
        %s500 = sld [smem:[#allocation4 + $0x5]]
        %v501 = vstv %s500
        %v502 = vmul.f32 %v501, %v369
        %v503 = vmul.f32 %v501, %v370
        %v504 = vmul.f32 %v501, %v371
        %v508 = vrot.slane %v502, 1
        %v509 = vrot.slane %v503, 1
        %v510 = vsel %vm463, %v508, %v509
        %v511 = vrot.slane %v504, 1
        %v512 = vsel %vm463, %v509, %v511
        %513 = vrot.lane.b32.xlu0 %v510, 126
        %v514 = vpop.permute.xlu0 %513
        %515 = vrot.lane.b32.xlu0 %v512, 126
        %v516 = vpop.permute.xlu0 %515
        %517 = vrot.lane.b32.xlu0 %v511, 126
        %v518 = vpop.permute.xlu0 %517
        %v522 = vadd.f32 %v497, %v514
        %v523 = vadd.f32 %v498, %v516
        %v524 = vadd.f32 %v499, %v518
        %s525 = sld [smem:[#allocation4 + $0x6]]
        %v526 = vstv %s525
        %v527 = vmul.f32 %v526, %v369
        %v528 = vmul.f32 %v526, %v370
        %v529 = vmul.f32 %v526, %v371
        %vm533 = vcmask 1045504
        %v534 = vrot.slane %v527, 2
        %v535 = vrot.slane %v528, 2
        %v536 = vsel %vm533, %v534, %v535
        %v537 = vrot.slane %v529, 2
        %v538 = vsel %vm533, %v535, %v537
        %v542 = vadd.f32 %v522, %v536
        %v543 = vadd.f32 %v523, %v538
        %v544 = vadd.f32 %v524, %v537
        %s545 = sld [smem:[#allocation4 + $0x7]]
        %v546 = vstv %s545
        %v547 = vmul.f32 %v546, %v369
        %v548 = vmul.f32 %v546, %v370
        %v549 = vmul.f32 %v546, %v371
        %v553 = vrot.slane %v547, 2
        %v554 = vrot.slane %v548, 2
        %v555 = vsel %vm533, %v553, %v554
        %v556 = vrot.slane %v549, 2
        %v557 = vsel %vm533, %v554, %v556
        %558 = vrot.lane.b32.xlu0 %v555, 127
        %v559 = vpop.permute.xlu0 %558
        %560 = vrot.lane.b32.xlu0 %v557, 127
        %v561 = vpop.permute.xlu0 %560
        %562 = vrot.lane.b32.xlu0 %v556, 127
        %v563 = vpop.permute.xlu0 %562
        %v567 = vadd.f32 %v542, %v559
        %v568 = vadd.f32 %v543, %v561
        %v569 = vadd.f32 %v544, %v563
        %s570 = sld [smem:[#allocation4 + $0x8]]
        %v571 = vstv %s570
        %v572 = vmul.f32 %v571, %v369
        %v573 = vmul.f32 %v571, %v370
        %v574 = vmul.f32 %v571, %v371
        %v578 = vrot.slane %v572, 2
        %v579 = vrot.slane %v573, 2
        %v580 = vsel %vm533, %v578, %v579
        %v581 = vrot.slane %v574, 2
        %v582 = vsel %vm533, %v579, %v581
        %583 = vrot.lane.b32.xlu0 %v580, 126
        %v584 = vpop.permute.xlu0 %583
        %585 = vrot.lane.b32.xlu0 %v582, 126
        %v586 = vpop.permute.xlu0 %585
        %587 = vrot.lane.b32.xlu0 %v581, 126
        %v588 = vpop.permute.xlu0 %587
        %v592 = vadd.f32 %v567, %v584
        %v593 = vadd.f32 %v568, %v586
        %v594 = vadd.f32 %v569, %v588
        %s595 = sld [smem:[#allocation4 + $0x9]]
        %v596 = vstv %s595
        %v597 = vmul.f32 %v596, %v372
        %v598 = vmul.f32 %v596, %v373
        %v599 = vmul.f32 %v596, %v374
        %v600 = vadd.f32 %v592, %v597
        %v601 = vadd.f32 %v593, %v598
        %v602 = vadd.f32 %v594, %v599
        %s603 = sld [smem:[#allocation4 + $0xa]]
        %v604 = vstv %s603
        %v605 = vmul.f32 %v604, %v372
        %v606 = vmul.f32 %v604, %v373
        %v607 = vmul.f32 %v604, %v374
        %611 = vrot.lane.b32.xlu0 %v605, 127
        %v612 = vpop.permute.xlu0 %611
        %613 = vrot.lane.b32.xlu0 %v606, 127
        %v614 = vpop.permute.xlu0 %613
        %615 = vrot.lane.b32.xlu0 %v607, 127
        %v616 = vpop.permute.xlu0 %615
        %v620 = vadd.f32 %v600, %v612
        %v621 = vadd.f32 %v601, %v614
        %v622 = vadd.f32 %v602, %v616
        %s623 = sld [smem:[#allocation4 + $0xb]]
        %v624 = vstv %s623
        %v625 = vmul.f32 %v624, %v372
        %v626 = vmul.f32 %v624, %v373
        %v627 = vmul.f32 %v624, %v374
        %631 = vrot.lane.b32.xlu0 %v625, 126
        %v632 = vpop.permute.xlu0 %631
        %633 = vrot.lane.b32.xlu0 %v626, 126
        %v634 = vpop.permute.xlu0 %633
        %635 = vrot.lane.b32.xlu0 %v627, 126
        %v636 = vpop.permute.xlu0 %635
        %v640 = vadd.f32 %v620, %v632
        %v641 = vadd.f32 %v621, %v634
        %v642 = vadd.f32 %v622, %v636
        %s643 = sld [smem:[#allocation4 + $0xc]]
        %v644 = vstv %s643
        %v645 = vmul.f32 %v644, %v372
        %v646 = vmul.f32 %v644, %v373
        %v647 = vmul.f32 %v644, %v374
        %v651 = vrot.slane %v645, 1
        %v652 = vrot.slane %v646, 1
        %v653 = vsel %vm463, %v651, %v652
        %v654 = vrot.slane %v647, 1
        %v655 = vsel %vm463, %v652, %v654
        %v659 = vadd.f32 %v640, %v653
        %v660 = vadd.f32 %v641, %v655
        %v661 = vadd.f32 %v642, %v654
        %s662 = sld [smem:[#allocation4 + $0xd]]
        %v663 = vstv %s662
        %v664 = vmul.f32 %v663, %v372
        %v665 = vmul.f32 %v663, %v373
        %v666 = vmul.f32 %v663, %v374
        %v670 = vrot.slane %v664, 1
        %v671 = vrot.slane %v665, 1
        %v672 = vsel %vm463, %v670, %v671
        %v673 = vrot.slane %v666, 1
        %v674 = vsel %vm463, %v671, %v673
        %675 = vrot.lane.b32.xlu0 %v672, 127
        %v676 = vpop.permute.xlu0 %675
        %677 = vrot.lane.b32.xlu0 %v674, 127
        %v678 = vpop.permute.xlu0 %677
        %679 = vrot.lane.b32.xlu0 %v673, 127
        %v680 = vpop.permute.xlu0 %679
        %v684 = vadd.f32 %v659, %v676
        %v685 = vadd.f32 %v660, %v678
        %v686 = vadd.f32 %v661, %v680
        %s687 = sld [smem:[#allocation4 + $0xe]]
        %v688 = vstv %s687
        %v689 = vmul.f32 %v688, %v372
        %v690 = vmul.f32 %v688, %v373
        %v691 = vmul.f32 %v688, %v374
        %v695 = vrot.slane %v689, 1
        %v696 = vrot.slane %v690, 1
        %v697 = vsel %vm463, %v695, %v696
        %v698 = vrot.slane %v691, 1
        %v699 = vsel %vm463, %v696, %v698
        %700 = vrot.lane.b32.xlu0 %v697, 126
        %v701 = vpop.permute.xlu0 %700
        %702 = vrot.lane.b32.xlu0 %v699, 126
        %v703 = vpop.permute.xlu0 %702
        %704 = vrot.lane.b32.xlu0 %v698, 126
        %v705 = vpop.permute.xlu0 %704
        %v709 = vadd.f32 %v684, %v701
        %v710 = vadd.f32 %v685, %v703
        %v711 = vadd.f32 %v686, %v705
        %s712 = sld [smem:[#allocation4 + $0xf]]
        %v713 = vstv %s712
        %v714 = vmul.f32 %v713, %v372
        %v715 = vmul.f32 %v713, %v373
        %v716 = vmul.f32 %v713, %v374
        %v720 = vrot.slane %v714, 2
        %v721 = vrot.slane %v715, 2
        %v722 = vsel %vm533, %v720, %v721
        %v723 = vrot.slane %v716, 2
        %v724 = vsel %vm533, %v721, %v723
        %v728 = vadd.f32 %v709, %v722
        %v729 = vadd.f32 %v710, %v724
        %v730 = vadd.f32 %v711, %v723
        %s731 = sld [smem:[#allocation4 + $0x10]]
        %v732 = vstv %s731
        %v733 = vmul.f32 %v732, %v372
        %v734 = vmul.f32 %v732, %v373
        %v735 = vmul.f32 %v732, %v374
        %v739 = vrot.slane %v733, 2
        %v740 = vrot.slane %v734, 2
        %v741 = vsel %vm533, %v739, %v740
        %v742 = vrot.slane %v735, 2
        %v743 = vsel %vm533, %v740, %v742
        %744 = vrot.lane.b32.xlu0 %v741, 127
        %v745 = vpop.permute.xlu0 %744
        %746 = vrot.lane.b32.xlu0 %v743, 127
        %v747 = vpop.permute.xlu0 %746
        %748 = vrot.lane.b32.xlu0 %v742, 127
        %v749 = vpop.permute.xlu0 %748
        %v753 = vadd.f32 %v728, %v745
        %v754 = vadd.f32 %v729, %v747
        %v755 = vadd.f32 %v730, %v749
        %s756 = sld [smem:[#allocation4 + $0x11]]
        %v757 = vstv %s756
        %v758 = vmul.f32 %v757, %v372
        %v759 = vmul.f32 %v757, %v373
        %v760 = vmul.f32 %v757, %v374
        %v764 = vrot.slane %v758, 2
        %v765 = vrot.slane %v759, 2
        %v766 = vsel %vm533, %v764, %v765
        %v767 = vrot.slane %v760, 2
        %v768 = vsel %vm533, %v765, %v767
        %769 = vrot.lane.b32.xlu0 %v766, 126
        %v770 = vpop.permute.xlu0 %769
        %771 = vrot.lane.b32.xlu0 %v768, 126
        %v772 = vpop.permute.xlu0 %771
        %773 = vrot.lane.b32.xlu0 %v767, 126
        %v774 = vpop.permute.xlu0 %773
        %v778 = vadd.f32 %v753, %v770
        %v779 = vadd.f32 %v754, %v772
        %v780 = vadd.f32 %v755, %v774
        %s781 = sld [smem:[#allocation4 + $0x12]]
        %v782 = vstv %s781
        %v783 = vmul.f32 %v782, %v375
        %v784 = vmul.f32 %v782, %v376
        %v785 = vmul.f32 %v782, %v377
        %v786 = vadd.f32 %v778, %v783
        %v787 = vadd.f32 %v779, %v784
        %v788 = vadd.f32 %v780, %v785
        %s789 = sld [smem:[#allocation4 + $0x13]]
        %v790 = vstv %s789
        %v791 = vmul.f32 %v790, %v375
        %v792 = vmul.f32 %v790, %v376
        %v793 = vmul.f32 %v790, %v377
        %797 = vrot.lane.b32.xlu0 %v791, 127
        %v798 = vpop.permute.xlu0 %797
        %799 = vrot.lane.b32.xlu0 %v792, 127
        %v800 = vpop.permute.xlu0 %799
        %801 = vrot.lane.b32.xlu0 %v793, 127
        %v802 = vpop.permute.xlu0 %801
        %v806 = vadd.f32 %v786, %v798
        %v807 = vadd.f32 %v787, %v800
        %v808 = vadd.f32 %v788, %v802
        %s809 = sld [smem:[#allocation4 + $0x14]]
        %v810 = vstv %s809
        %v811 = vmul.f32 %v810, %v375
        %v812 = vmul.f32 %v810, %v376
        %v813 = vmul.f32 %v810, %v377
        %817 = vrot.lane.b32.xlu0 %v811, 126
        %v818 = vpop.permute.xlu0 %817
        %819 = vrot.lane.b32.xlu0 %v812, 126
        %v820 = vpop.permute.xlu0 %819
        %821 = vrot.lane.b32.xlu0 %v813, 126
        %v822 = vpop.permute.xlu0 %821
        %v826 = vadd.f32 %v806, %v818
        %v827 = vadd.f32 %v807, %v820
        %v828 = vadd.f32 %v808, %v822
        %s829 = sld [smem:[#allocation4 + $0x15]]
        %v830 = vstv %s829
        %v831 = vmul.f32 %v830, %v375
        %v832 = vmul.f32 %v830, %v376
        %v833 = vmul.f32 %v830, %v377
        %v837 = vrot.slane %v831, 1
        %v838 = vrot.slane %v832, 1
        %v839 = vsel %vm463, %v837, %v838
        %v840 = vrot.slane %v833, 1
        %v841 = vsel %vm463, %v838, %v840
        %v845 = vadd.f32 %v826, %v839
        %v846 = vadd.f32 %v827, %v841
        %v847 = vadd.f32 %v828, %v840
        %s848 = sld [smem:[#allocation4 + $0x16]]
        %v849 = vstv %s848
        %v850 = vmul.f32 %v849, %v375
        %v851 = vmul.f32 %v849, %v376
        %v852 = vmul.f32 %v849, %v377
        %v856 = vrot.slane %v850, 1
        %v857 = vrot.slane %v851, 1
        %v858 = vsel %vm463, %v856, %v857
        %v859 = vrot.slane %v852, 1
        %v860 = vsel %vm463, %v857, %v859
        %861 = vrot.lane.b32.xlu0 %v858, 127
        %v862 = vpop.permute.xlu0 %861
        %863 = vrot.lane.b32.xlu0 %v860, 127
        %v864 = vpop.permute.xlu0 %863
        %865 = vrot.lane.b32.xlu0 %v859, 127
        %v866 = vpop.permute.xlu0 %865
        %v870 = vadd.f32 %v845, %v862
        %v871 = vadd.f32 %v846, %v864
        %v872 = vadd.f32 %v847, %v866
        %s873 = sld [smem:[#allocation4 + $0x17]]
        %v874 = vstv %s873
        %v875 = vmul.f32 %v874, %v375
        %v876 = vmul.f32 %v874, %v376
        %v877 = vmul.f32 %v874, %v377
        %v881 = vrot.slane %v875, 1
        %v882 = vrot.slane %v876, 1
        %v883 = vsel %vm463, %v881, %v882
        %v884 = vrot.slane %v877, 1
        %v885 = vsel %vm463, %v882, %v884
        %886 = vrot.lane.b32.xlu0 %v883, 126
        %v887 = vpop.permute.xlu0 %886
        %888 = vrot.lane.b32.xlu0 %v885, 126
        %v889 = vpop.permute.xlu0 %888
        %890 = vrot.lane.b32.xlu0 %v884, 126
        %v891 = vpop.permute.xlu0 %890
        %v895 = vadd.f32 %v870, %v887
        %v896 = vadd.f32 %v871, %v889
        %v897 = vadd.f32 %v872, %v891
        %s898 = sld [smem:[#allocation4 + $0x18]]
        %v899 = vstv %s898
        %v900 = vmul.f32 %v899, %v375
        %v901 = vmul.f32 %v899, %v376
        %v902 = vmul.f32 %v899, %v377
        %v906 = vrot.slane %v900, 2
        %v907 = vrot.slane %v901, 2
        %v908 = vsel %vm533, %v906, %v907
        %v909 = vrot.slane %v902, 2
        %v910 = vsel %vm533, %v907, %v909
        %v914 = vadd.f32 %v895, %v908
        %v915 = vadd.f32 %v896, %v910
        %v916 = vadd.f32 %v897, %v909
        %s917 = sld [smem:[#allocation4 + $0x19]]
        %v918 = vstv %s917
        %v919 = vmul.f32 %v918, %v375
        %v920 = vmul.f32 %v918, %v376
        %v921 = vmul.f32 %v918, %v377
        %v925 = vrot.slane %v919, 2
        %v926 = vrot.slane %v920, 2
        %v927 = vsel %vm533, %v925, %v926
        %v928 = vrot.slane %v921, 2
        %v929 = vsel %vm533, %v926, %v928
        %930 = vrot.lane.b32.xlu0 %v927, 127
        %v931 = vpop.permute.xlu0 %930
        %932 = vrot.lane.b32.xlu0 %v929, 127
        %v933 = vpop.permute.xlu0 %932
        %934 = vrot.lane.b32.xlu0 %v928, 127
        %v935 = vpop.permute.xlu0 %934
        %v939 = vadd.f32 %v914, %v931
        %v940 = vadd.f32 %v915, %v933
        %v941 = vadd.f32 %v916, %v935
        %s942 = sld [smem:[#allocation4 + $0x1a]]
        %v943 = vstv %s942
        %v944 = vmul.f32 %v943, %v375
        %v945 = vmul.f32 %v943, %v376
        %v946 = vmul.f32 %v943, %v377
        %v950 = vrot.slane %v944, 2
        %v951 = vrot.slane %v945, 2
        %v952 = vsel %vm533, %v950, %v951
        %v953 = vrot.slane %v946, 2
        %v954 = vsel %vm533, %v951, %v953
        %955 = vrot.lane.b32.xlu0 %v952, 126
        %v956 = vpop.permute.xlu0 %955
        %957 = vrot.lane.b32.xlu0 %v954, 126
        %v958 = vpop.permute.xlu0 %957
        %959 = vrot.lane.b32.xlu0 %v953, 126
        %v960 = vpop.permute.xlu0 %959
        %v964 = vadd.f32 %v939, %v956
        %v965 = vadd.f32 %v940, %v958
        %v966 = vadd.f32 %v941, %v960
        %s967 = sld [smem:[#allocation4 + $0x1b]]
        %v968 = vstv %s967
        %v969 = vmul.f32 %v968, %v378
        %v970 = vmul.f32 %v968, %v379
        %v971 = vmul.f32 %v968, %v380
        %v972 = vadd.f32 %v964, %v969
        %v973 = vadd.f32 %v965, %v970
        %v974 = vadd.f32 %v966, %v971
        %s975 = sld [smem:[#allocation4 + $0x1c]]
        %v976 = vstv %s975
        %v977 = vmul.f32 %v976, %v378
        %v978 = vmul.f32 %v976, %v379
        %v979 = vmul.f32 %v976, %v380
        %983 = vrot.lane.b32.xlu0 %v977, 127
        %v984 = vpop.permute.xlu0 %983
        %985 = vrot.lane.b32.xlu0 %v978, 127
        %v986 = vpop.permute.xlu0 %985
        %987 = vrot.lane.b32.xlu0 %v979, 127
        %v988 = vpop.permute.xlu0 %987
        %v992 = vadd.f32 %v972, %v984
        %v993 = vadd.f32 %v973, %v986
        %v994 = vadd.f32 %v974, %v988
        %s995 = sld [smem:[#allocation4 + $0x1d]]
        %v996 = vstv %s995
        %v997 = vmul.f32 %v996, %v378
        %v998 = vmul.f32 %v996, %v379
        %v999 = vmul.f32 %v996, %v380
        %1003 = vrot.lane.b32.xlu0 %v997, 126
        %v1004 = vpop.permute.xlu0 %1003
        %1005 = vrot.lane.b32.xlu0 %v998, 126
        %v1006 = vpop.permute.xlu0 %1005
        %1007 = vrot.lane.b32.xlu0 %v999, 126
        %v1008 = vpop.permute.xlu0 %1007
        %v1012 = vadd.f32 %v992, %v1004
        %v1013 = vadd.f32 %v993, %v1006
        %v1014 = vadd.f32 %v994, %v1008
        %s1015 = sld [smem:[#allocation4 + $0x1e]]
        %v1016 = vstv %s1015
        %v1017 = vmul.f32 %v1016, %v378
        %v1018 = vmul.f32 %v1016, %v379
        %v1019 = vmul.f32 %v1016, %v380
        %v1023 = vrot.slane %v1017, 1
        %v1024 = vrot.slane %v1018, 1
        %v1025 = vsel %vm463, %v1023, %v1024
        %v1026 = vrot.slane %v1019, 1
        %v1027 = vsel %vm463, %v1024, %v1026
        %v1031 = vadd.f32 %v1012, %v1025
        %v1032 = vadd.f32 %v1013, %v1027
        %v1033 = vadd.f32 %v1014, %v1026
        %s1034 = sld [smem:[#allocation4 + $0x1f]]
        %v1035 = vstv %s1034
        %v1036 = vmul.f32 %v1035, %v378
        %v1037 = vmul.f32 %v1035, %v379
        %v1038 = vmul.f32 %v1035, %v380
        %v1042 = vrot.slane %v1036, 1
        %v1043 = vrot.slane %v1037, 1
        %v1044 = vsel %vm463, %v1042, %v1043
        %v1045 = vrot.slane %v1038, 1
        %v1046 = vsel %vm463, %v1043, %v1045
        %1047 = vrot.lane.b32.xlu0 %v1044, 127
        %v1048 = vpop.permute.xlu0 %1047
        %1049 = vrot.lane.b32.xlu0 %v1046, 127
        %v1050 = vpop.permute.xlu0 %1049
        %1051 = vrot.lane.b32.xlu0 %v1045, 127
        %v1052 = vpop.permute.xlu0 %1051
        %v1056 = vadd.f32 %v1031, %v1048
        %v1057 = vadd.f32 %v1032, %v1050
        %v1058 = vadd.f32 %v1033, %v1052
        %s1059 = sld [smem:[#allocation4 + $0x20]]
        %v1060 = vstv %s1059
        %v1061 = vmul.f32 %v1060, %v378
        %v1062 = vmul.f32 %v1060, %v379
        %v1063 = vmul.f32 %v1060, %v380
        %v1067 = vrot.slane %v1061, 1
        %v1068 = vrot.slane %v1062, 1
        %v1069 = vsel %vm463, %v1067, %v1068
        %v1070 = vrot.slane %v1063, 1
        %v1071 = vsel %vm463, %v1068, %v1070
        %1072 = vrot.lane.b32.xlu0 %v1069, 126
        %v1073 = vpop.permute.xlu0 %1072
        %1074 = vrot.lane.b32.xlu0 %v1071, 126
        %v1075 = vpop.permute.xlu0 %1074
        %1076 = vrot.lane.b32.xlu0 %v1070, 126
        %v1077 = vpop.permute.xlu0 %1076
        %v1081 = vadd.f32 %v1056, %v1073
        %v1082 = vadd.f32 %v1057, %v1075
        %v1083 = vadd.f32 %v1058, %v1077
        %s1084 = sld [smem:[#allocation4 + $0x21]]
        %v1085 = vstv %s1084
        %v1086 = vmul.f32 %v1085, %v378
        %v1087 = vmul.f32 %v1085, %v379
        %v1088 = vmul.f32 %v1085, %v380
        %v1092 = vrot.slane %v1086, 2
        %v1093 = vrot.slane %v1087, 2
        %v1094 = vsel %vm533, %v1092, %v1093
        %v1095 = vrot.slane %v1088, 2
        %v1096 = vsel %vm533, %v1093, %v1095
        %v1100 = vadd.f32 %v1081, %v1094
        %v1101 = vadd.f32 %v1082, %v1096
        %v1102 = vadd.f32 %v1083, %v1095
        %s1103 = sld [smem:[#allocation4 + $0x22]]
        %v1104 = vstv %s1103
        %v1105 = vmul.f32 %v1104, %v378
        %v1106 = vmul.f32 %v1104, %v379
        %v1107 = vmul.f32 %v1104, %v380
        %v1111 = vrot.slane %v1105, 2
        %v1112 = vrot.slane %v1106, 2
        %v1113 = vsel %vm533, %v1111, %v1112
        %v1114 = vrot.slane %v1107, 2
        %v1115 = vsel %vm533, %v1112, %v1114
        %1116 = vrot.lane.b32.xlu0 %v1113, 127
        %v1117 = vpop.permute.xlu0 %1116
        %1118 = vrot.lane.b32.xlu0 %v1115, 127
        %v1119 = vpop.permute.xlu0 %1118
        %1120 = vrot.lane.b32.xlu0 %v1114, 127
        %v1121 = vpop.permute.xlu0 %1120
        %v1125 = vadd.f32 %v1100, %v1117
        %v1126 = vadd.f32 %v1101, %v1119
        %v1127 = vadd.f32 %v1102, %v1121
        %s1128 = sld [smem:[#allocation4 + $0x23]]
        %v1129 = vstv %s1128
        %v1130 = vmul.f32 %v1129, %v378
        %v1131 = vmul.f32 %v1129, %v379
        %v1132 = vmul.f32 %v1129, %v380
        %v1136 = vrot.slane %v1130, 2
        %v1137 = vrot.slane %v1131, 2
        %v1138 = vsel %vm533, %v1136, %v1137
        %v1139 = vrot.slane %v1132, 2
        %v1140 = vsel %vm533, %v1137, %v1139
        %1141 = vrot.lane.b32.xlu0 %v1138, 126
        %v1142 = vpop.permute.xlu0 %1141
        %1143 = vrot.lane.b32.xlu0 %v1140, 126
        %v1144 = vpop.permute.xlu0 %1143
        %1145 = vrot.lane.b32.xlu0 %v1139, 126
        %v1146 = vpop.permute.xlu0 %1145
        %v1150 = vadd.f32 %v1125, %v1142
        %v1151 = vadd.f32 %v1126, %v1144
        %v1152 = vadd.f32 %v1127, %v1146
        %v1153 = vsel %vm401, %v1150, 0.0
        %v1154 = vsel %vm402, %v1151, 0.0
        %v1155 = vsel %vm403, %v1152, 0.0
        %vm1156 = vcmp.gt.f32.partialorder %v1153, 0.0
        %vm1157 = vcmp.gt.f32.partialorder %v1154, 0.0
        %vm1158 = vcmp.gt.f32.partialorder %v1155, 0.0
        %v1159 = vstv %s404
        %v1160 = vmul.f32 %v1159, %v1153
        %v1161 = vmul.f32 %v1159, %v1154
        %v1162 = vmul.f32 %v1159, %v1155
        %v1163 = vsel %vm1156, %v1153, %v1160
        %v1164 = vsel %vm1157, %v1154, %v1161
        %v1165 = vsel %vm1158, %v1155, %v1162
        %s1166 = sld [smem:[#allocation7 + $0x1]]
        %v1167 = vstv %s1166
        %s1168 = sld [smem:[#allocation4 + $0x24]]
        %v1169 = vstv %s1168
        %v1170 = vmul.f32 %v1169, %v369
        %v1171 = vmul.f32 %v1169, %v370
        %v1172 = vmul.f32 %v1169, %v371
        %v1173 = vadd.f32 %v1167, %v1170
        %v1174 = vadd.f32 %v1167, %v1171
        %v1175 = vadd.f32 %v1167, %v1172
        %s1176 = sld [smem:[#allocation4 + $0x25]]
        %v1177 = vstv %s1176
        %v1178 = vmul.f32 %v1177, %v369
        %v1179 = vmul.f32 %v1177, %v370
        %v1180 = vmul.f32 %v1177, %v371
        %1184 = vrot.lane.b32.xlu0 %v1178, 127
        %v1185 = vpop.permute.xlu0 %1184
        %1186 = vrot.lane.b32.xlu0 %v1179, 127
        %v1187 = vpop.permute.xlu0 %1186
        %1188 = vrot.lane.b32.xlu0 %v1180, 127
        %v1189 = vpop.permute.xlu0 %1188
        %v1193 = vadd.f32 %v1173, %v1185
        %v1194 = vadd.f32 %v1174, %v1187
        %v1195 = vadd.f32 %v1175, %v1189
        %s1196 = sld [smem:[#allocation4 + $0x26]]
        %v1197 = vstv %s1196
        %v1198 = vmul.f32 %v1197, %v369
        %v1199 = vmul.f32 %v1197, %v370
        %v1200 = vmul.f32 %v1197, %v371
        %1204 = vrot.lane.b32.xlu0 %v1198, 126
        %v1205 = vpop.permute.xlu0 %1204
        %1206 = vrot.lane.b32.xlu0 %v1199, 126
        %v1207 = vpop.permute.xlu0 %1206
        %1208 = vrot.lane.b32.xlu0 %v1200, 126
        %v1209 = vpop.permute.xlu0 %1208
        %v1213 = vadd.f32 %v1193, %v1205
        %v1214 = vadd.f32 %v1194, %v1207
        %v1215 = vadd.f32 %v1195, %v1209
        %s1216 = sld [smem:[#allocation4 + $0x27]]
        %v1217 = vstv %s1216
        %v1218 = vmul.f32 %v1217, %v369
        %v1219 = vmul.f32 %v1217, %v370
        %v1220 = vmul.f32 %v1217, %v371
        %v1224 = vrot.slane %v1218, 1
        %v1225 = vrot.slane %v1219, 1
        %v1226 = vsel %vm463, %v1224, %v1225
        %v1227 = vrot.slane %v1220, 1
        %v1228 = vsel %vm463, %v1225, %v1227
        %v1232 = vadd.f32 %v1213, %v1226
        %v1233 = vadd.f32 %v1214, %v1228
        %v1234 = vadd.f32 %v1215, %v1227
        %s1235 = sld [smem:[#allocation4 + $0x28]]
        %v1236 = vstv %s1235
        %v1237 = vmul.f32 %v1236, %v369
        %v1238 = vmul.f32 %v1236, %v370
        %v1239 = vmul.f32 %v1236, %v371
        %v1243 = vrot.slane %v1237, 1
        %v1244 = vrot.slane %v1238, 1
        %v1245 = vsel %vm463, %v1243, %v1244
        %v1246 = vrot.slane %v1239, 1
        %v1247 = vsel %vm463, %v1244, %v1246
        %1248 = vrot.lane.b32.xlu0 %v1245, 127
        %v1249 = vpop.permute.xlu0 %1248
        %1250 = vrot.lane.b32.xlu0 %v1247, 127
        %v1251 = vpop.permute.xlu0 %1250
        %1252 = vrot.lane.b32.xlu0 %v1246, 127
        %v1253 = vpop.permute.xlu0 %1252
        %v1257 = vadd.f32 %v1232, %v1249
        %v1258 = vadd.f32 %v1233, %v1251
        %v1259 = vadd.f32 %v1234, %v1253
        %s1260 = sld [smem:[#allocation4 + $0x29]]
        %v1261 = vstv %s1260
        %v1262 = vmul.f32 %v1261, %v369
        %v1263 = vmul.f32 %v1261, %v370
        %v1264 = vmul.f32 %v1261, %v371
        %v1268 = vrot.slane %v1262, 1
        %v1269 = vrot.slane %v1263, 1
        %v1270 = vsel %vm463, %v1268, %v1269
        %v1271 = vrot.slane %v1264, 1
        %v1272 = vsel %vm463, %v1269, %v1271
        %1273 = vrot.lane.b32.xlu0 %v1270, 126
        %v1274 = vpop.permute.xlu0 %1273
        %1275 = vrot.lane.b32.xlu0 %v1272, 126
        %v1276 = vpop.permute.xlu0 %1275
        %1277 = vrot.lane.b32.xlu0 %v1271, 126
        %v1278 = vpop.permute.xlu0 %1277
        %v1282 = vadd.f32 %v1257, %v1274
        %v1283 = vadd.f32 %v1258, %v1276
        %v1284 = vadd.f32 %v1259, %v1278
        %s1285 = sld [smem:[#allocation4 + $0x2a]]
        %v1286 = vstv %s1285
        %v1287 = vmul.f32 %v1286, %v369
        %v1288 = vmul.f32 %v1286, %v370
        %v1289 = vmul.f32 %v1286, %v371
        %v1293 = vrot.slane %v1287, 2
        %v1294 = vrot.slane %v1288, 2
        %v1295 = vsel %vm533, %v1293, %v1294
        %v1296 = vrot.slane %v1289, 2
        %v1297 = vsel %vm533, %v1294, %v1296
        %v1301 = vadd.f32 %v1282, %v1295
        %v1302 = vadd.f32 %v1283, %v1297
        %v1303 = vadd.f32 %v1284, %v1296
        %s1304 = sld [smem:[#allocation4 + $0x2b]]
        %v1305 = vstv %s1304
        %v1306 = vmul.f32 %v1305, %v369
        %v1307 = vmul.f32 %v1305, %v370
        %v1308 = vmul.f32 %v1305, %v371
        %v1312 = vrot.slane %v1306, 2
        %v1313 = vrot.slane %v1307, 2
        %v1314 = vsel %vm533, %v1312, %v1313
        %v1315 = vrot.slane %v1308, 2
        %v1316 = vsel %vm533, %v1313, %v1315
        %1317 = vrot.lane.b32.xlu0 %v1314, 127
        %v1318 = vpop.permute.xlu0 %1317
        %1319 = vrot.lane.b32.xlu0 %v1316, 127
        %v1320 = vpop.permute.xlu0 %1319
        %1321 = vrot.lane.b32.xlu0 %v1315, 127
        %v1322 = vpop.permute.xlu0 %1321
        %v1326 = vadd.f32 %v1301, %v1318
        %v1327 = vadd.f32 %v1302, %v1320
        %v1328 = vadd.f32 %v1303, %v1322
        %s1329 = sld [smem:[#allocation4 + $0x2c]]
        %v1330 = vstv %s1329
        %v1331 = vmul.f32 %v1330, %v369
        %v1332 = vmul.f32 %v1330, %v370
        %v1333 = vmul.f32 %v1330, %v371
        %v1337 = vrot.slane %v1331, 2
        %v1338 = vrot.slane %v1332, 2
        %v1339 = vsel %vm533, %v1337, %v1338
        %v1340 = vrot.slane %v1333, 2
        %v1341 = vsel %vm533, %v1338, %v1340
        %1342 = vrot.lane.b32.xlu0 %v1339, 126
        %v1343 = vpop.permute.xlu0 %1342
        %1344 = vrot.lane.b32.xlu0 %v1341, 126
        %v1345 = vpop.permute.xlu0 %1344
        %1346 = vrot.lane.b32.xlu0 %v1340, 126
        %v1347 = vpop.permute.xlu0 %1346
        %v1351 = vadd.f32 %v1326, %v1343
        %v1352 = vadd.f32 %v1327, %v1345
        %v1353 = vadd.f32 %v1328, %v1347
        %s1354 = sld [smem:[#allocation4 + $0x2d]]
        %v1355 = vstv %s1354
        %v1356 = vmul.f32 %v1355, %v372
        %v1357 = vmul.f32 %v1355, %v373
        %v1358 = vmul.f32 %v1355, %v374
        %v1359 = vadd.f32 %v1351, %v1356
        %v1360 = vadd.f32 %v1352, %v1357
        %v1361 = vadd.f32 %v1353, %v1358
        %s1362 = sld [smem:[#allocation4 + $0x2e]]
        %v1363 = vstv %s1362
        %v1364 = vmul.f32 %v1363, %v372
        %v1365 = vmul.f32 %v1363, %v373
        %v1366 = vmul.f32 %v1363, %v374
        %1370 = vrot.lane.b32.xlu0 %v1364, 127
        %v1371 = vpop.permute.xlu0 %1370
        %1372 = vrot.lane.b32.xlu0 %v1365, 127
        %v1373 = vpop.permute.xlu0 %1372
        %1374 = vrot.lane.b32.xlu0 %v1366, 127
        %v1375 = vpop.permute.xlu0 %1374
        %v1379 = vadd.f32 %v1359, %v1371
        %v1380 = vadd.f32 %v1360, %v1373
        %v1381 = vadd.f32 %v1361, %v1375
        %s1382 = sld [smem:[#allocation4 + $0x2f]]
        %v1383 = vstv %s1382
        %v1384 = vmul.f32 %v1383, %v372
        %v1385 = vmul.f32 %v1383, %v373
        %v1386 = vmul.f32 %v1383, %v374
        %1390 = vrot.lane.b32.xlu0 %v1384, 126
        %v1391 = vpop.permute.xlu0 %1390
        %1392 = vrot.lane.b32.xlu0 %v1385, 126
        %v1393 = vpop.permute.xlu0 %1392
        %1394 = vrot.lane.b32.xlu0 %v1386, 126
        %v1395 = vpop.permute.xlu0 %1394
        %v1399 = vadd.f32 %v1379, %v1391
        %v1400 = vadd.f32 %v1380, %v1393
        %v1401 = vadd.f32 %v1381, %v1395
        %s1402 = sld [smem:[#allocation4 + $0x30]]
        %v1403 = vstv %s1402
        %v1404 = vmul.f32 %v1403, %v372
        %v1405 = vmul.f32 %v1403, %v373
        %v1406 = vmul.f32 %v1403, %v374
        %v1410 = vrot.slane %v1404, 1
        %v1411 = vrot.slane %v1405, 1
        %v1412 = vsel %vm463, %v1410, %v1411
        %v1413 = vrot.slane %v1406, 1
        %v1414 = vsel %vm463, %v1411, %v1413
        %v1418 = vadd.f32 %v1399, %v1412
        %v1419 = vadd.f32 %v1400, %v1414
        %v1420 = vadd.f32 %v1401, %v1413
        %s1421 = sld [smem:[#allocation4 + $0x31]]
        %v1422 = vstv %s1421
        %v1423 = vmul.f32 %v1422, %v372
        %v1424 = vmul.f32 %v1422, %v373
        %v1425 = vmul.f32 %v1422, %v374
        %v1429 = vrot.slane %v1423, 1
        %v1430 = vrot.slane %v1424, 1
        %v1431 = vsel %vm463, %v1429, %v1430
        %v1432 = vrot.slane %v1425, 1
        %v1433 = vsel %vm463, %v1430, %v1432
        %1434 = vrot.lane.b32.xlu0 %v1431, 127
        %v1435 = vpop.permute.xlu0 %1434
        %1436 = vrot.lane.b32.xlu0 %v1433, 127
        %v1437 = vpop.permute.xlu0 %1436
        %1438 = vrot.lane.b32.xlu0 %v1432, 127
        %v1439 = vpop.permute.xlu0 %1438
        %v1443 = vadd.f32 %v1418, %v1435
        %v1444 = vadd.f32 %v1419, %v1437
        %v1445 = vadd.f32 %v1420, %v1439
        %s1446 = sld [smem:[#allocation4 + $0x32]]
        %v1447 = vstv %s1446
        %v1448 = vmul.f32 %v1447, %v372
        %v1449 = vmul.f32 %v1447, %v373
        %v1450 = vmul.f32 %v1447, %v374
        %v1454 = vrot.slane %v1448, 1
        %v1455 = vrot.slane %v1449, 1
        %v1456 = vsel %vm463, %v1454, %v1455
        %v1457 = vrot.slane %v1450, 1
        %v1458 = vsel %vm463, %v1455, %v1457
        %1459 = vrot.lane.b32.xlu0 %v1456, 126
        %v1460 = vpop.permute.xlu0 %1459
        %1461 = vrot.lane.b32.xlu0 %v1458, 126
        %v1462 = vpop.permute.xlu0 %1461
        %1463 = vrot.lane.b32.xlu0 %v1457, 126
        %v1464 = vpop.permute.xlu0 %1463
        %v1468 = vadd.f32 %v1443, %v1460
        %v1469 = vadd.f32 %v1444, %v1462
        %v1470 = vadd.f32 %v1445, %v1464
        %s1471 = sld [smem:[#allocation4 + $0x33]]
        %v1472 = vstv %s1471
        %v1473 = vmul.f32 %v1472, %v372
        %v1474 = vmul.f32 %v1472, %v373
        %v1475 = vmul.f32 %v1472, %v374
        %v1479 = vrot.slane %v1473, 2
        %v1480 = vrot.slane %v1474, 2
        %v1481 = vsel %vm533, %v1479, %v1480
        %v1482 = vrot.slane %v1475, 2
        %v1483 = vsel %vm533, %v1480, %v1482
        %v1487 = vadd.f32 %v1468, %v1481
        %v1488 = vadd.f32 %v1469, %v1483
        %v1489 = vadd.f32 %v1470, %v1482
        %s1490 = sld [smem:[#allocation4 + $0x34]]
        %v1491 = vstv %s1490
        %v1492 = vmul.f32 %v1491, %v372
        %v1493 = vmul.f32 %v1491, %v373
        %v1494 = vmul.f32 %v1491, %v374
        %v1498 = vrot.slane %v1492, 2
        %v1499 = vrot.slane %v1493, 2
        %v1500 = vsel %vm533, %v1498, %v1499
        %v1501 = vrot.slane %v1494, 2
        %v1502 = vsel %vm533, %v1499, %v1501
        %1503 = vrot.lane.b32.xlu0 %v1500, 127
        %v1504 = vpop.permute.xlu0 %1503
        %1505 = vrot.lane.b32.xlu0 %v1502, 127
        %v1506 = vpop.permute.xlu0 %1505
        %1507 = vrot.lane.b32.xlu0 %v1501, 127
        %v1508 = vpop.permute.xlu0 %1507
        %v1512 = vadd.f32 %v1487, %v1504
        %v1513 = vadd.f32 %v1488, %v1506
        %v1514 = vadd.f32 %v1489, %v1508
        %s1515 = sld [smem:[#allocation4 + $0x35]]
        %v1516 = vstv %s1515
        %v1517 = vmul.f32 %v1516, %v372
        %v1518 = vmul.f32 %v1516, %v373
        %v1519 = vmul.f32 %v1516, %v374
        %v1523 = vrot.slane %v1517, 2
        %v1524 = vrot.slane %v1518, 2
        %v1525 = vsel %vm533, %v1523, %v1524
        %v1526 = vrot.slane %v1519, 2
        %v1527 = vsel %vm533, %v1524, %v1526
        %1528 = vrot.lane.b32.xlu0 %v1525, 126
        %v1529 = vpop.permute.xlu0 %1528
        %1530 = vrot.lane.b32.xlu0 %v1527, 126
        %v1531 = vpop.permute.xlu0 %1530
        %1532 = vrot.lane.b32.xlu0 %v1526, 126
        %v1533 = vpop.permute.xlu0 %1532
        %v1537 = vadd.f32 %v1512, %v1529
        %v1538 = vadd.f32 %v1513, %v1531
        %v1539 = vadd.f32 %v1514, %v1533
        %s1540 = sld [smem:[#allocation4 + $0x36]]
        %v1541 = vstv %s1540
        %v1542 = vmul.f32 %v1541, %v375
        %v1543 = vmul.f32 %v1541, %v376
        %v1544 = vmul.f32 %v1541, %v377
        %v1545 = vadd.f32 %v1537, %v1542
        %v1546 = vadd.f32 %v1538, %v1543
        %v1547 = vadd.f32 %v1539, %v1544
        %s1548 = sld [smem:[#allocation4 + $0x37]]
        %v1549 = vstv %s1548
        %v1550 = vmul.f32 %v1549, %v375
        %v1551 = vmul.f32 %v1549, %v376
        %v1552 = vmul.f32 %v1549, %v377
        %1556 = vrot.lane.b32.xlu0 %v1550, 127
        %v1557 = vpop.permute.xlu0 %1556
        %1558 = vrot.lane.b32.xlu0 %v1551, 127
        %v1559 = vpop.permute.xlu0 %1558
        %1560 = vrot.lane.b32.xlu0 %v1552, 127
        %v1561 = vpop.permute.xlu0 %1560
        %v1565 = vadd.f32 %v1545, %v1557
        %v1566 = vadd.f32 %v1546, %v1559
        %v1567 = vadd.f32 %v1547, %v1561
        %s1568 = sld [smem:[#allocation4 + $0x38]]
        %v1569 = vstv %s1568
        %v1570 = vmul.f32 %v1569, %v375
        %v1571 = vmul.f32 %v1569, %v376
        %v1572 = vmul.f32 %v1569, %v377
        %1576 = vrot.lane.b32.xlu0 %v1570, 126
        %v1577 = vpop.permute.xlu0 %1576
        %1578 = vrot.lane.b32.xlu0 %v1571, 126
        %v1579 = vpop.permute.xlu0 %1578
        %1580 = vrot.lane.b32.xlu0 %v1572, 126
        %v1581 = vpop.permute.xlu0 %1580
        %v1585 = vadd.f32 %v1565, %v1577
        %v1586 = vadd.f32 %v1566, %v1579
        %v1587 = vadd.f32 %v1567, %v1581
        %s1588 = sld [smem:[#allocation4 + $0x39]]
        %v1589 = vstv %s1588
        %v1590 = vmul.f32 %v1589, %v375
        %v1591 = vmul.f32 %v1589, %v376
        %v1592 = vmul.f32 %v1589, %v377
        %v1596 = vrot.slane %v1590, 1
        %v1597 = vrot.slane %v1591, 1
        %v1598 = vsel %vm463, %v1596, %v1597
        %v1599 = vrot.slane %v1592, 1
        %v1600 = vsel %vm463, %v1597, %v1599
        %v1604 = vadd.f32 %v1585, %v1598
        %v1605 = vadd.f32 %v1586, %v1600
        %v1606 = vadd.f32 %v1587, %v1599
        %s1607 = sld [smem:[#allocation4 + $0x3a]]
        %v1608 = vstv %s1607
        %v1609 = vmul.f32 %v1608, %v375
        %v1610 = vmul.f32 %v1608, %v376
        %v1611 = vmul.f32 %v1608, %v377
        %v1615 = vrot.slane %v1609, 1
        %v1616 = vrot.slane %v1610, 1
        %v1617 = vsel %vm463, %v1615, %v1616
        %v1618 = vrot.slane %v1611, 1
        %v1619 = vsel %vm463, %v1616, %v1618
        %1620 = vrot.lane.b32.xlu0 %v1617, 127
        %v1621 = vpop.permute.xlu0 %1620
        %1622 = vrot.lane.b32.xlu0 %v1619, 127
        %v1623 = vpop.permute.xlu0 %1622
        %1624 = vrot.lane.b32.xlu0 %v1618, 127
        %v1625 = vpop.permute.xlu0 %1624
        %v1629 = vadd.f32 %v1604, %v1621
        %v1630 = vadd.f32 %v1605, %v1623
        %v1631 = vadd.f32 %v1606, %v1625
        %s1632 = sld [smem:[#allocation4 + $0x3b]]
        %v1633 = vstv %s1632
        %v1634 = vmul.f32 %v1633, %v375
        %v1635 = vmul.f32 %v1633, %v376
        %v1636 = vmul.f32 %v1633, %v377
        %v1640 = vrot.slane %v1634, 1
        %v1641 = vrot.slane %v1635, 1
        %v1642 = vsel %vm463, %v1640, %v1641
        %v1643 = vrot.slane %v1636, 1
        %v1644 = vsel %vm463, %v1641, %v1643
        %1645 = vrot.lane.b32.xlu0 %v1642, 126
        %v1646 = vpop.permute.xlu0 %1645
        %1647 = vrot.lane.b32.xlu0 %v1644, 126
        %v1648 = vpop.permute.xlu0 %1647
        %1649 = vrot.lane.b32.xlu0 %v1643, 126
        %v1650 = vpop.permute.xlu0 %1649
        %v1654 = vadd.f32 %v1629, %v1646
        %v1655 = vadd.f32 %v1630, %v1648
        %v1656 = vadd.f32 %v1631, %v1650
        %s1657 = sld [smem:[#allocation4 + $0x3c]]
        %v1658 = vstv %s1657
        %v1659 = vmul.f32 %v1658, %v375
        %v1660 = vmul.f32 %v1658, %v376
        %v1661 = vmul.f32 %v1658, %v377
        %v1665 = vrot.slane %v1659, 2
        %v1666 = vrot.slane %v1660, 2
        %v1667 = vsel %vm533, %v1665, %v1666
        %v1668 = vrot.slane %v1661, 2
        %v1669 = vsel %vm533, %v1666, %v1668
        %v1673 = vadd.f32 %v1654, %v1667
        %v1674 = vadd.f32 %v1655, %v1669
        %v1675 = vadd.f32 %v1656, %v1668
        %s1676 = sld [smem:[#allocation4 + $0x3d]]
        %v1677 = vstv %s1676
        %v1678 = vmul.f32 %v1677, %v375
        %v1679 = vmul.f32 %v1677, %v376
        %v1680 = vmul.f32 %v1677, %v377
        %v1684 = vrot.slane %v1678, 2
        %v1685 = vrot.slane %v1679, 2
        %v1686 = vsel %vm533, %v1684, %v1685
        %v1687 = vrot.slane %v1680, 2
        %v1688 = vsel %vm533, %v1685, %v1687
        %1689 = vrot.lane.b32.xlu0 %v1686, 127
        %v1690 = vpop.permute.xlu0 %1689
        %1691 = vrot.lane.b32.xlu0 %v1688, 127
        %v1692 = vpop.permute.xlu0 %1691
        %1693 = vrot.lane.b32.xlu0 %v1687, 127
        %v1694 = vpop.permute.xlu0 %1693
        %v1698 = vadd.f32 %v1673, %v1690
        %v1699 = vadd.f32 %v1674, %v1692
        %v1700 = vadd.f32 %v1675, %v1694
        %s1701 = sld [smem:[#allocation4 + $0x3e]]
        %v1702 = vstv %s1701
        %v1703 = vmul.f32 %v1702, %v375
        %v1704 = vmul.f32 %v1702, %v376
        %v1705 = vmul.f32 %v1702, %v377
        %v1709 = vrot.slane %v1703, 2
        %v1710 = vrot.slane %v1704, 2
        %v1711 = vsel %vm533, %v1709, %v1710
        %v1712 = vrot.slane %v1705, 2
        %v1713 = vsel %vm533, %v1710, %v1712
        %1714 = vrot.lane.b32.xlu0 %v1711, 126
        %v1715 = vpop.permute.xlu0 %1714
        %1716 = vrot.lane.b32.xlu0 %v1713, 126
        %v1717 = vpop.permute.xlu0 %1716
        %1718 = vrot.lane.b32.xlu0 %v1712, 126
        %v1719 = vpop.permute.xlu0 %1718
        %v1723 = vadd.f32 %v1698, %v1715
        %v1724 = vadd.f32 %v1699, %v1717
        %v1725 = vadd.f32 %v1700, %v1719
        %s1726 = sld [smem:[#allocation4 + $0x3f]]
        %v1727 = vstv %s1726
        %v1728 = vmul.f32 %v1727, %v378
        %v1729 = vmul.f32 %v1727, %v379
        %v1730 = vmul.f32 %v1727, %v380
        %v1731 = vadd.f32 %v1723, %v1728
        %v1732 = vadd.f32 %v1724, %v1729
        %v1733 = vadd.f32 %v1725, %v1730
        %s1734 = sld [smem:[#allocation4 + $0x40]]
        %v1735 = vstv %s1734
        %v1736 = vmul.f32 %v1735, %v378
        %v1737 = vmul.f32 %v1735, %v379
        %v1738 = vmul.f32 %v1735, %v380
        %1742 = vrot.lane.b32.xlu0 %v1736, 127
        %v1743 = vpop.permute.xlu0 %1742
        %1744 = vrot.lane.b32.xlu0 %v1737, 127
        %v1745 = vpop.permute.xlu0 %1744
        %1746 = vrot.lane.b32.xlu0 %v1738, 127
        %v1747 = vpop.permute.xlu0 %1746
        %v1751 = vadd.f32 %v1731, %v1743
        %v1752 = vadd.f32 %v1732, %v1745
        %v1753 = vadd.f32 %v1733, %v1747
        %s1754 = sld [smem:[#allocation4 + $0x41]]
        %v1755 = vstv %s1754
        %v1756 = vmul.f32 %v1755, %v378
        %v1757 = vmul.f32 %v1755, %v379
        %v1758 = vmul.f32 %v1755, %v380
        %1762 = vrot.lane.b32.xlu0 %v1756, 126
        %v1763 = vpop.permute.xlu0 %1762
        %1764 = vrot.lane.b32.xlu0 %v1757, 126
        %v1765 = vpop.permute.xlu0 %1764
        %1766 = vrot.lane.b32.xlu0 %v1758, 126
        %v1767 = vpop.permute.xlu0 %1766
        %v1771 = vadd.f32 %v1751, %v1763
        %v1772 = vadd.f32 %v1752, %v1765
        %v1773 = vadd.f32 %v1753, %v1767
        %s1774 = sld [smem:[#allocation4 + $0x42]]
        %v1775 = vstv %s1774
        %v1776 = vmul.f32 %v1775, %v378
        %v1777 = vmul.f32 %v1775, %v379
        %v1778 = vmul.f32 %v1775, %v380
        %v1782 = vrot.slane %v1776, 1
        %v1783 = vrot.slane %v1777, 1
        %v1784 = vsel %vm463, %v1782, %v1783
        %v1785 = vrot.slane %v1778, 1
        %v1786 = vsel %vm463, %v1783, %v1785
        %v1790 = vadd.f32 %v1771, %v1784
        %v1791 = vadd.f32 %v1772, %v1786
        %v1792 = vadd.f32 %v1773, %v1785
        %s1793 = sld [smem:[#allocation4 + $0x43]]
        %v1794 = vstv %s1793
        %v1795 = vmul.f32 %v1794, %v378
        %v1796 = vmul.f32 %v1794, %v379
        %v1797 = vmul.f32 %v1794, %v380
        %v1801 = vrot.slane %v1795, 1
        %v1802 = vrot.slane %v1796, 1
        %v1803 = vsel %vm463, %v1801, %v1802
        %v1804 = vrot.slane %v1797, 1
        %v1805 = vsel %vm463, %v1802, %v1804
        %1806 = vrot.lane.b32.xlu0 %v1803, 127
        %v1807 = vpop.permute.xlu0 %1806
        %1808 = vrot.lane.b32.xlu0 %v1805, 127
        %v1809 = vpop.permute.xlu0 %1808
        %1810 = vrot.lane.b32.xlu0 %v1804, 127
        %v1811 = vpop.permute.xlu0 %1810
        %v1815 = vadd.f32 %v1790, %v1807
        %v1816 = vadd.f32 %v1791, %v1809
        %v1817 = vadd.f32 %v1792, %v1811
        %s1818 = sld [smem:[#allocation4 + $0x44]]
        %v1819 = vstv %s1818
        %v1820 = vmul.f32 %v1819, %v378
        %v1821 = vmul.f32 %v1819, %v379
        %v1822 = vmul.f32 %v1819, %v380
        %v1826 = vrot.slane %v1820, 1
        %v1827 = vrot.slane %v1821, 1
        %v1828 = vsel %vm463, %v1826, %v1827
        %v1829 = vrot.slane %v1822, 1
        %v1830 = vsel %vm463, %v1827, %v1829
        %1831 = vrot.lane.b32.xlu0 %v1828, 126
        %v1832 = vpop.permute.xlu0 %1831
        %1833 = vrot.lane.b32.xlu0 %v1830, 126
        %v1834 = vpop.permute.xlu0 %1833
        %1835 = vrot.lane.b32.xlu0 %v1829, 126
        %v1836 = vpop.permute.xlu0 %1835
        %v1840 = vadd.f32 %v1815, %v1832
        %v1841 = vadd.f32 %v1816, %v1834
        %v1842 = vadd.f32 %v1817, %v1836
        %s1843 = sld [smem:[#allocation4 + $0x45]]
        %v1844 = vstv %s1843
        %v1845 = vmul.f32 %v1844, %v378
        %v1846 = vmul.f32 %v1844, %v379
        %v1847 = vmul.f32 %v1844, %v380
        %v1851 = vrot.slane %v1845, 2
        %v1852 = vrot.slane %v1846, 2
        %v1853 = vsel %vm533, %v1851, %v1852
        %v1854 = vrot.slane %v1847, 2
        %v1855 = vsel %vm533, %v1852, %v1854
        %v1859 = vadd.f32 %v1840, %v1853
        %v1860 = vadd.f32 %v1841, %v1855
        %v1861 = vadd.f32 %v1842, %v1854
        %s1862 = sld [smem:[#allocation4 + $0x46]]
        %v1863 = vstv %s1862
        %v1864 = vmul.f32 %v1863, %v378
        %v1865 = vmul.f32 %v1863, %v379
        %v1866 = vmul.f32 %v1863, %v380
        %v1870 = vrot.slane %v1864, 2
        %v1871 = vrot.slane %v1865, 2
        %v1872 = vsel %vm533, %v1870, %v1871
        %v1873 = vrot.slane %v1866, 2
        %v1874 = vsel %vm533, %v1871, %v1873
        %1875 = vrot.lane.b32.xlu0 %v1872, 127
        %v1876 = vpop.permute.xlu0 %1875
        %1877 = vrot.lane.b32.xlu0 %v1874, 127
        %v1878 = vpop.permute.xlu0 %1877
        %1879 = vrot.lane.b32.xlu0 %v1873, 127
        %v1880 = vpop.permute.xlu0 %1879
        %v1884 = vadd.f32 %v1859, %v1876
        %v1885 = vadd.f32 %v1860, %v1878
        %v1886 = vadd.f32 %v1861, %v1880
        %s1887 = sld [smem:[#allocation4 + $0x47]]
        %v1888 = vstv %s1887
        %v1889 = vmul.f32 %v1888, %v378
        %v1890 = vmul.f32 %v1888, %v379
        %v1891 = vmul.f32 %v1888, %v380
        %v1895 = vrot.slane %v1889, 2
        %v1896 = vrot.slane %v1890, 2
        %v1897 = vsel %vm533, %v1895, %v1896
        %v1898 = vrot.slane %v1891, 2
        %v1899 = vsel %vm533, %v1896, %v1898
        %1900 = vrot.lane.b32.xlu0 %v1897, 126
        %v1901 = vpop.permute.xlu0 %1900
        %1902 = vrot.lane.b32.xlu0 %v1899, 126
        %v1903 = vpop.permute.xlu0 %1902
        %1904 = vrot.lane.b32.xlu0 %v1898, 126
        %v1905 = vpop.permute.xlu0 %1904
        %v1909 = vadd.f32 %v1884, %v1901
        %v1910 = vadd.f32 %v1885, %v1903
        %v1911 = vadd.f32 %v1886, %v1905
        %v1912 = vsel %vm401, %v1909, 0.0
        %v1913 = vsel %vm402, %v1910, 0.0
        %v1914 = vsel %vm403, %v1911, 0.0
        %vm1915 = vcmp.gt.f32.partialorder %v1912, 0.0
        %vm1916 = vcmp.gt.f32.partialorder %v1913, 0.0
        %vm1917 = vcmp.gt.f32.partialorder %v1914, 0.0
        %v1918 = vmul.f32 %v1159, %v1912
        %v1919 = vmul.f32 %v1159, %v1913
        %v1920 = vmul.f32 %v1159, %v1914
        %v1921 = vsel %vm1915, %v1912, %v1918
        %v1922 = vsel %vm1916, %v1913, %v1919
        %v1923 = vsel %vm1917, %v1914, %v1920
        %s1924 = sld [smem:[#allocation7 + $0x2]]
        %v1925 = vstv %s1924
        %s1926 = sld [smem:[#allocation4 + $0x48]]
        %v1927 = vstv %s1926
        %v1928 = vmul.f32 %v1927, %v369
        %v1929 = vmul.f32 %v1927, %v370
        %v1930 = vmul.f32 %v1927, %v371
        %v1931 = vadd.f32 %v1925, %v1928
        %v1932 = vadd.f32 %v1925, %v1929
        %v1933 = vadd.f32 %v1925, %v1930
        %s1934 = sld [smem:[#allocation4 + $0x49]]
        %v1935 = vstv %s1934
        %v1936 = vmul.f32 %v1935, %v369
        %v1937 = vmul.f32 %v1935, %v370
        %v1938 = vmul.f32 %v1935, %v371
        %1942 = vrot.lane.b32.xlu0 %v1936, 127
        %v1943 = vpop.permute.xlu0 %1942
        %1944 = vrot.lane.b32.xlu0 %v1937, 127
        %v1945 = vpop.permute.xlu0 %1944
        %1946 = vrot.lane.b32.xlu0 %v1938, 127
        %v1947 = vpop.permute.xlu0 %1946
        %v1951 = vadd.f32 %v1931, %v1943
        %v1952 = vadd.f32 %v1932, %v1945
        %v1953 = vadd.f32 %v1933, %v1947
        %s1954 = sld [smem:[#allocation4 + $0x4a]]
        %v1955 = vstv %s1954
        %v1956 = vmul.f32 %v1955, %v369
        %v1957 = vmul.f32 %v1955, %v370
        %v1958 = vmul.f32 %v1955, %v371
        %1962 = vrot.lane.b32.xlu0 %v1956, 126
        %v1963 = vpop.permute.xlu0 %1962
        %1964 = vrot.lane.b32.xlu0 %v1957, 126
        %v1965 = vpop.permute.xlu0 %1964
        %1966 = vrot.lane.b32.xlu0 %v1958, 126
        %v1967 = vpop.permute.xlu0 %1966
        %v1971 = vadd.f32 %v1951, %v1963
        %v1972 = vadd.f32 %v1952, %v1965
        %v1973 = vadd.f32 %v1953, %v1967
        %s1974 = sld [smem:[#allocation4 + $0x4b]]
        %v1975 = vstv %s1974
        %v1976 = vmul.f32 %v1975, %v369
        %v1977 = vmul.f32 %v1975, %v370
        %v1978 = vmul.f32 %v1975, %v371
        %v1982 = vrot.slane %v1976, 1
        %v1983 = vrot.slane %v1977, 1
        %v1984 = vsel %vm463, %v1982, %v1983
        %v1985 = vrot.slane %v1978, 1
        %v1986 = vsel %vm463, %v1983, %v1985
        %v1990 = vadd.f32 %v1971, %v1984
        %v1991 = vadd.f32 %v1972, %v1986
        %v1992 = vadd.f32 %v1973, %v1985
        %s1993 = sld [smem:[#allocation4 + $0x4c]]
        %v1994 = vstv %s1993
        %v1995 = vmul.f32 %v1994, %v369
        %v1996 = vmul.f32 %v1994, %v370
        %v1997 = vmul.f32 %v1994, %v371
        %v2001 = vrot.slane %v1995, 1
        %v2002 = vrot.slane %v1996, 1
        %v2003 = vsel %vm463, %v2001, %v2002
        %v2004 = vrot.slane %v1997, 1
        %v2005 = vsel %vm463, %v2002, %v2004
        %2006 = vrot.lane.b32.xlu0 %v2003, 127
        %v2007 = vpop.permute.xlu0 %2006
        %2008 = vrot.lane.b32.xlu0 %v2005, 127
        %v2009 = vpop.permute.xlu0 %2008
        %2010 = vrot.lane.b32.xlu0 %v2004, 127
        %v2011 = vpop.permute.xlu0 %2010
        %v2015 = vadd.f32 %v1990, %v2007
        %v2016 = vadd.f32 %v1991, %v2009
        %v2017 = vadd.f32 %v1992, %v2011
        %s2018 = sld [smem:[#allocation4 + $0x4d]]
        %v2019 = vstv %s2018
        %v2020 = vmul.f32 %v2019, %v369
        %v2021 = vmul.f32 %v2019, %v370
        %v2022 = vmul.f32 %v2019, %v371
        %v2026 = vrot.slane %v2020, 1
        %v2027 = vrot.slane %v2021, 1
        %v2028 = vsel %vm463, %v2026, %v2027
        %v2029 = vrot.slane %v2022, 1
        %v2030 = vsel %vm463, %v2027, %v2029
        %2031 = vrot.lane.b32.xlu0 %v2028, 126
        %v2032 = vpop.permute.xlu0 %2031
        %2033 = vrot.lane.b32.xlu0 %v2030, 126
        %v2034 = vpop.permute.xlu0 %2033
        %2035 = vrot.lane.b32.xlu0 %v2029, 126
        %v2036 = vpop.permute.xlu0 %2035
        %v2040 = vadd.f32 %v2015, %v2032
        %v2041 = vadd.f32 %v2016, %v2034
        %v2042 = vadd.f32 %v2017, %v2036
        %s2043 = sld [smem:[#allocation4 + $0x4e]]
        %v2044 = vstv %s2043
        %v2045 = vmul.f32 %v2044, %v369
        %v2046 = vmul.f32 %v2044, %v370
        %v2047 = vmul.f32 %v2044, %v371
        %v2051 = vrot.slane %v2045, 2
        %v2052 = vrot.slane %v2046, 2
        %v2053 = vsel %vm533, %v2051, %v2052
        %v2054 = vrot.slane %v2047, 2
        %v2055 = vsel %vm533, %v2052, %v2054
        %v2059 = vadd.f32 %v2040, %v2053
        %v2060 = vadd.f32 %v2041, %v2055
        %v2061 = vadd.f32 %v2042, %v2054
        %s2062 = sld [smem:[#allocation4 + $0x4f]]
        %v2063 = vstv %s2062
        %v2064 = vmul.f32 %v2063, %v369
        %v2065 = vmul.f32 %v2063, %v370
        %v2066 = vmul.f32 %v2063, %v371
        %v2070 = vrot.slane %v2064, 2
        %v2071 = vrot.slane %v2065, 2
        %v2072 = vsel %vm533, %v2070, %v2071
        %v2073 = vrot.slane %v2066, 2
        %v2074 = vsel %vm533, %v2071, %v2073
        %2075 = vrot.lane.b32.xlu0 %v2072, 127
        %v2076 = vpop.permute.xlu0 %2075
        %2077 = vrot.lane.b32.xlu0 %v2074, 127
        %v2078 = vpop.permute.xlu0 %2077
        %2079 = vrot.lane.b32.xlu0 %v2073, 127
        %v2080 = vpop.permute.xlu0 %2079
        %v2084 = vadd.f32 %v2059, %v2076
        %v2085 = vadd.f32 %v2060, %v2078
        %v2086 = vadd.f32 %v2061, %v2080
        %s2087 = sld [smem:[#allocation4 + $0x50]]
        %v2088 = vstv %s2087
        %v2089 = vmul.f32 %v2088, %v369
        %v2090 = vmul.f32 %v2088, %v370
        %v2091 = vmul.f32 %v2088, %v371
        %v2095 = vrot.slane %v2089, 2
        %v2096 = vrot.slane %v2090, 2
        %v2097 = vsel %vm533, %v2095, %v2096
        %v2098 = vrot.slane %v2091, 2
        %v2099 = vsel %vm533, %v2096, %v2098
        %2100 = vrot.lane.b32.xlu0 %v2097, 126
        %v2101 = vpop.permute.xlu0 %2100
        %2102 = vrot.lane.b32.xlu0 %v2099, 126
        %v2103 = vpop.permute.xlu0 %2102
        %2104 = vrot.lane.b32.xlu0 %v2098, 126
        %v2105 = vpop.permute.xlu0 %2104
        %v2109 = vadd.f32 %v2084, %v2101
        %v2110 = vadd.f32 %v2085, %v2103
        %v2111 = vadd.f32 %v2086, %v2105
        %s2112 = sld [smem:[#allocation4 + $0x51]]
        %v2113 = vstv %s2112
        %v2114 = vmul.f32 %v2113, %v372
        %v2115 = vmul.f32 %v2113, %v373
        %v2116 = vmul.f32 %v2113, %v374
        %v2117 = vadd.f32 %v2109, %v2114
        %v2118 = vadd.f32 %v2110, %v2115
        %v2119 = vadd.f32 %v2111, %v2116
        %s2120 = sld [smem:[#allocation4 + $0x52]]
        %v2121 = vstv %s2120
        %v2122 = vmul.f32 %v2121, %v372
        %v2123 = vmul.f32 %v2121, %v373
        %v2124 = vmul.f32 %v2121, %v374
        %2128 = vrot.lane.b32.xlu0 %v2122, 127
        %v2129 = vpop.permute.xlu0 %2128
        %2130 = vrot.lane.b32.xlu0 %v2123, 127
        %v2131 = vpop.permute.xlu0 %2130
        %2132 = vrot.lane.b32.xlu0 %v2124, 127
        %v2133 = vpop.permute.xlu0 %2132
        %v2137 = vadd.f32 %v2117, %v2129
        %v2138 = vadd.f32 %v2118, %v2131
        %v2139 = vadd.f32 %v2119, %v2133
        %s2140 = sld [smem:[#allocation4 + $0x53]]
        %v2141 = vstv %s2140
        %v2142 = vmul.f32 %v2141, %v372
        %v2143 = vmul.f32 %v2141, %v373
        %v2144 = vmul.f32 %v2141, %v374
        %2148 = vrot.lane.b32.xlu0 %v2142, 126
        %v2149 = vpop.permute.xlu0 %2148
        %2150 = vrot.lane.b32.xlu0 %v2143, 126
        %v2151 = vpop.permute.xlu0 %2150
        %2152 = vrot.lane.b32.xlu0 %v2144, 126
        %v2153 = vpop.permute.xlu0 %2152
        %v2157 = vadd.f32 %v2137, %v2149
        %v2158 = vadd.f32 %v2138, %v2151
        %v2159 = vadd.f32 %v2139, %v2153
        %s2160 = sld [smem:[#allocation4 + $0x54]]
        %v2161 = vstv %s2160
        %v2162 = vmul.f32 %v2161, %v372
        %v2163 = vmul.f32 %v2161, %v373
        %v2164 = vmul.f32 %v2161, %v374
        %v2168 = vrot.slane %v2162, 1
        %v2169 = vrot.slane %v2163, 1
        %v2170 = vsel %vm463, %v2168, %v2169
        %v2171 = vrot.slane %v2164, 1
        %v2172 = vsel %vm463, %v2169, %v2171
        %v2176 = vadd.f32 %v2157, %v2170
        %v2177 = vadd.f32 %v2158, %v2172
        %v2178 = vadd.f32 %v2159, %v2171
        %s2179 = sld [smem:[#allocation4 + $0x55]]
        %v2180 = vstv %s2179
        %v2181 = vmul.f32 %v2180, %v372
        %v2182 = vmul.f32 %v2180, %v373
        %v2183 = vmul.f32 %v2180, %v374
        %v2187 = vrot.slane %v2181, 1
        %v2188 = vrot.slane %v2182, 1
        %v2189 = vsel %vm463, %v2187, %v2188
        %v2190 = vrot.slane %v2183, 1
        %v2191 = vsel %vm463, %v2188, %v2190
        %2192 = vrot.lane.b32.xlu0 %v2189, 127
        %v2193 = vpop.permute.xlu0 %2192
        %2194 = vrot.lane.b32.xlu0 %v2191, 127
        %v2195 = vpop.permute.xlu0 %2194
        %2196 = vrot.lane.b32.xlu0 %v2190, 127
        %v2197 = vpop.permute.xlu0 %2196
        %v2201 = vadd.f32 %v2176, %v2193
        %v2202 = vadd.f32 %v2177, %v2195
        %v2203 = vadd.f32 %v2178, %v2197
        %s2204 = sld [smem:[#allocation4 + $0x56]]
        %v2205 = vstv %s2204
        %v2206 = vmul.f32 %v2205, %v372
        %v2207 = vmul.f32 %v2205, %v373
        %v2208 = vmul.f32 %v2205, %v374
        %v2212 = vrot.slane %v2206, 1
        %v2213 = vrot.slane %v2207, 1
        %v2214 = vsel %vm463, %v2212, %v2213
        %v2215 = vrot.slane %v2208, 1
        %v2216 = vsel %vm463, %v2213, %v2215
        %2217 = vrot.lane.b32.xlu0 %v2214, 126
        %v2218 = vpop.permute.xlu0 %2217
        %2219 = vrot.lane.b32.xlu0 %v2216, 126
        %v2220 = vpop.permute.xlu0 %2219
        %2221 = vrot.lane.b32.xlu0 %v2215, 126
        %v2222 = vpop.permute.xlu0 %2221
        %v2226 = vadd.f32 %v2201, %v2218
        %v2227 = vadd.f32 %v2202, %v2220
        %v2228 = vadd.f32 %v2203, %v2222
        %s2229 = sld [smem:[#allocation4 + $0x57]]
        %v2230 = vstv %s2229
        %v2231 = vmul.f32 %v2230, %v372
        %v2232 = vmul.f32 %v2230, %v373
        %v2233 = vmul.f32 %v2230, %v374
        %v2237 = vrot.slane %v2231, 2
        %v2238 = vrot.slane %v2232, 2
        %v2239 = vsel %vm533, %v2237, %v2238
        %v2240 = vrot.slane %v2233, 2
        %v2241 = vsel %vm533, %v2238, %v2240
        %v2245 = vadd.f32 %v2226, %v2239
        %v2246 = vadd.f32 %v2227, %v2241
        %v2247 = vadd.f32 %v2228, %v2240
        %s2248 = sld [smem:[#allocation4 + $0x58]]
        %v2249 = vstv %s2248
        %v2250 = vmul.f32 %v2249, %v372
        %v2251 = vmul.f32 %v2249, %v373
        %v2252 = vmul.f32 %v2249, %v374
        %v2256 = vrot.slane %v2250, 2
        %v2257 = vrot.slane %v2251, 2
        %v2258 = vsel %vm533, %v2256, %v2257
        %v2259 = vrot.slane %v2252, 2
        %v2260 = vsel %vm533, %v2257, %v2259
        %2261 = vrot.lane.b32.xlu0 %v2258, 127
        %v2262 = vpop.permute.xlu0 %2261
        %2263 = vrot.lane.b32.xlu0 %v2260, 127
        %v2264 = vpop.permute.xlu0 %2263
        %2265 = vrot.lane.b32.xlu0 %v2259, 127
        %v2266 = vpop.permute.xlu0 %2265
        %v2270 = vadd.f32 %v2245, %v2262
        %v2271 = vadd.f32 %v2246, %v2264
        %v2272 = vadd.f32 %v2247, %v2266
        %s2273 = sld [smem:[#allocation4 + $0x59]]
        %v2274 = vstv %s2273
        %v2275 = vmul.f32 %v2274, %v372
        %v2276 = vmul.f32 %v2274, %v373
        %v2277 = vmul.f32 %v2274, %v374
        %v2281 = vrot.slane %v2275, 2
        %v2282 = vrot.slane %v2276, 2
        %v2283 = vsel %vm533, %v2281, %v2282
        %v2284 = vrot.slane %v2277, 2
        %v2285 = vsel %vm533, %v2282, %v2284
        %2286 = vrot.lane.b32.xlu0 %v2283, 126
        %v2287 = vpop.permute.xlu0 %2286
        %2288 = vrot.lane.b32.xlu0 %v2285, 126
        %v2289 = vpop.permute.xlu0 %2288
        %2290 = vrot.lane.b32.xlu0 %v2284, 126
        %v2291 = vpop.permute.xlu0 %2290
        %v2295 = vadd.f32 %v2270, %v2287
        %v2296 = vadd.f32 %v2271, %v2289
        %v2297 = vadd.f32 %v2272, %v2291
        %s2298 = sld [smem:[#allocation4 + $0x5a]]
        %v2299 = vstv %s2298
        %v2300 = vmul.f32 %v2299, %v375
        %v2301 = vmul.f32 %v2299, %v376
        %v2302 = vmul.f32 %v2299, %v377
        %v2303 = vadd.f32 %v2295, %v2300
        %v2304 = vadd.f32 %v2296, %v2301
        %v2305 = vadd.f32 %v2297, %v2302
        %s2306 = sld [smem:[#allocation4 + $0x5b]]
        %v2307 = vstv %s2306
        %v2308 = vmul.f32 %v2307, %v375
        %v2309 = vmul.f32 %v2307, %v376
        %v2310 = vmul.f32 %v2307, %v377
        %2314 = vrot.lane.b32.xlu0 %v2308, 127
        %v2315 = vpop.permute.xlu0 %2314
        %2316 = vrot.lane.b32.xlu0 %v2309, 127
        %v2317 = vpop.permute.xlu0 %2316
        %2318 = vrot.lane.b32.xlu0 %v2310, 127
        %v2319 = vpop.permute.xlu0 %2318
        %v2323 = vadd.f32 %v2303, %v2315
        %v2324 = vadd.f32 %v2304, %v2317
        %v2325 = vadd.f32 %v2305, %v2319
        %s2326 = sld [smem:[#allocation4 + $0x5c]]
        %v2327 = vstv %s2326
        %v2328 = vmul.f32 %v2327, %v375
        %v2329 = vmul.f32 %v2327, %v376
        %v2330 = vmul.f32 %v2327, %v377
        %2334 = vrot.lane.b32.xlu0 %v2328, 126
        %v2335 = vpop.permute.xlu0 %2334
        %2336 = vrot.lane.b32.xlu0 %v2329, 126
        %v2337 = vpop.permute.xlu0 %2336
        %2338 = vrot.lane.b32.xlu0 %v2330, 126
        %v2339 = vpop.permute.xlu0 %2338
        %v2343 = vadd.f32 %v2323, %v2335
        %v2344 = vadd.f32 %v2324, %v2337
        %v2345 = vadd.f32 %v2325, %v2339
        %s2346 = sld [smem:[#allocation4 + $0x5d]]
        %v2347 = vstv %s2346
        %v2348 = vmul.f32 %v2347, %v375
        %v2349 = vmul.f32 %v2347, %v376
        %v2350 = vmul.f32 %v2347, %v377
        %v2354 = vrot.slane %v2348, 1
        %v2355 = vrot.slane %v2349, 1
        %v2356 = vsel %vm463, %v2354, %v2355
        %v2357 = vrot.slane %v2350, 1
        %v2358 = vsel %vm463, %v2355, %v2357
        %v2362 = vadd.f32 %v2343, %v2356
        %v2363 = vadd.f32 %v2344, %v2358
        %v2364 = vadd.f32 %v2345, %v2357
        %s2365 = sld [smem:[#allocation4 + $0x5e]]
        %v2366 = vstv %s2365
        %v2367 = vmul.f32 %v2366, %v375
        %v2368 = vmul.f32 %v2366, %v376
        %v2369 = vmul.f32 %v2366, %v377
        %v2373 = vrot.slane %v2367, 1
        %v2374 = vrot.slane %v2368, 1
        %v2375 = vsel %vm463, %v2373, %v2374
        %v2376 = vrot.slane %v2369, 1
        %v2377 = vsel %vm463, %v2374, %v2376
        %2378 = vrot.lane.b32.xlu0 %v2375, 127
        %v2379 = vpop.permute.xlu0 %2378
        %2380 = vrot.lane.b32.xlu0 %v2377, 127
        %v2381 = vpop.permute.xlu0 %2380
        %2382 = vrot.lane.b32.xlu0 %v2376, 127
        %v2383 = vpop.permute.xlu0 %2382
        %v2387 = vadd.f32 %v2362, %v2379
        %v2388 = vadd.f32 %v2363, %v2381
        %v2389 = vadd.f32 %v2364, %v2383
        %s2390 = sld [smem:[#allocation4 + $0x5f]]
        %v2391 = vstv %s2390
        %v2392 = vmul.f32 %v2391, %v375
        %v2393 = vmul.f32 %v2391, %v376
        %v2394 = vmul.f32 %v2391, %v377
        %v2398 = vrot.slane %v2392, 1
        %v2399 = vrot.slane %v2393, 1
        %v2400 = vsel %vm463, %v2398, %v2399
        %v2401 = vrot.slane %v2394, 1
        %v2402 = vsel %vm463, %v2399, %v2401
        %2403 = vrot.lane.b32.xlu0 %v2400, 126
        %v2404 = vpop.permute.xlu0 %2403
        %2405 = vrot.lane.b32.xlu0 %v2402, 126
        %v2406 = vpop.permute.xlu0 %2405
        %2407 = vrot.lane.b32.xlu0 %v2401, 126
        %v2408 = vpop.permute.xlu0 %2407
        %v2412 = vadd.f32 %v2387, %v2404
        %v2413 = vadd.f32 %v2388, %v2406
        %v2414 = vadd.f32 %v2389, %v2408
        %s2415 = sld [smem:[#allocation4 + $0x60]]
        %v2416 = vstv %s2415
        %v2417 = vmul.f32 %v2416, %v375
        %v2418 = vmul.f32 %v2416, %v376
        %v2419 = vmul.f32 %v2416, %v377
        %v2423 = vrot.slane %v2417, 2
        %v2424 = vrot.slane %v2418, 2
        %v2425 = vsel %vm533, %v2423, %v2424
        %v2426 = vrot.slane %v2419, 2
        %v2427 = vsel %vm533, %v2424, %v2426
        %v2431 = vadd.f32 %v2412, %v2425
        %v2432 = vadd.f32 %v2413, %v2427
        %v2433 = vadd.f32 %v2414, %v2426
        %s2434 = sld [smem:[#allocation4 + $0x61]]
        %v2435 = vstv %s2434
        %v2436 = vmul.f32 %v2435, %v375
        %v2437 = vmul.f32 %v2435, %v376
        %v2438 = vmul.f32 %v2435, %v377
        %v2442 = vrot.slane %v2436, 2
        %v2443 = vrot.slane %v2437, 2
        %v2444 = vsel %vm533, %v2442, %v2443
        %v2445 = vrot.slane %v2438, 2
        %v2446 = vsel %vm533, %v2443, %v2445
        %2447 = vrot.lane.b32.xlu0 %v2444, 127
        %v2448 = vpop.permute.xlu0 %2447
        %2449 = vrot.lane.b32.xlu0 %v2446, 127
        %v2450 = vpop.permute.xlu0 %2449
        %2451 = vrot.lane.b32.xlu0 %v2445, 127
        %v2452 = vpop.permute.xlu0 %2451
        %v2456 = vadd.f32 %v2431, %v2448
        %v2457 = vadd.f32 %v2432, %v2450
        %v2458 = vadd.f32 %v2433, %v2452
        %s2459 = sld [smem:[#allocation4 + $0x62]]
        %v2460 = vstv %s2459
        %v2461 = vmul.f32 %v2460, %v375
        %v2462 = vmul.f32 %v2460, %v376
        %v2463 = vmul.f32 %v2460, %v377
        %v2467 = vrot.slane %v2461, 2
        %v2468 = vrot.slane %v2462, 2
        %v2469 = vsel %vm533, %v2467, %v2468
        %v2470 = vrot.slane %v2463, 2
        %v2471 = vsel %vm533, %v2468, %v2470
        %2472 = vrot.lane.b32.xlu0 %v2469, 126
        %v2473 = vpop.permute.xlu0 %2472
        %2474 = vrot.lane.b32.xlu0 %v2471, 126
        %v2475 = vpop.permute.xlu0 %2474
        %2476 = vrot.lane.b32.xlu0 %v2470, 126
        %v2477 = vpop.permute.xlu0 %2476
        %v2481 = vadd.f32 %v2456, %v2473
        %v2482 = vadd.f32 %v2457, %v2475
        %v2483 = vadd.f32 %v2458, %v2477
        %s2484 = sld [smem:[#allocation4 + $0x63]]
        %v2485 = vstv %s2484
        %v2486 = vmul.f32 %v2485, %v378
        %v2487 = vmul.f32 %v2485, %v379
        %v2488 = vmul.f32 %v2485, %v380
        %v2489 = vadd.f32 %v2481, %v2486
        %v2490 = vadd.f32 %v2482, %v2487
        %v2491 = vadd.f32 %v2483, %v2488
        %s2492 = sld [smem:[#allocation4 + $0x64]]
        %v2493 = vstv %s2492
        %v2494 = vmul.f32 %v2493, %v378
        %v2495 = vmul.f32 %v2493, %v379
        %v2496 = vmul.f32 %v2493, %v380
        %2500 = vrot.lane.b32.xlu0 %v2494, 127
        %v2501 = vpop.permute.xlu0 %2500
        %2502 = vrot.lane.b32.xlu0 %v2495, 127
        %v2503 = vpop.permute.xlu0 %2502
        %2504 = vrot.lane.b32.xlu0 %v2496, 127
        %v2505 = vpop.permute.xlu0 %2504
        %v2509 = vadd.f32 %v2489, %v2501
        %v2510 = vadd.f32 %v2490, %v2503
        %v2511 = vadd.f32 %v2491, %v2505
        %s2512 = sld [smem:[#allocation4 + $0x65]]
        %v2513 = vstv %s2512
        %v2514 = vmul.f32 %v2513, %v378
        %v2515 = vmul.f32 %v2513, %v379
        %v2516 = vmul.f32 %v2513, %v380
        %2520 = vrot.lane.b32.xlu0 %v2514, 126
        %v2521 = vpop.permute.xlu0 %2520
        %2522 = vrot.lane.b32.xlu0 %v2515, 126
        %v2523 = vpop.permute.xlu0 %2522
        %2524 = vrot.lane.b32.xlu0 %v2516, 126
        %v2525 = vpop.permute.xlu0 %2524
        %v2529 = vadd.f32 %v2509, %v2521
        %v2530 = vadd.f32 %v2510, %v2523
        %v2531 = vadd.f32 %v2511, %v2525
        %s2532 = sld [smem:[#allocation4 + $0x66]]
        %v2533 = vstv %s2532
        %v2534 = vmul.f32 %v2533, %v378
        %v2535 = vmul.f32 %v2533, %v379
        %v2536 = vmul.f32 %v2533, %v380
        %v2540 = vrot.slane %v2534, 1
        %v2541 = vrot.slane %v2535, 1
        %v2542 = vsel %vm463, %v2540, %v2541
        %v2543 = vrot.slane %v2536, 1
        %v2544 = vsel %vm463, %v2541, %v2543
        %v2548 = vadd.f32 %v2529, %v2542
        %v2549 = vadd.f32 %v2530, %v2544
        %v2550 = vadd.f32 %v2531, %v2543
        %s2551 = sld [smem:[#allocation4 + $0x67]]
        %v2552 = vstv %s2551
        %v2553 = vmul.f32 %v2552, %v378
        %v2554 = vmul.f32 %v2552, %v379
        %v2555 = vmul.f32 %v2552, %v380
        %v2559 = vrot.slane %v2553, 1
        %v2560 = vrot.slane %v2554, 1
        %v2561 = vsel %vm463, %v2559, %v2560
        %v2562 = vrot.slane %v2555, 1
        %v2563 = vsel %vm463, %v2560, %v2562
        %2564 = vrot.lane.b32.xlu0 %v2561, 127
        %v2565 = vpop.permute.xlu0 %2564
        %2566 = vrot.lane.b32.xlu0 %v2563, 127
        %v2567 = vpop.permute.xlu0 %2566
        %2568 = vrot.lane.b32.xlu0 %v2562, 127
        %v2569 = vpop.permute.xlu0 %2568
        %v2573 = vadd.f32 %v2548, %v2565
        %v2574 = vadd.f32 %v2549, %v2567
        %v2575 = vadd.f32 %v2550, %v2569
        %s2576 = sld [smem:[#allocation4 + $0x68]]
        %v2577 = vstv %s2576
        %v2578 = vmul.f32 %v2577, %v378
        %v2579 = vmul.f32 %v2577, %v379
        %v2580 = vmul.f32 %v2577, %v380
        %v2584 = vrot.slane %v2578, 1
        %v2585 = vrot.slane %v2579, 1
        %v2586 = vsel %vm463, %v2584, %v2585
        %v2587 = vrot.slane %v2580, 1
        %v2588 = vsel %vm463, %v2585, %v2587
        %2589 = vrot.lane.b32.xlu0 %v2586, 126
        %v2590 = vpop.permute.xlu0 %2589
        %2591 = vrot.lane.b32.xlu0 %v2588, 126
        %v2592 = vpop.permute.xlu0 %2591
        %2593 = vrot.lane.b32.xlu0 %v2587, 126
        %v2594 = vpop.permute.xlu0 %2593
        %v2598 = vadd.f32 %v2573, %v2590
        %v2599 = vadd.f32 %v2574, %v2592
        %v2600 = vadd.f32 %v2575, %v2594
        %s2601 = sld [smem:[#allocation4 + $0x69]]
        %v2602 = vstv %s2601
        %v2603 = vmul.f32 %v2602, %v378
        %v2604 = vmul.f32 %v2602, %v379
        %v2605 = vmul.f32 %v2602, %v380
        %v2609 = vrot.slane %v2603, 2
        %v2610 = vrot.slane %v2604, 2
        %v2611 = vsel %vm533, %v2609, %v2610
        %v2612 = vrot.slane %v2605, 2
        %v2613 = vsel %vm533, %v2610, %v2612
        %v2617 = vadd.f32 %v2598, %v2611
        %v2618 = vadd.f32 %v2599, %v2613
        %v2619 = vadd.f32 %v2600, %v2612
        %s2620 = sld [smem:[#allocation4 + $0x6a]]
        %v2621 = vstv %s2620
        %v2622 = vmul.f32 %v2621, %v378
        %v2623 = vmul.f32 %v2621, %v379
        %v2624 = vmul.f32 %v2621, %v380
        %v2628 = vrot.slane %v2622, 2
        %v2629 = vrot.slane %v2623, 2
        %v2630 = vsel %vm533, %v2628, %v2629
        %v2631 = vrot.slane %v2624, 2
        %v2632 = vsel %vm533, %v2629, %v2631
        %2633 = vrot.lane.b32.xlu0 %v2630, 127
        %v2634 = vpop.permute.xlu0 %2633
        %2635 = vrot.lane.b32.xlu0 %v2632, 127
        %v2636 = vpop.permute.xlu0 %2635
        %2637 = vrot.lane.b32.xlu0 %v2631, 127
        %v2638 = vpop.permute.xlu0 %2637
        %v2642 = vadd.f32 %v2617, %v2634
        %v2643 = vadd.f32 %v2618, %v2636
        %v2644 = vadd.f32 %v2619, %v2638
        %s2645 = sld [smem:[#allocation4 + $0x6b]]
        %v2646 = vstv %s2645
        %v2647 = vmul.f32 %v2646, %v378
        %v2648 = vmul.f32 %v2646, %v379
        %v2649 = vmul.f32 %v2646, %v380
        %v2653 = vrot.slane %v2647, 2
        %v2654 = vrot.slane %v2648, 2
        %v2655 = vsel %vm533, %v2653, %v2654
        %v2656 = vrot.slane %v2649, 2
        %v2657 = vsel %vm533, %v2654, %v2656
        %2658 = vrot.lane.b32.xlu0 %v2655, 126
        %v2659 = vpop.permute.xlu0 %2658
        %2660 = vrot.lane.b32.xlu0 %v2657, 126
        %v2661 = vpop.permute.xlu0 %2660
        %2662 = vrot.lane.b32.xlu0 %v2656, 126
        %v2663 = vpop.permute.xlu0 %2662
        %v2667 = vadd.f32 %v2642, %v2659
        %v2668 = vadd.f32 %v2643, %v2661
        %v2669 = vadd.f32 %v2644, %v2663
        %v2670 = vsel %vm401, %v2667, 0.0
        %v2671 = vsel %vm402, %v2668, 0.0
        %v2672 = vsel %vm403, %v2669, 0.0
        %vm2673 = vcmp.gt.f32.partialorder %v2670, 0.0
        %vm2674 = vcmp.gt.f32.partialorder %v2671, 0.0
        %vm2675 = vcmp.gt.f32.partialorder %v2672, 0.0
        %v2676 = vmul.f32 %v1159, %v2670
        %v2677 = vmul.f32 %v1159, %v2671
        %v2678 = vmul.f32 %v1159, %v2672
        %v2679 = vsel %vm2673, %v2670, %v2676
        %v2680 = vsel %vm2674, %v2671, %v2677
        %v2681 = vsel %vm2675, %v2672, %v2678
        %s2682 = sld [smem:[#allocation7 + $0x3]]
        %v2683 = vstv %s2682
        %s2684 = sld [smem:[#allocation4 + $0x6c]]
        %v2685 = vstv %s2684
        %v2686 = vmul.f32 %v2685, %v369
        %v2687 = vmul.f32 %v2685, %v370
        %v2688 = vmul.f32 %v2685, %v371
        %v2689 = vadd.f32 %v2683, %v2686
        %v2690 = vadd.f32 %v2683, %v2687
        %v2691 = vadd.f32 %v2683, %v2688
        %s2692 = sld [smem:[#allocation4 + $0x6d]]
        %v2693 = vstv %s2692
        %v2694 = vmul.f32 %v2693, %v369
        %v2695 = vmul.f32 %v2693, %v370
        %v2696 = vmul.f32 %v2693, %v371
        %2700 = vrot.lane.b32.xlu0 %v2694, 127
        %v2701 = vpop.permute.xlu0 %2700
        %2702 = vrot.lane.b32.xlu0 %v2695, 127
        %v2703 = vpop.permute.xlu0 %2702
        %2704 = vrot.lane.b32.xlu0 %v2696, 127
        %v2705 = vpop.permute.xlu0 %2704
        %v2709 = vadd.f32 %v2689, %v2701
        %v2710 = vadd.f32 %v2690, %v2703
        %v2711 = vadd.f32 %v2691, %v2705
        %s2712 = sld [smem:[#allocation4 + $0x6e]]
        %v2713 = vstv %s2712
        %v2714 = vmul.f32 %v2713, %v369
        %v2715 = vmul.f32 %v2713, %v370
        %v2716 = vmul.f32 %v2713, %v371
        %2720 = vrot.lane.b32.xlu0 %v2714, 126
        %v2721 = vpop.permute.xlu0 %2720
        %2722 = vrot.lane.b32.xlu0 %v2715, 126
        %v2723 = vpop.permute.xlu0 %2722
        %2724 = vrot.lane.b32.xlu0 %v2716, 126
        %v2725 = vpop.permute.xlu0 %2724
        %v2729 = vadd.f32 %v2709, %v2721
        %v2730 = vadd.f32 %v2710, %v2723
        %v2731 = vadd.f32 %v2711, %v2725
        %s2732 = sld [smem:[#allocation4 + $0x6f]]
        %v2733 = vstv %s2732
        %v2734 = vmul.f32 %v2733, %v369
        %v2735 = vmul.f32 %v2733, %v370
        %v2736 = vmul.f32 %v2733, %v371
        %v2740 = vrot.slane %v2734, 1
        %v2741 = vrot.slane %v2735, 1
        %v2742 = vsel %vm463, %v2740, %v2741
        %v2743 = vrot.slane %v2736, 1
        %v2744 = vsel %vm463, %v2741, %v2743
        %v2748 = vadd.f32 %v2729, %v2742
        %v2749 = vadd.f32 %v2730, %v2744
        %v2750 = vadd.f32 %v2731, %v2743
        %s2751 = sld [smem:[#allocation4 + $0x70]]
        %v2752 = vstv %s2751
        %v2753 = vmul.f32 %v2752, %v369
        %v2754 = vmul.f32 %v2752, %v370
        %v2755 = vmul.f32 %v2752, %v371
        %v2759 = vrot.slane %v2753, 1
        %v2760 = vrot.slane %v2754, 1
        %v2761 = vsel %vm463, %v2759, %v2760
        %v2762 = vrot.slane %v2755, 1
        %v2763 = vsel %vm463, %v2760, %v2762
        %2764 = vrot.lane.b32.xlu0 %v2761, 127
        %v2765 = vpop.permute.xlu0 %2764
        %2766 = vrot.lane.b32.xlu0 %v2763, 127
        %v2767 = vpop.permute.xlu0 %2766
        %2768 = vrot.lane.b32.xlu0 %v2762, 127
        %v2769 = vpop.permute.xlu0 %2768
        %v2773 = vadd.f32 %v2748, %v2765
        %v2774 = vadd.f32 %v2749, %v2767
        %v2775 = vadd.f32 %v2750, %v2769
        %s2776 = sld [smem:[#allocation4 + $0x71]]
        %v2777 = vstv %s2776
        %v2778 = vmul.f32 %v2777, %v369
        %v2779 = vmul.f32 %v2777, %v370
        %v2780 = vmul.f32 %v2777, %v371
        %v2784 = vrot.slane %v2778, 1
        %v2785 = vrot.slane %v2779, 1
        %v2786 = vsel %vm463, %v2784, %v2785
        %v2787 = vrot.slane %v2780, 1
        %v2788 = vsel %vm463, %v2785, %v2787
        %2789 = vrot.lane.b32.xlu0 %v2786, 126
        %v2790 = vpop.permute.xlu0 %2789
        %2791 = vrot.lane.b32.xlu0 %v2788, 126
        %v2792 = vpop.permute.xlu0 %2791
        %2793 = vrot.lane.b32.xlu0 %v2787, 126
        %v2794 = vpop.permute.xlu0 %2793
        %v2798 = vadd.f32 %v2773, %v2790
        %v2799 = vadd.f32 %v2774, %v2792
        %v2800 = vadd.f32 %v2775, %v2794
        %s2801 = sld [smem:[#allocation4 + $0x72]]
        %v2802 = vstv %s2801
        %v2803 = vmul.f32 %v2802, %v369
        %v2804 = vmul.f32 %v2802, %v370
        %v2805 = vmul.f32 %v2802, %v371
        %v2809 = vrot.slane %v2803, 2
        %v2810 = vrot.slane %v2804, 2
        %v2811 = vsel %vm533, %v2809, %v2810
        %v2812 = vrot.slane %v2805, 2
        %v2813 = vsel %vm533, %v2810, %v2812
        %v2817 = vadd.f32 %v2798, %v2811
        %v2818 = vadd.f32 %v2799, %v2813
        %v2819 = vadd.f32 %v2800, %v2812
        %s2820 = sld [smem:[#allocation4 + $0x73]]
        %v2821 = vstv %s2820
        %v2822 = vmul.f32 %v2821, %v369
        %v2823 = vmul.f32 %v2821, %v370
        %v2824 = vmul.f32 %v2821, %v371
        %v2828 = vrot.slane %v2822, 2
        %v2829 = vrot.slane %v2823, 2
        %v2830 = vsel %vm533, %v2828, %v2829
        %v2831 = vrot.slane %v2824, 2
        %v2832 = vsel %vm533, %v2829, %v2831
        %2833 = vrot.lane.b32.xlu0 %v2830, 127
        %v2834 = vpop.permute.xlu0 %2833
        %2835 = vrot.lane.b32.xlu0 %v2832, 127
        %v2836 = vpop.permute.xlu0 %2835
        %2837 = vrot.lane.b32.xlu0 %v2831, 127
        %v2838 = vpop.permute.xlu0 %2837
        %v2842 = vadd.f32 %v2817, %v2834
        %v2843 = vadd.f32 %v2818, %v2836
        %v2844 = vadd.f32 %v2819, %v2838
        %s2845 = sld [smem:[#allocation4 + $0x74]]
        %v2846 = vstv %s2845
        %v2847 = vmul.f32 %v2846, %v369
        %v2848 = vmul.f32 %v2846, %v370
        %v2849 = vmul.f32 %v2846, %v371
        %v2853 = vrot.slane %v2847, 2
        %v2854 = vrot.slane %v2848, 2
        %v2855 = vsel %vm533, %v2853, %v2854
        %v2856 = vrot.slane %v2849, 2
        %v2857 = vsel %vm533, %v2854, %v2856
        %2858 = vrot.lane.b32.xlu0 %v2855, 126
        %v2859 = vpop.permute.xlu0 %2858
        %2860 = vrot.lane.b32.xlu0 %v2857, 126
        %v2861 = vpop.permute.xlu0 %2860
        %2862 = vrot.lane.b32.xlu0 %v2856, 126
        %v2863 = vpop.permute.xlu0 %2862
        %v2867 = vadd.f32 %v2842, %v2859
        %v2868 = vadd.f32 %v2843, %v2861
        %v2869 = vadd.f32 %v2844, %v2863
        %s2870 = sld [smem:[#allocation4 + $0x75]]
        %v2871 = vstv %s2870
        %v2872 = vmul.f32 %v2871, %v372
        %v2873 = vmul.f32 %v2871, %v373
        %v2874 = vmul.f32 %v2871, %v374
        %v2875 = vadd.f32 %v2867, %v2872
        %v2876 = vadd.f32 %v2868, %v2873
        %v2877 = vadd.f32 %v2869, %v2874
        %s2878 = sld [smem:[#allocation4 + $0x76]]
        %v2879 = vstv %s2878
        %v2880 = vmul.f32 %v2879, %v372
        %v2881 = vmul.f32 %v2879, %v373
        %v2882 = vmul.f32 %v2879, %v374
        %2886 = vrot.lane.b32.xlu0 %v2880, 127
        %v2887 = vpop.permute.xlu0 %2886
        %2888 = vrot.lane.b32.xlu0 %v2881, 127
        %v2889 = vpop.permute.xlu0 %2888
        %2890 = vrot.lane.b32.xlu0 %v2882, 127
        %v2891 = vpop.permute.xlu0 %2890
        %v2895 = vadd.f32 %v2875, %v2887
        %v2896 = vadd.f32 %v2876, %v2889
        %v2897 = vadd.f32 %v2877, %v2891
        %s2898 = sld [smem:[#allocation4 + $0x77]]
        %v2899 = vstv %s2898
        %v2900 = vmul.f32 %v2899, %v372
        %v2901 = vmul.f32 %v2899, %v373
        %v2902 = vmul.f32 %v2899, %v374
        %2906 = vrot.lane.b32.xlu0 %v2900, 126
        %v2907 = vpop.permute.xlu0 %2906
        %2908 = vrot.lane.b32.xlu0 %v2901, 126
        %v2909 = vpop.permute.xlu0 %2908
        %2910 = vrot.lane.b32.xlu0 %v2902, 126
        %v2911 = vpop.permute.xlu0 %2910
        %v2915 = vadd.f32 %v2895, %v2907
        %v2916 = vadd.f32 %v2896, %v2909
        %v2917 = vadd.f32 %v2897, %v2911
        %s2918 = sld [smem:[#allocation4 + $0x78]]
        %v2919 = vstv %s2918
        %v2920 = vmul.f32 %v2919, %v372
        %v2921 = vmul.f32 %v2919, %v373
        %v2922 = vmul.f32 %v2919, %v374
        %v2926 = vrot.slane %v2920, 1
        %v2927 = vrot.slane %v2921, 1
        %v2928 = vsel %vm463, %v2926, %v2927
        %v2929 = vrot.slane %v2922, 1
        %v2930 = vsel %vm463, %v2927, %v2929
        %v2934 = vadd.f32 %v2915, %v2928
        %v2935 = vadd.f32 %v2916, %v2930
        %v2936 = vadd.f32 %v2917, %v2929
        %s2937 = sld [smem:[#allocation4 + $0x79]]
        %v2938 = vstv %s2937
        %v2939 = vmul.f32 %v2938, %v372
        %v2940 = vmul.f32 %v2938, %v373
        %v2941 = vmul.f32 %v2938, %v374
        %v2945 = vrot.slane %v2939, 1
        %v2946 = vrot.slane %v2940, 1
        %v2947 = vsel %vm463, %v2945, %v2946
        %v2948 = vrot.slane %v2941, 1
        %v2949 = vsel %vm463, %v2946, %v2948
        %2950 = vrot.lane.b32.xlu0 %v2947, 127
        %v2951 = vpop.permute.xlu0 %2950
        %2952 = vrot.lane.b32.xlu0 %v2949, 127
        %v2953 = vpop.permute.xlu0 %2952
        %2954 = vrot.lane.b32.xlu0 %v2948, 127
        %v2955 = vpop.permute.xlu0 %2954
        %v2959 = vadd.f32 %v2934, %v2951
        %v2960 = vadd.f32 %v2935, %v2953
        %v2961 = vadd.f32 %v2936, %v2955
        %s2962 = sld [smem:[#allocation4 + $0x7a]]
        %v2963 = vstv %s2962
        %v2964 = vmul.f32 %v2963, %v372
        %v2965 = vmul.f32 %v2963, %v373
        %v2966 = vmul.f32 %v2963, %v374
        %v2970 = vrot.slane %v2964, 1
        %v2971 = vrot.slane %v2965, 1
        %v2972 = vsel %vm463, %v2970, %v2971
        %v2973 = vrot.slane %v2966, 1
        %v2974 = vsel %vm463, %v2971, %v2973
        %2975 = vrot.lane.b32.xlu0 %v2972, 126
        %v2976 = vpop.permute.xlu0 %2975
        %2977 = vrot.lane.b32.xlu0 %v2974, 126
        %v2978 = vpop.permute.xlu0 %2977
        %2979 = vrot.lane.b32.xlu0 %v2973, 126
        %v2980 = vpop.permute.xlu0 %2979
        %v2984 = vadd.f32 %v2959, %v2976
        %v2985 = vadd.f32 %v2960, %v2978
        %v2986 = vadd.f32 %v2961, %v2980
        %s2987 = sld [smem:[#allocation4 + $0x7b]]
        %v2988 = vstv %s2987
        %v2989 = vmul.f32 %v2988, %v372
        %v2990 = vmul.f32 %v2988, %v373
        %v2991 = vmul.f32 %v2988, %v374
        %v2995 = vrot.slane %v2989, 2
        %v2996 = vrot.slane %v2990, 2
        %v2997 = vsel %vm533, %v2995, %v2996
        %v2998 = vrot.slane %v2991, 2
        %v2999 = vsel %vm533, %v2996, %v2998
        %v3003 = vadd.f32 %v2984, %v2997
        %v3004 = vadd.f32 %v2985, %v2999
        %v3005 = vadd.f32 %v2986, %v2998
        %s3006 = sld [smem:[#allocation4 + $0x7c]]
        %v3007 = vstv %s3006
        %v3008 = vmul.f32 %v3007, %v372
        %v3009 = vmul.f32 %v3007, %v373
        %v3010 = vmul.f32 %v3007, %v374
        %v3014 = vrot.slane %v3008, 2
        %v3015 = vrot.slane %v3009, 2
        %v3016 = vsel %vm533, %v3014, %v3015
        %v3017 = vrot.slane %v3010, 2
        %v3018 = vsel %vm533, %v3015, %v3017
        %3019 = vrot.lane.b32.xlu0 %v3016, 127
        %v3020 = vpop.permute.xlu0 %3019
        %3021 = vrot.lane.b32.xlu0 %v3018, 127
        %v3022 = vpop.permute.xlu0 %3021
        %3023 = vrot.lane.b32.xlu0 %v3017, 127
        %v3024 = vpop.permute.xlu0 %3023
        %v3028 = vadd.f32 %v3003, %v3020
        %v3029 = vadd.f32 %v3004, %v3022
        %v3030 = vadd.f32 %v3005, %v3024
        %s3031 = sld [smem:[#allocation4 + $0x7d]]
        %v3032 = vstv %s3031
        %v3033 = vmul.f32 %v3032, %v372
        %v3034 = vmul.f32 %v3032, %v373
        %v3035 = vmul.f32 %v3032, %v374
        %v3039 = vrot.slane %v3033, 2
        %v3040 = vrot.slane %v3034, 2
        %v3041 = vsel %vm533, %v3039, %v3040
        %v3042 = vrot.slane %v3035, 2
        %v3043 = vsel %vm533, %v3040, %v3042
        %3044 = vrot.lane.b32.xlu0 %v3041, 126
        %v3045 = vpop.permute.xlu0 %3044
        %3046 = vrot.lane.b32.xlu0 %v3043, 126
        %v3047 = vpop.permute.xlu0 %3046
        %3048 = vrot.lane.b32.xlu0 %v3042, 126
        %v3049 = vpop.permute.xlu0 %3048
        %v3053 = vadd.f32 %v3028, %v3045
        %v3054 = vadd.f32 %v3029, %v3047
        %v3055 = vadd.f32 %v3030, %v3049
        %s3056 = sld [smem:[#allocation4 + $0x7e]]
        %v3057 = vstv %s3056
        %v3058 = vmul.f32 %v3057, %v375
        %v3059 = vmul.f32 %v3057, %v376
        %v3060 = vmul.f32 %v3057, %v377
        %v3061 = vadd.f32 %v3053, %v3058
        %v3062 = vadd.f32 %v3054, %v3059
        %v3063 = vadd.f32 %v3055, %v3060
        %s3064 = sld [smem:[#allocation4 + $0x7f]]
        %v3065 = vstv %s3064
        %v3066 = vmul.f32 %v3065, %v375
        %v3067 = vmul.f32 %v3065, %v376
        %v3068 = vmul.f32 %v3065, %v377
        %3072 = vrot.lane.b32.xlu0 %v3066, 127
        %v3073 = vpop.permute.xlu0 %3072
        %3074 = vrot.lane.b32.xlu0 %v3067, 127
        %v3075 = vpop.permute.xlu0 %3074
        %3076 = vrot.lane.b32.xlu0 %v3068, 127
        %v3077 = vpop.permute.xlu0 %3076
        %v3081 = vadd.f32 %v3061, %v3073
        %v3082 = vadd.f32 %v3062, %v3075
        %v3083 = vadd.f32 %v3063, %v3077
        %s3084 = sld [smem:[#allocation4 + $0x80]]
        %v3085 = vstv %s3084
        %v3086 = vmul.f32 %v3085, %v375
        %v3087 = vmul.f32 %v3085, %v376
        %v3088 = vmul.f32 %v3085, %v377
        %3092 = vrot.lane.b32.xlu0 %v3086, 126
        %v3093 = vpop.permute.xlu0 %3092
        %3094 = vrot.lane.b32.xlu0 %v3087, 126
        %v3095 = vpop.permute.xlu0 %3094
        %3096 = vrot.lane.b32.xlu0 %v3088, 126
        %v3097 = vpop.permute.xlu0 %3096
        %v3101 = vadd.f32 %v3081, %v3093
        %v3102 = vadd.f32 %v3082, %v3095
        %v3103 = vadd.f32 %v3083, %v3097
        %s3104 = sld [smem:[#allocation4 + $0x81]]
        %v3105 = vstv %s3104
        %v3106 = vmul.f32 %v3105, %v375
        %v3107 = vmul.f32 %v3105, %v376
        %v3108 = vmul.f32 %v3105, %v377
        %v3112 = vrot.slane %v3106, 1
        %v3113 = vrot.slane %v3107, 1
        %v3114 = vsel %vm463, %v3112, %v3113
        %v3115 = vrot.slane %v3108, 1
        %v3116 = vsel %vm463, %v3113, %v3115
        %v3120 = vadd.f32 %v3101, %v3114
        %v3121 = vadd.f32 %v3102, %v3116
        %v3122 = vadd.f32 %v3103, %v3115
        %s3123 = sld [smem:[#allocation4 + $0x82]]
        %v3124 = vstv %s3123
        %v3125 = vmul.f32 %v3124, %v375
        %v3126 = vmul.f32 %v3124, %v376
        %v3127 = vmul.f32 %v3124, %v377
        %v3131 = vrot.slane %v3125, 1
        %v3132 = vrot.slane %v3126, 1
        %v3133 = vsel %vm463, %v3131, %v3132
        %v3134 = vrot.slane %v3127, 1
        %v3135 = vsel %vm463, %v3132, %v3134
        %3136 = vrot.lane.b32.xlu0 %v3133, 127
        %v3137 = vpop.permute.xlu0 %3136
        %3138 = vrot.lane.b32.xlu0 %v3135, 127
        %v3139 = vpop.permute.xlu0 %3138
        %3140 = vrot.lane.b32.xlu0 %v3134, 127
        %v3141 = vpop.permute.xlu0 %3140
        %v3145 = vadd.f32 %v3120, %v3137
        %v3146 = vadd.f32 %v3121, %v3139
        %v3147 = vadd.f32 %v3122, %v3141
        %s3148 = sld [smem:[#allocation4 + $0x83]]
        %v3149 = vstv %s3148
        %v3150 = vmul.f32 %v3149, %v375
        %v3151 = vmul.f32 %v3149, %v376
        %v3152 = vmul.f32 %v3149, %v377
        %v3156 = vrot.slane %v3150, 1
        %v3157 = vrot.slane %v3151, 1
        %v3158 = vsel %vm463, %v3156, %v3157
        %v3159 = vrot.slane %v3152, 1
        %v3160 = vsel %vm463, %v3157, %v3159
        %3161 = vrot.lane.b32.xlu0 %v3158, 126
        %v3162 = vpop.permute.xlu0 %3161
        %3163 = vrot.lane.b32.xlu0 %v3160, 126
        %v3164 = vpop.permute.xlu0 %3163
        %3165 = vrot.lane.b32.xlu0 %v3159, 126
        %v3166 = vpop.permute.xlu0 %3165
        %v3170 = vadd.f32 %v3145, %v3162
        %v3171 = vadd.f32 %v3146, %v3164
        %v3172 = vadd.f32 %v3147, %v3166
        %s3173 = sld [smem:[#allocation4 + $0x84]]
        %v3174 = vstv %s3173
        %v3175 = vmul.f32 %v3174, %v375
        %v3176 = vmul.f32 %v3174, %v376
        %v3177 = vmul.f32 %v3174, %v377
        %v3181 = vrot.slane %v3175, 2
        %v3182 = vrot.slane %v3176, 2
        %v3183 = vsel %vm533, %v3181, %v3182
        %v3184 = vrot.slane %v3177, 2
        %v3185 = vsel %vm533, %v3182, %v3184
        %v3189 = vadd.f32 %v3170, %v3183
        %v3190 = vadd.f32 %v3171, %v3185
        %v3191 = vadd.f32 %v3172, %v3184
        %s3192 = sld [smem:[#allocation4 + $0x85]]
        %v3193 = vstv %s3192
        %v3194 = vmul.f32 %v3193, %v375
        %v3195 = vmul.f32 %v3193, %v376
        %v3196 = vmul.f32 %v3193, %v377
        %v3200 = vrot.slane %v3194, 2
        %v3201 = vrot.slane %v3195, 2
        %v3202 = vsel %vm533, %v3200, %v3201
        %v3203 = vrot.slane %v3196, 2
        %v3204 = vsel %vm533, %v3201, %v3203
        %3205 = vrot.lane.b32.xlu0 %v3202, 127
        %v3206 = vpop.permute.xlu0 %3205
        %3207 = vrot.lane.b32.xlu0 %v3204, 127
        %v3208 = vpop.permute.xlu0 %3207
        %3209 = vrot.lane.b32.xlu0 %v3203, 127
        %v3210 = vpop.permute.xlu0 %3209
        %v3214 = vadd.f32 %v3189, %v3206
        %v3215 = vadd.f32 %v3190, %v3208
        %v3216 = vadd.f32 %v3191, %v3210
        %s3217 = sld [smem:[#allocation4 + $0x86]]
        %v3218 = vstv %s3217
        %v3219 = vmul.f32 %v3218, %v375
        %v3220 = vmul.f32 %v3218, %v376
        %v3221 = vmul.f32 %v3218, %v377
        %v3225 = vrot.slane %v3219, 2
        %v3226 = vrot.slane %v3220, 2
        %v3227 = vsel %vm533, %v3225, %v3226
        %v3228 = vrot.slane %v3221, 2
        %v3229 = vsel %vm533, %v3226, %v3228
        %3230 = vrot.lane.b32.xlu0 %v3227, 126
        %v3231 = vpop.permute.xlu0 %3230
        %3232 = vrot.lane.b32.xlu0 %v3229, 126
        %v3233 = vpop.permute.xlu0 %3232
        %3234 = vrot.lane.b32.xlu0 %v3228, 126
        %v3235 = vpop.permute.xlu0 %3234
        %v3239 = vadd.f32 %v3214, %v3231
        %v3240 = vadd.f32 %v3215, %v3233
        %v3241 = vadd.f32 %v3216, %v3235
        %s3242 = sld [smem:[#allocation4 + $0x87]]
        %v3243 = vstv %s3242
        %v3244 = vmul.f32 %v3243, %v378
        %v3245 = vmul.f32 %v3243, %v379
        %v3246 = vmul.f32 %v3243, %v380
        %v3247 = vadd.f32 %v3239, %v3244
        %v3248 = vadd.f32 %v3240, %v3245
        %v3249 = vadd.f32 %v3241, %v3246
        %s3250 = sld [smem:[#allocation4 + $0x88]]
        %v3251 = vstv %s3250
        %v3252 = vmul.f32 %v3251, %v378
        %v3253 = vmul.f32 %v3251, %v379
        %v3254 = vmul.f32 %v3251, %v380
        %3258 = vrot.lane.b32.xlu0 %v3252, 127
        %v3259 = vpop.permute.xlu0 %3258
        %3260 = vrot.lane.b32.xlu0 %v3253, 127
        %v3261 = vpop.permute.xlu0 %3260
        %3262 = vrot.lane.b32.xlu0 %v3254, 127
        %v3263 = vpop.permute.xlu0 %3262
        %v3267 = vadd.f32 %v3247, %v3259
        %v3268 = vadd.f32 %v3248, %v3261
        %v3269 = vadd.f32 %v3249, %v3263
        %s3270 = sld [smem:[#allocation4 + $0x89]]
        %v3271 = vstv %s3270
        %v3272 = vmul.f32 %v3271, %v378
        %v3273 = vmul.f32 %v3271, %v379
        %v3274 = vmul.f32 %v3271, %v380
        %3278 = vrot.lane.b32.xlu0 %v3272, 126
        %v3279 = vpop.permute.xlu0 %3278
        %3280 = vrot.lane.b32.xlu0 %v3273, 126
        %v3281 = vpop.permute.xlu0 %3280
        %3282 = vrot.lane.b32.xlu0 %v3274, 126
        %v3283 = vpop.permute.xlu0 %3282
        %v3287 = vadd.f32 %v3267, %v3279
        %v3288 = vadd.f32 %v3268, %v3281
        %v3289 = vadd.f32 %v3269, %v3283
        %s3290 = sld [smem:[#allocation4 + $0x8a]]
        %v3291 = vstv %s3290
        %v3292 = vmul.f32 %v3291, %v378
        %v3293 = vmul.f32 %v3291, %v379
        %v3294 = vmul.f32 %v3291, %v380
        %v3298 = vrot.slane %v3292, 1
        %v3299 = vrot.slane %v3293, 1
        %v3300 = vsel %vm463, %v3298, %v3299
        %v3301 = vrot.slane %v3294, 1
        %v3302 = vsel %vm463, %v3299, %v3301
        %v3306 = vadd.f32 %v3287, %v3300
        %v3307 = vadd.f32 %v3288, %v3302
        %v3308 = vadd.f32 %v3289, %v3301
        %s3309 = sld [smem:[#allocation4 + $0x8b]]
        %v3310 = vstv %s3309
        %v3311 = vmul.f32 %v3310, %v378
        %v3312 = vmul.f32 %v3310, %v379
        %v3313 = vmul.f32 %v3310, %v380
        %v3317 = vrot.slane %v3311, 1
        %v3318 = vrot.slane %v3312, 1
        %v3319 = vsel %vm463, %v3317, %v3318
        %v3320 = vrot.slane %v3313, 1
        %v3321 = vsel %vm463, %v3318, %v3320
        %3322 = vrot.lane.b32.xlu0 %v3319, 127
        %v3323 = vpop.permute.xlu0 %3322
        %3324 = vrot.lane.b32.xlu0 %v3321, 127
        %v3325 = vpop.permute.xlu0 %3324
        %3326 = vrot.lane.b32.xlu0 %v3320, 127
        %v3327 = vpop.permute.xlu0 %3326
        %v3331 = vadd.f32 %v3306, %v3323
        %v3332 = vadd.f32 %v3307, %v3325
        %v3333 = vadd.f32 %v3308, %v3327
        %s3334 = sld [smem:[#allocation4 + $0x8c]]
        %v3335 = vstv %s3334
        %v3336 = vmul.f32 %v3335, %v378
        %v3337 = vmul.f32 %v3335, %v379
        %v3338 = vmul.f32 %v3335, %v380
        %v3342 = vrot.slane %v3336, 1
        %v3343 = vrot.slane %v3337, 1
        %v3344 = vsel %vm463, %v3342, %v3343
        %v3345 = vrot.slane %v3338, 1
        %v3346 = vsel %vm463, %v3343, %v3345
        %3347 = vrot.lane.b32.xlu0 %v3344, 126
        %v3348 = vpop.permute.xlu0 %3347
        %3349 = vrot.lane.b32.xlu0 %v3346, 126
        %v3350 = vpop.permute.xlu0 %3349
        %3351 = vrot.lane.b32.xlu0 %v3345, 126
        %v3352 = vpop.permute.xlu0 %3351
        %v3356 = vadd.f32 %v3331, %v3348
        %v3357 = vadd.f32 %v3332, %v3350
        %v3358 = vadd.f32 %v3333, %v3352
        %s3359 = sld [smem:[#allocation4 + $0x8d]]
        %v3360 = vstv %s3359
        %v3361 = vmul.f32 %v3360, %v378
        %v3362 = vmul.f32 %v3360, %v379
        %v3363 = vmul.f32 %v3360, %v380
        %v3367 = vrot.slane %v3361, 2
        %v3368 = vrot.slane %v3362, 2
        %v3369 = vsel %vm533, %v3367, %v3368
        %v3370 = vrot.slane %v3363, 2
        %v3371 = vsel %vm533, %v3368, %v3370
        %v3375 = vadd.f32 %v3356, %v3369
        %v3376 = vadd.f32 %v3357, %v3371
        %v3377 = vadd.f32 %v3358, %v3370
        %s3378 = sld [smem:[#allocation4 + $0x8e]]
        %v3379 = vstv %s3378
        %v3380 = vmul.f32 %v3379, %v378
        %v3381 = vmul.f32 %v3379, %v379
        %v3382 = vmul.f32 %v3379, %v380
        %v3386 = vrot.slane %v3380, 2
        %v3387 = vrot.slane %v3381, 2
        %v3388 = vsel %vm533, %v3386, %v3387
        %v3389 = vrot.slane %v3382, 2
        %v3390 = vsel %vm533, %v3387, %v3389
        %3391 = vrot.lane.b32.xlu0 %v3388, 127
        %v3392 = vpop.permute.xlu0 %3391
        %3393 = vrot.lane.b32.xlu0 %v3390, 127
        %v3394 = vpop.permute.xlu0 %3393
        %3395 = vrot.lane.b32.xlu0 %v3389, 127
        %v3396 = vpop.permute.xlu0 %3395
        %v3400 = vadd.f32 %v3375, %v3392
        %v3401 = vadd.f32 %v3376, %v3394
        %v3402 = vadd.f32 %v3377, %v3396
        %s3403 = sld [smem:[#allocation4 + $0x8f]]
        %v3404 = vstv %s3403
        %v3405 = vmul.f32 %v3404, %v378
        %v3406 = vmul.f32 %v3404, %v379
        %v3407 = vmul.f32 %v3404, %v380
        %v3411 = vrot.slane %v3405, 2
        %v3412 = vrot.slane %v3406, 2
        %v3413 = vsel %vm533, %v3411, %v3412
        %v3414 = vrot.slane %v3407, 2
        %v3415 = vsel %vm533, %v3412, %v3414
        %3416 = vrot.lane.b32.xlu0 %v3413, 126
        %v3417 = vpop.permute.xlu0 %3416
        %3418 = vrot.lane.b32.xlu0 %v3415, 126
        %v3419 = vpop.permute.xlu0 %3418
        %3420 = vrot.lane.b32.xlu0 %v3414, 126
        %v3421 = vpop.permute.xlu0 %3420
        %v3425 = vadd.f32 %v3400, %v3417
        %v3426 = vadd.f32 %v3401, %v3419
        %v3427 = vadd.f32 %v3402, %v3421
        %v3428 = vsel %vm401, %v3425, 0.0
        %v3429 = vsel %vm402, %v3426, 0.0
        %v3430 = vsel %vm403, %v3427, 0.0
        %vm3431 = vcmp.gt.f32.partialorder %v3428, 0.0
        %vm3432 = vcmp.gt.f32.partialorder %v3429, 0.0
        %vm3433 = vcmp.gt.f32.partialorder %v3430, 0.0
        %v3434 = vmul.f32 %v1159, %v3428
        %v3435 = vmul.f32 %v1159, %v3429
        %v3436 = vmul.f32 %v1159, %v3430
        %v3437 = vsel %vm3431, %v3428, %v3434
        %v3438 = vsel %vm3432, %v3429, %v3435
        %v3439 = vsel %vm3433, %v3430, %v3436
        %s3440 = sld [smem:[#allocation10]]
        %v3441 = vstv %s3440
        %s3442 = sld [smem:[#allocation9]]
        %v3443 = vstv %s3442
        %v3444 = vmul.f32 %v3443, %v1163
        %v3445 = vmul.f32 %v3443, %v1164
        %v3446 = vadd.f32 %v3441, %v3444
        %v3447 = vadd.f32 %v3441, %v3445
        %s3448 = sld [smem:[#allocation9 + $0x1]]
        %v3449 = vstv %s3448
        %v3450 = vmul.f32 %v3449, %v1163
        %v3451 = vmul.f32 %v3449, %v1164
        %3454 = vrot.lane.b32.xlu0 %v3450, 127
        %v3455 = vpop.permute.xlu0 %3454
        %3456 = vrot.lane.b32.xlu0 %v3451, 127
        %v3457 = vpop.permute.xlu0 %3456
        %v3460 = vadd.f32 %v3446, %v3455
        %v3461 = vadd.f32 %v3447, %v3457
        %s3462 = sld [smem:[#allocation9 + $0x2]]
        %v3463 = vstv %s3462
        %v3464 = vmul.f32 %v3463, %v1163
        %v3465 = vmul.f32 %v3463, %v1164
        %3468 = vrot.lane.b32.xlu0 %v3464, 126
        %v3469 = vpop.permute.xlu0 %3468
        %3470 = vrot.lane.b32.xlu0 %v3465, 126
        %v3471 = vpop.permute.xlu0 %3470
        %v3474 = vadd.f32 %v3460, %v3469
        %v3475 = vadd.f32 %v3461, %v3471
        %s3476 = sld [smem:[#allocation9 + $0x3]]
        %v3477 = vstv %s3476
        %v3478 = vmul.f32 %v3477, %v1163
        %v3479 = vmul.f32 %v3477, %v1164
        %v3480 = vmul.f32 %v3477, %v1165
        %v3484 = vrot.slane %v3478, 1
        %v3485 = vrot.slane %v3479, 1
        %v3486 = vsel %vm463, %v3484, %v3485
        %v3487 = vrot.slane %v3480, 1
        %v3488 = vsel %vm463, %v3485, %v3487
        %v3491 = vadd.f32 %v3474, %v3486
        %v3492 = vadd.f32 %v3475, %v3488
        %s3493 = sld [smem:[#allocation9 + $0x4]]
        %v3494 = vstv %s3493
        %v3495 = vmul.f32 %v3494, %v1163
        %v3496 = vmul.f32 %v3494, %v1164
        %v3497 = vmul.f32 %v3494, %v1165
        %v3501 = vrot.slane %v3495, 1
        %v3502 = vrot.slane %v3496, 1
        %v3503 = vsel %vm463, %v3501, %v3502
        %v3504 = vrot.slane %v3497, 1
        %v3505 = vsel %vm463, %v3502, %v3504
        %3506 = vrot.lane.b32.xlu0 %v3503, 127
        %v3507 = vpop.permute.xlu0 %3506
        %3508 = vrot.lane.b32.xlu0 %v3505, 127
        %v3509 = vpop.permute.xlu0 %3508
        %v3512 = vadd.f32 %v3491, %v3507
        %v3513 = vadd.f32 %v3492, %v3509
        %s3514 = sld [smem:[#allocation9 + $0x5]]
        %v3515 = vstv %s3514
        %v3516 = vmul.f32 %v3515, %v1163
        %v3517 = vmul.f32 %v3515, %v1164
        %v3518 = vmul.f32 %v3515, %v1165
        %v3522 = vrot.slane %v3516, 1
        %v3523 = vrot.slane %v3517, 1
        %v3524 = vsel %vm463, %v3522, %v3523
        %v3525 = vrot.slane %v3518, 1
        %v3526 = vsel %vm463, %v3523, %v3525
        %3527 = vrot.lane.b32.xlu0 %v3524, 126
        %v3528 = vpop.permute.xlu0 %3527
        %3529 = vrot.lane.b32.xlu0 %v3526, 126
        %v3530 = vpop.permute.xlu0 %3529
        %v3533 = vadd.f32 %v3512, %v3528
        %v3534 = vadd.f32 %v3513, %v3530
        %s3535 = sld [smem:[#allocation9 + $0x6]]
        %v3536 = vstv %s3535
        %v3537 = vmul.f32 %v3536, %v1163
        %v3538 = vmul.f32 %v3536, %v1164
        %v3539 = vmul.f32 %v3536, %v1165
        %v3543 = vrot.slane %v3537, 2
        %v3544 = vrot.slane %v3538, 2
        %v3545 = vsel %vm533, %v3543, %v3544
        %v3546 = vrot.slane %v3539, 2
        %v3547 = vsel %vm533, %v3544, %v3546
        %v3550 = vadd.f32 %v3533, %v3545
        %v3551 = vadd.f32 %v3534, %v3547
        %s3552 = sld [smem:[#allocation9 + $0x7]]
        %v3553 = vstv %s3552
        %v3554 = vmul.f32 %v3553, %v1163
        %v3555 = vmul.f32 %v3553, %v1164
        %v3556 = vmul.f32 %v3553, %v1165
        %v3560 = vrot.slane %v3554, 2
        %v3561 = vrot.slane %v3555, 2
        %v3562 = vsel %vm533, %v3560, %v3561
        %v3563 = vrot.slane %v3556, 2
        %v3564 = vsel %vm533, %v3561, %v3563
        %3565 = vrot.lane.b32.xlu0 %v3562, 127
        %v3566 = vpop.permute.xlu0 %3565
        %3567 = vrot.lane.b32.xlu0 %v3564, 127
        %v3568 = vpop.permute.xlu0 %3567
        %v3571 = vadd.f32 %v3550, %v3566
        %v3572 = vadd.f32 %v3551, %v3568
        %s3573 = sld [smem:[#allocation9 + $0x8]]
        %v3574 = vstv %s3573
        %v3575 = vmul.f32 %v3574, %v1163
        %v3576 = vmul.f32 %v3574, %v1164
        %v3577 = vmul.f32 %v3574, %v1165
        %v3581 = vrot.slane %v3575, 2
        %v3582 = vrot.slane %v3576, 2
        %v3583 = vsel %vm533, %v3581, %v3582
        %v3584 = vrot.slane %v3577, 2
        %v3585 = vsel %vm533, %v3582, %v3584
        %3586 = vrot.lane.b32.xlu0 %v3583, 126
        %v3587 = vpop.permute.xlu0 %3586
        %3588 = vrot.lane.b32.xlu0 %v3585, 126
        %v3589 = vpop.permute.xlu0 %3588
        %v3592 = vadd.f32 %v3571, %v3587
        %v3593 = vadd.f32 %v3572, %v3589
        %s3594 = sld [smem:[#allocation9 + $0x9]]
        %v3595 = vstv %s3594
        %v3596 = vmul.f32 %v3595, %v1921
        %v3597 = vmul.f32 %v3595, %v1922
        %v3598 = vadd.f32 %v3592, %v3596
        %v3599 = vadd.f32 %v3593, %v3597
        %s3600 = sld [smem:[#allocation9 + $0xa]]
        %v3601 = vstv %s3600
        %v3602 = vmul.f32 %v3601, %v1921
        %v3603 = vmul.f32 %v3601, %v1922
        %3606 = vrot.lane.b32.xlu0 %v3602, 127
        %v3607 = vpop.permute.xlu0 %3606
        %3608 = vrot.lane.b32.xlu0 %v3603, 127
        %v3609 = vpop.permute.xlu0 %3608
        %v3612 = vadd.f32 %v3598, %v3607
        %v3613 = vadd.f32 %v3599, %v3609
        %s3614 = sld [smem:[#allocation9 + $0xb]]
        %v3615 = vstv %s3614
        %v3616 = vmul.f32 %v3615, %v1921
        %v3617 = vmul.f32 %v3615, %v1922
        %3620 = vrot.lane.b32.xlu0 %v3616, 126
        %v3621 = vpop.permute.xlu0 %3620
        %3622 = vrot.lane.b32.xlu0 %v3617, 126
        %v3623 = vpop.permute.xlu0 %3622
        %v3626 = vadd.f32 %v3612, %v3621
        %v3627 = vadd.f32 %v3613, %v3623
        %s3628 = sld [smem:[#allocation9 + $0xc]]
        %v3629 = vstv %s3628
        %v3630 = vmul.f32 %v3629, %v1921
        %v3631 = vmul.f32 %v3629, %v1922
        %v3632 = vmul.f32 %v3629, %v1923
        %v3636 = vrot.slane %v3630, 1
        %v3637 = vrot.slane %v3631, 1
        %v3638 = vsel %vm463, %v3636, %v3637
        %v3639 = vrot.slane %v3632, 1
        %v3640 = vsel %vm463, %v3637, %v3639
        %v3643 = vadd.f32 %v3626, %v3638
        %v3644 = vadd.f32 %v3627, %v3640
        %s3645 = sld [smem:[#allocation9 + $0xd]]
        %v3646 = vstv %s3645
        %v3647 = vmul.f32 %v3646, %v1921
        %v3648 = vmul.f32 %v3646, %v1922
        %v3649 = vmul.f32 %v3646, %v1923
        %v3653 = vrot.slane %v3647, 1
        %v3654 = vrot.slane %v3648, 1
        %v3655 = vsel %vm463, %v3653, %v3654
        %v3656 = vrot.slane %v3649, 1
        %v3657 = vsel %vm463, %v3654, %v3656
        %3658 = vrot.lane.b32.xlu0 %v3655, 127
        %v3659 = vpop.permute.xlu0 %3658
        %3660 = vrot.lane.b32.xlu0 %v3657, 127
        %v3661 = vpop.permute.xlu0 %3660
        %v3664 = vadd.f32 %v3643, %v3659
        %v3665 = vadd.f32 %v3644, %v3661
        %s3666 = sld [smem:[#allocation9 + $0xe]]
        %v3667 = vstv %s3666
        %v3668 = vmul.f32 %v3667, %v1921
        %v3669 = vmul.f32 %v3667, %v1922
        %v3670 = vmul.f32 %v3667, %v1923
        %v3674 = vrot.slane %v3668, 1
        %v3675 = vrot.slane %v3669, 1
        %v3676 = vsel %vm463, %v3674, %v3675
        %v3677 = vrot.slane %v3670, 1
        %v3678 = vsel %vm463, %v3675, %v3677
        %3679 = vrot.lane.b32.xlu0 %v3676, 126
        %v3680 = vpop.permute.xlu0 %3679
        %3681 = vrot.lane.b32.xlu0 %v3678, 126
        %v3682 = vpop.permute.xlu0 %3681
        %v3685 = vadd.f32 %v3664, %v3680
        %v3686 = vadd.f32 %v3665, %v3682
        %s3687 = sld [smem:[#allocation9 + $0xf]]
        %v3688 = vstv %s3687
        %v3689 = vmul.f32 %v3688, %v1921
        %v3690 = vmul.f32 %v3688, %v1922
        %v3691 = vmul.f32 %v3688, %v1923
        %v3695 = vrot.slane %v3689, 2
        %v3696 = vrot.slane %v3690, 2
        %v3697 = vsel %vm533, %v3695, %v3696
        %v3698 = vrot.slane %v3691, 2
        %v3699 = vsel %vm533, %v3696, %v3698
        %v3702 = vadd.f32 %v3685, %v3697
        %v3703 = vadd.f32 %v3686, %v3699
        %s3704 = sld [smem:[#allocation9 + $0x10]]
        %v3705 = vstv %s3704
        %v3706 = vmul.f32 %v3705, %v1921
        %v3707 = vmul.f32 %v3705, %v1922
        %v3708 = vmul.f32 %v3705, %v1923
        %v3712 = vrot.slane %v3706, 2
        %v3713 = vrot.slane %v3707, 2
        %v3714 = vsel %vm533, %v3712, %v3713
        %v3715 = vrot.slane %v3708, 2
        %v3716 = vsel %vm533, %v3713, %v3715
        %3717 = vrot.lane.b32.xlu0 %v3714, 127
        %v3718 = vpop.permute.xlu0 %3717
        %3719 = vrot.lane.b32.xlu0 %v3716, 127
        %v3720 = vpop.permute.xlu0 %3719
        %v3723 = vadd.f32 %v3702, %v3718
        %v3724 = vadd.f32 %v3703, %v3720
        %s3725 = sld [smem:[#allocation9 + $0x11]]
        %v3726 = vstv %s3725
        %v3727 = vmul.f32 %v3726, %v1921
        %v3728 = vmul.f32 %v3726, %v1922
        %v3729 = vmul.f32 %v3726, %v1923
        %v3733 = vrot.slane %v3727, 2
        %v3734 = vrot.slane %v3728, 2
        %v3735 = vsel %vm533, %v3733, %v3734
        %v3736 = vrot.slane %v3729, 2
        %v3737 = vsel %vm533, %v3734, %v3736
        %3738 = vrot.lane.b32.xlu0 %v3735, 126
        %v3739 = vpop.permute.xlu0 %3738
        %3740 = vrot.lane.b32.xlu0 %v3737, 126
        %v3741 = vpop.permute.xlu0 %3740
        %v3744 = vadd.f32 %v3723, %v3739
        %v3745 = vadd.f32 %v3724, %v3741
        %s3746 = sld [smem:[#allocation9 + $0x12]]
        %v3747 = vstv %s3746
        %v3748 = vmul.f32 %v3747, %v2679
        %v3749 = vmul.f32 %v3747, %v2680
        %v3750 = vadd.f32 %v3744, %v3748
        %v3751 = vadd.f32 %v3745, %v3749
        %s3752 = sld [smem:[#allocation9 + $0x13]]
        %v3753 = vstv %s3752
        %v3754 = vmul.f32 %v3753, %v2679
        %v3755 = vmul.f32 %v3753, %v2680
        %3758 = vrot.lane.b32.xlu0 %v3754, 127
        %v3759 = vpop.permute.xlu0 %3758
        %3760 = vrot.lane.b32.xlu0 %v3755, 127
        %v3761 = vpop.permute.xlu0 %3760
        %v3764 = vadd.f32 %v3750, %v3759
        %v3765 = vadd.f32 %v3751, %v3761
        %s3766 = sld [smem:[#allocation9 + $0x14]]
        %v3767 = vstv %s3766
        %v3768 = vmul.f32 %v3767, %v2679
        %v3769 = vmul.f32 %v3767, %v2680
        %3772 = vrot.lane.b32.xlu0 %v3768, 126
        %v3773 = vpop.permute.xlu0 %3772
        %3774 = vrot.lane.b32.xlu0 %v3769, 126
        %v3775 = vpop.permute.xlu0 %3774
        %v3778 = vadd.f32 %v3764, %v3773
        %v3779 = vadd.f32 %v3765, %v3775
        %s3780 = sld [smem:[#allocation9 + $0x15]]
        %v3781 = vstv %s3780
        %v3782 = vmul.f32 %v3781, %v2679
        %v3783 = vmul.f32 %v3781, %v2680
        %v3784 = vmul.f32 %v3781, %v2681
        %v3788 = vrot.slane %v3782, 1
        %v3789 = vrot.slane %v3783, 1
        %v3790 = vsel %vm463, %v3788, %v3789
        %v3791 = vrot.slane %v3784, 1
        %v3792 = vsel %vm463, %v3789, %v3791
        %v3795 = vadd.f32 %v3778, %v3790
        %v3796 = vadd.f32 %v3779, %v3792
        %s3797 = sld [smem:[#allocation9 + $0x16]]
        %v3798 = vstv %s3797
        %v3799 = vmul.f32 %v3798, %v2679
        %v3800 = vmul.f32 %v3798, %v2680
        %v3801 = vmul.f32 %v3798, %v2681
        %v3805 = vrot.slane %v3799, 1
        %v3806 = vrot.slane %v3800, 1
        %v3807 = vsel %vm463, %v3805, %v3806
        %v3808 = vrot.slane %v3801, 1
        %v3809 = vsel %vm463, %v3806, %v3808
        %3810 = vrot.lane.b32.xlu0 %v3807, 127
        %v3811 = vpop.permute.xlu0 %3810
        %3812 = vrot.lane.b32.xlu0 %v3809, 127
        %v3813 = vpop.permute.xlu0 %3812
        %v3816 = vadd.f32 %v3795, %v3811
        %v3817 = vadd.f32 %v3796, %v3813
        %s3818 = sld [smem:[#allocation9 + $0x17]]
        %v3819 = vstv %s3818
        %v3820 = vmul.f32 %v3819, %v2679
        %v3821 = vmul.f32 %v3819, %v2680
        %v3822 = vmul.f32 %v3819, %v2681
        %v3826 = vrot.slane %v3820, 1
        %v3827 = vrot.slane %v3821, 1
        %v3828 = vsel %vm463, %v3826, %v3827
        %v3829 = vrot.slane %v3822, 1
        %v3830 = vsel %vm463, %v3827, %v3829
        %3831 = vrot.lane.b32.xlu0 %v3828, 126
        %v3832 = vpop.permute.xlu0 %3831
        %3833 = vrot.lane.b32.xlu0 %v3830, 126
        %v3834 = vpop.permute.xlu0 %3833
        %v3837 = vadd.f32 %v3816, %v3832
        %v3838 = vadd.f32 %v3817, %v3834
        %s3839 = sld [smem:[#allocation9 + $0x18]]
        %v3840 = vstv %s3839
        %v3841 = vmul.f32 %v3840, %v2679
        %v3842 = vmul.f32 %v3840, %v2680
        %v3843 = vmul.f32 %v3840, %v2681
        %v3847 = vrot.slane %v3841, 2
        %v3848 = vrot.slane %v3842, 2
        %v3849 = vsel %vm533, %v3847, %v3848
        %v3850 = vrot.slane %v3843, 2
        %v3851 = vsel %vm533, %v3848, %v3850
        %v3854 = vadd.f32 %v3837, %v3849
        %v3855 = vadd.f32 %v3838, %v3851
        %s3856 = sld [smem:[#allocation9 + $0x19]]
        %v3857 = vstv %s3856
        %v3858 = vmul.f32 %v3857, %v2679
        %v3859 = vmul.f32 %v3857, %v2680
        %v3860 = vmul.f32 %v3857, %v2681
        %v3864 = vrot.slane %v3858, 2
        %v3865 = vrot.slane %v3859, 2
        %v3866 = vsel %vm533, %v3864, %v3865
        %v3867 = vrot.slane %v3860, 2
        %v3868 = vsel %vm533, %v3865, %v3867
        %3869 = vrot.lane.b32.xlu0 %v3866, 127
        %v3870 = vpop.permute.xlu0 %3869
        %3871 = vrot.lane.b32.xlu0 %v3868, 127
        %v3872 = vpop.permute.xlu0 %3871
        %v3875 = vadd.f32 %v3854, %v3870
        %v3876 = vadd.f32 %v3855, %v3872
        %s3877 = sld [smem:[#allocation9 + $0x1a]]
        %v3878 = vstv %s3877
        %v3879 = vmul.f32 %v3878, %v2679
        %v3880 = vmul.f32 %v3878, %v2680
        %v3881 = vmul.f32 %v3878, %v2681
        %v3885 = vrot.slane %v3879, 2
        %v3886 = vrot.slane %v3880, 2
        %v3887 = vsel %vm533, %v3885, %v3886
        %v3888 = vrot.slane %v3881, 2
        %v3889 = vsel %vm533, %v3886, %v3888
        %3890 = vrot.lane.b32.xlu0 %v3887, 126
        %v3891 = vpop.permute.xlu0 %3890
        %3892 = vrot.lane.b32.xlu0 %v3889, 126
        %v3893 = vpop.permute.xlu0 %3892
        %v3896 = vadd.f32 %v3875, %v3891
        %v3897 = vadd.f32 %v3876, %v3893
        %s3898 = sld [smem:[#allocation9 + $0x1b]]
        %v3899 = vstv %s3898
        %v3900 = vmul.f32 %v3899, %v3437
        %v3901 = vmul.f32 %v3899, %v3438
        %v3902 = vadd.f32 %v3896, %v3900
        %v3903 = vadd.f32 %v3897, %v3901
        %s3904 = sld [smem:[#allocation9 + $0x1c]]
        %v3905 = vstv %s3904
        %v3906 = vmul.f32 %v3905, %v3437
        %v3907 = vmul.f32 %v3905, %v3438
        %3910 = vrot.lane.b32.xlu0 %v3906, 127
        %v3911 = vpop.permute.xlu0 %3910
        %3912 = vrot.lane.b32.xlu0 %v3907, 127
        %v3913 = vpop.permute.xlu0 %3912
        %v3916 = vadd.f32 %v3902, %v3911
        %v3917 = vadd.f32 %v3903, %v3913
        %s3918 = sld [smem:[#allocation9 + $0x1d]]
        %v3919 = vstv %s3918
        %v3920 = vmul.f32 %v3919, %v3437
        %v3921 = vmul.f32 %v3919, %v3438
        %3924 = vrot.lane.b32.xlu0 %v3920, 126
        %v3925 = vpop.permute.xlu0 %3924
        %3926 = vrot.lane.b32.xlu0 %v3921, 126
        %v3927 = vpop.permute.xlu0 %3926
        %v3930 = vadd.f32 %v3916, %v3925
        %v3931 = vadd.f32 %v3917, %v3927
        %s3932 = sld [smem:[#allocation9 + $0x1e]]
        %v3933 = vstv %s3932
        %v3934 = vmul.f32 %v3933, %v3437
        %v3935 = vmul.f32 %v3933, %v3438
        %v3936 = vmul.f32 %v3933, %v3439
        %v3940 = vrot.slane %v3934, 1
        %v3941 = vrot.slane %v3935, 1
        %v3942 = vsel %vm463, %v3940, %v3941
        %v3943 = vrot.slane %v3936, 1
        %v3944 = vsel %vm463, %v3941, %v3943
        %v3947 = vadd.f32 %v3930, %v3942
        %v3948 = vadd.f32 %v3931, %v3944
        %s3949 = sld [smem:[#allocation9 + $0x1f]]
        %v3950 = vstv %s3949
        %v3951 = vmul.f32 %v3950, %v3437
        %v3952 = vmul.f32 %v3950, %v3438
        %v3953 = vmul.f32 %v3950, %v3439
        %v3957 = vrot.slane %v3951, 1
        %v3958 = vrot.slane %v3952, 1
        %v3959 = vsel %vm463, %v3957, %v3958
        %v3960 = vrot.slane %v3953, 1
        %v3961 = vsel %vm463, %v3958, %v3960
        %3962 = vrot.lane.b32.xlu0 %v3959, 127
        %v3963 = vpop.permute.xlu0 %3962
        %3964 = vrot.lane.b32.xlu0 %v3961, 127
        %v3965 = vpop.permute.xlu0 %3964
        %v3968 = vadd.f32 %v3947, %v3963
        %v3969 = vadd.f32 %v3948, %v3965
        %s3970 = sld [smem:[#allocation9 + $0x20]]
        %v3971 = vstv %s3970
        %v3972 = vmul.f32 %v3971, %v3437
        %v3973 = vmul.f32 %v3971, %v3438
        %v3974 = vmul.f32 %v3971, %v3439
        %v3978 = vrot.slane %v3972, 1
        %v3979 = vrot.slane %v3973, 1
        %v3980 = vsel %vm463, %v3978, %v3979
        %v3981 = vrot.slane %v3974, 1
        %v3982 = vsel %vm463, %v3979, %v3981
        %3983 = vrot.lane.b32.xlu0 %v3980, 126
        %v3984 = vpop.permute.xlu0 %3983
        %3985 = vrot.lane.b32.xlu0 %v3982, 126
        %v3986 = vpop.permute.xlu0 %3985
        %v3989 = vadd.f32 %v3968, %v3984
        %v3990 = vadd.f32 %v3969, %v3986
        %s3991 = sld [smem:[#allocation9 + $0x21]]
        %v3992 = vstv %s3991
        %v3993 = vmul.f32 %v3992, %v3437
        %v3994 = vmul.f32 %v3992, %v3438
        %v3995 = vmul.f32 %v3992, %v3439
        %v3999 = vrot.slane %v3993, 2
        %v4000 = vrot.slane %v3994, 2
        %v4001 = vsel %vm533, %v3999, %v4000
        %v4002 = vrot.slane %v3995, 2
        %v4003 = vsel %vm533, %v4000, %v4002
        %v4006 = vadd.f32 %v3989, %v4001
        %v4007 = vadd.f32 %v3990, %v4003
        %s4008 = sld [smem:[#allocation9 + $0x22]]
        %v4009 = vstv %s4008
        %v4010 = vmul.f32 %v4009, %v3437
        %v4011 = vmul.f32 %v4009, %v3438
        %v4012 = vmul.f32 %v4009, %v3439
        %v4016 = vrot.slane %v4010, 2
        %v4017 = vrot.slane %v4011, 2
        %v4018 = vsel %vm533, %v4016, %v4017
        %v4019 = vrot.slane %v4012, 2
        %v4020 = vsel %vm533, %v4017, %v4019
        %4021 = vrot.lane.b32.xlu0 %v4018, 127
        %v4022 = vpop.permute.xlu0 %4021
        %4023 = vrot.lane.b32.xlu0 %v4020, 127
        %v4024 = vpop.permute.xlu0 %4023
        %v4027 = vadd.f32 %v4006, %v4022
        %v4028 = vadd.f32 %v4007, %v4024
        %s4029 = sld [smem:[#allocation9 + $0x23]]
        %v4030 = vstv %s4029
        %v4031 = vmul.f32 %v4030, %v3437
        %v4032 = vmul.f32 %v4030, %v3438
        %v4033 = vmul.f32 %v4030, %v3439
        %v4037 = vrot.slane %v4031, 2
        %v4038 = vrot.slane %v4032, 2
        %v4039 = vsel %vm533, %v4037, %v4038
        %v4040 = vrot.slane %v4033, 2
        %v4041 = vsel %vm533, %v4038, %v4040
        %4042 = vrot.lane.b32.xlu0 %v4039, 126
        %v4043 = vpop.permute.xlu0 %4042
        %4044 = vrot.lane.b32.xlu0 %v4041, 126
        %v4045 = vpop.permute.xlu0 %4044
        %v4048 = vadd.f32 %v4027, %v4043
        %v4049 = vadd.f32 %v4028, %v4045
        %v4053 = vrot.slane %v331, 2
        %v4054 = vrot.slane %v332, 2
        %v4055 = vsel %vm533, %v4053, %v4054
        %v4056 = vrot.slane %v333, 2
        %v4057 = vsel %vm533, %v4054, %v4056
        %4058 = vrot.lane.b32.xlu0 %v4055, 126
        %v4059 = vpop.permute.xlu0 %4058
        %4060 = vrot.lane.b32.xlu0 %v4057, 126
        %v4061 = vpop.permute.xlu0 %4060
        %v4064 = vadd.f32 %v4048, %v4059
        %v4065 = vadd.f32 %v4049, %v4061
        %vm4066 = vcmask 130048
        %4067 = vst.msk [vmem:[%s325] sm:$0xff] %vm4066, %v4064
        %4068 = vst.msk [vmem:[%s325 + $0x8] sm:$0xff] %vm4066, %v4065
        %s4069 = sld [smem:[#allocation10 + $0x1]]
        %v4070 = vstv %s4069
        %s4071 = sld [smem:[#allocation9 + $0x24]]
        %v4072 = vstv %s4071
        %v4073 = vmul.f32 %v4072, %v1163
        %v4074 = vmul.f32 %v4072, %v1164
        %v4075 = vadd.f32 %v4070, %v4073
        %v4076 = vadd.f32 %v4070, %v4074
        %s4077 = sld [smem:[#allocation9 + $0x25]]
        %v4078 = vstv %s4077
        %v4079 = vmul.f32 %v4078, %v1163
        %v4080 = vmul.f32 %v4078, %v1164
        %4083 = vrot.lane.b32.xlu0 %v4079, 127
        %v4084 = vpop.permute.xlu0 %4083
        %4085 = vrot.lane.b32.xlu0 %v4080, 127
        %v4086 = vpop.permute.xlu0 %4085
        %v4089 = vadd.f32 %v4075, %v4084
        %v4090 = vadd.f32 %v4076, %v4086
        %s4091 = sld [smem:[#allocation9 + $0x26]]
        %v4092 = vstv %s4091
        %v4093 = vmul.f32 %v4092, %v1163
        %v4094 = vmul.f32 %v4092, %v1164
        %4097 = vrot.lane.b32.xlu0 %v4093, 126
        %v4098 = vpop.permute.xlu0 %4097
        %4099 = vrot.lane.b32.xlu0 %v4094, 126
        %v4100 = vpop.permute.xlu0 %4099
        %v4103 = vadd.f32 %v4089, %v4098
        %v4104 = vadd.f32 %v4090, %v4100
        %s4105 = sld [smem:[#allocation9 + $0x27]]
        %v4106 = vstv %s4105
        %v4107 = vmul.f32 %v4106, %v1163
        %v4108 = vmul.f32 %v4106, %v1164
        %v4109 = vmul.f32 %v4106, %v1165
        %v4113 = vrot.slane %v4107, 1
        %v4114 = vrot.slane %v4108, 1
        %v4115 = vsel %vm463, %v4113, %v4114
        %v4116 = vrot.slane %v4109, 1
        %v4117 = vsel %vm463, %v4114, %v4116
        %v4120 = vadd.f32 %v4103, %v4115
        %v4121 = vadd.f32 %v4104, %v4117
        %s4122 = sld [smem:[#allocation9 + $0x28]]
        %v4123 = vstv %s4122
        %v4124 = vmul.f32 %v4123, %v1163
        %v4125 = vmul.f32 %v4123, %v1164
        %v4126 = vmul.f32 %v4123, %v1165
        %v4130 = vrot.slane %v4124, 1
        %v4131 = vrot.slane %v4125, 1
        %v4132 = vsel %vm463, %v4130, %v4131
        %v4133 = vrot.slane %v4126, 1
        %v4134 = vsel %vm463, %v4131, %v4133
        %4135 = vrot.lane.b32.xlu0 %v4132, 127
        %v4136 = vpop.permute.xlu0 %4135
        %4137 = vrot.lane.b32.xlu0 %v4134, 127
        %v4138 = vpop.permute.xlu0 %4137
        %v4141 = vadd.f32 %v4120, %v4136
        %v4142 = vadd.f32 %v4121, %v4138
        %s4143 = sld [smem:[#allocation9 + $0x29]]
        %v4144 = vstv %s4143
        %v4145 = vmul.f32 %v4144, %v1163
        %v4146 = vmul.f32 %v4144, %v1164
        %v4147 = vmul.f32 %v4144, %v1165
        %v4151 = vrot.slane %v4145, 1
        %v4152 = vrot.slane %v4146, 1
        %v4153 = vsel %vm463, %v4151, %v4152
        %v4154 = vrot.slane %v4147, 1
        %v4155 = vsel %vm463, %v4152, %v4154
        %4156 = vrot.lane.b32.xlu0 %v4153, 126
        %v4157 = vpop.permute.xlu0 %4156
        %4158 = vrot.lane.b32.xlu0 %v4155, 126
        %v4159 = vpop.permute.xlu0 %4158
        %v4162 = vadd.f32 %v4141, %v4157
        %v4163 = vadd.f32 %v4142, %v4159
        %s4164 = sld [smem:[#allocation9 + $0x2a]]
        %v4165 = vstv %s4164
        %v4166 = vmul.f32 %v4165, %v1163
        %v4167 = vmul.f32 %v4165, %v1164
        %v4168 = vmul.f32 %v4165, %v1165
        %v4172 = vrot.slane %v4166, 2
        %v4173 = vrot.slane %v4167, 2
        %v4174 = vsel %vm533, %v4172, %v4173
        %v4175 = vrot.slane %v4168, 2
        %v4176 = vsel %vm533, %v4173, %v4175
        %v4179 = vadd.f32 %v4162, %v4174
        %v4180 = vadd.f32 %v4163, %v4176
        %s4181 = sld [smem:[#allocation9 + $0x2b]]
        %v4182 = vstv %s4181
        %v4183 = vmul.f32 %v4182, %v1163
        %v4184 = vmul.f32 %v4182, %v1164
        %v4185 = vmul.f32 %v4182, %v1165
        %v4189 = vrot.slane %v4183, 2
        %v4190 = vrot.slane %v4184, 2
        %v4191 = vsel %vm533, %v4189, %v4190
        %v4192 = vrot.slane %v4185, 2
        %v4193 = vsel %vm533, %v4190, %v4192
        %4194 = vrot.lane.b32.xlu0 %v4191, 127
        %v4195 = vpop.permute.xlu0 %4194
        %4196 = vrot.lane.b32.xlu0 %v4193, 127
        %v4197 = vpop.permute.xlu0 %4196
        %v4200 = vadd.f32 %v4179, %v4195
        %v4201 = vadd.f32 %v4180, %v4197
        %s4202 = sld [smem:[#allocation9 + $0x2c]]
        %v4203 = vstv %s4202
        %v4204 = vmul.f32 %v4203, %v1163
        %v4205 = vmul.f32 %v4203, %v1164
        %v4206 = vmul.f32 %v4203, %v1165
        %v4210 = vrot.slane %v4204, 2
        %v4211 = vrot.slane %v4205, 2
        %v4212 = vsel %vm533, %v4210, %v4211
        %v4213 = vrot.slane %v4206, 2
        %v4214 = vsel %vm533, %v4211, %v4213
        %4215 = vrot.lane.b32.xlu0 %v4212, 126
        %v4216 = vpop.permute.xlu0 %4215
        %4217 = vrot.lane.b32.xlu0 %v4214, 126
        %v4218 = vpop.permute.xlu0 %4217
        %v4221 = vadd.f32 %v4200, %v4216
        %v4222 = vadd.f32 %v4201, %v4218
        %s4223 = sld [smem:[#allocation9 + $0x2d]]
        %v4224 = vstv %s4223
        %v4225 = vmul.f32 %v4224, %v1921
        %v4226 = vmul.f32 %v4224, %v1922
        %v4227 = vadd.f32 %v4221, %v4225
        %v4228 = vadd.f32 %v4222, %v4226
        %s4229 = sld [smem:[#allocation9 + $0x2e]]
        %v4230 = vstv %s4229
        %v4231 = vmul.f32 %v4230, %v1921
        %v4232 = vmul.f32 %v4230, %v1922
        %4235 = vrot.lane.b32.xlu0 %v4231, 127
        %v4236 = vpop.permute.xlu0 %4235
        %4237 = vrot.lane.b32.xlu0 %v4232, 127
        %v4238 = vpop.permute.xlu0 %4237
        %v4241 = vadd.f32 %v4227, %v4236
        %v4242 = vadd.f32 %v4228, %v4238
        %s4243 = sld [smem:[#allocation9 + $0x2f]]
        %v4244 = vstv %s4243
        %v4245 = vmul.f32 %v4244, %v1921
        %v4246 = vmul.f32 %v4244, %v1922
        %4249 = vrot.lane.b32.xlu0 %v4245, 126
        %v4250 = vpop.permute.xlu0 %4249
        %4251 = vrot.lane.b32.xlu0 %v4246, 126
        %v4252 = vpop.permute.xlu0 %4251
        %v4255 = vadd.f32 %v4241, %v4250
        %v4256 = vadd.f32 %v4242, %v4252
        %s4257 = sld [smem:[#allocation9 + $0x30]]
        %v4258 = vstv %s4257
        %v4259 = vmul.f32 %v4258, %v1921
        %v4260 = vmul.f32 %v4258, %v1922
        %v4261 = vmul.f32 %v4258, %v1923
        %v4265 = vrot.slane %v4259, 1
        %v4266 = vrot.slane %v4260, 1
        %v4267 = vsel %vm463, %v4265, %v4266
        %v4268 = vrot.slane %v4261, 1
        %v4269 = vsel %vm463, %v4266, %v4268
        %v4272 = vadd.f32 %v4255, %v4267
        %v4273 = vadd.f32 %v4256, %v4269
        %s4274 = sld [smem:[#allocation9 + $0x31]]
        %v4275 = vstv %s4274
        %v4276 = vmul.f32 %v4275, %v1921
        %v4277 = vmul.f32 %v4275, %v1922
        %v4278 = vmul.f32 %v4275, %v1923
        %v4282 = vrot.slane %v4276, 1
        %v4283 = vrot.slane %v4277, 1
        %v4284 = vsel %vm463, %v4282, %v4283
        %v4285 = vrot.slane %v4278, 1
        %v4286 = vsel %vm463, %v4283, %v4285
        %4287 = vrot.lane.b32.xlu0 %v4284, 127
        %v4288 = vpop.permute.xlu0 %4287
        %4289 = vrot.lane.b32.xlu0 %v4286, 127
        %v4290 = vpop.permute.xlu0 %4289
        %v4293 = vadd.f32 %v4272, %v4288
        %v4294 = vadd.f32 %v4273, %v4290
        %s4295 = sld [smem:[#allocation9 + $0x32]]
        %v4296 = vstv %s4295
        %v4297 = vmul.f32 %v4296, %v1921
        %v4298 = vmul.f32 %v4296, %v1922
        %v4299 = vmul.f32 %v4296, %v1923
        %v4303 = vrot.slane %v4297, 1
        %v4304 = vrot.slane %v4298, 1
        %v4305 = vsel %vm463, %v4303, %v4304
        %v4306 = vrot.slane %v4299, 1
        %v4307 = vsel %vm463, %v4304, %v4306
        %4308 = vrot.lane.b32.xlu0 %v4305, 126
        %v4309 = vpop.permute.xlu0 %4308
        %4310 = vrot.lane.b32.xlu0 %v4307, 126
        %v4311 = vpop.permute.xlu0 %4310
        %v4314 = vadd.f32 %v4293, %v4309
        %v4315 = vadd.f32 %v4294, %v4311
        %s4316 = sld [smem:[#allocation9 + $0x33]]
        %v4317 = vstv %s4316
        %v4318 = vmul.f32 %v4317, %v1921
        %v4319 = vmul.f32 %v4317, %v1922
        %v4320 = vmul.f32 %v4317, %v1923
        %v4324 = vrot.slane %v4318, 2
        %v4325 = vrot.slane %v4319, 2
        %v4326 = vsel %vm533, %v4324, %v4325
        %v4327 = vrot.slane %v4320, 2
        %v4328 = vsel %vm533, %v4325, %v4327
        %v4331 = vadd.f32 %v4314, %v4326
        %v4332 = vadd.f32 %v4315, %v4328
        %s4333 = sld [smem:[#allocation9 + $0x34]]
        %v4334 = vstv %s4333
        %v4335 = vmul.f32 %v4334, %v1921
        %v4336 = vmul.f32 %v4334, %v1922
        %v4337 = vmul.f32 %v4334, %v1923
        %v4341 = vrot.slane %v4335, 2
        %v4342 = vrot.slane %v4336, 2
        %v4343 = vsel %vm533, %v4341, %v4342
        %v4344 = vrot.slane %v4337, 2
        %v4345 = vsel %vm533, %v4342, %v4344
        %4346 = vrot.lane.b32.xlu0 %v4343, 127
        %v4347 = vpop.permute.xlu0 %4346
        %4348 = vrot.lane.b32.xlu0 %v4345, 127
        %v4349 = vpop.permute.xlu0 %4348
        %v4352 = vadd.f32 %v4331, %v4347
        %v4353 = vadd.f32 %v4332, %v4349
        %s4354 = sld [smem:[#allocation9 + $0x35]]
        %v4355 = vstv %s4354
        %v4356 = vmul.f32 %v4355, %v1921
        %v4357 = vmul.f32 %v4355, %v1922
        %v4358 = vmul.f32 %v4355, %v1923
        %v4362 = vrot.slane %v4356, 2
        %v4363 = vrot.slane %v4357, 2
        %v4364 = vsel %vm533, %v4362, %v4363
        %v4365 = vrot.slane %v4358, 2
        %v4366 = vsel %vm533, %v4363, %v4365
        %4367 = vrot.lane.b32.xlu0 %v4364, 126
        %v4368 = vpop.permute.xlu0 %4367
        %4369 = vrot.lane.b32.xlu0 %v4366, 126
        %v4370 = vpop.permute.xlu0 %4369
        %v4373 = vadd.f32 %v4352, %v4368
        %v4374 = vadd.f32 %v4353, %v4370
        %s4375 = sld [smem:[#allocation9 + $0x36]]
        %v4376 = vstv %s4375
        %v4377 = vmul.f32 %v4376, %v2679
        %v4378 = vmul.f32 %v4376, %v2680
        %v4379 = vadd.f32 %v4373, %v4377
        %v4380 = vadd.f32 %v4374, %v4378
        %s4381 = sld [smem:[#allocation9 + $0x37]]
        %v4382 = vstv %s4381
        %v4383 = vmul.f32 %v4382, %v2679
        %v4384 = vmul.f32 %v4382, %v2680
        %4387 = vrot.lane.b32.xlu0 %v4383, 127
        %v4388 = vpop.permute.xlu0 %4387
        %4389 = vrot.lane.b32.xlu0 %v4384, 127
        %v4390 = vpop.permute.xlu0 %4389
        %v4393 = vadd.f32 %v4379, %v4388
        %v4394 = vadd.f32 %v4380, %v4390
        %s4395 = sld [smem:[#allocation9 + $0x38]]
        %v4396 = vstv %s4395
        %v4397 = vmul.f32 %v4396, %v2679
        %v4398 = vmul.f32 %v4396, %v2680
        %4401 = vrot.lane.b32.xlu0 %v4397, 126
        %v4402 = vpop.permute.xlu0 %4401
        %4403 = vrot.lane.b32.xlu0 %v4398, 126
        %v4404 = vpop.permute.xlu0 %4403
        %v4407 = vadd.f32 %v4393, %v4402
        %v4408 = vadd.f32 %v4394, %v4404
        %s4409 = sld [smem:[#allocation9 + $0x39]]
        %v4410 = vstv %s4409
        %v4411 = vmul.f32 %v4410, %v2679
        %v4412 = vmul.f32 %v4410, %v2680
        %v4413 = vmul.f32 %v4410, %v2681
        %v4417 = vrot.slane %v4411, 1
        %v4418 = vrot.slane %v4412, 1
        %v4419 = vsel %vm463, %v4417, %v4418
        %v4420 = vrot.slane %v4413, 1
        %v4421 = vsel %vm463, %v4418, %v4420
        %v4424 = vadd.f32 %v4407, %v4419
        %v4425 = vadd.f32 %v4408, %v4421
        %s4426 = sld [smem:[#allocation9 + $0x3a]]
        %v4427 = vstv %s4426
        %v4428 = vmul.f32 %v4427, %v2679
        %v4429 = vmul.f32 %v4427, %v2680
        %v4430 = vmul.f32 %v4427, %v2681
        %v4434 = vrot.slane %v4428, 1
        %v4435 = vrot.slane %v4429, 1
        %v4436 = vsel %vm463, %v4434, %v4435
        %v4437 = vrot.slane %v4430, 1
        %v4438 = vsel %vm463, %v4435, %v4437
        %4439 = vrot.lane.b32.xlu0 %v4436, 127
        %v4440 = vpop.permute.xlu0 %4439
        %4441 = vrot.lane.b32.xlu0 %v4438, 127
        %v4442 = vpop.permute.xlu0 %4441
        %v4445 = vadd.f32 %v4424, %v4440
        %v4446 = vadd.f32 %v4425, %v4442
        %s4447 = sld [smem:[#allocation9 + $0x3b]]
        %v4448 = vstv %s4447
        %v4449 = vmul.f32 %v4448, %v2679
        %v4450 = vmul.f32 %v4448, %v2680
        %v4451 = vmul.f32 %v4448, %v2681
        %v4455 = vrot.slane %v4449, 1
        %v4456 = vrot.slane %v4450, 1
        %v4457 = vsel %vm463, %v4455, %v4456
        %v4458 = vrot.slane %v4451, 1
        %v4459 = vsel %vm463, %v4456, %v4458
        %4460 = vrot.lane.b32.xlu0 %v4457, 126
        %v4461 = vpop.permute.xlu0 %4460
        %4462 = vrot.lane.b32.xlu0 %v4459, 126
        %v4463 = vpop.permute.xlu0 %4462
        %v4466 = vadd.f32 %v4445, %v4461
        %v4467 = vadd.f32 %v4446, %v4463
        %s4468 = sld [smem:[#allocation9 + $0x3c]]
        %v4469 = vstv %s4468
        %v4470 = vmul.f32 %v4469, %v2679
        %v4471 = vmul.f32 %v4469, %v2680
        %v4472 = vmul.f32 %v4469, %v2681
        %v4476 = vrot.slane %v4470, 2
        %v4477 = vrot.slane %v4471, 2
        %v4478 = vsel %vm533, %v4476, %v4477
        %v4479 = vrot.slane %v4472, 2
        %v4480 = vsel %vm533, %v4477, %v4479
        %v4483 = vadd.f32 %v4466, %v4478
        %v4484 = vadd.f32 %v4467, %v4480
        %s4485 = sld [smem:[#allocation9 + $0x3d]]
        %v4486 = vstv %s4485
        %v4487 = vmul.f32 %v4486, %v2679
        %v4488 = vmul.f32 %v4486, %v2680
        %v4489 = vmul.f32 %v4486, %v2681
        %v4493 = vrot.slane %v4487, 2
        %v4494 = vrot.slane %v4488, 2
        %v4495 = vsel %vm533, %v4493, %v4494
        %v4496 = vrot.slane %v4489, 2
        %v4497 = vsel %vm533, %v4494, %v4496
        %4498 = vrot.lane.b32.xlu0 %v4495, 127
        %v4499 = vpop.permute.xlu0 %4498
        %4500 = vrot.lane.b32.xlu0 %v4497, 127
        %v4501 = vpop.permute.xlu0 %4500
        %v4504 = vadd.f32 %v4483, %v4499
        %v4505 = vadd.f32 %v4484, %v4501
        %s4506 = sld [smem:[#allocation9 + $0x3e]]
        %v4507 = vstv %s4506
        %v4508 = vmul.f32 %v4507, %v2679
        %v4509 = vmul.f32 %v4507, %v2680
        %v4510 = vmul.f32 %v4507, %v2681
        %v4514 = vrot.slane %v4508, 2
        %v4515 = vrot.slane %v4509, 2
        %v4516 = vsel %vm533, %v4514, %v4515
        %v4517 = vrot.slane %v4510, 2
        %v4518 = vsel %vm533, %v4515, %v4517
        %4519 = vrot.lane.b32.xlu0 %v4516, 126
        %v4520 = vpop.permute.xlu0 %4519
        %4521 = vrot.lane.b32.xlu0 %v4518, 126
        %v4522 = vpop.permute.xlu0 %4521
        %v4525 = vadd.f32 %v4504, %v4520
        %v4526 = vadd.f32 %v4505, %v4522
        %s4527 = sld [smem:[#allocation9 + $0x3f]]
        %v4528 = vstv %s4527
        %v4529 = vmul.f32 %v4528, %v3437
        %v4530 = vmul.f32 %v4528, %v3438
        %v4531 = vadd.f32 %v4525, %v4529
        %v4532 = vadd.f32 %v4526, %v4530
        %s4533 = sld [smem:[#allocation9 + $0x40]]
        %v4534 = vstv %s4533
        %v4535 = vmul.f32 %v4534, %v3437
        %v4536 = vmul.f32 %v4534, %v3438
        %4539 = vrot.lane.b32.xlu0 %v4535, 127
        %v4540 = vpop.permute.xlu0 %4539
        %4541 = vrot.lane.b32.xlu0 %v4536, 127
        %v4542 = vpop.permute.xlu0 %4541
        %v4545 = vadd.f32 %v4531, %v4540
        %v4546 = vadd.f32 %v4532, %v4542
        %s4547 = sld [smem:[#allocation9 + $0x41]]
        %v4548 = vstv %s4547
        %v4549 = vmul.f32 %v4548, %v3437
        %v4550 = vmul.f32 %v4548, %v3438
        %4553 = vrot.lane.b32.xlu0 %v4549, 126
        %v4554 = vpop.permute.xlu0 %4553
        %4555 = vrot.lane.b32.xlu0 %v4550, 126
        %v4556 = vpop.permute.xlu0 %4555
        %v4559 = vadd.f32 %v4545, %v4554
        %v4560 = vadd.f32 %v4546, %v4556
        %s4561 = sld [smem:[#allocation9 + $0x42]]
        %v4562 = vstv %s4561
        %v4563 = vmul.f32 %v4562, %v3437
        %v4564 = vmul.f32 %v4562, %v3438
        %v4565 = vmul.f32 %v4562, %v3439
        %v4569 = vrot.slane %v4563, 1
        %v4570 = vrot.slane %v4564, 1
        %v4571 = vsel %vm463, %v4569, %v4570
        %v4572 = vrot.slane %v4565, 1
        %v4573 = vsel %vm463, %v4570, %v4572
        %v4576 = vadd.f32 %v4559, %v4571
        %v4577 = vadd.f32 %v4560, %v4573
        %s4578 = sld [smem:[#allocation9 + $0x43]]
        %v4579 = vstv %s4578
        %v4580 = vmul.f32 %v4579, %v3437
        %v4581 = vmul.f32 %v4579, %v3438
        %v4582 = vmul.f32 %v4579, %v3439
        %v4586 = vrot.slane %v4580, 1
        %v4587 = vrot.slane %v4581, 1
        %v4588 = vsel %vm463, %v4586, %v4587
        %v4589 = vrot.slane %v4582, 1
        %v4590 = vsel %vm463, %v4587, %v4589
        %4591 = vrot.lane.b32.xlu0 %v4588, 127
        %v4592 = vpop.permute.xlu0 %4591
        %4593 = vrot.lane.b32.xlu0 %v4590, 127
        %v4594 = vpop.permute.xlu0 %4593
        %v4597 = vadd.f32 %v4576, %v4592
        %v4598 = vadd.f32 %v4577, %v4594
        %s4599 = sld [smem:[#allocation9 + $0x44]]
        %v4600 = vstv %s4599
        %v4601 = vmul.f32 %v4600, %v3437
        %v4602 = vmul.f32 %v4600, %v3438
        %v4603 = vmul.f32 %v4600, %v3439
        %v4607 = vrot.slane %v4601, 1
        %v4608 = vrot.slane %v4602, 1
        %v4609 = vsel %vm463, %v4607, %v4608
        %v4610 = vrot.slane %v4603, 1
        %v4611 = vsel %vm463, %v4608, %v4610
        %4612 = vrot.lane.b32.xlu0 %v4609, 126
        %v4613 = vpop.permute.xlu0 %4612
        %4614 = vrot.lane.b32.xlu0 %v4611, 126
        %v4615 = vpop.permute.xlu0 %4614
        %v4618 = vadd.f32 %v4597, %v4613
        %v4619 = vadd.f32 %v4598, %v4615
        %s4620 = sld [smem:[#allocation9 + $0x45]]
        %v4621 = vstv %s4620
        %v4622 = vmul.f32 %v4621, %v3437
        %v4623 = vmul.f32 %v4621, %v3438
        %v4624 = vmul.f32 %v4621, %v3439
        %v4628 = vrot.slane %v4622, 2
        %v4629 = vrot.slane %v4623, 2
        %v4630 = vsel %vm533, %v4628, %v4629
        %v4631 = vrot.slane %v4624, 2
        %v4632 = vsel %vm533, %v4629, %v4631
        %v4635 = vadd.f32 %v4618, %v4630
        %v4636 = vadd.f32 %v4619, %v4632
        %s4637 = sld [smem:[#allocation9 + $0x46]]
        %v4638 = vstv %s4637
        %v4639 = vmul.f32 %v4638, %v3437
        %v4640 = vmul.f32 %v4638, %v3438
        %v4641 = vmul.f32 %v4638, %v3439
        %v4645 = vrot.slane %v4639, 2
        %v4646 = vrot.slane %v4640, 2
        %v4647 = vsel %vm533, %v4645, %v4646
        %v4648 = vrot.slane %v4641, 2
        %v4649 = vsel %vm533, %v4646, %v4648
        %4650 = vrot.lane.b32.xlu0 %v4647, 127
        %v4651 = vpop.permute.xlu0 %4650
        %4652 = vrot.lane.b32.xlu0 %v4649, 127
        %v4653 = vpop.permute.xlu0 %4652
        %v4656 = vadd.f32 %v4635, %v4651
        %v4657 = vadd.f32 %v4636, %v4653
        %s4658 = sld [smem:[#allocation9 + $0x47]]
        %v4659 = vstv %s4658
        %v4660 = vmul.f32 %v4659, %v3437
        %v4661 = vmul.f32 %v4659, %v3438
        %v4662 = vmul.f32 %v4659, %v3439
        %v4666 = vrot.slane %v4660, 2
        %v4667 = vrot.slane %v4661, 2
        %v4668 = vsel %vm533, %v4666, %v4667
        %v4669 = vrot.slane %v4662, 2
        %v4670 = vsel %vm533, %v4667, %v4669
        %4671 = vrot.lane.b32.xlu0 %v4668, 126
        %v4672 = vpop.permute.xlu0 %4671
        %4673 = vrot.lane.b32.xlu0 %v4670, 126
        %v4674 = vpop.permute.xlu0 %4673
        %v4677 = vadd.f32 %v4656, %v4672
        %v4678 = vadd.f32 %v4657, %v4674
        %v4682 = vrot.slane %v334, 2
        %v4683 = vrot.slane %v335, 2
        %v4684 = vsel %vm533, %v4682, %v4683
        %v4685 = vrot.slane %v336, 2
        %v4686 = vsel %vm533, %v4683, %v4685
        %4687 = vrot.lane.b32.xlu0 %v4684, 126
        %v4688 = vpop.permute.xlu0 %4687
        %4689 = vrot.lane.b32.xlu0 %v4686, 126
        %v4690 = vpop.permute.xlu0 %4689
        %v4693 = vadd.f32 %v4677, %v4688
        %v4694 = vadd.f32 %v4678, %v4690
        %s4695 = scalar_lea.vmem %s325, 16 [#allocation12]
        %4696 = vst.msk [vmem:[%s4695] sm:$0xff] %vm4066, %v4693
        %4697 = vst.msk [vmem:[%s4695 + $0x8] sm:$0xff] %vm4066, %v4694
        %s4698 = sld [smem:[#allocation10 + $0x2]]
        %v4699 = vstv %s4698
        %s4700 = sld [smem:[#allocation9 + $0x48]]
        %v4701 = vstv %s4700
        %v4702 = vmul.f32 %v4701, %v1163
        %v4703 = vmul.f32 %v4701, %v1164
        %v4704 = vadd.f32 %v4699, %v4702
        %v4705 = vadd.f32 %v4699, %v4703
        %s4706 = sld [smem:[#allocation9 + $0x49]]
        %v4707 = vstv %s4706
        %v4708 = vmul.f32 %v4707, %v1163
        %v4709 = vmul.f32 %v4707, %v1164
        %4712 = vrot.lane.b32.xlu0 %v4708, 127
        %v4713 = vpop.permute.xlu0 %4712
        %4714 = vrot.lane.b32.xlu0 %v4709, 127
        %v4715 = vpop.permute.xlu0 %4714
        %v4718 = vadd.f32 %v4704, %v4713
        %v4719 = vadd.f32 %v4705, %v4715
        %s4720 = sld [smem:[#allocation9 + $0x4a]]
        %v4721 = vstv %s4720
        %v4722 = vmul.f32 %v4721, %v1163
        %v4723 = vmul.f32 %v4721, %v1164
        %4726 = vrot.lane.b32.xlu0 %v4722, 126
        %v4727 = vpop.permute.xlu0 %4726
        %4728 = vrot.lane.b32.xlu0 %v4723, 126
        %v4729 = vpop.permute.xlu0 %4728
        %v4732 = vadd.f32 %v4718, %v4727
        %v4733 = vadd.f32 %v4719, %v4729
        %s4734 = sld [smem:[#allocation9 + $0x4b]]
        %v4735 = vstv %s4734
        %v4736 = vmul.f32 %v4735, %v1163
        %v4737 = vmul.f32 %v4735, %v1164
        %v4738 = vmul.f32 %v4735, %v1165
        %v4742 = vrot.slane %v4736, 1
        %v4743 = vrot.slane %v4737, 1
        %v4744 = vsel %vm463, %v4742, %v4743
        %v4745 = vrot.slane %v4738, 1
        %v4746 = vsel %vm463, %v4743, %v4745
        %v4749 = vadd.f32 %v4732, %v4744
        %v4750 = vadd.f32 %v4733, %v4746
        %s4751 = sld [smem:[#allocation9 + $0x4c]]
        %v4752 = vstv %s4751
        %v4753 = vmul.f32 %v4752, %v1163
        %v4754 = vmul.f32 %v4752, %v1164
        %v4755 = vmul.f32 %v4752, %v1165
        %v4759 = vrot.slane %v4753, 1
        %v4760 = vrot.slane %v4754, 1
        %v4761 = vsel %vm463, %v4759, %v4760
        %v4762 = vrot.slane %v4755, 1
        %v4763 = vsel %vm463, %v4760, %v4762
        %4764 = vrot.lane.b32.xlu0 %v4761, 127
        %v4765 = vpop.permute.xlu0 %4764
        %4766 = vrot.lane.b32.xlu0 %v4763, 127
        %v4767 = vpop.permute.xlu0 %4766
        %v4770 = vadd.f32 %v4749, %v4765
        %v4771 = vadd.f32 %v4750, %v4767
        %s4772 = sld [smem:[#allocation9 + $0x4d]]
        %v4773 = vstv %s4772
        %v4774 = vmul.f32 %v4773, %v1163
        %v4775 = vmul.f32 %v4773, %v1164
        %v4776 = vmul.f32 %v4773, %v1165
        %v4780 = vrot.slane %v4774, 1
        %v4781 = vrot.slane %v4775, 1
        %v4782 = vsel %vm463, %v4780, %v4781
        %v4783 = vrot.slane %v4776, 1
        %v4784 = vsel %vm463, %v4781, %v4783
        %4785 = vrot.lane.b32.xlu0 %v4782, 126
        %v4786 = vpop.permute.xlu0 %4785
        %4787 = vrot.lane.b32.xlu0 %v4784, 126
        %v4788 = vpop.permute.xlu0 %4787
        %v4791 = vadd.f32 %v4770, %v4786
        %v4792 = vadd.f32 %v4771, %v4788
        %s4793 = sld [smem:[#allocation9 + $0x4e]]
        %v4794 = vstv %s4793
        %v4795 = vmul.f32 %v4794, %v1163
        %v4796 = vmul.f32 %v4794, %v1164
        %v4797 = vmul.f32 %v4794, %v1165
        %v4801 = vrot.slane %v4795, 2
        %v4802 = vrot.slane %v4796, 2
        %v4803 = vsel %vm533, %v4801, %v4802
        %v4804 = vrot.slane %v4797, 2
        %v4805 = vsel %vm533, %v4802, %v4804
        %v4808 = vadd.f32 %v4791, %v4803
        %v4809 = vadd.f32 %v4792, %v4805
        %s4810 = sld [smem:[#allocation9 + $0x4f]]
        %v4811 = vstv %s4810
        %v4812 = vmul.f32 %v4811, %v1163
        %v4813 = vmul.f32 %v4811, %v1164
        %v4814 = vmul.f32 %v4811, %v1165
        %v4818 = vrot.slane %v4812, 2
        %v4819 = vrot.slane %v4813, 2
        %v4820 = vsel %vm533, %v4818, %v4819
        %v4821 = vrot.slane %v4814, 2
        %v4822 = vsel %vm533, %v4819, %v4821
        %4823 = vrot.lane.b32.xlu0 %v4820, 127
        %v4824 = vpop.permute.xlu0 %4823
        %4825 = vrot.lane.b32.xlu0 %v4822, 127
        %v4826 = vpop.permute.xlu0 %4825
        %v4829 = vadd.f32 %v4808, %v4824
        %v4830 = vadd.f32 %v4809, %v4826
        %s4831 = sld [smem:[#allocation9 + $0x50]]
        %v4832 = vstv %s4831
        %v4833 = vmul.f32 %v4832, %v1163
        %v4834 = vmul.f32 %v4832, %v1164
        %v4835 = vmul.f32 %v4832, %v1165
        %v4839 = vrot.slane %v4833, 2
        %v4840 = vrot.slane %v4834, 2
        %v4841 = vsel %vm533, %v4839, %v4840
        %v4842 = vrot.slane %v4835, 2
        %v4843 = vsel %vm533, %v4840, %v4842
        %4844 = vrot.lane.b32.xlu0 %v4841, 126
        %v4845 = vpop.permute.xlu0 %4844
        %4846 = vrot.lane.b32.xlu0 %v4843, 126
        %v4847 = vpop.permute.xlu0 %4846
        %v4850 = vadd.f32 %v4829, %v4845
        %v4851 = vadd.f32 %v4830, %v4847
        %s4852 = sld [smem:[#allocation9 + $0x51]]
        %v4853 = vstv %s4852
        %v4854 = vmul.f32 %v4853, %v1921
        %v4855 = vmul.f32 %v4853, %v1922
        %v4856 = vadd.f32 %v4850, %v4854
        %v4857 = vadd.f32 %v4851, %v4855
        %s4858 = sld [smem:[#allocation9 + $0x52]]
        %v4859 = vstv %s4858
        %v4860 = vmul.f32 %v4859, %v1921
        %v4861 = vmul.f32 %v4859, %v1922
        %4864 = vrot.lane.b32.xlu0 %v4860, 127
        %v4865 = vpop.permute.xlu0 %4864
        %4866 = vrot.lane.b32.xlu0 %v4861, 127
        %v4867 = vpop.permute.xlu0 %4866
        %v4870 = vadd.f32 %v4856, %v4865
        %v4871 = vadd.f32 %v4857, %v4867
        %s4872 = sld [smem:[#allocation9 + $0x53]]
        %v4873 = vstv %s4872
        %v4874 = vmul.f32 %v4873, %v1921
        %v4875 = vmul.f32 %v4873, %v1922
        %4878 = vrot.lane.b32.xlu0 %v4874, 126
        %v4879 = vpop.permute.xlu0 %4878
        %4880 = vrot.lane.b32.xlu0 %v4875, 126
        %v4881 = vpop.permute.xlu0 %4880
        %v4884 = vadd.f32 %v4870, %v4879
        %v4885 = vadd.f32 %v4871, %v4881
        %s4886 = sld [smem:[#allocation9 + $0x54]]
        %v4887 = vstv %s4886
        %v4888 = vmul.f32 %v4887, %v1921
        %v4889 = vmul.f32 %v4887, %v1922
        %v4890 = vmul.f32 %v4887, %v1923
        %v4894 = vrot.slane %v4888, 1
        %v4895 = vrot.slane %v4889, 1
        %v4896 = vsel %vm463, %v4894, %v4895
        %v4897 = vrot.slane %v4890, 1
        %v4898 = vsel %vm463, %v4895, %v4897
        %v4901 = vadd.f32 %v4884, %v4896
        %v4902 = vadd.f32 %v4885, %v4898
        %s4903 = sld [smem:[#allocation9 + $0x55]]
        %v4904 = vstv %s4903
        %v4905 = vmul.f32 %v4904, %v1921
        %v4906 = vmul.f32 %v4904, %v1922
        %v4907 = vmul.f32 %v4904, %v1923
        %v4911 = vrot.slane %v4905, 1
        %v4912 = vrot.slane %v4906, 1
        %v4913 = vsel %vm463, %v4911, %v4912
        %v4914 = vrot.slane %v4907, 1
        %v4915 = vsel %vm463, %v4912, %v4914
        %4916 = vrot.lane.b32.xlu0 %v4913, 127
        %v4917 = vpop.permute.xlu0 %4916
        %4918 = vrot.lane.b32.xlu0 %v4915, 127
        %v4919 = vpop.permute.xlu0 %4918
        %v4922 = vadd.f32 %v4901, %v4917
        %v4923 = vadd.f32 %v4902, %v4919
        %s4924 = sld [smem:[#allocation9 + $0x56]]
        %v4925 = vstv %s4924
        %v4926 = vmul.f32 %v4925, %v1921
        %v4927 = vmul.f32 %v4925, %v1922
        %v4928 = vmul.f32 %v4925, %v1923
        %v4932 = vrot.slane %v4926, 1
        %v4933 = vrot.slane %v4927, 1
        %v4934 = vsel %vm463, %v4932, %v4933
        %v4935 = vrot.slane %v4928, 1
        %v4936 = vsel %vm463, %v4933, %v4935
        %4937 = vrot.lane.b32.xlu0 %v4934, 126
        %v4938 = vpop.permute.xlu0 %4937
        %4939 = vrot.lane.b32.xlu0 %v4936, 126
        %v4940 = vpop.permute.xlu0 %4939
        %v4943 = vadd.f32 %v4922, %v4938
        %v4944 = vadd.f32 %v4923, %v4940
        %s4945 = sld [smem:[#allocation9 + $0x57]]
        %v4946 = vstv %s4945
        %v4947 = vmul.f32 %v4946, %v1921
        %v4948 = vmul.f32 %v4946, %v1922
        %v4949 = vmul.f32 %v4946, %v1923
        %v4953 = vrot.slane %v4947, 2
        %v4954 = vrot.slane %v4948, 2
        %v4955 = vsel %vm533, %v4953, %v4954
        %v4956 = vrot.slane %v4949, 2
        %v4957 = vsel %vm533, %v4954, %v4956
        %v4960 = vadd.f32 %v4943, %v4955
        %v4961 = vadd.f32 %v4944, %v4957
        %s4962 = sld [smem:[#allocation9 + $0x58]]
        %v4963 = vstv %s4962
        %v4964 = vmul.f32 %v4963, %v1921
        %v4965 = vmul.f32 %v4963, %v1922
        %v4966 = vmul.f32 %v4963, %v1923
        %v4970 = vrot.slane %v4964, 2
        %v4971 = vrot.slane %v4965, 2
        %v4972 = vsel %vm533, %v4970, %v4971
        %v4973 = vrot.slane %v4966, 2
        %v4974 = vsel %vm533, %v4971, %v4973
        %4975 = vrot.lane.b32.xlu0 %v4972, 127
        %v4976 = vpop.permute.xlu0 %4975
        %4977 = vrot.lane.b32.xlu0 %v4974, 127
        %v4978 = vpop.permute.xlu0 %4977
        %v4981 = vadd.f32 %v4960, %v4976
        %v4982 = vadd.f32 %v4961, %v4978
        %s4983 = sld [smem:[#allocation9 + $0x59]]
        %v4984 = vstv %s4983
        %v4985 = vmul.f32 %v4984, %v1921
        %v4986 = vmul.f32 %v4984, %v1922
        %v4987 = vmul.f32 %v4984, %v1923
        %v4991 = vrot.slane %v4985, 2
        %v4992 = vrot.slane %v4986, 2
        %v4993 = vsel %vm533, %v4991, %v4992
        %v4994 = vrot.slane %v4987, 2
        %v4995 = vsel %vm533, %v4992, %v4994
        %4996 = vrot.lane.b32.xlu0 %v4993, 126
        %v4997 = vpop.permute.xlu0 %4996
        %4998 = vrot.lane.b32.xlu0 %v4995, 126
        %v4999 = vpop.permute.xlu0 %4998
        %v5002 = vadd.f32 %v4981, %v4997
        %v5003 = vadd.f32 %v4982, %v4999
        %s5004 = sld [smem:[#allocation9 + $0x5a]]
        %v5005 = vstv %s5004
        %v5006 = vmul.f32 %v5005, %v2679
        %v5007 = vmul.f32 %v5005, %v2680
        %v5008 = vadd.f32 %v5002, %v5006
        %v5009 = vadd.f32 %v5003, %v5007
        %s5010 = sld [smem:[#allocation9 + $0x5b]]
        %v5011 = vstv %s5010
        %v5012 = vmul.f32 %v5011, %v2679
        %v5013 = vmul.f32 %v5011, %v2680
        %5016 = vrot.lane.b32.xlu0 %v5012, 127
        %v5017 = vpop.permute.xlu0 %5016
        %5018 = vrot.lane.b32.xlu0 %v5013, 127
        %v5019 = vpop.permute.xlu0 %5018
        %v5022 = vadd.f32 %v5008, %v5017
        %v5023 = vadd.f32 %v5009, %v5019
        %s5024 = sld [smem:[#allocation9 + $0x5c]]
        %v5025 = vstv %s5024
        %v5026 = vmul.f32 %v5025, %v2679
        %v5027 = vmul.f32 %v5025, %v2680
        %5030 = vrot.lane.b32.xlu0 %v5026, 126
        %v5031 = vpop.permute.xlu0 %5030
        %5032 = vrot.lane.b32.xlu0 %v5027, 126
        %v5033 = vpop.permute.xlu0 %5032
        %v5036 = vadd.f32 %v5022, %v5031
        %v5037 = vadd.f32 %v5023, %v5033
        %s5038 = sld [smem:[#allocation9 + $0x5d]]
        %v5039 = vstv %s5038
        %v5040 = vmul.f32 %v5039, %v2679
        %v5041 = vmul.f32 %v5039, %v2680
        %v5042 = vmul.f32 %v5039, %v2681
        %v5046 = vrot.slane %v5040, 1
        %v5047 = vrot.slane %v5041, 1
        %v5048 = vsel %vm463, %v5046, %v5047
        %v5049 = vrot.slane %v5042, 1
        %v5050 = vsel %vm463, %v5047, %v5049
        %v5053 = vadd.f32 %v5036, %v5048
        %v5054 = vadd.f32 %v5037, %v5050
        %s5055 = sld [smem:[#allocation9 + $0x5e]]
        %v5056 = vstv %s5055
        %v5057 = vmul.f32 %v5056, %v2679
        %v5058 = vmul.f32 %v5056, %v2680
        %v5059 = vmul.f32 %v5056, %v2681
        %v5063 = vrot.slane %v5057, 1
        %v5064 = vrot.slane %v5058, 1
        %v5065 = vsel %vm463, %v5063, %v5064
        %v5066 = vrot.slane %v5059, 1
        %v5067 = vsel %vm463, %v5064, %v5066
        %5068 = vrot.lane.b32.xlu0 %v5065, 127
        %v5069 = vpop.permute.xlu0 %5068
        %5070 = vrot.lane.b32.xlu0 %v5067, 127
        %v5071 = vpop.permute.xlu0 %5070
        %v5074 = vadd.f32 %v5053, %v5069
        %v5075 = vadd.f32 %v5054, %v5071
        %s5076 = sld [smem:[#allocation9 + $0x5f]]
        %v5077 = vstv %s5076
        %v5078 = vmul.f32 %v5077, %v2679
        %v5079 = vmul.f32 %v5077, %v2680
        %v5080 = vmul.f32 %v5077, %v2681
        %v5084 = vrot.slane %v5078, 1
        %v5085 = vrot.slane %v5079, 1
        %v5086 = vsel %vm463, %v5084, %v5085
        %v5087 = vrot.slane %v5080, 1
        %v5088 = vsel %vm463, %v5085, %v5087
        %5089 = vrot.lane.b32.xlu0 %v5086, 126
        %v5090 = vpop.permute.xlu0 %5089
        %5091 = vrot.lane.b32.xlu0 %v5088, 126
        %v5092 = vpop.permute.xlu0 %5091
        %v5095 = vadd.f32 %v5074, %v5090
        %v5096 = vadd.f32 %v5075, %v5092
        %s5097 = sld [smem:[#allocation9 + $0x60]]
        %v5098 = vstv %s5097
        %v5099 = vmul.f32 %v5098, %v2679
        %v5100 = vmul.f32 %v5098, %v2680
        %v5101 = vmul.f32 %v5098, %v2681
        %v5105 = vrot.slane %v5099, 2
        %v5106 = vrot.slane %v5100, 2
        %v5107 = vsel %vm533, %v5105, %v5106
        %v5108 = vrot.slane %v5101, 2
        %v5109 = vsel %vm533, %v5106, %v5108
        %v5112 = vadd.f32 %v5095, %v5107
        %v5113 = vadd.f32 %v5096, %v5109
        %s5114 = sld [smem:[#allocation9 + $0x61]]
        %v5115 = vstv %s5114
        %v5116 = vmul.f32 %v5115, %v2679
        %v5117 = vmul.f32 %v5115, %v2680
        %v5118 = vmul.f32 %v5115, %v2681
        %v5122 = vrot.slane %v5116, 2
        %v5123 = vrot.slane %v5117, 2
        %v5124 = vsel %vm533, %v5122, %v5123
        %v5125 = vrot.slane %v5118, 2
        %v5126 = vsel %vm533, %v5123, %v5125
        %5127 = vrot.lane.b32.xlu0 %v5124, 127
        %v5128 = vpop.permute.xlu0 %5127
        %5129 = vrot.lane.b32.xlu0 %v5126, 127
        %v5130 = vpop.permute.xlu0 %5129
        %v5133 = vadd.f32 %v5112, %v5128
        %v5134 = vadd.f32 %v5113, %v5130
        %s5135 = sld [smem:[#allocation9 + $0x62]]
        %v5136 = vstv %s5135
        %v5137 = vmul.f32 %v5136, %v2679
        %v5138 = vmul.f32 %v5136, %v2680
        %v5139 = vmul.f32 %v5136, %v2681
        %v5143 = vrot.slane %v5137, 2
        %v5144 = vrot.slane %v5138, 2
        %v5145 = vsel %vm533, %v5143, %v5144
        %v5146 = vrot.slane %v5139, 2
        %v5147 = vsel %vm533, %v5144, %v5146
        %5148 = vrot.lane.b32.xlu0 %v5145, 126
        %v5149 = vpop.permute.xlu0 %5148
        %5150 = vrot.lane.b32.xlu0 %v5147, 126
        %v5151 = vpop.permute.xlu0 %5150
        %v5154 = vadd.f32 %v5133, %v5149
        %v5155 = vadd.f32 %v5134, %v5151
        %s5156 = sld [smem:[#allocation9 + $0x63]]
        %v5157 = vstv %s5156
        %v5158 = vmul.f32 %v5157, %v3437
        %v5159 = vmul.f32 %v5157, %v3438
        %v5160 = vadd.f32 %v5154, %v5158
        %v5161 = vadd.f32 %v5155, %v5159
        %s5162 = sld [smem:[#allocation9 + $0x64]]
        %v5163 = vstv %s5162
        %v5164 = vmul.f32 %v5163, %v3437
        %v5165 = vmul.f32 %v5163, %v3438
        %5168 = vrot.lane.b32.xlu0 %v5164, 127
        %v5169 = vpop.permute.xlu0 %5168
        %5170 = vrot.lane.b32.xlu0 %v5165, 127
        %v5171 = vpop.permute.xlu0 %5170
        %v5174 = vadd.f32 %v5160, %v5169
        %v5175 = vadd.f32 %v5161, %v5171
        %s5176 = sld [smem:[#allocation9 + $0x65]]
        %v5177 = vstv %s5176
        %v5178 = vmul.f32 %v5177, %v3437
        %v5179 = vmul.f32 %v5177, %v3438
        %5182 = vrot.lane.b32.xlu0 %v5178, 126
        %v5183 = vpop.permute.xlu0 %5182
        %5184 = vrot.lane.b32.xlu0 %v5179, 126
        %v5185 = vpop.permute.xlu0 %5184
        %v5188 = vadd.f32 %v5174, %v5183
        %v5189 = vadd.f32 %v5175, %v5185
        %s5190 = sld [smem:[#allocation9 + $0x66]]
        %v5191 = vstv %s5190
        %v5192 = vmul.f32 %v5191, %v3437
        %v5193 = vmul.f32 %v5191, %v3438
        %v5194 = vmul.f32 %v5191, %v3439
        %v5198 = vrot.slane %v5192, 1
        %v5199 = vrot.slane %v5193, 1
        %v5200 = vsel %vm463, %v5198, %v5199
        %v5201 = vrot.slane %v5194, 1
        %v5202 = vsel %vm463, %v5199, %v5201
        %v5205 = vadd.f32 %v5188, %v5200
        %v5206 = vadd.f32 %v5189, %v5202
        %s5207 = sld [smem:[#allocation9 + $0x67]]
        %v5208 = vstv %s5207
        %v5209 = vmul.f32 %v5208, %v3437
        %v5210 = vmul.f32 %v5208, %v3438
        %v5211 = vmul.f32 %v5208, %v3439
        %v5215 = vrot.slane %v5209, 1
        %v5216 = vrot.slane %v5210, 1
        %v5217 = vsel %vm463, %v5215, %v5216
        %v5218 = vrot.slane %v5211, 1
        %v5219 = vsel %vm463, %v5216, %v5218
        %5220 = vrot.lane.b32.xlu0 %v5217, 127
        %v5221 = vpop.permute.xlu0 %5220
        %5222 = vrot.lane.b32.xlu0 %v5219, 127
        %v5223 = vpop.permute.xlu0 %5222
        %v5226 = vadd.f32 %v5205, %v5221
        %v5227 = vadd.f32 %v5206, %v5223
        %s5228 = sld [smem:[#allocation9 + $0x68]]
        %v5229 = vstv %s5228
        %v5230 = vmul.f32 %v5229, %v3437
        %v5231 = vmul.f32 %v5229, %v3438
        %v5232 = vmul.f32 %v5229, %v3439
        %v5236 = vrot.slane %v5230, 1
        %v5237 = vrot.slane %v5231, 1
        %v5238 = vsel %vm463, %v5236, %v5237
        %v5239 = vrot.slane %v5232, 1
        %v5240 = vsel %vm463, %v5237, %v5239
        %5241 = vrot.lane.b32.xlu0 %v5238, 126
        %v5242 = vpop.permute.xlu0 %5241
        %5243 = vrot.lane.b32.xlu0 %v5240, 126
        %v5244 = vpop.permute.xlu0 %5243
        %v5247 = vadd.f32 %v5226, %v5242
        %v5248 = vadd.f32 %v5227, %v5244
        %s5249 = sld [smem:[#allocation9 + $0x69]]
        %v5250 = vstv %s5249
        %v5251 = vmul.f32 %v5250, %v3437
        %v5252 = vmul.f32 %v5250, %v3438
        %v5253 = vmul.f32 %v5250, %v3439
        %v5257 = vrot.slane %v5251, 2
        %v5258 = vrot.slane %v5252, 2
        %v5259 = vsel %vm533, %v5257, %v5258
        %v5260 = vrot.slane %v5253, 2
        %v5261 = vsel %vm533, %v5258, %v5260
        %v5264 = vadd.f32 %v5247, %v5259
        %v5265 = vadd.f32 %v5248, %v5261
        %s5266 = sld [smem:[#allocation9 + $0x6a]]
        %v5267 = vstv %s5266
        %v5268 = vmul.f32 %v5267, %v3437
        %v5269 = vmul.f32 %v5267, %v3438
        %v5270 = vmul.f32 %v5267, %v3439
        %v5274 = vrot.slane %v5268, 2
        %v5275 = vrot.slane %v5269, 2
        %v5276 = vsel %vm533, %v5274, %v5275
        %v5277 = vrot.slane %v5270, 2
        %v5278 = vsel %vm533, %v5275, %v5277
        %5279 = vrot.lane.b32.xlu0 %v5276, 127
        %v5280 = vpop.permute.xlu0 %5279
        %5281 = vrot.lane.b32.xlu0 %v5278, 127
        %v5282 = vpop.permute.xlu0 %5281
        %v5285 = vadd.f32 %v5264, %v5280
        %v5286 = vadd.f32 %v5265, %v5282
        %s5287 = sld [smem:[#allocation9 + $0x6b]]
        %v5288 = vstv %s5287
        %v5289 = vmul.f32 %v5288, %v3437
        %v5290 = vmul.f32 %v5288, %v3438
        %v5291 = vmul.f32 %v5288, %v3439
        %v5295 = vrot.slane %v5289, 2
        %v5296 = vrot.slane %v5290, 2
        %v5297 = vsel %vm533, %v5295, %v5296
        %v5298 = vrot.slane %v5291, 2
        %v5299 = vsel %vm533, %v5296, %v5298
        %5300 = vrot.lane.b32.xlu0 %v5297, 126
        %v5301 = vpop.permute.xlu0 %5300
        %5302 = vrot.lane.b32.xlu0 %v5299, 126
        %v5303 = vpop.permute.xlu0 %5302
        %v5306 = vadd.f32 %v5285, %v5301
        %v5307 = vadd.f32 %v5286, %v5303
        %v5311 = vrot.slane %v337, 2
        %v5312 = vrot.slane %v338, 2
        %v5313 = vsel %vm533, %v5311, %v5312
        %v5314 = vrot.slane %v339, 2
        %v5315 = vsel %vm533, %v5312, %v5314
        %5316 = vrot.lane.b32.xlu0 %v5313, 126
        %v5317 = vpop.permute.xlu0 %5316
        %5318 = vrot.lane.b32.xlu0 %v5315, 126
        %v5319 = vpop.permute.xlu0 %5318
        %v5322 = vadd.f32 %v5306, %v5317
        %v5323 = vadd.f32 %v5307, %v5319
        %s5324 = scalar_lea.vmem %s325, 32 [#allocation12]
        %5325 = vst.msk [vmem:[%s5324] sm:$0xff] %vm4066, %v5322
        %5326 = vst.msk [vmem:[%s5324 + $0x8] sm:$0xff] %vm4066, %v5323
        %s5327 = sld [smem:[#allocation10 + $0x3]]
        %v5328 = vstv %s5327
        %s5329 = sld [smem:[#allocation9 + $0x6c]]
        %v5330 = vstv %s5329
        %v5331 = vmul.f32 %v5330, %v1163
        %v5332 = vmul.f32 %v5330, %v1164
        %v5333 = vadd.f32 %v5328, %v5331
        %v5334 = vadd.f32 %v5328, %v5332
        %s5335 = sld [smem:[#allocation9 + $0x6d]]
        %v5336 = vstv %s5335
        %v5337 = vmul.f32 %v5336, %v1163
        %v5338 = vmul.f32 %v5336, %v1164
        %5341 = vrot.lane.b32.xlu0 %v5337, 127
        %v5342 = vpop.permute.xlu0 %5341
        %5343 = vrot.lane.b32.xlu0 %v5338, 127
        %v5344 = vpop.permute.xlu0 %5343
        %v5347 = vadd.f32 %v5333, %v5342
        %v5348 = vadd.f32 %v5334, %v5344
        %s5349 = sld [smem:[#allocation9 + $0x6e]]
        %v5350 = vstv %s5349
        %v5351 = vmul.f32 %v5350, %v1163
        %v5352 = vmul.f32 %v5350, %v1164
        %5355 = vrot.lane.b32.xlu0 %v5351, 126
        %v5356 = vpop.permute.xlu0 %5355
        %5357 = vrot.lane.b32.xlu0 %v5352, 126
        %v5358 = vpop.permute.xlu0 %5357
        %v5361 = vadd.f32 %v5347, %v5356
        %v5362 = vadd.f32 %v5348, %v5358
        %s5363 = sld [smem:[#allocation9 + $0x6f]]
        %v5364 = vstv %s5363
        %v5365 = vmul.f32 %v5364, %v1163
        %v5366 = vmul.f32 %v5364, %v1164
        %v5367 = vmul.f32 %v5364, %v1165
        %v5371 = vrot.slane %v5365, 1
        %v5372 = vrot.slane %v5366, 1
        %v5373 = vsel %vm463, %v5371, %v5372
        %v5374 = vrot.slane %v5367, 1
        %v5375 = vsel %vm463, %v5372, %v5374
        %v5378 = vadd.f32 %v5361, %v5373
        %v5379 = vadd.f32 %v5362, %v5375
        %s5380 = sld [smem:[#allocation9 + $0x70]]
        %v5381 = vstv %s5380
        %v5382 = vmul.f32 %v5381, %v1163
        %v5383 = vmul.f32 %v5381, %v1164
        %v5384 = vmul.f32 %v5381, %v1165
        %v5388 = vrot.slane %v5382, 1
        %v5389 = vrot.slane %v5383, 1
        %v5390 = vsel %vm463, %v5388, %v5389
        %v5391 = vrot.slane %v5384, 1
        %v5392 = vsel %vm463, %v5389, %v5391
        %5393 = vrot.lane.b32.xlu0 %v5390, 127
        %v5394 = vpop.permute.xlu0 %5393
        %5395 = vrot.lane.b32.xlu0 %v5392, 127
        %v5396 = vpop.permute.xlu0 %5395
        %v5399 = vadd.f32 %v5378, %v5394
        %v5400 = vadd.f32 %v5379, %v5396
        %s5401 = sld [smem:[#allocation9 + $0x71]]
        %v5402 = vstv %s5401
        %v5403 = vmul.f32 %v5402, %v1163
        %v5404 = vmul.f32 %v5402, %v1164
        %v5405 = vmul.f32 %v5402, %v1165
        %v5409 = vrot.slane %v5403, 1
        %v5410 = vrot.slane %v5404, 1
        %v5411 = vsel %vm463, %v5409, %v5410
        %v5412 = vrot.slane %v5405, 1
        %v5413 = vsel %vm463, %v5410, %v5412
        %5414 = vrot.lane.b32.xlu0 %v5411, 126
        %v5415 = vpop.permute.xlu0 %5414
        %5416 = vrot.lane.b32.xlu0 %v5413, 126
        %v5417 = vpop.permute.xlu0 %5416
        %v5420 = vadd.f32 %v5399, %v5415
        %v5421 = vadd.f32 %v5400, %v5417
        %s5422 = sld [smem:[#allocation9 + $0x72]]
        %v5423 = vstv %s5422
        %v5424 = vmul.f32 %v5423, %v1163
        %v5425 = vmul.f32 %v5423, %v1164
        %v5426 = vmul.f32 %v5423, %v1165
        %v5430 = vrot.slane %v5424, 2
        %v5431 = vrot.slane %v5425, 2
        %v5432 = vsel %vm533, %v5430, %v5431
        %v5433 = vrot.slane %v5426, 2
        %v5434 = vsel %vm533, %v5431, %v5433
        %v5437 = vadd.f32 %v5420, %v5432
        %v5438 = vadd.f32 %v5421, %v5434
        %s5439 = sld [smem:[#allocation9 + $0x73]]
        %v5440 = vstv %s5439
        %v5441 = vmul.f32 %v5440, %v1163
        %v5442 = vmul.f32 %v5440, %v1164
        %v5443 = vmul.f32 %v5440, %v1165
        %v5447 = vrot.slane %v5441, 2
        %v5448 = vrot.slane %v5442, 2
        %v5449 = vsel %vm533, %v5447, %v5448
        %v5450 = vrot.slane %v5443, 2
        %v5451 = vsel %vm533, %v5448, %v5450
        %5452 = vrot.lane.b32.xlu0 %v5449, 127
        %v5453 = vpop.permute.xlu0 %5452
        %5454 = vrot.lane.b32.xlu0 %v5451, 127
        %v5455 = vpop.permute.xlu0 %5454
        %v5458 = vadd.f32 %v5437, %v5453
        %v5459 = vadd.f32 %v5438, %v5455
        %s5460 = sld [smem:[#allocation9 + $0x74]]
        %v5461 = vstv %s5460
        %v5462 = vmul.f32 %v5461, %v1163
        %v5463 = vmul.f32 %v5461, %v1164
        %v5464 = vmul.f32 %v5461, %v1165
        %v5468 = vrot.slane %v5462, 2
        %v5469 = vrot.slane %v5463, 2
        %v5470 = vsel %vm533, %v5468, %v5469
        %v5471 = vrot.slane %v5464, 2
        %v5472 = vsel %vm533, %v5469, %v5471
        %5473 = vrot.lane.b32.xlu0 %v5470, 126
        %v5474 = vpop.permute.xlu0 %5473
        %5475 = vrot.lane.b32.xlu0 %v5472, 126
        %v5476 = vpop.permute.xlu0 %5475
        %v5479 = vadd.f32 %v5458, %v5474
        %v5480 = vadd.f32 %v5459, %v5476
        %s5481 = sld [smem:[#allocation9 + $0x75]]
        %v5482 = vstv %s5481
        %v5483 = vmul.f32 %v5482, %v1921
        %v5484 = vmul.f32 %v5482, %v1922
        %v5485 = vadd.f32 %v5479, %v5483
        %v5486 = vadd.f32 %v5480, %v5484
        %s5487 = sld [smem:[#allocation9 + $0x76]]
        %v5488 = vstv %s5487
        %v5489 = vmul.f32 %v5488, %v1921
        %v5490 = vmul.f32 %v5488, %v1922
        %5493 = vrot.lane.b32.xlu0 %v5489, 127
        %v5494 = vpop.permute.xlu0 %5493
        %5495 = vrot.lane.b32.xlu0 %v5490, 127
        %v5496 = vpop.permute.xlu0 %5495
        %v5499 = vadd.f32 %v5485, %v5494
        %v5500 = vadd.f32 %v5486, %v5496
        %s5501 = sld [smem:[#allocation9 + $0x77]]
        %v5502 = vstv %s5501
        %v5503 = vmul.f32 %v5502, %v1921
        %v5504 = vmul.f32 %v5502, %v1922
        %5507 = vrot.lane.b32.xlu0 %v5503, 126
        %v5508 = vpop.permute.xlu0 %5507
        %5509 = vrot.lane.b32.xlu0 %v5504, 126
        %v5510 = vpop.permute.xlu0 %5509
        %v5513 = vadd.f32 %v5499, %v5508
        %v5514 = vadd.f32 %v5500, %v5510
        %s5515 = sld [smem:[#allocation9 + $0x78]]
        %v5516 = vstv %s5515
        %v5517 = vmul.f32 %v5516, %v1921
        %v5518 = vmul.f32 %v5516, %v1922
        %v5519 = vmul.f32 %v5516, %v1923
        %v5523 = vrot.slane %v5517, 1
        %v5524 = vrot.slane %v5518, 1
        %v5525 = vsel %vm463, %v5523, %v5524
        %v5526 = vrot.slane %v5519, 1
        %v5527 = vsel %vm463, %v5524, %v5526
        %v5530 = vadd.f32 %v5513, %v5525
        %v5531 = vadd.f32 %v5514, %v5527
        %s5532 = sld [smem:[#allocation9 + $0x79]]
        %v5533 = vstv %s5532
        %v5534 = vmul.f32 %v5533, %v1921
        %v5535 = vmul.f32 %v5533, %v1922
        %v5536 = vmul.f32 %v5533, %v1923
        %v5540 = vrot.slane %v5534, 1
        %v5541 = vrot.slane %v5535, 1
        %v5542 = vsel %vm463, %v5540, %v5541
        %v5543 = vrot.slane %v5536, 1
        %v5544 = vsel %vm463, %v5541, %v5543
        %5545 = vrot.lane.b32.xlu0 %v5542, 127
        %v5546 = vpop.permute.xlu0 %5545
        %5547 = vrot.lane.b32.xlu0 %v5544, 127
        %v5548 = vpop.permute.xlu0 %5547
        %v5551 = vadd.f32 %v5530, %v5546
        %v5552 = vadd.f32 %v5531, %v5548
        %s5553 = sld [smem:[#allocation9 + $0x7a]]
        %v5554 = vstv %s5553
        %v5555 = vmul.f32 %v5554, %v1921
        %v5556 = vmul.f32 %v5554, %v1922
        %v5557 = vmul.f32 %v5554, %v1923
        %v5561 = vrot.slane %v5555, 1
        %v5562 = vrot.slane %v5556, 1
        %v5563 = vsel %vm463, %v5561, %v5562
        %v5564 = vrot.slane %v5557, 1
        %v5565 = vsel %vm463, %v5562, %v5564
        %5566 = vrot.lane.b32.xlu0 %v5563, 126
        %v5567 = vpop.permute.xlu0 %5566
        %5568 = vrot.lane.b32.xlu0 %v5565, 126
        %v5569 = vpop.permute.xlu0 %5568
        %v5572 = vadd.f32 %v5551, %v5567
        %v5573 = vadd.f32 %v5552, %v5569
        %s5574 = sld [smem:[#allocation9 + $0x7b]]
        %v5575 = vstv %s5574
        %v5576 = vmul.f32 %v5575, %v1921
        %v5577 = vmul.f32 %v5575, %v1922
        %v5578 = vmul.f32 %v5575, %v1923
        %v5582 = vrot.slane %v5576, 2
        %v5583 = vrot.slane %v5577, 2
        %v5584 = vsel %vm533, %v5582, %v5583
        %v5585 = vrot.slane %v5578, 2
        %v5586 = vsel %vm533, %v5583, %v5585
        %v5589 = vadd.f32 %v5572, %v5584
        %v5590 = vadd.f32 %v5573, %v5586
        %s5591 = sld [smem:[#allocation9 + $0x7c]]
        %v5592 = vstv %s5591
        %v5593 = vmul.f32 %v5592, %v1921
        %v5594 = vmul.f32 %v5592, %v1922
        %v5595 = vmul.f32 %v5592, %v1923
        %v5599 = vrot.slane %v5593, 2
        %v5600 = vrot.slane %v5594, 2
        %v5601 = vsel %vm533, %v5599, %v5600
        %v5602 = vrot.slane %v5595, 2
        %v5603 = vsel %vm533, %v5600, %v5602
        %5604 = vrot.lane.b32.xlu0 %v5601, 127
        %v5605 = vpop.permute.xlu0 %5604
        %5606 = vrot.lane.b32.xlu0 %v5603, 127
        %v5607 = vpop.permute.xlu0 %5606
        %v5610 = vadd.f32 %v5589, %v5605
        %v5611 = vadd.f32 %v5590, %v5607
        %s5612 = sld [smem:[#allocation9 + $0x7d]]
        %v5613 = vstv %s5612
        %v5614 = vmul.f32 %v5613, %v1921
        %v5615 = vmul.f32 %v5613, %v1922
        %v5616 = vmul.f32 %v5613, %v1923
        %v5620 = vrot.slane %v5614, 2
        %v5621 = vrot.slane %v5615, 2
        %v5622 = vsel %vm533, %v5620, %v5621
        %v5623 = vrot.slane %v5616, 2
        %v5624 = vsel %vm533, %v5621, %v5623
        %5625 = vrot.lane.b32.xlu0 %v5622, 126
        %v5626 = vpop.permute.xlu0 %5625
        %5627 = vrot.lane.b32.xlu0 %v5624, 126
        %v5628 = vpop.permute.xlu0 %5627
        %v5631 = vadd.f32 %v5610, %v5626
        %v5632 = vadd.f32 %v5611, %v5628
        %s5633 = sld [smem:[#allocation9 + $0x7e]]
        %v5634 = vstv %s5633
        %v5635 = vmul.f32 %v5634, %v2679
        %v5636 = vmul.f32 %v5634, %v2680
        %v5637 = vadd.f32 %v5631, %v5635
        %v5638 = vadd.f32 %v5632, %v5636
        %s5639 = sld [smem:[#allocation9 + $0x7f]]
        %v5640 = vstv %s5639
        %v5641 = vmul.f32 %v5640, %v2679
        %v5642 = vmul.f32 %v5640, %v2680
        %5645 = vrot.lane.b32.xlu0 %v5641, 127
        %v5646 = vpop.permute.xlu0 %5645
        %5647 = vrot.lane.b32.xlu0 %v5642, 127
        %v5648 = vpop.permute.xlu0 %5647
        %v5651 = vadd.f32 %v5637, %v5646
        %v5652 = vadd.f32 %v5638, %v5648
        %s5653 = sld [smem:[#allocation9 + $0x80]]
        %v5654 = vstv %s5653
        %v5655 = vmul.f32 %v5654, %v2679
        %v5656 = vmul.f32 %v5654, %v2680
        %5659 = vrot.lane.b32.xlu0 %v5655, 126
        %v5660 = vpop.permute.xlu0 %5659
        %5661 = vrot.lane.b32.xlu0 %v5656, 126
        %v5662 = vpop.permute.xlu0 %5661
        %v5665 = vadd.f32 %v5651, %v5660
        %v5666 = vadd.f32 %v5652, %v5662
        %s5667 = sld [smem:[#allocation9 + $0x81]]
        %v5668 = vstv %s5667
        %v5669 = vmul.f32 %v5668, %v2679
        %v5670 = vmul.f32 %v5668, %v2680
        %v5671 = vmul.f32 %v5668, %v2681
        %v5675 = vrot.slane %v5669, 1
        %v5676 = vrot.slane %v5670, 1
        %v5677 = vsel %vm463, %v5675, %v5676
        %v5678 = vrot.slane %v5671, 1
        %v5679 = vsel %vm463, %v5676, %v5678
        %v5682 = vadd.f32 %v5665, %v5677
        %v5683 = vadd.f32 %v5666, %v5679
        %s5684 = sld [smem:[#allocation9 + $0x82]]
        %v5685 = vstv %s5684
        %v5686 = vmul.f32 %v5685, %v2679
        %v5687 = vmul.f32 %v5685, %v2680
        %v5688 = vmul.f32 %v5685, %v2681
        %v5692 = vrot.slane %v5686, 1
        %v5693 = vrot.slane %v5687, 1
        %v5694 = vsel %vm463, %v5692, %v5693
        %v5695 = vrot.slane %v5688, 1
        %v5696 = vsel %vm463, %v5693, %v5695
        %5697 = vrot.lane.b32.xlu0 %v5694, 127
        %v5698 = vpop.permute.xlu0 %5697
        %5699 = vrot.lane.b32.xlu0 %v5696, 127
        %v5700 = vpop.permute.xlu0 %5699
        %v5703 = vadd.f32 %v5682, %v5698
        %v5704 = vadd.f32 %v5683, %v5700
        %s5705 = sld [smem:[#allocation9 + $0x83]]
        %v5706 = vstv %s5705
        %v5707 = vmul.f32 %v5706, %v2679
        %v5708 = vmul.f32 %v5706, %v2680
        %v5709 = vmul.f32 %v5706, %v2681
        %v5713 = vrot.slane %v5707, 1
        %v5714 = vrot.slane %v5708, 1
        %v5715 = vsel %vm463, %v5713, %v5714
        %v5716 = vrot.slane %v5709, 1
        %v5717 = vsel %vm463, %v5714, %v5716
        %5718 = vrot.lane.b32.xlu0 %v5715, 126
        %v5719 = vpop.permute.xlu0 %5718
        %5720 = vrot.lane.b32.xlu0 %v5717, 126
        %v5721 = vpop.permute.xlu0 %5720
        %v5724 = vadd.f32 %v5703, %v5719
        %v5725 = vadd.f32 %v5704, %v5721
        %s5726 = sld [smem:[#allocation9 + $0x84]]
        %v5727 = vstv %s5726
        %v5728 = vmul.f32 %v5727, %v2679
        %v5729 = vmul.f32 %v5727, %v2680
        %v5730 = vmul.f32 %v5727, %v2681
        %v5734 = vrot.slane %v5728, 2
        %v5735 = vrot.slane %v5729, 2
        %v5736 = vsel %vm533, %v5734, %v5735
        %v5737 = vrot.slane %v5730, 2
        %v5738 = vsel %vm533, %v5735, %v5737
        %v5741 = vadd.f32 %v5724, %v5736
        %v5742 = vadd.f32 %v5725, %v5738
        %s5743 = sld [smem:[#allocation9 + $0x85]]
        %v5744 = vstv %s5743
        %v5745 = vmul.f32 %v5744, %v2679
        %v5746 = vmul.f32 %v5744, %v2680
        %v5747 = vmul.f32 %v5744, %v2681
        %v5751 = vrot.slane %v5745, 2
        %v5752 = vrot.slane %v5746, 2
        %v5753 = vsel %vm533, %v5751, %v5752
        %v5754 = vrot.slane %v5747, 2
        %v5755 = vsel %vm533, %v5752, %v5754
        %5756 = vrot.lane.b32.xlu0 %v5753, 127
        %v5757 = vpop.permute.xlu0 %5756
        %5758 = vrot.lane.b32.xlu0 %v5755, 127
        %v5759 = vpop.permute.xlu0 %5758
        %v5762 = vadd.f32 %v5741, %v5757
        %v5763 = vadd.f32 %v5742, %v5759
        %s5764 = sld [smem:[#allocation9 + $0x86]]
        %v5765 = vstv %s5764
        %v5766 = vmul.f32 %v5765, %v2679
        %v5767 = vmul.f32 %v5765, %v2680
        %v5768 = vmul.f32 %v5765, %v2681
        %v5772 = vrot.slane %v5766, 2
        %v5773 = vrot.slane %v5767, 2
        %v5774 = vsel %vm533, %v5772, %v5773
        %v5775 = vrot.slane %v5768, 2
        %v5776 = vsel %vm533, %v5773, %v5775
        %5777 = vrot.lane.b32.xlu0 %v5774, 126
        %v5778 = vpop.permute.xlu0 %5777
        %5779 = vrot.lane.b32.xlu0 %v5776, 126
        %v5780 = vpop.permute.xlu0 %5779
        %v5783 = vadd.f32 %v5762, %v5778
        %v5784 = vadd.f32 %v5763, %v5780
        %s5785 = sld [smem:[#allocation9 + $0x87]]
        %v5786 = vstv %s5785
        %v5787 = vmul.f32 %v5786, %v3437
        %v5788 = vmul.f32 %v5786, %v3438
        %v5789 = vadd.f32 %v5783, %v5787
        %v5790 = vadd.f32 %v5784, %v5788
        %s5791 = sld [smem:[#allocation9 + $0x88]]
        %v5792 = vstv %s5791
        %v5793 = vmul.f32 %v5792, %v3437
        %v5794 = vmul.f32 %v5792, %v3438
        %5797 = vrot.lane.b32.xlu0 %v5793, 127
        %v5798 = vpop.permute.xlu0 %5797
        %5799 = vrot.lane.b32.xlu0 %v5794, 127
        %v5800 = vpop.permute.xlu0 %5799
        %v5803 = vadd.f32 %v5789, %v5798
        %v5804 = vadd.f32 %v5790, %v5800
        %s5805 = sld [smem:[#allocation9 + $0x89]]
        %v5806 = vstv %s5805
        %v5807 = vmul.f32 %v5806, %v3437
        %v5808 = vmul.f32 %v5806, %v3438
        %5811 = vrot.lane.b32.xlu0 %v5807, 126
        %v5812 = vpop.permute.xlu0 %5811
        %5813 = vrot.lane.b32.xlu0 %v5808, 126
        %v5814 = vpop.permute.xlu0 %5813
        %v5817 = vadd.f32 %v5803, %v5812
        %v5818 = vadd.f32 %v5804, %v5814
        %s5819 = sld [smem:[#allocation9 + $0x8a]]
        %v5820 = vstv %s5819
        %v5821 = vmul.f32 %v5820, %v3437
        %v5822 = vmul.f32 %v5820, %v3438
        %v5823 = vmul.f32 %v5820, %v3439
        %v5827 = vrot.slane %v5821, 1
        %v5828 = vrot.slane %v5822, 1
        %v5829 = vsel %vm463, %v5827, %v5828
        %v5830 = vrot.slane %v5823, 1
        %v5831 = vsel %vm463, %v5828, %v5830
        %v5834 = vadd.f32 %v5817, %v5829
        %v5835 = vadd.f32 %v5818, %v5831
        %s5836 = sld [smem:[#allocation9 + $0x8b]]
        %v5837 = vstv %s5836
        %v5838 = vmul.f32 %v5837, %v3437
        %v5839 = vmul.f32 %v5837, %v3438
        %v5840 = vmul.f32 %v5837, %v3439
        %v5844 = vrot.slane %v5838, 1
        %v5845 = vrot.slane %v5839, 1
        %v5846 = vsel %vm463, %v5844, %v5845
        %v5847 = vrot.slane %v5840, 1
        %v5848 = vsel %vm463, %v5845, %v5847
        %5849 = vrot.lane.b32.xlu0 %v5846, 127
        %v5850 = vpop.permute.xlu0 %5849
        %5851 = vrot.lane.b32.xlu0 %v5848, 127
        %v5852 = vpop.permute.xlu0 %5851
        %v5855 = vadd.f32 %v5834, %v5850
        %v5856 = vadd.f32 %v5835, %v5852
        %s5857 = sld [smem:[#allocation9 + $0x8c]]
        %v5858 = vstv %s5857
        %v5859 = vmul.f32 %v5858, %v3437
        %v5860 = vmul.f32 %v5858, %v3438
        %v5861 = vmul.f32 %v5858, %v3439
        %v5865 = vrot.slane %v5859, 1
        %v5866 = vrot.slane %v5860, 1
        %v5867 = vsel %vm463, %v5865, %v5866
        %v5868 = vrot.slane %v5861, 1
        %v5869 = vsel %vm463, %v5866, %v5868
        %5870 = vrot.lane.b32.xlu0 %v5867, 126
        %v5871 = vpop.permute.xlu0 %5870
        %5872 = vrot.lane.b32.xlu0 %v5869, 126
        %v5873 = vpop.permute.xlu0 %5872
        %v5876 = vadd.f32 %v5855, %v5871
        %v5877 = vadd.f32 %v5856, %v5873
        %s5878 = sld [smem:[#allocation9 + $0x8d]]
        %v5879 = vstv %s5878
        %v5880 = vmul.f32 %v5879, %v3437
        %v5881 = vmul.f32 %v5879, %v3438
        %v5882 = vmul.f32 %v5879, %v3439
        %v5886 = vrot.slane %v5880, 2
        %v5887 = vrot.slane %v5881, 2
        %v5888 = vsel %vm533, %v5886, %v5887
        %v5889 = vrot.slane %v5882, 2
        %v5890 = vsel %vm533, %v5887, %v5889
        %v5893 = vadd.f32 %v5876, %v5888
        %v5894 = vadd.f32 %v5877, %v5890
        %s5895 = sld [smem:[#allocation9 + $0x8e]]
        %v5896 = vstv %s5895
        %v5897 = vmul.f32 %v5896, %v3437
        %v5898 = vmul.f32 %v5896, %v3438
        %v5899 = vmul.f32 %v5896, %v3439
        %v5903 = vrot.slane %v5897, 2
        %v5904 = vrot.slane %v5898, 2
        %v5905 = vsel %vm533, %v5903, %v5904
        %v5906 = vrot.slane %v5899, 2
        %v5907 = vsel %vm533, %v5904, %v5906
        %5908 = vrot.lane.b32.xlu0 %v5905, 127
        %v5909 = vpop.permute.xlu0 %5908
        %5910 = vrot.lane.b32.xlu0 %v5907, 127
        %v5911 = vpop.permute.xlu0 %5910
        %v5914 = vadd.f32 %v5893, %v5909
        %v5915 = vadd.f32 %v5894, %v5911
        %s5916 = sld [smem:[#allocation9 + $0x8f]]
        %v5917 = vstv %s5916
        %v5918 = vmul.f32 %v5917, %v3437
        %v5919 = vmul.f32 %v5917, %v3438
        %v5920 = vmul.f32 %v5917, %v3439
        %v5924 = vrot.slane %v5918, 2
        %v5925 = vrot.slane %v5919, 2
        %v5926 = vsel %vm533, %v5924, %v5925
        %v5927 = vrot.slane %v5920, 2
        %v5928 = vsel %vm533, %v5925, %v5927
        %5929 = vrot.lane.b32.xlu0 %v5926, 126
        %v5930 = vpop.permute.xlu0 %5929
        %5931 = vrot.lane.b32.xlu0 %v5928, 126
        %v5932 = vpop.permute.xlu0 %5931
        %v5935 = vadd.f32 %v5914, %v5930
        %v5936 = vadd.f32 %v5915, %v5932
        %v5940 = vrot.slane %v340, 2
        %v5941 = vrot.slane %v341, 2
        %v5942 = vsel %vm533, %v5940, %v5941
        %v5943 = vrot.slane %v342, 2
        %v5944 = vsel %vm533, %v5941, %v5943
        %5945 = vrot.lane.b32.xlu0 %v5942, 126
        %v5946 = vpop.permute.xlu0 %5945
        %5947 = vrot.lane.b32.xlu0 %v5944, 126
        %v5948 = vpop.permute.xlu0 %5947
        %v5951 = vadd.f32 %v5935, %v5946
        %v5952 = vadd.f32 %v5936, %v5948
        %s5953 = scalar_lea.vmem %s325, 48 [#allocation12]
        %5954 = vst.msk [vmem:[%s5953] sm:$0xff] %vm4066, %v5951
        %5955 = vst.msk [vmem:[%s5953 + $0x8] sm:$0xff] %vm4066, %v5952
        %s5956 = sand.u32 %s186, 1
        %s5957 = scalar_lea.sflag [#allocation5], %s5956
        %s5958 = sand.u32 %s186, 1
        %s5959 = smul.addr %s5958, 64
        %s5960 = scalar_lea.vmem [#allocation12], %s5959
        // Predicated region
        $region65: #{lateral_block.1} parent=47 // pred_check
          %p5961 = pneg %p196
        $region66: #{lateral_block.1} parent=47 // pred_check_branch
          %5963 = sbr.rel (%p5961) target = $region68
        $region67: #{lateral_block.1} parent=47 // pred_region
          %s5965 = ssub.s32 1024, 1024
          %5966 = vsyncadd %s5957, %s5965
          %s5967 = smul.addr %s26, 8
          %s5968 = smul.addr %s5967, 128
          %s5969 = scalar_lea.hbm %s7, %s5968
          %s5970 = sshll.u32 %s5960, 4
          %s5971 = int_to_ptr.vmem [resolvable:$true] %s5970
          %5976 = dma.vmem_to_hbm [thread:$0]  %s5971, 1024, %s5969, %s5957, 128, 128, 8
        $region68: #{lateral_block.1} parent=47 // pred_fallthru
          _
      $region48: #{lateral_block.1} parent=5 // pred_fallthru
        _
      %p5977 = scmp.le.s32.totalorder 2, %s21
      // Predicated region
      $region69: #{lateral_block.1} parent=5 // pred_check
        %p5978 = pneg %p5977
      $region70: #{lateral_block.1} parent=5 // pred_check_branch
        %5980 = sbr.rel (%p5978) target = $region72
      $region71: #{lateral_block.1} parent=5 // pred_region
        %s5981 = ssub.s32 %s21, 2
        // Predicated region
        $region73: #{lateral_block.1} parent=71 // pred_check
          %p5982 = pneg %p202
        $region74: #{lateral_block.1} parent=71 // pred_check_branch
          %5984 = sbr.rel (%p5982) target = $region76
        $region75: #{lateral_block.1} parent=71 // pred_region
          %s5985 = sand.u32 %s187, 1
          %s5986 = scalar_lea.sflag [#allocation5], %s5985
          %s5987 = sand.u32 %s187, 1
          %s5988 = smul.addr %s5987, 64
          %s5989 = scalar_lea.vmem [#allocation12], %s5988
          %5990 = dma.done %s5986, 1024
        $region76: #{lateral_block.1} parent=71 // pred_fallthru
          _
      $region72: #{lateral_block.1} parent=5 // pred_fallthru
        _
    $region6: #{lateral_block.1} parent=1 // loop_footer
      %s25 = sadd.s32 1, %s21
    $region7: #{lateral_block.1} parent=1 // loop_footer_branch
      %20 = sbr.rel target = $region3
    $region8: #{lateral_block.1} parent=1 // loop_exit
      _
    %5991 = vsyncpa [#allocation5], 1
    %s5992 = scalar_lea.sflag [#allocation5], 1
    %5993 = vsyncpa %s5992, 1
    %5994 = vsyncpa [#allocation6], 1
    %s5995 = scalar_lea.sflag [#allocation6], 1
    %5996 = vsyncpa %s5995, 1
    %5997 = vsyncpa [#allocation8], 1
    %5998 = vsyncpa [#allocation11], 1

</llo_original>
